<compile_context>
chip_gen: v7x
topology: tpu7x:2x2x1
jax: 0.10.0
libtpu: 0.0.40
codegen_flags: <defaults>
</compile_context>

<pallas_src>
import functools
from types import SimpleNamespace

import jax
import jax.numpy as jnp
from jax.experimental import pallas as pl
from jax.experimental.pallas import tpu as pltpu


# ----------------------------- static geometry -------------------------------

def _round_up(x, m):
    return (x + m - 1) // m * m


def _make_geom(input_shape, n_actions):
    """Static shape bookkeeping for the fused forward kernel."""
    C0, H0, W0 = input_shape
    K1, K2, K3 = 8, 4, 3                  # conv kernel sizes (stride 1, VALID)
    C1, C2, C3 = 32, 64, 64               # conv output channels
    F1 = 512                              # fc1 width
    H1, W1 = H0 - K1 + 1, W0 - K1 + 1
    H2, W2 = H1 - K2 + 1, W1 - K2 + 1
    H3, W3 = H2 - K3 + 1, W2 - K3 + 1
    Wr = W1                               # raster width shared by all VMEM activations
    R1 = H1 * W1                          # real conv1 rows (per batch element)
    R2 = H2 * Wr                          # conv2 rows in the padded raster
    R3 = H3 * Wr                          # conv3 rows in the padded raster
    # Scratch rows, including the slack the next layer's shifted reads touch.
    R1p = _round_up(max(R1, (K2 - 1) * (Wr + 1) + R2), 8)
    R2p = _round_up(max(R2, (K3 - 1) * (Wr + 1) + R3), 8)
    P1K = K1 * K1 * C0                    # conv1 im2col contraction size
    flat = C3 * H3 * W3                   # torch conv_out_size
    NA = n_actions
    NAp = _round_up(max(NA, 128), 128)    # lane-dense padded q-value width
    return SimpleNamespace(**locals())


# ----------------------------- fused Pallas kernel ---------------------------

def _dqn_kernel(p1_ref, w1_ref, b1_ref, w2_ref, b2_ref, w3_ref, b3_ref,
                w4_ref, b4_ref, w5_ref, b5_ref,
                out_ref,
                y1_ref, y2_ref, y3_ref, *, g):
    """Whole DQN forward for one batch element; everything stays in VMEM."""
    f32, bf16 = jnp.float32, jnp.bfloat16

    def mm(x, w):
        # bf16 MXU matmul with f32 accumulation.
        return jnp.dot(x.astype(bf16), w.astype(bf16), preferred_element_type=f32)

    # ---- conv1: one im2col GEMM (patch matrix prepared by the wrapper) -----
    y1 = mm(p1_ref[0], w1_ref[...]) + b1_ref[...]
    y1_ref[...] = jnp.maximum(y1, 0.0)

    # Keep the slack rows touched by conv3's shifted reads finite.
    if g.R2p > g.R2:
        y2_ref[g.R2:g.R2p, :] = jnp.zeros((g.R2p - g.R2, g.C2), f32)

    # ---- conv2: in-VMEM shift-and-accumulate im2col -------------------------
    acc2 = jnp.zeros((g.R2, g.C2), f32)
    for kh in range(g.K2):
        for kw in range(g.K2):
            src = kh * g.Wr + kw
            row = (kh * g.K2 + kw) * g.C1
            acc2 = acc2 + mm(y1_ref[src:src + g.R2, :],
                             w2_ref[row:row + g.C1, :])
    y2_ref[0:g.R2, :] = jnp.maximum(acc2 + b2_ref[...], 0.0)

    # ---- conv3 ---------------------------------------------------------------
    acc3 = jnp.zeros((g.R3, g.C3), f32)
    for kh in range(g.K3):
        for kw in range(g.K3):
            src = kh * g.Wr + kw
            row = (kh * g.K3 + kw) * g.C2
            acc3 = acc3 + mm(y2_ref[src:src + g.R3, :],
                             w3_ref[row:row + g.C2, :])
    y3_ref[...] = jnp.maximum(acc3 + b3_ref[...], 0.0)

    # ---- fc1: the CHW->HWC flatten is folded into the accumulation order
    # (w4 rows were pre-permuted at prep time to match) ------------------------
    acc4 = jnp.zeros((1, g.F1), f32)
    for hh in range(g.H3):
        for ww in range(g.W3):
            src = hh * g.Wr + ww
            row = (hh * g.W3 + ww) * g.C3
            acc4 = acc4 + mm(y3_ref[src:src + 1, :],
                             w4_ref[row:row + g.C3, :])
    h1 = jnp.maximum(acc4 + b4_ref[...], 0.0)

    # ---- fc2: zero-padded to a lane-dense 128-wide HBM store ----------------
    out_ref[0] = mm(h1, w5_ref[...]) + b5_ref[...]


# ----------------------------- parameters ------------------------------------

def conv_out_size(input_shape):
    C, H, W = input_shape
    h, w = H, W
    for k in (8, 4, 3):                    # three stride-1 valid convs
        h, w = h - k + 1, w - k + 1
    return 64 * h * w


def init_params(key, input_shape, n_actions):
    """Parameters in the PyTorch layout (Conv2d: (CO,CI,KH,KW); Linear: (out,in))."""
    C, H, W = input_shape
    flat = conv_out_size(input_shape)
    ks = jax.random.split(key, 10)
    s = 0.05
    return {
        "c1w": s * jax.random.normal(ks[0], (32, C, 8, 8), jnp.float32),
        "c1b": s * jax.random.normal(ks[5], (32,), jnp.float32),
        "c2w": s * jax.random.normal(ks[1], (64, 32, 4, 4), jnp.float32),
        "c2b": s * jax.random.normal(ks[6], (64,), jnp.float32),
        "c3w": s * jax.random.normal(ks[2], (64, 64, 3, 3), jnp.float32),
        "c3b": s * jax.random.normal(ks[7], (64,), jnp.float32),
        "f1w": s * jax.random.normal(ks[3], (512, flat), jnp.float32),
        "f1b": s * jax.random.normal(ks[8], (512,), jnp.float32),
        "f2w": s * jax.random.normal(ks[4], (n_actions, 512), jnp.float32),
        "f2b": s * jax.random.normal(ks[9], (n_actions,), jnp.float32),
    }


def prepare_params(params, input_shape, n_actions):
    """One-time re-layout of the torch-format parameters for the fused kernel.

    conv:  (CO, CI, KH, KW) -> (KH*KW*CI, CO) bf16  (matches NHWC im2col)
    fc1:   columns permuted from torch's CHW flatten to the kernel's HWC
           flatten, then transposed to (flat, 512)
    fc2:   transposed and zero-padded to (512, NAp) for a lane-dense store.
    """
    g = _make_geom(input_shape, n_actions)
    bf16 = jnp.bfloat16

    def conv_w(w):
        co, ci, kh, kw = w.shape
        return w.transpose(2, 3, 1, 0).reshape(kh * kw * ci, co).astype(bf16)

    f1w = params["f1w"].reshape(g.F1, g.C3, g.H3, g.W3)
    f1w = f1w.transpose(0, 2, 3, 1).reshape(g.F1, g.flat)     # cols now (h, w, c)
    f2w = jnp.zeros((g.NAp, g.F1), params["f2w"].dtype).at[:g.NA].set(params["f2w"])
    f2b = jnp.zeros((g.NAp,), jnp.float32).at[:g.NA].set(params["f2b"])

    return {
        "w1": conv_w(params["c1w"]),
        "b1": params["c1b"].reshape(1, -1).astype(jnp.float32),
        "w2": conv_w(params["c2w"]),
        "b2": params["c2b"].reshape(1, -1).astype(jnp.float32),
        "w3": conv_w(params["c3w"]),
        "b3": params["c3b"].reshape(1, -1).astype(jnp.float32),
        "w4": f1w.T.astype(bf16),
        "b4": params["f1b"].reshape(1, -1).astype(jnp.float32),
        "w5": f2w.T.astype(bf16),
        "b5": f2b.reshape(1, -1),
    }


# ----------------------------- wrapper ---------------------------------------

def _conv1_patches(x, g):
    """im2col for conv1, built by XLA from the raw NCHW input.

    Returns (N, R1p, K1*K1*C0) bf16 with columns in (kh, kw, ci) order; rows
    zero-padded from R1 = H1*W1 up to R1p (8-aligned + slack for conv2's
    shifted in-kernel reads).
    """
    n = x.shape[0]
    xh = x.transpose(0, 2, 3, 1)                               # NHWC
    cols = []
    for i in range(g.K1):
        for j in range(g.K1):
            cols.append(xh[:, i:i + g.H1, j:j + g.W1, :])      # (N, H1, W1, C0)
    p = jnp.concatenate(cols, axis=-1)                         # (N, H1, W1, P1K)
    p = p.reshape(n, g.R1, g.P1K)
    p = jnp.pad(p, ((0, 0), (0, g.R1p - g.R1), (0, 0)))
    return p.astype(jnp.bfloat16)


def dqn_forward(prep, x, *, input_shape, n_actions):
    g = _make_geom(input_shape, n_actions)
    n = x.shape[0]
    p1 = _conv1_patches(x, g)

    def _rep(arr):   # weight/bias: same full-array block at every grid step
        nd = arr.ndim
        return pl.BlockSpec(arr.shape, lambda b: (0,) * nd)

    flops = 2 * n * (g.R1 * g.P1K * g.C1
                     + g.R2 * (g.K2 * g.K2 * g.C1) * g.C2
                     + g.R3 * (g.K3 * g.K3 * g.C2) * g.C3
                     + g.flat * g.F1 + g.F1 * g.NAp)
    weight_bytes = sum(int(v.size) * v.dtype.itemsize for v in prep.values())
    bytes_accessed = int(p1.size) * 2 + weight_bytes + n * g.NAp * 4

    out = pl.pallas_call(
        functools.partial(_dqn_kernel, g=g),
        out_shape=jax.ShapeDtypeStruct((n, 1, g.NAp), jnp.float32),
        grid=(n,),
        in_specs=[
            pl.BlockSpec((1, g.R1p, g.P1K), lambda b: (b, 0, 0)),
            _rep(prep["w1"]), _rep(prep["b1"]),
            _rep(prep["w2"]), _rep(prep["b2"]),
            _rep(prep["w3"]), _rep(prep["b3"]),
            _rep(prep["w4"]), _rep(prep["b4"]),
            _rep(prep["w5"]), _rep(prep["b5"]),
        ],
        out_specs=pl.BlockSpec((1, 1, g.NAp), lambda b: (b, 0, 0)),
        scratch_shapes=[
            pltpu.VMEM((g.R1p, g.C1), jnp.float32),   # conv1 output raster
            pltpu.VMEM((g.R2p, g.C2), jnp.float32),   # conv2 output raster (+slack)
            pltpu.VMEM((g.R3, g.C3), jnp.float32),    # conv3 output raster
        ],
        compiler_params=pltpu.CompilerParams(
            dimension_semantics=("parallel",)),       # v7x: batch across TensorCores
        cost_estimate=pl.CostEstimate(
            flops=flops, transcendentals=0, bytes_accessed=bytes_accessed),
    )(p1, prep["w1"], prep["b1"], prep["w2"], prep["b2"], prep["w3"],
      prep["b3"], prep["w4"], prep["b4"], prep["w5"], prep["b5"])

    return out[:, 0, :n_actions]


# ----------------------------- pure-JAX reference ----------------------------

def dqn_reference(params, x):
    """f32 reference with PyTorch semantics (NCHW convs, CHW flatten)."""
    def conv(y, w, b):
        y = jax.lax.conv_general_dilated(
            y, w, window_strides=(1, 1), padding="VALID",
            dimension_numbers=("NCHW", "OIHW", "NCHW"))
        return jax.nn.relu(y + b.reshape(1, -1, 1, 1))

    y = conv(x, params["c1w"], params["c1b"])
    y = conv(y, params["c2w"], params["c2b"])
    y = conv(y, params["c3w"], params["c3b"])
    flat = y.reshape(x.shape[0], -1)
    h = jax.nn.relu(flat @ params["f1w"].T + params["f1b"])
    return h @ params["f2w"].T + params["f2b"]


# ----------------------------- main -------------------------------------------

if __name__ == "__main__":
    key = jax.random.PRNGKey(0)
    k_param, k_x = jax.random.split(key)

    input_shape = (4, 16, 16)   # (C, H, W): spatial 16 -> 9 -> 6 -> 4, flat = 1024
    n_actions = 4
    batch = 2

    params = init_params(k_param, input_shape, n_actions)
    prep = prepare_params(params, input_shape, n_actions)
    x = jax.random.normal(k_x, (batch,) + input_shape, jnp.float32)

    fwd = jax.jit(functools.partial(dqn_forward, input_shape=input_shape,
                                    n_actions=n_actions))
    q = jax.block_until_ready(fwd(prep, x))

    assert q.shape == (batch, n_actions), q.shape
    assert q.dtype == jnp.float32

    # Validate against the f32 reference (bf16 MXU inputs -> loose tolerance).
    ref = jax.block_until_ready(dqn_reference(params, x))
    assert bool(jnp.all(jnp.isfinite(q)))
    assert jnp.allclose(q, ref, rtol=0.1, atol=0.1), (q, ref)

    print("KERNEL_OK")
</pallas_src>

<mosaic_0001>
module attributes {stable_mosaic.version = 11 : i64} {
  func.func @_dqn_kernel(%arg0: i32, %arg1: memref<1x88x256xbf16, #tpu.memory_space<vmem>>, %arg2: memref<256x32xbf16, #tpu.memory_space<vmem>>, %arg3: memref<1x32xf32, #tpu.memory_space<vmem>>, %arg4: memref<512x64xbf16, #tpu.memory_space<vmem>>, %arg5: memref<1x64xf32, #tpu.memory_space<vmem>>, %arg6: memref<576x64xbf16, #tpu.memory_space<vmem>>, %arg7: memref<1x64xf32, #tpu.memory_space<vmem>>, %arg8: memref<1024x512xbf16, #tpu.memory_space<vmem>>, %arg9: memref<1x512xf32, #tpu.memory_space<vmem>>, %arg10: memref<512x128xbf16, #tpu.memory_space<vmem>>, %arg11: memref<1x128xf32, #tpu.memory_space<vmem>>, %arg12: memref<1x1x128xf32, #tpu.memory_space<vmem>>, %arg13: memref<88x32xf32, #tpu.memory_space<vmem>>, %arg14: memref<56x64xf32, #tpu.memory_space<vmem>>, %arg15: memref<36x64xf32, #tpu.memory_space<vmem>>) attributes {dimension_semantics = [#tpu.dimension_semantics<parallel>], iteration_bounds = array<i64: 2>, scalar_prefetch = 0 : i64, scratch_operands = 3 : i64, tpu.core_type = #tpu.core_type<tc>, window_params = [{transform_indices = @transform_0, window_bounds = array<i64: 1, 88, 256>}, {pipeline_mode = #tpu.pipeline_mode<synchronous>, transform_indices = @transform_1, window_bounds = array<i64: 256, 32>}, {pipeline_mode = #tpu.pipeline_mode<synchronous>, transform_indices = @transform_2, window_bounds = array<i64: 1, 32>}, {pipeline_mode = #tpu.pipeline_mode<synchronous>, transform_indices = @transform_3, window_bounds = array<i64: 512, 64>}, {pipeline_mode = #tpu.pipeline_mode<synchronous>, transform_indices = @transform_4, window_bounds = array<i64: 1, 64>}, {pipeline_mode = #tpu.pipeline_mode<synchronous>, transform_indices = @transform_5, window_bounds = array<i64: 576, 64>}, {pipeline_mode = #tpu.pipeline_mode<synchronous>, transform_indices = @transform_6, window_bounds = array<i64: 1, 64>}, {pipeline_mode = #tpu.pipeline_mode<synchronous>, transform_indices = @transform_7, window_bounds = array<i64: 1024, 512>}, {pipeline_mode = #tpu.pipeline_mode<synchronous>, transform_indices = @transform_8, window_bounds = array<i64: 1, 512>}, {pipeline_mode = #tpu.pipeline_mode<synchronous>, transform_indices = @transform_9, window_bounds = array<i64: 512, 128>}, {pipeline_mode = #tpu.pipeline_mode<synchronous>, transform_indices = @transform_10, window_bounds = array<i64: 1, 128>}, {transform_indices = @transform_11, window_bounds = array<i64: 1, 1, 128>}]} {
    %c0 = arith.constant 0 : index
    %c0_0 = arith.constant 0 : index
    %c0_1 = arith.constant 0 : index
    %0 = vector.load %arg1[%c0, %c0_0, %c0_1] : memref<1x88x256xbf16, #tpu.memory_space<vmem>>, vector<1x88x256xbf16>
    %1 = vector.shape_cast %0 : vector<1x88x256xbf16> to vector<88x256xbf16>
    %c0_2 = arith.constant 0 : index
    %c0_3 = arith.constant 0 : index
    %2 = vector.load %arg2[%c0_2, %c0_3] : memref<256x32xbf16, #tpu.memory_space<vmem>>, vector<256x32xbf16>
    %cst = arith.constant dense<0.000000e+00> : vector<88x32xf32>
    %3 = tpu.matmul %1, %2, %cst {dimension_numbers = #tpu.dot_dimension_numbers<[1], [0], [0], [1], [0, 0, 1, 1], [], []>} : vector<88x256xbf16>, vector<256x32xbf16>, vector<88x32xf32> -> vector<88x32xf32>
    %c0_4 = arith.constant 0 : index
    %c0_5 = arith.constant 0 : index
    %4 = vector.load %arg3[%c0_4, %c0_5] : memref<1x32xf32, #tpu.memory_space<vmem>>, vector<1x32xf32>
    %5 = vector.broadcast %4 : vector<1x32xf32> to vector<88x32xf32>
    %6 = arith.addf %3, %5 : vector<88x32xf32>
    %cst_6 = arith.constant 0.000000e+00 : f32
    %7 = vector.broadcast %cst_6 : f32 to vector<88x32xf32>
    %8 = arith.maximumf %6, %7 : vector<88x32xf32>
    %c0_7 = arith.constant 0 : index
    %c0_8 = arith.constant 0 : index
    %9 = vector.load %arg13[%c0_7, %c0_8] : memref<88x32xf32, #tpu.memory_space<vmem>>, vector<88x32xf32>
    tpu.vector_store %arg13[%c0_7, %c0_8], %8 {strides = array<i32>} : memref<88x32xf32, #tpu.memory_space<vmem>>, vector<88x32xf32>,
    %cst_9 = arith.constant 0.000000e+00 : f32
    %10 = vector.broadcast %cst_9 : f32 to vector<2x64xf32>
    %c54 = arith.constant 54 : index
    %c0_10 = arith.constant 0 : index
    %11 = vector.load %arg14[%c54, %c0_10] : memref<56x64xf32, #tpu.memory_space<vmem>>, vector<2x64xf32>
    tpu.vector_store %arg14[%c54, %c0_10], %10 {strides = array<i32>} : memref<56x64xf32, #tpu.memory_space<vmem>>, vector<2x64xf32>,
    %cst_11 = arith.constant 0.000000e+00 : f32
    %12 = vector.broadcast %cst_11 : f32 to vector<54x64xf32>
    %c0_12 = arith.constant 0 : index
    %c0_13 = arith.constant 0 : index
    %13 = vector.load %arg13[%c0_12, %c0_13] : memref<88x32xf32, #tpu.memory_space<vmem>>, vector<54x32xf32>
    %c0_14 = arith.constant 0 : index
    %c0_15 = arith.constant 0 : index
    %14 = vector.load %arg4[%c0_14, %c0_15] : memref<512x64xbf16, #tpu.memory_space<vmem>>, vector<32x64xbf16>
    %15 = arith.truncf %13 : vector<54x32xf32> to vector<54x32xbf16>
    %cst_16 = arith.constant dense<0.000000e+00> : vector<54x64xf32>
    %16 = tpu.matmul %15, %14, %cst_16 {dimension_numbers = #tpu.dot_dimension_numbers<[1], [0], [0], [1], [0, 0, 1, 1], [], []>} : vector<54x32xbf16>, vector<32x64xbf16>, vector<54x64xf32> -> vector<54x64xf32>
    %17 = arith.addf %12, %16 : vector<54x64xf32>
    %c1 = arith.constant 1 : index
    %c0_17 = arith.constant 0 : index
    %18 = vector.load %arg13[%c1, %c0_17] : memref<88x32xf32, #tpu.memory_space<vmem>>, vector<54x32xf32>
    %c32 = arith.constant 32 : index
    %c0_18 = arith.constant 0 : index
    %19 = vector.load %arg4[%c32, %c0_18] : memref<512x64xbf16, #tpu.memory_space<vmem>>, vector<32x64xbf16>
    %20 = arith.truncf %18 : vector<54x32xf32> to vector<54x32xbf16>
    %cst_19 = arith.constant dense<0.000000e+00> : vector<54x64xf32>
    %21 = tpu.matmul %20, %19, %cst_19 {dimension_numbers = #tpu.dot_dimension_numbers<[1], [0], [0], [1], [0, 0, 1, 1], [], []>} : vector<54x32xbf16>, vector<32x64xbf16>, vector<54x64xf32> -> vector<54x64xf32>
    %22 = arith.addf %17, %21 : vector<54x64xf32>
    %c2 = arith.constant 2 : index
    %c0_20 = arith.constant 0 : index
    %23 = vector.load %arg13[%c2, %c0_20] : memref<88x32xf32, #tpu.memory_space<vmem>>, vector<54x32xf32>
    %c64 = arith.constant 64 : index
    %c0_21 = arith.constant 0 : index
    %24 = vector.load %arg4[%c64, %c0_21] : memref<512x64xbf16, #tpu.memory_space<vmem>>, vector<32x64xbf16>
    %25 = arith.truncf %23 : vector<54x32xf32> to vector<54x32xbf16>
    %cst_22 = arith.constant dense<0.000000e+00> : vector<54x64xf32>
    %26 = tpu.matmul %25, %24, %cst_22 {dimension_numbers = #tpu.dot_dimension_numbers<[1], [0], [0], [1], [0, 0, 1, 1], [], []>} : vector<54x32xbf16>, vector<32x64xbf16>, vector<54x64xf32> -> vector<54x64xf32>
    %27 = arith.addf %22, %26 : vector<54x64xf32>
    %c3 = arith.constant 3 : index
    %c0_23 = arith.constant 0 : index
    %28 = vector.load %arg13[%c3, %c0_23] : memref<88x32xf32, #tpu.memory_space<vmem>>, vector<54x32xf32>
    %c96 = arith.constant 96 : index
    %c0_24 = arith.constant 0 : index
    %29 = vector.load %arg4[%c96, %c0_24] : memref<512x64xbf16, #tpu.memory_space<vmem>>, vector<32x64xbf16>
    %30 = arith.truncf %28 : vector<54x32xf32> to vector<54x32xbf16>
    %cst_25 = arith.constant dense<0.000000e+00> : vector<54x64xf32>
    %31 = tpu.matmul %30, %29, %cst_25 {dimension_numbers = #tpu.dot_dimension_numbers<[1], [0], [0], [1], [0, 0, 1, 1], [], []>} : vector<54x32xbf16>, vector<32x64xbf16>, vector<54x64xf32> -> vector<54x64xf32>
    %32 = arith.addf %27, %31 : vector<54x64xf32>
    %c9 = arith.constant 9 : index
    %c0_26 = arith.constant 0 : index
    %33 = vector.load %arg13[%c9, %c0_26] : memref<88x32xf32, #tpu.memory_space<vmem>>, vector<54x32xf32>
    %c128 = arith.constant 128 : index
    %c0_27 = arith.constant 0 : index
    %34 = vector.load %arg4[%c128, %c0_27] : memref<512x64xbf16, #tpu.memory_space<vmem>>, vector<32x64xbf16>
    %35 = arith.truncf %33 : vector<54x32xf32> to vector<54x32xbf16>
    %cst_28 = arith.constant dense<0.000000e+00> : vector<54x64xf32>
    %36 = tpu.matmul %35, %34, %cst_28 {dimension_numbers = #tpu.dot_dimension_numbers<[1], [0], [0], [1], [0, 0, 1, 1], [], []>} : vector<54x32xbf16>, vector<32x64xbf16>, vector<54x64xf32> -> vector<54x64xf32>
    %37 = arith.addf %32, %36 : vector<54x64xf32>
    %c10 = arith.constant 10 : index
    %c0_29 = arith.constant 0 : index
    %38 = vector.load %arg13[%c10, %c0_29] : memref<88x32xf32, #tpu.memory_space<vmem>>, vector<54x32xf32>
    %c160 = arith.constant 160 : index
    %c0_30 = arith.constant 0 : index
    %39 = vector.load %arg4[%c160, %c0_30] : memref<512x64xbf16, #tpu.memory_space<vmem>>, vector<32x64xbf16>
    %40 = arith.truncf %38 : vector<54x32xf32> to vector<54x32xbf16>
    %cst_31 = arith.constant dense<0.000000e+00> : vector<54x64xf32>
    %41 = tpu.matmul %40, %39, %cst_31 {dimension_numbers = #tpu.dot_dimension_numbers<[1], [0], [0], [1], [0, 0, 1, 1], [], []>} : vector<54x32xbf16>, vector<32x64xbf16>, vector<54x64xf32> -> vector<54x64xf32>
    %42 = arith.addf %37, %41 : vector<54x64xf32>
    %c11 = arith.constant 11 : index
    %c0_32 = arith.constant 0 : index
    %43 = vector.load %arg13[%c11, %c0_32] : memref<88x32xf32, #tpu.memory_space<vmem>>, vector<54x32xf32>
    %c192 = arith.constant 192 : index
    %c0_33 = arith.constant 0 : index
    %44 = vector.load %arg4[%c192, %c0_33] : memref<512x64xbf16, #tpu.memory_space<vmem>>, vector<32x64xbf16>
    %45 = arith.truncf %43 : vector<54x32xf32> to vector<54x32xbf16>
    %cst_34 = arith.constant dense<0.000000e+00> : vector<54x64xf32>
    %46 = tpu.matmul %45, %44, %cst_34 {dimension_numbers = #tpu.dot_dimension_numbers<[1], [0], [0], [1], [0, 0, 1, 1], [], []>} : vector<54x32xbf16>, vector<32x64xbf16>, vector<54x64xf32> -> vector<54x64xf32>
    %47 = arith.addf %42, %46 : vector<54x64xf32>
    %c12 = arith.constant 12 : index
    %c0_35 = arith.constant 0 : index
    %48 = vector.load %arg13[%c12, %c0_35] : memref<88x32xf32, #tpu.memory_space<vmem>>, vector<54x32xf32>
    %c224 = arith.constant 224 : index
    %c0_36 = arith.constant 0 : index
    %49 = vector.load %arg4[%c224, %c0_36] : memref<512x64xbf16, #tpu.memory_space<vmem>>, vector<32x64xbf16>
    %50 = arith.truncf %48 : vector<54x32xf32> to vector<54x32xbf16>
    %cst_37 = arith.constant dense<0.000000e+00> : vector<54x64xf32>
    %51 = tpu.matmul %50, %49, %cst_37 {dimension_numbers = #tpu.dot_dimension_numbers<[1], [0], [0], [1], [0, 0, 1, 1], [], []>} : vector<54x32xbf16>, vector<32x64xbf16>, vector<54x64xf32> -> vector<54x64xf32>
    %52 = arith.addf %47, %51 : vector<54x64xf32>
    %c18 = arith.constant 18 : index
    %c0_38 = arith.constant 0 : index
    %53 = vector.load %arg13[%c18, %c0_38] : memref<88x32xf32, #tpu.memory_space<vmem>>, vector<54x32xf32>
    %c256 = arith.constant 256 : index
    %c0_39 = arith.constant 0 : index
    %54 = vector.load %arg4[%c256, %c0_39] : memref<512x64xbf16, #tpu.memory_space<vmem>>, vector<32x64xbf16>
    %55 = arith.truncf %53 : vector<54x32xf32> to vector<54x32xbf16>
    %cst_40 = arith.constant dense<0.000000e+00> : vector<54x64xf32>
    %56 = tpu.matmul %55, %54, %cst_40 {dimension_numbers = #tpu.dot_dimension_numbers<[1], [0], [0], [1], [0, 0, 1, 1], [], []>} : vector<54x32xbf16>, vector<32x64xbf16>, vector<54x64xf32> -> vector<54x64xf32>
    %57 = arith.addf %52, %56 : vector<54x64xf32>
    %c19 = arith.constant 19 : index
    %c0_41 = arith.constant 0 : index
    %58 = vector.load %arg13[%c19, %c0_41] : memref<88x32xf32, #tpu.memory_space<vmem>>, vector<54x32xf32>
    %c288 = arith.constant 288 : index
    %c0_42 = arith.constant 0 : index
    %59 = vector.load %arg4[%c288, %c0_42] : memref<512x64xbf16, #tpu.memory_space<vmem>>, vector<32x64xbf16>
    %60 = arith.truncf %58 : vector<54x32xf32> to vector<54x32xbf16>
    %cst_43 = arith.constant dense<0.000000e+00> : vector<54x64xf32>
    %61 = tpu.matmul %60, %59, %cst_43 {dimension_numbers = #tpu.dot_dimension_numbers<[1], [0], [0], [1], [0, 0, 1, 1], [], []>} : vector<54x32xbf16>, vector<32x64xbf16>, vector<54x64xf32> -> vector<54x64xf32>
    %62 = arith.addf %57, %61 : vector<54x64xf32>
    %c20 = arith.constant 20 : index
    %c0_44 = arith.constant 0 : index
    %63 = vector.load %arg13[%c20, %c0_44] : memref<88x32xf32, #tpu.memory_space<vmem>>, vector<54x32xf32>
    %c320 = arith.constant 320 : index
    %c0_45 = arith.constant 0 : index
    %64 = vector.load %arg4[%c320, %c0_45] : memref<512x64xbf16, #tpu.memory_space<vmem>>, vector<32x64xbf16>
    %65 = arith.truncf %63 : vector<54x32xf32> to vector<54x32xbf16>
    %cst_46 = arith.constant dense<0.000000e+00> : vector<54x64xf32>
    %66 = tpu.matmul %65, %64, %cst_46 {dimension_numbers = #tpu.dot_dimension_numbers<[1], [0], [0], [1], [0, 0, 1, 1], [], []>} : vector<54x32xbf16>, vector<32x64xbf16>, vector<54x64xf32> -> vector<54x64xf32>
    %67 = arith.addf %62, %66 : vector<54x64xf32>
    %c21 = arith.constant 21 : index
    %c0_47 = arith.constant 0 : index
    %68 = vector.load %arg13[%c21, %c0_47] : memref<88x32xf32, #tpu.memory_space<vmem>>, vector<54x32xf32>
    %c352 = arith.constant 352 : index
    %c0_48 = arith.constant 0 : index
    %69 = vector.load %arg4[%c352, %c0_48] : memref<512x64xbf16, #tpu.memory_space<vmem>>, vector<32x64xbf16>
    %70 = arith.truncf %68 : vector<54x32xf32> to vector<54x32xbf16>
    %cst_49 = arith.constant dense<0.000000e+00> : vector<54x64xf32>
    %71 = tpu.matmul %70, %69, %cst_49 {dimension_numbers = #tpu.dot_dimension_numbers<[1], [0], [0], [1], [0, 0, 1, 1], [], []>} : vector<54x32xbf16>, vector<32x64xbf16>, vector<54x64xf32> -> vector<54x64xf32>
    %72 = arith.addf %67, %71 : vector<54x64xf32>
    %c27 = arith.constant 27 : index
    %c0_50 = arith.constant 0 : index
    %73 = vector.load %arg13[%c27, %c0_50] : memref<88x32xf32, #tpu.memory_space<vmem>>, vector<54x32xf32>
    %c384 = arith.constant 384 : index
    %c0_51 = arith.constant 0 : index
    %74 = vector.load %arg4[%c384, %c0_51] : memref<512x64xbf16, #tpu.memory_space<vmem>>, vector<32x64xbf16>
    %75 = arith.truncf %73 : vector<54x32xf32> to vector<54x32xbf16>
    %cst_52 = arith.constant dense<0.000000e+00> : vector<54x64xf32>
    %76 = tpu.matmul %75, %74, %cst_52 {dimension_numbers = #tpu.dot_dimension_numbers<[1], [0], [0], [1], [0, 0, 1, 1], [], []>} : vector<54x32xbf16>, vector<32x64xbf16>, vector<54x64xf32> -> vector<54x64xf32>
    %77 = arith.addf %72, %76 : vector<54x64xf32>
    %c28 = arith.constant 28 : index
    %c0_53 = arith.constant 0 : index
    %78 = vector.load %arg13[%c28, %c0_53] : memref<88x32xf32, #tpu.memory_space<vmem>>, vector<54x32xf32>
    %c416 = arith.constant 416 : index
    %c0_54 = arith.constant 0 : index
    %79 = vector.load %arg4[%c416, %c0_54] : memref<512x64xbf16, #tpu.memory_space<vmem>>, vector<32x64xbf16>
    %80 = arith.truncf %78 : vector<54x32xf32> to vector<54x32xbf16>
    %cst_55 = arith.constant dense<0.000000e+00> : vector<54x64xf32>
    %81 = tpu.matmul %80, %79, %cst_55 {dimension_numbers = #tpu.dot_dimension_numbers<[1], [0], [0], [1], [0, 0, 1, 1], [], []>} : vector<54x32xbf16>, vector<32x64xbf16>, vector<54x64xf32> -> vector<54x64xf32>
    %82 = arith.addf %77, %81 : vector<54x64xf32>
    %c29 = arith.constant 29 : index
    %c0_56 = arith.constant 0 : index
    %83 = vector.load %arg13[%c29, %c0_56] : memref<88x32xf32, #tpu.memory_space<vmem>>, vector<54x32xf32>
    %c448 = arith.constant 448 : index
    %c0_57 = arith.constant 0 : index
    %84 = vector.load %arg4[%c448, %c0_57] : memref<512x64xbf16, #tpu.memory_space<vmem>>, vector<32x64xbf16>
    %85 = arith.truncf %83 : vector<54x32xf32> to vector<54x32xbf16>
    %cst_58 = arith.constant dense<0.000000e+00> : vector<54x64xf32>
    %86 = tpu.matmul %85, %84, %cst_58 {dimension_numbers = #tpu.dot_dimension_numbers<[1], [0], [0], [1], [0, 0, 1, 1], [], []>} : vector<54x32xbf16>, vector<32x64xbf16>, vector<54x64xf32> -> vector<54x64xf32>
    %87 = arith.addf %82, %86 : vector<54x64xf32>
    %c30 = arith.constant 30 : index
    %c0_59 = arith.constant 0 : index
    %88 = vector.load %arg13[%c30, %c0_59] : memref<88x32xf32, #tpu.memory_space<vmem>>, vector<54x32xf32>
    %c480 = arith.constant 480 : index
    %c0_60 = arith.constant 0 : index
    %89 = vector.load %arg4[%c480, %c0_60] : memref<512x64xbf16, #tpu.memory_space<vmem>>, vector<32x64xbf16>
    %90 = arith.truncf %88 : vector<54x32xf32> to vector<54x32xbf16>
    %cst_61 = arith.constant dense<0.000000e+00> : vector<54x64xf32>
    %91 = tpu.matmul %90, %89, %cst_61 {dimension_numbers = #tpu.dot_dimension_numbers<[1], [0], [0], [1], [0, 0, 1, 1], [], []>} : vector<54x32xbf16>, vector<32x64xbf16>, vector<54x64xf32> -> vector<54x64xf32>
    %92 = arith.addf %87, %91 : vector<54x64xf32>
    %c0_62 = arith.constant 0 : index
    %c0_63 = arith.constant 0 : index
    %93 = vector.load %arg5[%c0_62, %c0_63] : memref<1x64xf32, #tpu.memory_space<vmem>>, vector<1x64xf32>
    %94 = vector.broadcast %93 : vector<1x64xf32> to vector<54x64xf32>
    %95 = arith.addf %92, %94 : vector<54x64xf32>
    %cst_64 = arith.constant 0.000000e+00 : f32
    %96 = vector.broadcast %cst_64 : f32 to vector<54x64xf32>
    %97 = arith.maximumf %95, %96 : vector<54x64xf32>
    %c0_65 = arith.constant 0 : index
    %c0_66 = arith.constant 0 : index
    %98 = vector.load %arg14[%c0_65, %c0_66] : memref<56x64xf32, #tpu.memory_space<vmem>>, vector<54x64xf32>
    tpu.vector_store %arg14[%c0_65, %c0_66], %97 {strides = array<i32>} : memref<56x64xf32, #tpu.memory_space<vmem>>, vector<54x64xf32>,
    %cst_67 = arith.constant 0.000000e+00 : f32
    %99 = vector.broadcast %cst_67 : f32 to vector<36x64xf32>
    %c0_68 = arith.constant 0 : index
    %c0_69 = arith.constant 0 : index
    %100 = vector.load %arg14[%c0_68, %c0_69] : memref<56x64xf32, #tpu.memory_space<vmem>>, vector<36x64xf32>
    %c0_70 = arith.constant 0 : index
    %c0_71 = arith.constant 0 : index
    %101 = vector.load %arg6[%c0_70, %c0_71] : memref<576x64xbf16, #tpu.memory_space<vmem>>, vector<64x64xbf16>
    %102 = arith.truncf %100 : vector<36x64xf32> to vector<36x64xbf16>
    %cst_72 = arith.constant dense<0.000000e+00> : vector<36x64xf32>
    %103 = tpu.matmul %102, %101, %cst_72 {dimension_numbers = #tpu.dot_dimension_numbers<[1], [0], [0], [1], [0, 0, 1, 1], [], []>} : vector<36x64xbf16>, vector<64x64xbf16>, vector<36x64xf32> -> vector<36x64xf32>
    %104 = arith.addf %99, %103 : vector<36x64xf32>
    %c1_73 = arith.constant 1 : index
    %c0_74 = arith.constant 0 : index
    %105 = vector.load %arg14[%c1_73, %c0_74] : memref<56x64xf32, #tpu.memory_space<vmem>>, vector<36x64xf32>
    %c64_75 = arith.constant 64 : index
    %c0_76 = arith.constant 0 : index
    %106 = vector.load %arg6[%c64_75, %c0_76] : memref<576x64xbf16, #tpu.memory_space<vmem>>, vector<64x64xbf16>
    %107 = arith.truncf %105 : vector<36x64xf32> to vector<36x64xbf16>
    %cst_77 = arith.constant dense<0.000000e+00> : vector<36x64xf32>
    %108 = tpu.matmul %107, %106, %cst_77 {dimension_numbers = #tpu.dot_dimension_numbers<[1], [0], [0], [1], [0, 0, 1, 1], [], []>} : vector<36x64xbf16>, vector<64x64xbf16>, vector<36x64xf32> -> vector<36x64xf32>
    %109 = arith.addf %104, %108 : vector<36x64xf32>
    %c2_78 = arith.constant 2 : index
    %c0_79 = arith.constant 0 : index
    %110 = vector.load %arg14[%c2_78, %c0_79] : memref<56x64xf32, #tpu.memory_space<vmem>>, vector<36x64xf32>
    %c128_80 = arith.constant 128 : index
    %c0_81 = arith.constant 0 : index
    %111 = vector.load %arg6[%c128_80, %c0_81] : memref<576x64xbf16, #tpu.memory_space<vmem>>, vector<64x64xbf16>
    %112 = arith.truncf %110 : vector<36x64xf32> to vector<36x64xbf16>
    %cst_82 = arith.constant dense<0.000000e+00> : vector<36x64xf32>
    %113 = tpu.matmul %112, %111, %cst_82 {dimension_numbers = #tpu.dot_dimension_numbers<[1], [0], [0], [1], [0, 0, 1, 1], [], []>} : vector<36x64xbf16>, vector<64x64xbf16>, vector<36x64xf32> -> vector<36x64xf32>
    %114 = arith.addf %109, %113 : vector<36x64xf32>
    %c9_83 = arith.constant 9 : index
    %c0_84 = arith.constant 0 : index
    %115 = vector.load %arg14[%c9_83, %c0_84] : memref<56x64xf32, #tpu.memory_space<vmem>>, vector<36x64xf32>
    %c192_85 = arith.constant 192 : index
    %c0_86 = arith.constant 0 : index
    %116 = vector.load %arg6[%c192_85, %c0_86] : memref<576x64xbf16, #tpu.memory_space<vmem>>, vector<64x64xbf16>
    %117 = arith.truncf %115 : vector<36x64xf32> to vector<36x64xbf16>
    %cst_87 = arith.constant dense<0.000000e+00> : vector<36x64xf32>
    %118 = tpu.matmul %117, %116, %cst_87 {dimension_numbers = #tpu.dot_dimension_numbers<[1], [0], [0], [1], [0, 0, 1, 1], [], []>} : vector<36x64xbf16>, vector<64x64xbf16>, vector<36x64xf32> -> vector<36x64xf32>
    %119 = arith.addf %114, %118 : vector<36x64xf32>
    %c10_88 = arith.constant 10 : index
    %c0_89 = arith.constant 0 : index
    %120 = vector.load %arg14[%c10_88, %c0_89] : memref<56x64xf32, #tpu.memory_space<vmem>>, vector<36x64xf32>
    %c256_90 = arith.constant 256 : index
    %c0_91 = arith.constant 0 : index
    %121 = vector.load %arg6[%c256_90, %c0_91] : memref<576x64xbf16, #tpu.memory_space<vmem>>, vector<64x64xbf16>
    %122 = arith.truncf %120 : vector<36x64xf32> to vector<36x64xbf16>
    %cst_92 = arith.constant dense<0.000000e+00> : vector<36x64xf32>
    %123 = tpu.matmul %122, %121, %cst_92 {dimension_numbers = #tpu.dot_dimension_numbers<[1], [0], [0], [1], [0, 0, 1, 1], [], []>} : vector<36x64xbf16>, vector<64x64xbf16>, vector<36x64xf32> -> vector<36x64xf32>
    %124 = arith.addf %119, %123 : vector<36x64xf32>
    %c11_93 = arith.constant 11 : index
    %c0_94 = arith.constant 0 : index
    %125 = vector.load %arg14[%c11_93, %c0_94] : memref<56x64xf32, #tpu.memory_space<vmem>>, vector<36x64xf32>
    %c320_95 = arith.constant 320 : index
    %c0_96 = arith.constant 0 : index
    %126 = vector.load %arg6[%c320_95, %c0_96] : memref<576x64xbf16, #tpu.memory_space<vmem>>, vector<64x64xbf16>
    %127 = arith.truncf %125 : vector<36x64xf32> to vector<36x64xbf16>
    %cst_97 = arith.constant dense<0.000000e+00> : vector<36x64xf32>
    %128 = tpu.matmul %127, %126, %cst_97 {dimension_numbers = #tpu.dot_dimension_numbers<[1], [0], [0], [1], [0, 0, 1, 1], [], []>} : vector<36x64xbf16>, vector<64x64xbf16>, vector<36x64xf32> -> vector<36x64xf32>
    %129 = arith.addf %124, %128 : vector<36x64xf32>
    %c18_98 = arith.constant 18 : index
    %c0_99 = arith.constant 0 : index
    %130 = vector.load %arg14[%c18_98, %c0_99] : memref<56x64xf32, #tpu.memory_space<vmem>>, vector<36x64xf32>
    %c384_100 = arith.constant 384 : index
    %c0_101 = arith.constant 0 : index
    %131 = vector.load %arg6[%c384_100, %c0_101] : memref<576x64xbf16, #tpu.memory_space<vmem>>, vector<64x64xbf16>
    %132 = arith.truncf %130 : vector<36x64xf32> to vector<36x64xbf16>
    %cst_102 = arith.constant dense<0.000000e+00> : vector<36x64xf32>
    %133 = tpu.matmul %132, %131, %cst_102 {dimension_numbers = #tpu.dot_dimension_numbers<[1], [0], [0], [1], [0, 0, 1, 1], [], []>} : vector<36x64xbf16>, vector<64x64xbf16>, vector<36x64xf32> -> vector<36x64xf32>
    %134 = arith.addf %129, %133 : vector<36x64xf32>
    %c19_103 = arith.constant 19 : index
    %c0_104 = arith.constant 0 : index
    %135 = vector.load %arg14[%c19_103, %c0_104] : memref<56x64xf32, #tpu.memory_space<vmem>>, vector<36x64xf32>
    %c448_105 = arith.constant 448 : index
    %c0_106 = arith.constant 0 : index
    %136 = vector.load %arg6[%c448_105, %c0_106] : memref<576x64xbf16, #tpu.memory_space<vmem>>, vector<64x64xbf16>
    %137 = arith.truncf %135 : vector<36x64xf32> to vector<36x64xbf16>
    %cst_107 = arith.constant dense<0.000000e+00> : vector<36x64xf32>
    %138 = tpu.matmul %137, %136, %cst_107 {dimension_numbers = #tpu.dot_dimension_numbers<[1], [0], [0], [1], [0, 0, 1, 1], [], []>} : vector<36x64xbf16>, vector<64x64xbf16>, vector<36x64xf32> -> vector<36x64xf32>
    %139 = arith.addf %134, %138 : vector<36x64xf32>
    %c20_108 = arith.constant 20 : index
    %c0_109 = arith.constant 0 : index
    %140 = vector.load %arg14[%c20_108, %c0_109] : memref<56x64xf32, #tpu.memory_space<vmem>>, vector<36x64xf32>
    %c512 = arith.constant 512 : index
    %c0_110 = arith.constant 0 : index
    %141 = vector.load %arg6[%c512, %c0_110] : memref<576x64xbf16, #tpu.memory_space<vmem>>, vector<64x64xbf16>
    %142 = arith.truncf %140 : vector<36x64xf32> to vector<36x64xbf16>
    %cst_111 = arith.constant dense<0.000000e+00> : vector<36x64xf32>
    %143 = tpu.matmul %142, %141, %cst_111 {dimension_numbers = #tpu.dot_dimension_numbers<[1], [0], [0], [1], [0, 0, 1, 1], [], []>} : vector<36x64xbf16>, vector<64x64xbf16>, vector<36x64xf32> -> vector<36x64xf32>
    %144 = arith.addf %139, %143 : vector<36x64xf32>
    %c0_112 = arith.constant 0 : index
    %c0_113 = arith.constant 0 : index
    %145 = vector.load %arg7[%c0_112, %c0_113] : memref<1x64xf32, #tpu.memory_space<vmem>>, vector<1x64xf32>
    %146 = vector.broadcast %145 : vector<1x64xf32> to vector<36x64xf32>
    %147 = arith.addf %144, %146 : vector<36x64xf32>
    %cst_114 = arith.constant 0.000000e+00 : f32
    %148 = vector.broadcast %cst_114 : f32 to vector<36x64xf32>
    %149 = arith.maximumf %147, %148 : vector<36x64xf32>
    %c0_115 = arith.constant 0 : index
    %c0_116 = arith.constant 0 : index
    %150 = vector.load %arg15[%c0_115, %c0_116] : memref<36x64xf32, #tpu.memory_space<vmem>>, vector<36x64xf32>
    tpu.vector_store %arg15[%c0_115, %c0_116], %149 {strides = array<i32>} : memref<36x64xf32, #tpu.memory_space<vmem>>, vector<36x64xf32>,
    %cst_117 = arith.constant 0.000000e+00 : f32
    %151 = vector.broadcast %cst_117 : f32 to vector<1x512xf32>
    %c0_118 = arith.constant 0 : index
    %c0_119 = arith.constant 0 : index
    %152 = vector.load %arg15[%c0_118, %c0_119] : memref<36x64xf32, #tpu.memory_space<vmem>>, vector<1x64xf32>
    %c0_120 = arith.constant 0 : index
    %c0_121 = arith.constant 0 : index
    %153 = vector.load %arg8[%c0_120, %c0_121] : memref<1024x512xbf16, #tpu.memory_space<vmem>>, vector<64x512xbf16>
    %154 = arith.truncf %152 : vector<1x64xf32> to vector<1x64xbf16>
    %cst_122 = arith.constant dense<0.000000e+00> : vector<1x512xf32>
    %155 = tpu.matmul %154, %153, %cst_122 {dimension_numbers = #tpu.dot_dimension_numbers<[1], [0], [0], [1], [0, 0, 1, 1], [], []>} : vector<1x64xbf16>, vector<64x512xbf16>, vector<1x512xf32> -> vector<1x512xf32>
    %156 = arith.addf %151, %155 : vector<1x512xf32>
    %c1_123 = arith.constant 1 : index
    %c0_124 = arith.constant 0 : index
    %157 = vector.load %arg15[%c1_123, %c0_124] : memref<36x64xf32, #tpu.memory_space<vmem>>, vector<1x64xf32>
    %c64_125 = arith.constant 64 : index
    %c0_126 = arith.constant 0 : index
    %158 = vector.load %arg8[%c64_125, %c0_126] : memref<1024x512xbf16, #tpu.memory_space<vmem>>, vector<64x512xbf16>
    %159 = arith.truncf %157 : vector<1x64xf32> to vector<1x64xbf16>
    %cst_127 = arith.constant dense<0.000000e+00> : vector<1x512xf32>
    %160 = tpu.matmul %159, %158, %cst_127 {dimension_numbers = #tpu.dot_dimension_numbers<[1], [0], [0], [1], [0, 0, 1, 1], [], []>} : vector<1x64xbf16>, vector<64x512xbf16>, vector<1x512xf32> -> vector<1x512xf32>
    %161 = arith.addf %156, %160 : vector<1x512xf32>
    %c2_128 = arith.constant 2 : index
    %c0_129 = arith.constant 0 : index
    %162 = vector.load %arg15[%c2_128, %c0_129] : memref<36x64xf32, #tpu.memory_space<vmem>>, vector<1x64xf32>
    %c128_130 = arith.constant 128 : index
    %c0_131 = arith.constant 0 : index
    %163 = vector.load %arg8[%c128_130, %c0_131] : memref<1024x512xbf16, #tpu.memory_space<vmem>>, vector<64x512xbf16>
    %164 = arith.truncf %162 : vector<1x64xf32> to vector<1x64xbf16>
    %cst_132 = arith.constant dense<0.000000e+00> : vector<1x512xf32>
    %165 = tpu.matmul %164, %163, %cst_132 {dimension_numbers = #tpu.dot_dimension_numbers<[1], [0], [0], [1], [0, 0, 1, 1], [], []>} : vector<1x64xbf16>, vector<64x512xbf16>, vector<1x512xf32> -> vector<1x512xf32>
    %166 = arith.addf %161, %165 : vector<1x512xf32>
    %c3_133 = arith.constant 3 : index
    %c0_134 = arith.constant 0 : index
    %167 = vector.load %arg15[%c3_133, %c0_134] : memref<36x64xf32, #tpu.memory_space<vmem>>, vector<1x64xf32>
    %c192_135 = arith.constant 192 : index
    %c0_136 = arith.constant 0 : index
    %168 = vector.load %arg8[%c192_135, %c0_136] : memref<1024x512xbf16, #tpu.memory_space<vmem>>, vector<64x512xbf16>
    %169 = arith.truncf %167 : vector<1x64xf32> to vector<1x64xbf16>
    %cst_137 = arith.constant dense<0.000000e+00> : vector<1x512xf32>
    %170 = tpu.matmul %169, %168, %cst_137 {dimension_numbers = #tpu.dot_dimension_numbers<[1], [0], [0], [1], [0, 0, 1, 1], [], []>} : vector<1x64xbf16>, vector<64x512xbf16>, vector<1x512xf32> -> vector<1x512xf32>
    %171 = arith.addf %166, %170 : vector<1x512xf32>
    %c9_138 = arith.constant 9 : index
    %c0_139 = arith.constant 0 : index
    %172 = vector.load %arg15[%c9_138, %c0_139] : memref<36x64xf32, #tpu.memory_space<vmem>>, vector<1x64xf32>
    %c256_140 = arith.constant 256 : index
    %c0_141 = arith.constant 0 : index
    %173 = vector.load %arg8[%c256_140, %c0_141] : memref<1024x512xbf16, #tpu.memory_space<vmem>>, vector<64x512xbf16>
    %174 = arith.truncf %172 : vector<1x64xf32> to vector<1x64xbf16>
    %cst_142 = arith.constant dense<0.000000e+00> : vector<1x512xf32>
    %175 = tpu.matmul %174, %173, %cst_142 {dimension_numbers = #tpu.dot_dimension_numbers<[1], [0], [0], [1], [0, 0, 1, 1], [], []>} : vector<1x64xbf16>, vector<64x512xbf16>, vector<1x512xf32> -> vector<1x512xf32>
    %176 = arith.addf %171, %175 : vector<1x512xf32>
    %c10_143 = arith.constant 10 : index
    %c0_144 = arith.constant 0 : index
    %177 = vector.load %arg15[%c10_143, %c0_144] : memref<36x64xf32, #tpu.memory_space<vmem>>, vector<1x64xf32>
    %c320_145 = arith.constant 320 : index
    %c0_146 = arith.constant 0 : index
    %178 = vector.load %arg8[%c320_145, %c0_146] : memref<1024x512xbf16, #tpu.memory_space<vmem>>, vector<64x512xbf16>
    %179 = arith.truncf %177 : vector<1x64xf32> to vector<1x64xbf16>
    %cst_147 = arith.constant dense<0.000000e+00> : vector<1x512xf32>
    %180 = tpu.matmul %179, %178, %cst_147 {dimension_numbers = #tpu.dot_dimension_numbers<[1], [0], [0], [1], [0, 0, 1, 1], [], []>} : vector<1x64xbf16>, vector<64x512xbf16>, vector<1x512xf32> -> vector<1x512xf32>
    %181 = arith.addf %176, %180 : vector<1x512xf32>
    %c11_148 = arith.constant 11 : index
    %c0_149 = arith.constant 0 : index
    %182 = vector.load %arg15[%c11_148, %c0_149] : memref<36x64xf32, #tpu.memory_space<vmem>>, vector<1x64xf32>
    %c384_150 = arith.constant 384 : index
    %c0_151 = arith.constant 0 : index
    %183 = vector.load %arg8[%c384_150, %c0_151] : memref<1024x512xbf16, #tpu.memory_space<vmem>>, vector<64x512xbf16>
    %184 = arith.truncf %182 : vector<1x64xf32> to vector<1x64xbf16>
    %cst_152 = arith.constant dense<0.000000e+00> : vector<1x512xf32>
    %185 = tpu.matmul %184, %183, %cst_152 {dimension_numbers = #tpu.dot_dimension_numbers<[1], [0], [0], [1], [0, 0, 1, 1], [], []>} : vector<1x64xbf16>, vector<64x512xbf16>, vector<1x512xf32> -> vector<1x512xf32>
    %186 = arith.addf %181, %185 : vector<1x512xf32>
    %c12_153 = arith.constant 12 : index
    %c0_154 = arith.constant 0 : index
    %187 = vector.load %arg15[%c12_153, %c0_154] : memref<36x64xf32, #tpu.memory_space<vmem>>, vector<1x64xf32>
    %c448_155 = arith.constant 448 : index
    %c0_156 = arith.constant 0 : index
    %188 = vector.load %arg8[%c448_155, %c0_156] : memref<1024x512xbf16, #tpu.memory_space<vmem>>, vector<64x512xbf16>
    %189 = arith.truncf %187 : vector<1x64xf32> to vector<1x64xbf16>
    %cst_157 = arith.constant dense<0.000000e+00> : vector<1x512xf32>
    %190 = tpu.matmul %189, %188, %cst_157 {dimension_numbers = #tpu.dot_dimension_numbers<[1], [0], [0], [1], [0, 0, 1, 1], [], []>} : vector<1x64xbf16>, vector<64x512xbf16>, vector<1x512xf32> -> vector<1x512xf32>
    %191 = arith.addf %186, %190 : vector<1x512xf32>
    %c18_158 = arith.constant 18 : index
    %c0_159 = arith.constant 0 : index
    %192 = vector.load %arg15[%c18_158, %c0_159] : memref<36x64xf32, #tpu.memory_space<vmem>>, vector<1x64xf32>
    %c512_160 = arith.constant 512 : index
    %c0_161 = arith.constant 0 : index
    %193 = vector.load %arg8[%c512_160, %c0_161] : memref<1024x512xbf16, #tpu.memory_space<vmem>>, vector<64x512xbf16>
    %194 = arith.truncf %192 : vector<1x64xf32> to vector<1x64xbf16>
    %cst_162 = arith.constant dense<0.000000e+00> : vector<1x512xf32>
    %195 = tpu.matmul %194, %193, %cst_162 {dimension_numbers = #tpu.dot_dimension_numbers<[1], [0], [0], [1], [0, 0, 1, 1], [], []>} : vector<1x64xbf16>, vector<64x512xbf16>, vector<1x512xf32> -> vector<1x512xf32>
    %196 = arith.addf %191, %195 : vector<1x512xf32>
    %c19_163 = arith.constant 19 : index
    %c0_164 = arith.constant 0 : index
    %197 = vector.load %arg15[%c19_163, %c0_164] : memref<36x64xf32, #tpu.memory_space<vmem>>, vector<1x64xf32>
    %c576 = arith.constant 576 : index
    %c0_165 = arith.constant 0 : index
    %198 = vector.load %arg8[%c576, %c0_165] : memref<1024x512xbf16, #tpu.memory_space<vmem>>, vector<64x512xbf16>
    %199 = arith.truncf %197 : vector<1x64xf32> to vector<1x64xbf16>
    %cst_166 = arith.constant dense<0.000000e+00> : vector<1x512xf32>
    %200 = tpu.matmul %199, %198, %cst_166 {dimension_numbers = #tpu.dot_dimension_numbers<[1], [0], [0], [1], [0, 0, 1, 1], [], []>} : vector<1x64xbf16>, vector<64x512xbf16>, vector<1x512xf32> -> vector<1x512xf32>
    %201 = arith.addf %196, %200 : vector<1x512xf32>
    %c20_167 = arith.constant 20 : index
    %c0_168 = arith.constant 0 : index
    %202 = vector.load %arg15[%c20_167, %c0_168] : memref<36x64xf32, #tpu.memory_space<vmem>>, vector<1x64xf32>
    %c640 = arith.constant 640 : index
    %c0_169 = arith.constant 0 : index
    %203 = vector.load %arg8[%c640, %c0_169] : memref<1024x512xbf16, #tpu.memory_space<vmem>>, vector<64x512xbf16>
    %204 = arith.truncf %202 : vector<1x64xf32> to vector<1x64xbf16>
    %cst_170 = arith.constant dense<0.000000e+00> : vector<1x512xf32>
    %205 = tpu.matmul %204, %203, %cst_170 {dimension_numbers = #tpu.dot_dimension_numbers<[1], [0], [0], [1], [0, 0, 1, 1], [], []>} : vector<1x64xbf16>, vector<64x512xbf16>, vector<1x512xf32> -> vector<1x512xf32>
    %206 = arith.addf %201, %205 : vector<1x512xf32>
    %c21_171 = arith.constant 21 : index
    %c0_172 = arith.constant 0 : index
    %207 = vector.load %arg15[%c21_171, %c0_172] : memref<36x64xf32, #tpu.memory_space<vmem>>, vector<1x64xf32>
    %c704 = arith.constant 704 : index
    %c0_173 = arith.constant 0 : index
    %208 = vector.load %arg8[%c704, %c0_173] : memref<1024x512xbf16, #tpu.memory_space<vmem>>, vector<64x512xbf16>
    %209 = arith.truncf %207 : vector<1x64xf32> to vector<1x64xbf16>
    %cst_174 = arith.constant dense<0.000000e+00> : vector<1x512xf32>
    %210 = tpu.matmul %209, %208, %cst_174 {dimension_numbers = #tpu.dot_dimension_numbers<[1], [0], [0], [1], [0, 0, 1, 1], [], []>} : vector<1x64xbf16>, vector<64x512xbf16>, vector<1x512xf32> -> vector<1x512xf32>
    %211 = arith.addf %206, %210 : vector<1x512xf32>
    %c27_175 = arith.constant 27 : index
    %c0_176 = arith.constant 0 : index
    %212 = vector.load %arg15[%c27_175, %c0_176] : memref<36x64xf32, #tpu.memory_space<vmem>>, vector<1x64xf32>
    %c768 = arith.constant 768 : index
    %c0_177 = arith.constant 0 : index
    %213 = vector.load %arg8[%c768, %c0_177] : memref<1024x512xbf16, #tpu.memory_space<vmem>>, vector<64x512xbf16>
    %214 = arith.truncf %212 : vector<1x64xf32> to vector<1x64xbf16>
    %cst_178 = arith.constant dense<0.000000e+00> : vector<1x512xf32>
    %215 = tpu.matmul %214, %213, %cst_178 {dimension_numbers = #tpu.dot_dimension_numbers<[1], [0], [0], [1], [0, 0, 1, 1], [], []>} : vector<1x64xbf16>, vector<64x512xbf16>, vector<1x512xf32> -> vector<1x512xf32>
    %216 = arith.addf %211, %215 : vector<1x512xf32>
    %c28_179 = arith.constant 28 : index
    %c0_180 = arith.constant 0 : index
    %217 = vector.load %arg15[%c28_179, %c0_180] : memref<36x64xf32, #tpu.memory_space<vmem>>, vector<1x64xf32>
    %c832 = arith.constant 832 : index
    %c0_181 = arith.constant 0 : index
    %218 = vector.load %arg8[%c832, %c0_181] : memref<1024x512xbf16, #tpu.memory_space<vmem>>, vector<64x512xbf16>
    %219 = arith.truncf %217 : vector<1x64xf32> to vector<1x64xbf16>
    %cst_182 = arith.constant dense<0.000000e+00> : vector<1x512xf32>
    %220 = tpu.matmul %219, %218, %cst_182 {dimension_numbers = #tpu.dot_dimension_numbers<[1], [0], [0], [1], [0, 0, 1, 1], [], []>} : vector<1x64xbf16>, vector<64x512xbf16>, vector<1x512xf32> -> vector<1x512xf32>
    %221 = arith.addf %216, %220 : vector<1x512xf32>
    %c29_183 = arith.constant 29 : index
    %c0_184 = arith.constant 0 : index
    %222 = vector.load %arg15[%c29_183, %c0_184] : memref<36x64xf32, #tpu.memory_space<vmem>>, vector<1x64xf32>
    %c896 = arith.constant 896 : index
    %c0_185 = arith.constant 0 : index
    %223 = vector.load %arg8[%c896, %c0_185] : memref<1024x512xbf16, #tpu.memory_space<vmem>>, vector<64x512xbf16>
    %224 = arith.truncf %222 : vector<1x64xf32> to vector<1x64xbf16>
    %cst_186 = arith.constant dense<0.000000e+00> : vector<1x512xf32>
    %225 = tpu.matmul %224, %223, %cst_186 {dimension_numbers = #tpu.dot_dimension_numbers<[1], [0], [0], [1], [0, 0, 1, 1], [], []>} : vector<1x64xbf16>, vector<64x512xbf16>, vector<1x512xf32> -> vector<1x512xf32>
    %226 = arith.addf %221, %225 : vector<1x512xf32>
    %c30_187 = arith.constant 30 : index
    %c0_188 = arith.constant 0 : index
    %227 = vector.load %arg15[%c30_187, %c0_188] : memref<36x64xf32, #tpu.memory_space<vmem>>, vector<1x64xf32>
    %c960 = arith.constant 960 : index
    %c0_189 = arith.constant 0 : index
    %228 = vector.load %arg8[%c960, %c0_189] : memref<1024x512xbf16, #tpu.memory_space<vmem>>, vector<64x512xbf16>
    %229 = arith.truncf %227 : vector<1x64xf32> to vector<1x64xbf16>
    %cst_190 = arith.constant dense<0.000000e+00> : vector<1x512xf32>
    %230 = tpu.matmul %229, %228, %cst_190 {dimension_numbers = #tpu.dot_dimension_numbers<[1], [0], [0], [1], [0, 0, 1, 1], [], []>} : vector<1x64xbf16>, vector<64x512xbf16>, vector<1x512xf32> -> vector<1x512xf32>
    %231 = arith.addf %226, %230 : vector<1x512xf32>
    %c0_191 = arith.constant 0 : index
    %c0_192 = arith.constant 0 : index
    %232 = vector.load %arg9[%c0_191, %c0_192] : memref<1x512xf32, #tpu.memory_space<vmem>>, vector<1x512xf32>
    %233 = arith.addf %231, %232 : vector<1x512xf32>
    %cst_193 = arith.constant 0.000000e+00 : f32
    %234 = vector.broadcast %cst_193 : f32 to vector<1x512xf32>
    %235 = arith.maximumf %233, %234 : vector<1x512xf32>
    %c0_194 = arith.constant 0 : index
    %c0_195 = arith.constant 0 : index
    %236 = vector.load %arg10[%c0_194, %c0_195] : memref<512x128xbf16, #tpu.memory_space<vmem>>, vector<512x128xbf16>
    %237 = arith.truncf %235 : vector<1x512xf32> to vector<1x512xbf16>
    %cst_196 = arith.constant dense<0.000000e+00> : vector<1x128xf32>
    %238 = tpu.matmul %237, %236, %cst_196 {dimension_numbers = #tpu.dot_dimension_numbers<[1], [0], [0], [1], [0, 0, 1, 1], [], []>} : vector<1x512xbf16>, vector<512x128xbf16>, vector<1x128xf32> -> vector<1x128xf32>
    %c0_197 = arith.constant 0 : index
    %c0_198 = arith.constant 0 : index
    %239 = vector.load %arg11[%c0_197, %c0_198] : memref<1x128xf32, #tpu.memory_space<vmem>>, vector<1x128xf32>
    %240 = arith.addf %238, %239 : vector<1x128xf32>
    %c0_199 = arith.constant 0 : index
    %c0_200 = arith.constant 0 : index
    %c0_201 = arith.constant 0 : index
    %241 = vector.load %arg12[%c0_199, %c0_200, %c0_201] : memref<1x1x128xf32, #tpu.memory_space<vmem>>, vector<1x1x128xf32>
    %242 = vector.shape_cast %241 : vector<1x1x128xf32> to vector<1x128xf32>
    %243 = vector.shape_cast %240 : vector<1x128xf32> to vector<1x1x128xf32>
    tpu.vector_store %arg12[%c0_199, %c0_200, %c0_201], %243 {strides = array<i32>} : memref<1x1x128xf32, #tpu.memory_space<vmem>>, vector<1x1x128xf32>,
    return
  }
  func.func @transform_0(%arg0: i32) -> (i32, i32, i32) {
    %c0_i32 = arith.constant 0 : i32
    %c0_i32_0 = arith.constant 0 : i32
    %c0_i32_1 = arith.constant 0 : i32
    return %arg0, %c0_i32, %c0_i32_0 : i32, i32, i32
  }
  func.func @transform_1(%arg0: i32) -> (i32, i32) {
    %c0_i32 = arith.constant 0 : i32
    %c0_i32_0 = arith.constant 0 : i32
    %c0_i32_1 = arith.constant 0 : i32
    return %c0_i32, %c0_i32_0 : i32, i32
  }
  func.func @transform_2(%arg0: i32) -> (i32, i32) {
    %c0_i32 = arith.constant 0 : i32
    %c0_i32_0 = arith.constant 0 : i32
    %c0_i32_1 = arith.constant 0 : i32
    return %c0_i32, %c0_i32_0 : i32, i32
  }
  func.func @transform_3(%arg0: i32) -> (i32, i32) {
    %c0_i32 = arith.constant 0 : i32
    %c0_i32_0 = arith.constant 0 : i32
    %c0_i32_1 = arith.constant 0 : i32
    return %c0_i32, %c0_i32_0 : i32, i32
  }
  func.func @transform_4(%arg0: i32) -> (i32, i32) {
    %c0_i32 = arith.constant 0 : i32
    %c0_i32_0 = arith.constant 0 : i32
    %c0_i32_1 = arith.constant 0 : i32
    return %c0_i32, %c0_i32_0 : i32, i32
  }
  func.func @transform_5(%arg0: i32) -> (i32, i32) {
    %c0_i32 = arith.constant 0 : i32
    %c0_i32_0 = arith.constant 0 : i32
    %c0_i32_1 = arith.constant 0 : i32
    return %c0_i32, %c0_i32_0 : i32, i32
  }
  func.func @transform_6(%arg0: i32) -> (i32, i32) {
    %c0_i32 = arith.constant 0 : i32
    %c0_i32_0 = arith.constant 0 : i32
    %c0_i32_1 = arith.constant 0 : i32
    return %c0_i32, %c0_i32_0 : i32, i32
  }
  func.func @transform_7(%arg0: i32) -> (i32, i32) {
    %c0_i32 = arith.constant 0 : i32
    %c0_i32_0 = arith.constant 0 : i32
    %c0_i32_1 = arith.constant 0 : i32
    return %c0_i32, %c0_i32_0 : i32, i32
  }
  func.func @transform_8(%arg0: i32) -> (i32, i32) {
    %c0_i32 = arith.constant 0 : i32
    %c0_i32_0 = arith.constant 0 : i32
    %c0_i32_1 = arith.constant 0 : i32
    return %c0_i32, %c0_i32_0 : i32, i32
  }
  func.func @transform_9(%arg0: i32) -> (i32, i32) {
    %c0_i32 = arith.constant 0 : i32
    %c0_i32_0 = arith.constant 0 : i32
    %c0_i32_1 = arith.constant 0 : i32
    return %c0_i32, %c0_i32_0 : i32, i32
  }
  func.func @transform_10(%arg0: i32) -> (i32, i32) {
    %c0_i32 = arith.constant 0 : i32
    %c0_i32_0 = arith.constant 0 : i32
    %c0_i32_1 = arith.constant 0 : i32
    return %c0_i32, %c0_i32_0 : i32, i32
  }
  func.func @transform_11(%arg0: i32) -> (i32, i32, i32) {
    %c0_i32 = arith.constant 0 : i32
    %c0_i32_0 = arith.constant 0 : i32
    %c0_i32_1 = arith.constant 0 : i32
    return %arg0, %c0_i32, %c0_i32_0 : i32, i32, i32
  }
}

</mosaic_0001>

<llo_original>
// kernel: dqn_forward.1
$region0: #{dqn_forward.1}
  #allocation0 [shape = 'u32[]', space=smem, size = 0x4, offset = 0x4, fixed_abs, tag = 'smem constant byte address 0x4 - core index']
  #allocation1 [shape = 'u32[144,128]{1,0:T(1,128)}', space=vmem, size = 0x12000, scoped, tag = 'internal scratch']
  #allocation2 [shape = 'f32[88,32]{1,0:T(8,128)}', space=vmem, size = 0xb000, scoped, tag = 'scratch operand']
  #allocation3 [shape = 'f32[56,64]{1,0:T(8,128)}', space=vmem, size = 0x7000, scoped, tag = 'scratch operand']
  #allocation4 [shape = 'f32[36,64]{1,0:T(8,128)}', space=vmem, size = 0x5000, scoped, tag = 'scratch operand']
  %s0 = inlined_call_operand.vmem [shape: bf16[2,88,256], index: 0, kind: input, shape index: {}]
  %s1 = inlined_call_operand.vmem [shape: bf16[256,32], index: 1, kind: input, shape index: {}]
  %s2 = inlined_call_operand.vmem [shape: f32[1,32], index: 2, kind: input, shape index: {}]
  %s3 = inlined_call_operand.vmem [shape: bf16[512,64], index: 3, kind: input, shape index: {}]
  %s4 = inlined_call_operand.vmem [shape: f32[1,64], index: 4, kind: input, shape index: {}]
  %s5 = inlined_call_operand.vmem [shape: bf16[576,64], index: 5, kind: input, shape index: {}]
  %s6 = inlined_call_operand.vmem [shape: f32[1,64], index: 6, kind: input, shape index: {}]
  %s7 = inlined_call_operand.vmem [shape: bf16[1024,512], index: 7, kind: input, shape index: {}]
  %s8 = inlined_call_operand.vmem [shape: f32[1,512], index: 8, kind: input, shape index: {}]
  %s9 = inlined_call_operand.vmem [shape: bf16[512,128], index: 9, kind: input, shape index: {}]
  %s10 = inlined_call_operand.vmem [shape: f32[1,128], index: 10, kind: input, shape index: {}]
  %s11 = inlined_call_operand.hbm [shape: f32[2,1,128], index: 11, kind: output, shape index: {}]
  %s12 = sld [smem:[#allocation0]]
  $region77: #{dqn_forward.1} parent=0
    _
  %s14 = ssub.s32 1, %s12
  %s15 = scalar_select 0, %s14, %s12
  $region1: #{dqn_forward.1} parent=0
    #allocation5 [shape = 'u8[1024]{0}', space=vmem, size = 0x400, scoped, tag = 'output window, operand 0']
    #allocation6 [shape = 's32[2]{0}', space=sflag, size = 0x8, scoped, tag = 'scoped memory for dqn_forward.1']
    %16 = vsyncpa [#allocation6], 0
    %s17 = scalar_lea.sflag [#allocation6], 1
    %18 = vsyncpa %s17, 0
    loop: start=0, step=1, limit=4
    $region2: #{dqn_forward.1} parent=1 // loop_pre_header
      _
    $region3: #{dqn_forward.1} parent=1 // loop_header
      %s20 = sphi 0, %s24
      %p21 = scmp.ge.s32.totalorder %s20, 4
      %s30 = sphi 0, %s32
      %s33 = sphi 0, %s30
      %s34 = sphi 0, %s33
      %s50 = sphi 0, %s34
      %s54 = sphi 0, %s54
      %s56 = sphi 0, %s54
      %s57 = sphi 0, %s56
      %s71 = sphi 0, %s57
      %s75 = sphi 0, %s75
      %s77 = sphi 0, %s75
      %s78 = sphi 0, %s77
      %s92 = sphi 0, %s78
      %s96 = sphi 0, %s96
      %s98 = sphi 0, %s96
      %s99 = sphi 0, %s98
      %s113 = sphi 0, %s99
      %s117 = sphi 0, %s117
      %s119 = sphi 0, %s117
      %s120 = sphi 0, %s119
      %s134 = sphi 0, %s120
      %s138 = sphi 0, %s138
      %s140 = sphi 0, %s138
      %s141 = sphi 0, %s140
      %s155 = sphi 0, %s141
      %s159 = sphi 0, %s159
      %s161 = sphi 0, %s159
      %s162 = sphi 0, %s161
      %s176 = sphi 0, %s162
      %s180 = sphi 0, %s180
      %s182 = sphi 0, %s180
      %s183 = sphi 0, %s182
      %s197 = sphi 0, %s183
      %s201 = sphi 0, %s201
      %s203 = sphi 0, %s201
      %s204 = sphi 0, %s203
      %s218 = sphi 0, %s204
      %s222 = sphi 0, %s222
      %s224 = sphi 0, %s222
      %s225 = sphi 0, %s224
      %s239 = sphi 0, %s225
      %s243 = sphi 0, %s243
      %s245 = sphi 0, %s243
      %s246 = sphi 0, %s245
      %s260 = sphi 0, %s246
      %s266 = sphi 0, %s268
      %s269 = sphi 0, %s266
      %s270 = sphi 0, %s269
      %s286 = sphi 0, %s270
    $region4: #{dqn_forward.1} parent=1 // loop_header_branch
      %23 = sbr.rel (%p21) target = $region8
    $region5: #{dqn_forward.1} parent=1 // loop_body
      %s25 = ssub.s32 %s20, 1
      %s26 = ssub.s32 %s20, 2
      %s27 = sadd.s32 %s20, 1
      %s28 = ssub.s32 %s20, %s27
      %p29 = scmp.eq.s32.totalorder %s28, 0
      %s31 = sadd.s32 %s30, 1
      %s32 = scalar_select %p29, %s30, %s31
      %p35 = pneg %p29
      %p36 = scmp.eq.s32.totalorder %s20, 1
      %p37 = por %p35, %p36
      %p38 = scmp.ne.s32.totalorder %s30, %s33
      %p39 = scmp.eq.s32.totalorder %s20, 0
      %p40 = por %p38, %p39
      %p41 = scmp.ne.s32.totalorder %s30, %s33
      %p42 = scmp.eq.s32.totalorder %s25, 1
      %p43 = por %p41, %p42
      %p44 = scmp.ne.s32.totalorder %s33, %s34
      %p45 = scmp.eq.s32.totalorder %s25, 0
      %p46 = por %p44, %p45
      %p47 = scmp.ne.s32.totalorder %s33, %s34
      %p48 = scmp.eq.s32.totalorder %s26, 1
      %p49 = por %p47, %p48
      %p51 = scmp.ne.s32.totalorder %s34, %s50
      %p52 = scmp.eq.s32.totalorder %s26, 0
      %p53 = por %p51, %p52
      %s55 = sadd.s32 %s54, 1
      %p58 = scmp.eq.s32.totalorder %s20, 1
      %p59 = scmp.ne.s32.totalorder %s54, %s56
      %p60 = scmp.eq.s32.totalorder %s20, 0
      %p61 = por %p59, %p60
      %p62 = scmp.ne.s32.totalorder %s54, %s56
      %p63 = scmp.eq.s32.totalorder %s25, 1
      %p64 = por %p62, %p63
      %p65 = scmp.ne.s32.totalorder %s56, %s57
      %p66 = scmp.eq.s32.totalorder %s25, 0
      %p67 = por %p65, %p66
      %p68 = scmp.ne.s32.totalorder %s56, %s57
      %p69 = scmp.eq.s32.totalorder %s26, 1
      %p70 = por %p68, %p69
      %p72 = scmp.ne.s32.totalorder %s57, %s71
      %p73 = scmp.eq.s32.totalorder %s26, 0
      %p74 = por %p72, %p73
      %s76 = sadd.s32 %s75, 1
      %p79 = scmp.eq.s32.totalorder %s20, 1
      %p80 = scmp.ne.s32.totalorder %s75, %s77
      %p81 = scmp.eq.s32.totalorder %s20, 0
      %p82 = por %p80, %p81
      %p83 = scmp.ne.s32.totalorder %s75, %s77
      %p84 = scmp.eq.s32.totalorder %s25, 1
      %p85 = por %p83, %p84
      %p86 = scmp.ne.s32.totalorder %s77, %s78
      %p87 = scmp.eq.s32.totalorder %s25, 0
      %p88 = por %p86, %p87
      %p89 = scmp.ne.s32.totalorder %s77, %s78
      %p90 = scmp.eq.s32.totalorder %s26, 1
      %p91 = por %p89, %p90
      %p93 = scmp.ne.s32.totalorder %s78, %s92
      %p94 = scmp.eq.s32.totalorder %s26, 0
      %p95 = por %p93, %p94
      %s97 = sadd.s32 %s96, 1
      %p100 = scmp.eq.s32.totalorder %s20, 1
      %p101 = scmp.ne.s32.totalorder %s96, %s98
      %p102 = scmp.eq.s32.totalorder %s20, 0
      %p103 = por %p101, %p102
      %p104 = scmp.ne.s32.totalorder %s96, %s98
      %p105 = scmp.eq.s32.totalorder %s25, 1
      %p106 = por %p104, %p105
      %p107 = scmp.ne.s32.totalorder %s98, %s99
      %p108 = scmp.eq.s32.totalorder %s25, 0
      %p109 = por %p107, %p108
      %p110 = scmp.ne.s32.totalorder %s98, %s99
      %p111 = scmp.eq.s32.totalorder %s26, 1
      %p112 = por %p110, %p111
      %p114 = scmp.ne.s32.totalorder %s99, %s113
      %p115 = scmp.eq.s32.totalorder %s26, 0
      %p116 = por %p114, %p115
      %s118 = sadd.s32 %s117, 1
      %p121 = scmp.eq.s32.totalorder %s20, 1
      %p122 = scmp.ne.s32.totalorder %s117, %s119
      %p123 = scmp.eq.s32.totalorder %s20, 0
      %p124 = por %p122, %p123
      %p125 = scmp.ne.s32.totalorder %s117, %s119
      %p126 = scmp.eq.s32.totalorder %s25, 1
      %p127 = por %p125, %p126
      %p128 = scmp.ne.s32.totalorder %s119, %s120
      %p129 = scmp.eq.s32.totalorder %s25, 0
      %p130 = por %p128, %p129
      %p131 = scmp.ne.s32.totalorder %s119, %s120
      %p132 = scmp.eq.s32.totalorder %s26, 1
      %p133 = por %p131, %p132
      %p135 = scmp.ne.s32.totalorder %s120, %s134
      %p136 = scmp.eq.s32.totalorder %s26, 0
      %p137 = por %p135, %p136
      %s139 = sadd.s32 %s138, 1
      %p142 = scmp.eq.s32.totalorder %s20, 1
      %p143 = scmp.ne.s32.totalorder %s138, %s140
      %p144 = scmp.eq.s32.totalorder %s20, 0
      %p145 = por %p143, %p144
      %p146 = scmp.ne.s32.totalorder %s138, %s140
      %p147 = scmp.eq.s32.totalorder %s25, 1
      %p148 = por %p146, %p147
      %p149 = scmp.ne.s32.totalorder %s140, %s141
      %p150 = scmp.eq.s32.totalorder %s25, 0
      %p151 = por %p149, %p150
      %p152 = scmp.ne.s32.totalorder %s140, %s141
      %p153 = scmp.eq.s32.totalorder %s26, 1
      %p154 = por %p152, %p153
      %p156 = scmp.ne.s32.totalorder %s141, %s155
      %p157 = scmp.eq.s32.totalorder %s26, 0
      %p158 = por %p156, %p157
      %s160 = sadd.s32 %s159, 1
      %p163 = scmp.eq.s32.totalorder %s20, 1
      %p164 = scmp.ne.s32.totalorder %s159, %s161
      %p165 = scmp.eq.s32.totalorder %s20, 0
      %p166 = por %p164, %p165
      %p167 = scmp.ne.s32.totalorder %s159, %s161
      %p168 = scmp.eq.s32.totalorder %s25, 1
      %p169 = por %p167, %p168
      %p170 = scmp.ne.s32.totalorder %s161, %s162
      %p171 = scmp.eq.s32.totalorder %s25, 0
      %p172 = por %p170, %p171
      %p173 = scmp.ne.s32.totalorder %s161, %s162
      %p174 = scmp.eq.s32.totalorder %s26, 1
      %p175 = por %p173, %p174
      %p177 = scmp.ne.s32.totalorder %s162, %s176
      %p178 = scmp.eq.s32.totalorder %s26, 0
      %p179 = por %p177, %p178
      %s181 = sadd.s32 %s180, 1
      %p184 = scmp.eq.s32.totalorder %s20, 1
      %p185 = scmp.ne.s32.totalorder %s180, %s182
      %p186 = scmp.eq.s32.totalorder %s20, 0
      %p187 = por %p185, %p186
      %p188 = scmp.ne.s32.totalorder %s180, %s182
      %p189 = scmp.eq.s32.totalorder %s25, 1
      %p190 = por %p188, %p189
      %p191 = scmp.ne.s32.totalorder %s182, %s183
      %p192 = scmp.eq.s32.totalorder %s25, 0
      %p193 = por %p191, %p192
      %p194 = scmp.ne.s32.totalorder %s182, %s183
      %p195 = scmp.eq.s32.totalorder %s26, 1
      %p196 = por %p194, %p195
      %p198 = scmp.ne.s32.totalorder %s183, %s197
      %p199 = scmp.eq.s32.totalorder %s26, 0
      %p200 = por %p198, %p199
      %s202 = sadd.s32 %s201, 1
      %p205 = scmp.eq.s32.totalorder %s20, 1
      %p206 = scmp.ne.s32.totalorder %s201, %s203
      %p207 = scmp.eq.s32.totalorder %s20, 0
      %p208 = por %p206, %p207
      %p209 = scmp.ne.s32.totalorder %s201, %s203
      %p210 = scmp.eq.s32.totalorder %s25, 1
      %p211 = por %p209, %p210
      %p212 = scmp.ne.s32.totalorder %s203, %s204
      %p213 = scmp.eq.s32.totalorder %s25, 0
      %p214 = por %p212, %p213
      %p215 = scmp.ne.s32.totalorder %s203, %s204
      %p216 = scmp.eq.s32.totalorder %s26, 1
      %p217 = por %p215, %p216
      %p219 = scmp.ne.s32.totalorder %s204, %s218
      %p220 = scmp.eq.s32.totalorder %s26, 0
      %p221 = por %p219, %p220
      %s223 = sadd.s32 %s222, 1
      %p226 = scmp.eq.s32.totalorder %s20, 1
      %p227 = scmp.ne.s32.totalorder %s222, %s224
      %p228 = scmp.eq.s32.totalorder %s20, 0
      %p229 = por %p227, %p228
      %p230 = scmp.ne.s32.totalorder %s222, %s224
      %p231 = scmp.eq.s32.totalorder %s25, 1
      %p232 = por %p230, %p231
      %p233 = scmp.ne.s32.totalorder %s224, %s225
      %p234 = scmp.eq.s32.totalorder %s25, 0
      %p235 = por %p233, %p234
      %p236 = scmp.ne.s32.totalorder %s224, %s225
      %p237 = scmp.eq.s32.totalorder %s26, 1
      %p238 = por %p236, %p237
      %p240 = scmp.ne.s32.totalorder %s225, %s239
      %p241 = scmp.eq.s32.totalorder %s26, 0
      %p242 = por %p240, %p241
      %s244 = sadd.s32 %s243, 1
      %p247 = scmp.eq.s32.totalorder %s20, 1
      %p248 = scmp.ne.s32.totalorder %s243, %s245
      %p249 = scmp.eq.s32.totalorder %s20, 0
      %p250 = por %p248, %p249
      %p251 = scmp.ne.s32.totalorder %s243, %s245
      %p252 = scmp.eq.s32.totalorder %s25, 1
      %p253 = por %p251, %p252
      %p254 = scmp.ne.s32.totalorder %s245, %s246
      %p255 = scmp.eq.s32.totalorder %s25, 0
      %p256 = por %p254, %p255
      %p257 = scmp.ne.s32.totalorder %s245, %s246
      %p258 = scmp.eq.s32.totalorder %s26, 1
      %p259 = por %p257, %p258
      %p261 = scmp.ne.s32.totalorder %s246, %s260
      %p262 = scmp.eq.s32.totalorder %s26, 0
      %p263 = por %p261, %p262
      %s264 = ssub.s32 %s20, %s27
      %p265 = scmp.eq.s32.totalorder %s264, 0
      %s267 = sadd.s32 %s266, 1
      %s268 = scalar_select %p265, %s266, %s267
      %p271 = pneg %p265
      %p272 = scmp.eq.s32.totalorder %s20, 1
      %p273 = por %p271, %p272
      %p274 = scmp.ne.s32.totalorder %s266, %s269
      %p275 = scmp.eq.s32.totalorder %s20, 0
      %p276 = por %p274, %p275
      %p277 = scmp.ne.s32.totalorder %s266, %s269
      %p278 = scmp.eq.s32.totalorder %s25, 1
      %p279 = por %p277, %p278
      %p280 = scmp.ne.s32.totalorder %s269, %s270
      %p281 = scmp.eq.s32.totalorder %s25, 0
      %p282 = por %p280, %p281
      %p283 = scmp.ne.s32.totalorder %s269, %s270
      %p284 = scmp.eq.s32.totalorder %s26, 1
      %p285 = por %p283, %p284
      %p287 = scmp.ne.s32.totalorder %s270, %s286
      %p288 = scmp.eq.s32.totalorder %s26, 0
      %p289 = por %p287, %p288
      %p290 = scmp.le.s32.totalorder 1, %s20
      %p291 = scmp.lt.s32.totalorder %s20, 3
      %p292 = pnand %p290, %p291
      %p293 = pneg %p292
      // Predicated region
      $region9: #{dqn_forward.1} parent=5 // pred_check
        _
      $region10: #{dqn_forward.1} parent=5 // pred_check_branch
        %295 = sbr.rel (%p292) target = $region12
      $region11: #{dqn_forward.1} parent=5 // pred_region
        %s296 = ssub.s32 %s20, 1
        // Predicated region
        $region13: #{dqn_forward.1} parent=11 // pred_check
          %p297 = pneg %p67
        $region14: #{dqn_forward.1} parent=11 // pred_check_branch
          %299 = sbr.rel (%p297) target = $region16
        $region15: #{dqn_forward.1} parent=11 // pred_region
          _
        $region16: #{dqn_forward.1} parent=11 // pred_fallthru
          _
        // Predicated region
        $region17: #{dqn_forward.1} parent=11 // pred_check
          %p300 = pneg %p88
        $region18: #{dqn_forward.1} parent=11 // pred_check_branch
          %302 = sbr.rel (%p300) target = $region20
        $region19: #{dqn_forward.1} parent=11 // pred_region
          _
        $region20: #{dqn_forward.1} parent=11 // pred_fallthru
          _
        // Predicated region
        $region21: #{dqn_forward.1} parent=11 // pred_check
          %p303 = pneg %p109
        $region22: #{dqn_forward.1} parent=11 // pred_check_branch
          %305 = sbr.rel (%p303) target = $region24
        $region23: #{dqn_forward.1} parent=11 // pred_region
          _
        $region24: #{dqn_forward.1} parent=11 // pred_fallthru
          _
        // Predicated region
        $region25: #{dqn_forward.1} parent=11 // pred_check
          %p306 = pneg %p130
        $region26: #{dqn_forward.1} parent=11 // pred_check_branch
          %308 = sbr.rel (%p306) target = $region28
        $region27: #{dqn_forward.1} parent=11 // pred_region
          _
        $region28: #{dqn_forward.1} parent=11 // pred_fallthru
          _
        // Predicated region
        $region29: #{dqn_forward.1} parent=11 // pred_check
          %p309 = pneg %p151
        $region30: #{dqn_forward.1} parent=11 // pred_check_branch
          %311 = sbr.rel (%p309) target = $region32
        $region31: #{dqn_forward.1} parent=11 // pred_region
          _
        $region32: #{dqn_forward.1} parent=11 // pred_fallthru
          _
        // Predicated region
        $region33: #{dqn_forward.1} parent=11 // pred_check
          %p312 = pneg %p172
        $region34: #{dqn_forward.1} parent=11 // pred_check_branch
          %314 = sbr.rel (%p312) target = $region36
        $region35: #{dqn_forward.1} parent=11 // pred_region
          _
        $region36: #{dqn_forward.1} parent=11 // pred_fallthru
          _
        // Predicated region
        $region37: #{dqn_forward.1} parent=11 // pred_check
          %p315 = pneg %p193
        $region38: #{dqn_forward.1} parent=11 // pred_check_branch
          %317 = sbr.rel (%p315) target = $region40
        $region39: #{dqn_forward.1} parent=11 // pred_region
          _
        $region40: #{dqn_forward.1} parent=11 // pred_fallthru
          _
        // Predicated region
        $region41: #{dqn_forward.1} parent=11 // pred_check
          %p318 = pneg %p214
        $region42: #{dqn_forward.1} parent=11 // pred_check_branch
          %320 = sbr.rel (%p318) target = $region44
        $region43: #{dqn_forward.1} parent=11 // pred_region
          _
        $region44: #{dqn_forward.1} parent=11 // pred_fallthru
          _
        // Predicated region
        $region45: #{dqn_forward.1} parent=11 // pred_check
          %p321 = pneg %p235
        $region46: #{dqn_forward.1} parent=11 // pred_check_branch
          %323 = sbr.rel (%p321) target = $region48
        $region47: #{dqn_forward.1} parent=11 // pred_region
          _
        $region48: #{dqn_forward.1} parent=11 // pred_fallthru
          _
        // Predicated region
        $region49: #{dqn_forward.1} parent=11 // pred_check
          %p324 = pneg %p256
        $region50: #{dqn_forward.1} parent=11 // pred_check_branch
          %326 = sbr.rel (%p324) target = $region52
        $region51: #{dqn_forward.1} parent=11 // pred_region
          _
        $region52: #{dqn_forward.1} parent=11 // pred_fallthru
          _
      $region12: #{dqn_forward.1} parent=5 // pred_fallthru
        _
      %p327 = scmp.lt.s32.totalorder %s20, 2
      // Predicated region
      $region53: #{dqn_forward.1} parent=5 // pred_check
        %p328 = pneg %p327
      $region54: #{dqn_forward.1} parent=5 // pred_check_branch
        %330 = sbr.rel (%p328) target = $region56
      $region55: #{dqn_forward.1} parent=5 // pred_region
        // Predicated region
        $region57: #{dqn_forward.1} parent=55 // pred_check
          %p331 = pneg %p40
        $region58: #{dqn_forward.1} parent=55 // pred_check_branch
          %333 = sbr.rel (%p331) target = $region60
        $region59: #{dqn_forward.1} parent=55 // pred_region
          %p334 = scmp.lt.s32.totalorder %s20, 1
          %s335 = scalar_select %p334, %s20, 1
          %s336 = smul.addr %s335, 22
          %s337 = smul.addr %s336, 4
          %s338 = scalar_lea.vmem %s0, %s337
        $region60: #{dqn_forward.1} parent=55 // pred_fallthru
          _
      $region56: #{dqn_forward.1} parent=5 // pred_fallthru
        _
      %p339 = scmp.le.s32.totalorder 1, %s20
      %p340 = scmp.lt.s32.totalorder %s20, 3
      %p341 = pnand %p339, %p340
      %p342 = pneg %p341
      // Predicated region
      $region61: #{dqn_forward.1} parent=5 // pred_check
        _
      $region62: #{dqn_forward.1} parent=5 // pred_check_branch
        %344 = sbr.rel (%p341) target = $region64
      $region63: #{dqn_forward.1} parent=5 // pred_region
        %s345 = ssub.s32 %s20, 1
        %p346 = scmp.lt.s32.totalorder %s25, 1
        %s347 = scalar_select %p346, %s25, 1
        %s348 = smul.addr %s347, 22
        %s349 = smul.addr %s348, 4
        %s350 = scalar_lea.vmem %s0, %s349
        %p351 = pneg %p46
        %p352 = pneg %p43
        %p353 = pneg %p67
        %p354 = pneg %p64
        %p355 = pneg %p88
        %p356 = pneg %p85
        %p357 = pneg %p109
        %p358 = pneg %p106
        %p359 = pneg %p130
        %p360 = pneg %p127
        %p361 = pneg %p151
        %p362 = pneg %p148
        %p363 = pneg %p172
        %p364 = pneg %p169
        %p365 = pneg %p193
        %p366 = pneg %p190
        %p367 = pneg %p214
        %p368 = pneg %p211
        %p369 = pneg %p235
        %p370 = pneg %p232
        %p371 = pneg %p256
        %p372 = pneg %p253
        %p373 = pneg %p282
        %p374 = pneg %p279
        %s375 = sand.u32 %s269, 1
        %s376 = scalar_lea.sflag [#allocation6], %s375
        %s377 = sand.u32 %s269, 1
        %s378 = scalar_lea.vmem [#allocation5], %s377
        %p379 = scmp.lt.s32.totalorder %s25, 1
        %s380 = scalar_select %p379, %s25, 1
        %s381 = smul.addr %s380, 22
        %s382 = smul.addr %s381, 4
        %s383 = scalar_lea.vmem %s0, %s382
        %v385 = vld [vmem:[%s383] sm:$0xff]
        %v386 = vld [vmem:[%s383 + $0x8] sm:$0xff]
        %v387 = vld [vmem:[%s383 + $0x10] sm:$0xff]
        %v388 = vld [vmem:[%s383 + $0x18] sm:$0xff]
        %v389 = vld [vmem:[%s383 + $0x20] sm:$0xff]
        %v390 = vld [vmem:[%s383 + $0x28] sm:$0xff]
        %v391 = vld [vmem:[%s383 + $0x30] sm:$0xff]
        %v392 = vld [vmem:[%s383 + $0x38] sm:$0xff]
        %v393 = vld [vmem:[%s383 + $0x40] sm:$0xff]
        %v394 = vld [vmem:[%s383 + $0x48] sm:$0xff]
        %v395 = vld [vmem:[%s383 + $0x50] sm:$0xff]
        %v396 = vld [vmem:[%s1] sm:$0xf]
        %v397 = vld [vmem:[%s1 + $0x4] sm:$0xf]
        %v398 = vld [vmem:[%s1 + $0x8] sm:$0xf]
        %v399 = vld [vmem:[%s1 + $0xc] sm:$0xf]
        %v400 = vld [vmem:[%s1 + $0x10] sm:$0xf]
        %v401 = vld [vmem:[%s1 + $0x14] sm:$0xf]
        %v402 = vld [vmem:[%s1 + $0x18] sm:$0xf]
        %v403 = vld [vmem:[%s1 + $0x1c] sm:$0xf]
        %v404 = vld [vmem:[%s1 + $0x20] sm:$0xf]
        %v405 = vld [vmem:[%s1 + $0x24] sm:$0xf]
        %v406 = vld [vmem:[%s1 + $0x28] sm:$0xf]
        %v407 = vld [vmem:[%s1 + $0x2c] sm:$0xf]
        %v408 = vld [vmem:[%s1 + $0x30] sm:$0xf]
        %v409 = vld [vmem:[%s1 + $0x34] sm:$0xf]
        %v410 = vld [vmem:[%s1 + $0x38] sm:$0xf]
        %v411 = vld [vmem:[%s1 + $0x3c] sm:$0xf]
        %v412 = vld [vmem:[%s1 + $0x40] sm:$0xf]
        %v413 = vld [vmem:[%s1 + $0x44] sm:$0xf]
        %v414 = vld [vmem:[%s1 + $0x48] sm:$0xf]
        %v415 = vld [vmem:[%s1 + $0x4c] sm:$0xf]
        %v416 = vld [vmem:[%s1 + $0x50] sm:$0xf]
        %v417 = vld [vmem:[%s1 + $0x54] sm:$0xf]
        %v418 = vld [vmem:[%s1 + $0x58] sm:$0xf]
        %v419 = vld [vmem:[%s1 + $0x5c] sm:$0xf]
        %v420 = vld [vmem:[%s1 + $0x60] sm:$0xf]
        %v421 = vld [vmem:[%s1 + $0x64] sm:$0xf]
        %v422 = vld [vmem:[%s1 + $0x68] sm:$0xf]
        %v423 = vld [vmem:[%s1 + $0x6c] sm:$0xf]
        %v424 = vld [vmem:[%s1 + $0x70] sm:$0xf]
        %v425 = vld [vmem:[%s1 + $0x74] sm:$0xf]
        %v426 = vld [vmem:[%s1 + $0x78] sm:$0xf]
        %v427 = vld [vmem:[%s1 + $0x7c] sm:$0xf]
        %v428 = vld [vmem:[%s2] sm:$0x1]
        %v430 = vlaneseq
        %v431 = vshrl.u32 %v430, 7
        %v432 = vsub.s32 0, %v431
        %v433 = vrot.slane %v428, %v432
        %v446 = vunpack.c.l.b16 %v385
        %v447 = vunpack.c.h.b16 %v385
        %v448 = vunpack.c.l.b16 %v386
        %v449 = vunpack.c.h.b16 %v386
        %v450 = vunpack.c.l.b16 %v387
        %v451 = vunpack.c.h.b16 %v387
        %v452 = vunpack.c.l.b16 %v388
        %v453 = vunpack.c.h.b16 %v388
        %v454 = vunpack.c.l.b16 %v389
        %v455 = vunpack.c.h.b16 %v389
        %v456 = vunpack.c.l.b16 %v390
        %v457 = vunpack.c.h.b16 %v390
        %v458 = vunpack.c.l.b16 %v391
        %v459 = vunpack.c.h.b16 %v391
        %v460 = vunpack.c.l.b16 %v392
        %v461 = vunpack.c.h.b16 %v392
        %v462 = vunpack.c.l.b16 %v393
        %v463 = vunpack.c.h.b16 %v393
        %v464 = vunpack.c.l.b16 %v394
        %v465 = vunpack.c.h.b16 %v394
        %v466 = vunpack.c.l.b16 %v395
        %v467 = vunpack.c.h.b16 %v395
        %v468 = vpack.c.b16 %v448, %v446
        %v469 = vpack.c.b16 %v449, %v447
        %v470 = vpack.c.b16 %v452, %v450
        %v471 = vpack.c.b16 %v453, %v451
        %v472 = vpack.c.b16 %v456, %v454
        %v473 = vpack.c.b16 %v457, %v455
        %v474 = vpack.c.b16 %v460, %v458
        %v475 = vpack.c.b16 %v461, %v459
        %v476 = vpack.c.b16 %v464, %v462
        %v477 = vpack.c.b16 %v465, %v463
        %v478 = vpack.c.b16 %v466, %v466
        %v479 = vpack.c.b16 %v467, %v467
        %v524 = vunpack.c.l.b16 %v396
        %v525 = vunpack.c.l.b16 %v397
        %v526 = vunpack.c.l.b16 %v398
        %v527 = vunpack.c.l.b16 %v399
        %v528 = vunpack.c.l.b16 %v400
        %v529 = vunpack.c.l.b16 %v401
        %v530 = vunpack.c.l.b16 %v402
        %v531 = vunpack.c.l.b16 %v403
        %v532 = vunpack.c.l.b16 %v404
        %v533 = vunpack.c.l.b16 %v405
        %v534 = vunpack.c.l.b16 %v406
        %v535 = vunpack.c.l.b16 %v407
        %v536 = vunpack.c.l.b16 %v408
        %v537 = vunpack.c.l.b16 %v409
        %v538 = vunpack.c.l.b16 %v410
        %v539 = vunpack.c.l.b16 %v411
        %v540 = vunpack.c.l.b16 %v412
        %v541 = vunpack.c.l.b16 %v413
        %v542 = vunpack.c.l.b16 %v414
        %v543 = vunpack.c.l.b16 %v415
        %v544 = vunpack.c.l.b16 %v416
        %v545 = vunpack.c.l.b16 %v417
        %v546 = vunpack.c.l.b16 %v418
        %v547 = vunpack.c.l.b16 %v419
        %v548 = vunpack.c.l.b16 %v420
        %v549 = vunpack.c.l.b16 %v421
        %v550 = vunpack.c.l.b16 %v422
        %v551 = vunpack.c.l.b16 %v423
        %v552 = vunpack.c.l.b16 %v424
        %v553 = vunpack.c.l.b16 %v425
        %v554 = vunpack.c.l.b16 %v426
        %v555 = vunpack.c.l.b16 %v427
        %v556 = vpack.c.b16 %v525, %v524
        %v557 = vpack.c.b16 %v527, %v526
        %v558 = vpack.c.b16 %v529, %v528
        %v559 = vpack.c.b16 %v531, %v530
        %v560 = vpack.c.b16 %v533, %v532
        %v561 = vpack.c.b16 %v535, %v534
        %v562 = vpack.c.b16 %v537, %v536
        %v563 = vpack.c.b16 %v539, %v538
        %v564 = vpack.c.b16 %v541, %v540
        %v565 = vpack.c.b16 %v543, %v542
        %v566 = vpack.c.b16 %v545, %v544
        %v567 = vpack.c.b16 %v547, %v546
        %v568 = vpack.c.b16 %v549, %v548
        %v569 = vpack.c.b16 %v551, %v550
        %v570 = vpack.c.b16 %v553, %v552
        %v571 = vpack.c.b16 %v555, %v554
        %588 = vmatprep.subr.bf16.mxu0 0
        %589 = vmatpush1.bf16.msra.mxu0 %v556
        %590 = vmatprep.subr.bf16.mxu0 0
        %591 = vmatpush1.bf16.msra.mxu0 %v557
        %592 = vmatprep.subr.bf16.mxu0 0
        %593 = vmatpush1.bf16.msra.mxu0 %v558
        %594 = vmatprep.subr.bf16.mxu0 0
        %595 = vmatpush1.bf16.msra.mxu0 %v559
        %596 = vmatprep.subr.bf16.mxu0 0
        %597 = vmatpush1.bf16.msra.mxu0 %v560
        %598 = vmatprep.subr.bf16.mxu0 0
        %599 = vmatpush1.bf16.msra.mxu0 %v561
        %600 = vmatprep.subr.bf16.mxu0 0
        %601 = vmatpush1.bf16.msra.mxu0 %v562
        %602 = vmatprep.subr.bf16.mxu0 0
        %603 = vmatpush1.bf16.msra.mxu0 %v563
        %604 = vmatprep.subr.bf16.mxu0 0
        %605 = vmatpush1.bf16.msra.mxu0 %v564
        %606 = vmatprep.subr.bf16.mxu0 0
        %607 = vmatpush1.bf16.msra.mxu0 %v565
        %608 = vmatprep.subr.bf16.mxu0 0
        %609 = vmatpush1.bf16.msra.mxu0 %v566
        %610 = vmatprep.subr.bf16.mxu0 0
        %611 = vmatpush1.bf16.msra.mxu0 %v567
        %612 = vmatprep.subr.bf16.mxu0 0
        %613 = vmatpush1.bf16.msra.mxu0 %v568
        %614 = vmatprep.subr.bf16.mxu0 0
        %615 = vmatpush1.bf16.msra.mxu0 %v569
        %616 = vmatprep.subr.bf16.mxu0 0
        %617 = vmatpush1.bf16.msra.mxu0 %v570
        %618 = vmatprep.subr.bf16.mxu0 0
        %619 = vmatpush1.bf16.msra.mxu0 %v571
        %620 = vmatprep.mubr.bf16.mxu0 %v469
        %621 = vmatmul.mubr.bf16.gmra.mrb[0].mxu0 %v468
        %v622 = vpop.f32.mrb[0].mxu0
        %v623 = vadd.f32 %v433, %v622
        %v624 = vpop.f32.mrb[0].mxu0
        %v625 = vpop.f32.mrb[0].mxu0
        %v626 = vadd.f32 %v433, %v625
        %v627 = vpop.f32.mrb[0].mxu0
        %628 = vmatprep.mubr.bf16.mxu0 %v471
        %629 = vmatmul.mubr.bf16.gmra.mrb[0].mxu0 %v470
        %v630 = vpop.f32.mrb[0].mxu0
        %v631 = vadd.f32 %v433, %v630
        %v632 = vpop.f32.mrb[0].mxu0
        %v633 = vpop.f32.mrb[0].mxu0
        %v634 = vadd.f32 %v433, %v633
        %v635 = vpop.f32.mrb[0].mxu0
        %636 = vmatprep.mubr.bf16.mxu0 %v473
        %637 = vmatmul.mubr.bf16.gmra.mrb[0].mxu0 %v472
        %v638 = vpop.f32.mrb[0].mxu0
        %v639 = vadd.f32 %v433, %v638
        %v640 = vpop.f32.mrb[0].mxu0
        %v641 = vpop.f32.mrb[0].mxu0
        %v642 = vadd.f32 %v433, %v641
        %v643 = vpop.f32.mrb[0].mxu0
        %644 = vmatprep.mubr.bf16.mxu0 %v475
        %645 = vmatmul.mubr.bf16.gmra.mrb[0].mxu0 %v474
        %v646 = vpop.f32.mrb[0].mxu0
        %v647 = vadd.f32 %v433, %v646
        %v648 = vpop.f32.mrb[0].mxu0
        %v649 = vpop.f32.mrb[0].mxu0
        %v650 = vadd.f32 %v433, %v649
        %v651 = vpop.f32.mrb[0].mxu0
        %652 = vmatprep.mubr.bf16.mxu0 %v477
        %653 = vmatmul.mubr.bf16.gmra.mrb[0].mxu0 %v476
        %v654 = vpop.f32.mrb[0].mxu0
        %v655 = vadd.f32 %v433, %v654
        %v656 = vpop.f32.mrb[0].mxu0
        %v657 = vpop.f32.mrb[0].mxu0
        %v658 = vadd.f32 %v433, %v657
        %v659 = vpop.f32.mrb[0].mxu0
        %660 = vmatprep.mubr.bf16.mxu0 %v479
        %661 = vmatmul.mubr.bf16.gmra.mrb[0].mxu0 %v478
        %v662 = vpop.f32.mrb[0].mxu0
        %v663 = vadd.f32 %v433, %v662
        %v664 = vpop.f32.mrb[0].mxu0
        %v665 = vpop.f32.mrb[0].mxu0
        %v666 = vpop.f32.mrb[0].mxu0
        %667 = vdwg.mxu0
        %v668 = vmax.f32 %v623, 0.0
        %v669 = vmax.f32 %v626, 0.0
        %v670 = vmax.f32 %v631, 0.0
        %v671 = vmax.f32 %v634, 0.0
        %v672 = vmax.f32 %v639, 0.0
        %v673 = vmax.f32 %v642, 0.0
        %v674 = vmax.f32 %v647, 0.0
        %v675 = vmax.f32 %v650, 0.0
        %v676 = vmax.f32 %v655, 0.0
        %v677 = vmax.f32 %v658, 0.0
        %v678 = vmax.f32 %v663, 0.0
        %vm679 = vcmask 261120
        %680 = vst.msk [vmem:[#allocation2] sm:$0xff] %vm679, %v668
        %681 = vst.msk [vmem:[#allocation2 + $0x8] sm:$0xff] %vm679, %v669
        %682 = vst.msk [vmem:[#allocation2 + $0x10] sm:$0xff] %vm679, %v670
        %683 = vst.msk [vmem:[#allocation2 + $0x18] sm:$0xff] %vm679, %v671
        %684 = vst.msk [vmem:[#allocation2 + $0x20] sm:$0xff] %vm679, %v672
        %685 = vst.msk [vmem:[#allocation2 + $0x28] sm:$0xff] %vm679, %v673
        %686 = vst.msk [vmem:[#allocation2 + $0x30] sm:$0xff] %vm679, %v674
        %687 = vst.msk [vmem:[#allocation2 + $0x38] sm:$0xff] %vm679, %v675
        %688 = vst.msk [vmem:[#allocation2 + $0x40] sm:$0xff] %vm679, %v676
        %689 = vst.msk [vmem:[#allocation2 + $0x48] sm:$0xff] %vm679, %v677
        %690 = vst.msk [vmem:[#allocation2 + $0x50] sm:$0xff] %vm679, %v678
        %vm691 = vcmask 517120
        %692 = vst.msk [vmem:[#allocation3 + $0x36] sm:$0x3] %vm691, 0.0
        %v693 = vld [vmem:[#allocation2] sm:$0xff]
        %v694 = vld [vmem:[#allocation2 + $0x8] sm:$0xff]
        %v695 = vld [vmem:[#allocation2 + $0x10] sm:$0xff]
        %v696 = vld [vmem:[#allocation2 + $0x18] sm:$0xff]
        %v697 = vld [vmem:[#allocation2 + $0x20] sm:$0xff]
        %v698 = vld [vmem:[#allocation2 + $0x28] sm:$0xff]
        %v699 = vld [vmem:[#allocation2 + $0x30] sm:$0x3f]
        %v700 = vld [vmem:[%s3] sm:$0xf]
        %v701 = vld [vmem:[%s3 + $0x4] sm:$0xf]
        %v702 = vld [vmem:[%s3 + $0x8] sm:$0xf]
        %v703 = vld [vmem:[%s3 + $0xc] sm:$0xf]
        %v704 = vpack.c.bf16 %v694, %v693
        %v705 = vpack.c.bf16 %v696, %v695
        %v706 = vpack.c.bf16 %v698, %v697
        %v707 = vpack.c.bf16 %v699, %v699
        %v708 = vld [vmem:[#allocation2 + $0x1] sm:$0xff]
        %v709 = vld [vmem:[#allocation2 + $0x9] sm:$0xff]
        %v710 = vld [vmem:[#allocation2 + $0x11] sm:$0xff]
        %v711 = vld [vmem:[#allocation2 + $0x19] sm:$0xff]
        %v712 = vld [vmem:[#allocation2 + $0x21] sm:$0xff]
        %v713 = vld [vmem:[#allocation2 + $0x29] sm:$0xff]
        %v714 = vld [vmem:[#allocation2 + $0x31] sm:$0x3f]
        %v715 = vld [vmem:[%s3 + $0x10] sm:$0xf]
        %v716 = vld [vmem:[%s3 + $0x14] sm:$0xf]
        %v717 = vld [vmem:[%s3 + $0x18] sm:$0xf]
        %v718 = vld [vmem:[%s3 + $0x1c] sm:$0xf]
        %v719 = vpack.c.bf16 %v709, %v708
        %v720 = vpack.c.bf16 %v711, %v710
        %v721 = vpack.c.bf16 %v713, %v712
        %v722 = vpack.c.bf16 %v714, %v714
        %v727 = vunpack.c.l.b16 %v715
        %v728 = vunpack.c.l.b16 %v716
        %v729 = vunpack.c.l.b16 %v717
        %v730 = vunpack.c.l.b16 %v718
        %v731 = vpack.c.b16 %v728, %v727
        %v732 = vpack.c.b16 %v730, %v729
        %v736 = vsel %vm679, %v719, 0
        %v739 = vsel %vm679, %v720, 0
        %v742 = vsel %vm679, %v721, 0
        %v745 = vsel %vm679, %v722, 0
        %747 = vmatprep.subr.bf16.mxu0 0
        %748 = vmatpush1.bf16.msra.mxu0 %v731
        %749 = vmatprep.subr.bf16.mxu0 0
        %750 = vmatpush1.bf16.msra.mxu0 %v732
        %751 = vmatprep.subr.bf16.mxu0 0
        %752 = vmatpush1.bf16.msra.mxu0 0
        %753 = vmatprep.subr.bf16.mxu0 0
        %754 = vmatpush1.bf16.msra.mxu0 0
        %755 = vmatprep.subr.bf16.mxu0 0
        %756 = vmatpush1.bf16.msra.mxu0 0
        %757 = vmatprep.subr.bf16.mxu0 0
        %758 = vmatpush1.bf16.msra.mxu0 0
        %759 = vmatprep.subr.bf16.mxu0 0
        %760 = vmatpush1.bf16.msra.mxu0 0
        %761 = vmatprep.subr.bf16.mxu0 0
        %762 = vmatpush1.bf16.msra.mxu0 0
        %763 = vmatprep.subr.bf16.mxu0 0
        %764 = vmatpush1.bf16.msra.mxu0 0
        %765 = vmatprep.subr.bf16.mxu0 0
        %766 = vmatpush1.bf16.msra.mxu0 0
        %767 = vmatprep.subr.bf16.mxu0 0
        %768 = vmatpush1.bf16.msra.mxu0 0
        %769 = vmatprep.subr.bf16.mxu0 0
        %770 = vmatpush1.bf16.msra.mxu0 0
        %771 = vmatprep.subr.bf16.mxu0 0
        %772 = vmatpush1.bf16.msra.mxu0 0
        %773 = vmatprep.subr.bf16.mxu0 0
        %774 = vmatpush1.bf16.msra.mxu0 0
        %775 = vmatprep.subr.bf16.mxu0 0
        %776 = vmatpush1.bf16.msra.mxu0 0
        %777 = vmatprep.subr.bf16.mxu0 0
        %778 = vmatpush1.bf16.msra.mxu0 0
        %779 = vmatprep.mubr.bf16.mxu0 0
        %780 = vmatmul.mubr.bf16.gmra.mrb[0].mxu0 %v736
        %v781 = vpop.f32.mrb[0].mxu0
        %v782 = vadd.f32 0.0, %v781
        %v783 = vpop.f32.mrb[0].mxu0
        %v784 = vpop.f32.mrb[0].mxu0
        %v785 = vadd.f32 0.0, %v784
        %v786 = vpop.f32.mrb[0].mxu0
        %787 = vmatprep.mubr.bf16.mxu0 0
        %788 = vmatmul.mubr.bf16.gmra.mrb[0].mxu0 %v739
        %v789 = vpop.f32.mrb[0].mxu0
        %v790 = vadd.f32 0.0, %v789
        %v791 = vpop.f32.mrb[0].mxu0
        %v792 = vpop.f32.mrb[0].mxu0
        %v793 = vadd.f32 0.0, %v792
        %v794 = vpop.f32.mrb[0].mxu0
        %795 = vmatprep.mubr.bf16.mxu0 0
        %796 = vmatmul.mubr.bf16.gmra.mrb[0].mxu0 %v742
        %v797 = vpop.f32.mrb[0].mxu0
        %v798 = vadd.f32 0.0, %v797
        %v799 = vpop.f32.mrb[0].mxu0
        %v800 = vpop.f32.mrb[0].mxu0
        %v801 = vadd.f32 0.0, %v800
        %v802 = vpop.f32.mrb[0].mxu0
        %803 = vmatprep.mubr.bf16.mxu0 0
        %804 = vmatmul.mubr.bf16.gmra.mrb[0].mxu0 %v745
        %v805 = vpop.f32.mrb[0].mxu0
        %v806 = vadd.f32 0.0, %v805
        %v807 = vpop.f32.mrb[0].mxu0
        %v808 = vpop.f32.mrb[0].mxu0
        %v809 = vpop.f32.mrb[0].mxu0
        %810 = vdwg.mxu0
        %v815 = vunpack.c.l.b16 %v700
        %v816 = vunpack.c.l.b16 %v701
        %v817 = vunpack.c.l.b16 %v702
        %v818 = vunpack.c.l.b16 %v703
        %v819 = vpack.c.b16 %v816, %v815
        %v820 = vpack.c.b16 %v818, %v817
        %v824 = vsel %vm679, %v704, 0
        %v827 = vsel %vm679, %v705, 0
        %v830 = vsel %vm679, %v706, 0
        %v833 = vsel %vm679, %v707, 0
        %835 = vmatprep.subr.bf16.mxu0 0
        %836 = vmatpush1.bf16.msra.mxu0 %v819
        %837 = vmatprep.subr.bf16.mxu0 0
        %838 = vmatpush1.bf16.msra.mxu0 %v820
        %839 = vmatprep.subr.bf16.mxu0 0
        %840 = vmatpush1.bf16.msra.mxu0 0
        %841 = vmatprep.subr.bf16.mxu0 0
        %842 = vmatpush1.bf16.msra.mxu0 0
        %843 = vmatprep.subr.bf16.mxu0 0
        %844 = vmatpush1.bf16.msra.mxu0 0
        %845 = vmatprep.subr.bf16.mxu0 0
        %846 = vmatpush1.bf16.msra.mxu0 0
        %847 = vmatprep.subr.bf16.mxu0 0
        %848 = vmatpush1.bf16.msra.mxu0 0
        %849 = vmatprep.subr.bf16.mxu0 0
        %850 = vmatpush1.bf16.msra.mxu0 0
        %851 = vmatprep.subr.bf16.mxu0 0
        %852 = vmatpush1.bf16.msra.mxu0 0
        %853 = vmatprep.subr.bf16.mxu0 0
        %854 = vmatpush1.bf16.msra.mxu0 0
        %855 = vmatprep.subr.bf16.mxu0 0
        %856 = vmatpush1.bf16.msra.mxu0 0
        %857 = vmatprep.subr.bf16.mxu0 0
        %858 = vmatpush1.bf16.msra.mxu0 0
        %859 = vmatprep.subr.bf16.mxu0 0
        %860 = vmatpush1.bf16.msra.mxu0 0
        %861 = vmatprep.subr.bf16.mxu0 0
        %862 = vmatpush1.bf16.msra.mxu0 0
        %863 = vmatprep.subr.bf16.mxu0 0
        %864 = vmatpush1.bf16.msra.mxu0 0
        %865 = vmatprep.subr.bf16.mxu0 0
        %866 = vmatpush1.bf16.msra.mxu0 0
        %867 = vmatprep.mubr.bf16.mxu0 0
        %868 = vmatmul.mubr.bf16.gmra.mrb[0].mxu0 %v824
        %v869 = vpop.f32.mrb[0].mxu0
        %v870 = vadd.f32 %v782, %v869
        %v871 = vpop.f32.mrb[0].mxu0
        %v872 = vpop.f32.mrb[0].mxu0
        %v873 = vadd.f32 %v785, %v872
        %v874 = vpop.f32.mrb[0].mxu0
        %875 = vmatprep.mubr.bf16.mxu0 0
        %876 = vmatmul.mubr.bf16.gmra.mrb[0].mxu0 %v827
        %v877 = vpop.f32.mrb[0].mxu0
        %v878 = vadd.f32 %v790, %v877
        %v879 = vpop.f32.mrb[0].mxu0
        %v880 = vpop.f32.mrb[0].mxu0
        %v881 = vadd.f32 %v793, %v880
        %v882 = vpop.f32.mrb[0].mxu0
        %883 = vmatprep.mubr.bf16.mxu0 0
        %884 = vmatmul.mubr.bf16.gmra.mrb[0].mxu0 %v830
        %v885 = vpop.f32.mrb[0].mxu0
        %v886 = vadd.f32 %v798, %v885
        %v887 = vpop.f32.mrb[0].mxu0
        %v888 = vpop.f32.mrb[0].mxu0
        %v889 = vadd.f32 %v801, %v888
        %v890 = vpop.f32.mrb[0].mxu0
        %891 = vmatprep.mubr.bf16.mxu0 0
        %892 = vmatmul.mubr.bf16.gmra.mrb[0].mxu0 %v833
        %v893 = vpop.f32.mrb[0].mxu0
        %v894 = vadd.f32 %v806, %v893
        %v895 = vpop.f32.mrb[0].mxu0
        %v896 = vpop.f32.mrb[0].mxu0
        %v897 = vpop.f32.mrb[0].mxu0
        %898 = vdwg.mxu0
        %v899 = vld [vmem:[#allocation2 + $0x2] sm:$0xff]
        %v900 = vld [vmem:[#allocation2 + $0xa] sm:$0xff]
        %v901 = vld [vmem:[#allocation2 + $0x12] sm:$0xff]
        %v902 = vld [vmem:[#allocation2 + $0x1a] sm:$0xff]
        %v903 = vld [vmem:[#allocation2 + $0x22] sm:$0xff]
        %v904 = vld [vmem:[#allocation2 + $0x2a] sm:$0xff]
        %v905 = vld [vmem:[#allocation2 + $0x32] sm:$0x3f]
        %v906 = vld [vmem:[%s3 + $0x20] sm:$0xf]
        %v907 = vld [vmem:[%s3 + $0x24] sm:$0xf]
        %v908 = vld [vmem:[%s3 + $0x28] sm:$0xf]
        %v909 = vld [vmem:[%s3 + $0x2c] sm:$0xf]
        %v910 = vpack.c.bf16 %v900, %v899
        %v911 = vpack.c.bf16 %v902, %v901
        %v912 = vpack.c.bf16 %v904, %v903
        %v913 = vpack.c.bf16 %v905, %v905
        %v918 = vunpack.c.l.b16 %v906
        %v919 = vunpack.c.l.b16 %v907
        %v920 = vunpack.c.l.b16 %v908
        %v921 = vunpack.c.l.b16 %v909
        %v922 = vpack.c.b16 %v919, %v918
        %v923 = vpack.c.b16 %v921, %v920
        %v927 = vsel %vm679, %v910, 0
        %v930 = vsel %vm679, %v911, 0
        %v933 = vsel %vm679, %v912, 0
        %v936 = vsel %vm679, %v913, 0
        %938 = vmatprep.subr.bf16.mxu0 0
        %939 = vmatpush1.bf16.msra.mxu0 %v922
        %940 = vmatprep.subr.bf16.mxu0 0
        %941 = vmatpush1.bf16.msra.mxu0 %v923
        %942 = vmatprep.subr.bf16.mxu0 0
        %943 = vmatpush1.bf16.msra.mxu0 0
        %944 = vmatprep.subr.bf16.mxu0 0
        %945 = vmatpush1.bf16.msra.mxu0 0
        %946 = vmatprep.subr.bf16.mxu0 0
        %947 = vmatpush1.bf16.msra.mxu0 0
        %948 = vmatprep.subr.bf16.mxu0 0
        %949 = vmatpush1.bf16.msra.mxu0 0
        %950 = vmatprep.subr.bf16.mxu0 0
        %951 = vmatpush1.bf16.msra.mxu0 0
        %952 = vmatprep.subr.bf16.mxu0 0
        %953 = vmatpush1.bf16.msra.mxu0 0
        %954 = vmatprep.subr.bf16.mxu0 0
        %955 = vmatpush1.bf16.msra.mxu0 0
        %956 = vmatprep.subr.bf16.mxu0 0
        %957 = vmatpush1.bf16.msra.mxu0 0
        %958 = vmatprep.subr.bf16.mxu0 0
        %959 = vmatpush1.bf16.msra.mxu0 0
        %960 = vmatprep.subr.bf16.mxu0 0
        %961 = vmatpush1.bf16.msra.mxu0 0
        %962 = vmatprep.subr.bf16.mxu0 0
        %963 = vmatpush1.bf16.msra.mxu0 0
        %964 = vmatprep.subr.bf16.mxu0 0
        %965 = vmatpush1.bf16.msra.mxu0 0
        %966 = vmatprep.subr.bf16.mxu0 0
        %967 = vmatpush1.bf16.msra.mxu0 0
        %968 = vmatprep.subr.bf16.mxu0 0
        %969 = vmatpush1.bf16.msra.mxu0 0
        %970 = vmatprep.mubr.bf16.mxu0 0
        %971 = vmatmul.mubr.bf16.gmra.mrb[0].mxu0 %v927
        %v972 = vpop.f32.mrb[0].mxu0
        %v973 = vadd.f32 0.0, %v972
        %v974 = vpop.f32.mrb[0].mxu0
        %v975 = vpop.f32.mrb[0].mxu0
        %v976 = vadd.f32 0.0, %v975
        %v977 = vpop.f32.mrb[0].mxu0
        %978 = vmatprep.mubr.bf16.mxu0 0
        %979 = vmatmul.mubr.bf16.gmra.mrb[0].mxu0 %v930
        %v980 = vpop.f32.mrb[0].mxu0
        %v981 = vadd.f32 0.0, %v980
        %v982 = vpop.f32.mrb[0].mxu0
        %v983 = vpop.f32.mrb[0].mxu0
        %v984 = vadd.f32 0.0, %v983
        %v985 = vpop.f32.mrb[0].mxu0
        %986 = vmatprep.mubr.bf16.mxu0 0
        %987 = vmatmul.mubr.bf16.gmra.mrb[0].mxu0 %v933
        %v988 = vpop.f32.mrb[0].mxu0
        %v989 = vadd.f32 0.0, %v988
        %v990 = vpop.f32.mrb[0].mxu0
        %v991 = vpop.f32.mrb[0].mxu0
        %v992 = vadd.f32 0.0, %v991
        %v993 = vpop.f32.mrb[0].mxu0
        %994 = vmatprep.mubr.bf16.mxu0 0
        %995 = vmatmul.mubr.bf16.gmra.mrb[0].mxu0 %v936
        %v996 = vpop.f32.mrb[0].mxu0
        %v997 = vadd.f32 0.0, %v996
        %v998 = vpop.f32.mrb[0].mxu0
        %v999 = vpop.f32.mrb[0].mxu0
        %v1000 = vpop.f32.mrb[0].mxu0
        %1001 = vdwg.mxu0
        %v1002 = vadd.f32 %v870, %v973
        %v1003 = vadd.f32 %v873, %v976
        %v1004 = vadd.f32 %v878, %v981
        %v1005 = vadd.f32 %v881, %v984
        %v1006 = vadd.f32 %v886, %v989
        %v1007 = vadd.f32 %v889, %v992
        %v1008 = vadd.f32 %v894, %v997
        %v1009 = vld [vmem:[#allocation2 + $0x3] sm:$0xff]
        %v1010 = vld [vmem:[#allocation2 + $0xb] sm:$0xff]
        %v1011 = vld [vmem:[#allocation2 + $0x13] sm:$0xff]
        %v1012 = vld [vmem:[#allocation2 + $0x1b] sm:$0xff]
        %v1013 = vld [vmem:[#allocation2 + $0x23] sm:$0xff]
        %v1014 = vld [vmem:[#allocation2 + $0x2b] sm:$0xff]
        %v1015 = vld [vmem:[#allocation2 + $0x33] sm:$0x3f]
        %v1016 = vld [vmem:[%s3 + $0x30] sm:$0xf]
        %v1017 = vld [vmem:[%s3 + $0x34] sm:$0xf]
        %v1018 = vld [vmem:[%s3 + $0x38] sm:$0xf]
        %v1019 = vld [vmem:[%s3 + $0x3c] sm:$0xf]
        %v1020 = vpack.c.bf16 %v1010, %v1009
        %v1021 = vpack.c.bf16 %v1012, %v1011
        %v1022 = vpack.c.bf16 %v1014, %v1013
        %v1023 = vpack.c.bf16 %v1015, %v1015
        %v1028 = vunpack.c.l.b16 %v1016
        %v1029 = vunpack.c.l.b16 %v1017
        %v1030 = vunpack.c.l.b16 %v1018
        %v1031 = vunpack.c.l.b16 %v1019
        %v1032 = vpack.c.b16 %v1029, %v1028
        %v1033 = vpack.c.b16 %v1031, %v1030
        %v1037 = vsel %vm679, %v1020, 0
        %v1040 = vsel %vm679, %v1021, 0
        %v1043 = vsel %vm679, %v1022, 0
        %v1046 = vsel %vm679, %v1023, 0
        %1048 = vmatprep.subr.bf16.mxu0 0
        %1049 = vmatpush1.bf16.msra.mxu0 %v1032
        %1050 = vmatprep.subr.bf16.mxu0 0
        %1051 = vmatpush1.bf16.msra.mxu0 %v1033
        %1052 = vmatprep.subr.bf16.mxu0 0
        %1053 = vmatpush1.bf16.msra.mxu0 0
        %1054 = vmatprep.subr.bf16.mxu0 0
        %1055 = vmatpush1.bf16.msra.mxu0 0
        %1056 = vmatprep.subr.bf16.mxu0 0
        %1057 = vmatpush1.bf16.msra.mxu0 0
        %1058 = vmatprep.subr.bf16.mxu0 0
        %1059 = vmatpush1.bf16.msra.mxu0 0
        %1060 = vmatprep.subr.bf16.mxu0 0
        %1061 = vmatpush1.bf16.msra.mxu0 0
        %1062 = vmatprep.subr.bf16.mxu0 0
        %1063 = vmatpush1.bf16.msra.mxu0 0
        %1064 = vmatprep.subr.bf16.mxu0 0
        %1065 = vmatpush1.bf16.msra.mxu0 0
        %1066 = vmatprep.subr.bf16.mxu0 0
        %1067 = vmatpush1.bf16.msra.mxu0 0
        %1068 = vmatprep.subr.bf16.mxu0 0
        %1069 = vmatpush1.bf16.msra.mxu0 0
        %1070 = vmatprep.subr.bf16.mxu0 0
        %1071 = vmatpush1.bf16.msra.mxu0 0
        %1072 = vmatprep.subr.bf16.mxu0 0
        %1073 = vmatpush1.bf16.msra.mxu0 0
        %1074 = vmatprep.subr.bf16.mxu0 0
        %1075 = vmatpush1.bf16.msra.mxu0 0
        %1076 = vmatprep.subr.bf16.mxu0 0
        %1077 = vmatpush1.bf16.msra.mxu0 0
        %1078 = vmatprep.subr.bf16.mxu0 0
        %1079 = vmatpush1.bf16.msra.mxu0 0
        %1080 = vmatprep.mubr.bf16.mxu0 0
        %1081 = vmatmul.mubr.bf16.gmra.mrb[0].mxu0 %v1037
        %v1082 = vpop.f32.mrb[0].mxu0
        %v1083 = vadd.f32 0.0, %v1082
        %v1084 = vpop.f32.mrb[0].mxu0
        %v1085 = vpop.f32.mrb[0].mxu0
        %v1086 = vadd.f32 0.0, %v1085
        %v1087 = vpop.f32.mrb[0].mxu0
        %1088 = vmatprep.mubr.bf16.mxu0 0
        %1089 = vmatmul.mubr.bf16.gmra.mrb[0].mxu0 %v1040
        %v1090 = vpop.f32.mrb[0].mxu0
        %v1091 = vadd.f32 0.0, %v1090
        %v1092 = vpop.f32.mrb[0].mxu0
        %v1093 = vpop.f32.mrb[0].mxu0
        %v1094 = vadd.f32 0.0, %v1093
        %v1095 = vpop.f32.mrb[0].mxu0
        %1096 = vmatprep.mubr.bf16.mxu0 0
        %1097 = vmatmul.mubr.bf16.gmra.mrb[0].mxu0 %v1043
        %v1098 = vpop.f32.mrb[0].mxu0
        %v1099 = vadd.f32 0.0, %v1098
        %v1100 = vpop.f32.mrb[0].mxu0
        %v1101 = vpop.f32.mrb[0].mxu0
        %v1102 = vadd.f32 0.0, %v1101
        %v1103 = vpop.f32.mrb[0].mxu0
        %1104 = vmatprep.mubr.bf16.mxu0 0
        %1105 = vmatmul.mubr.bf16.gmra.mrb[0].mxu0 %v1046
        %v1106 = vpop.f32.mrb[0].mxu0
        %v1107 = vadd.f32 0.0, %v1106
        %v1108 = vpop.f32.mrb[0].mxu0
        %v1109 = vpop.f32.mrb[0].mxu0
        %v1110 = vpop.f32.mrb[0].mxu0
        %1111 = vdwg.mxu0
        %v1112 = vadd.f32 %v1002, %v1083
        %v1113 = vadd.f32 %v1003, %v1086
        %v1114 = vadd.f32 %v1004, %v1091
        %v1115 = vadd.f32 %v1005, %v1094
        %v1116 = vadd.f32 %v1006, %v1099
        %v1117 = vadd.f32 %v1007, %v1102
        %v1118 = vadd.f32 %v1008, %v1107
        %v1119 = vld [vmem:[#allocation2 + $0x9] sm:$0xff]
        %v1120 = vld [vmem:[#allocation2 + $0x11] sm:$0xff]
        %v1121 = vld [vmem:[#allocation2 + $0x19] sm:$0xff]
        %v1122 = vld [vmem:[#allocation2 + $0x21] sm:$0xff]
        %v1123 = vld [vmem:[#allocation2 + $0x29] sm:$0xff]
        %v1124 = vld [vmem:[#allocation2 + $0x31] sm:$0xff]
        %v1125 = vld [vmem:[#allocation2 + $0x39] sm:$0x3f]
        %v1126 = vld [vmem:[%s3 + $0x40] sm:$0xf]
        %v1127 = vld [vmem:[%s3 + $0x44] sm:$0xf]
        %v1128 = vld [vmem:[%s3 + $0x48] sm:$0xf]
        %v1129 = vld [vmem:[%s3 + $0x4c] sm:$0xf]
        %v1130 = vpack.c.bf16 %v1120, %v1119
        %v1131 = vpack.c.bf16 %v1122, %v1121
        %v1132 = vpack.c.bf16 %v1124, %v1123
        %v1133 = vpack.c.bf16 %v1125, %v1125
        %v1138 = vunpack.c.l.b16 %v1126
        %v1139 = vunpack.c.l.b16 %v1127
        %v1140 = vunpack.c.l.b16 %v1128
        %v1141 = vunpack.c.l.b16 %v1129
        %v1142 = vpack.c.b16 %v1139, %v1138
        %v1143 = vpack.c.b16 %v1141, %v1140
        %v1147 = vsel %vm679, %v1130, 0
        %v1150 = vsel %vm679, %v1131, 0
        %v1153 = vsel %vm679, %v1132, 0
        %v1156 = vsel %vm679, %v1133, 0
        %1158 = vmatprep.subr.bf16.mxu0 0
        %1159 = vmatpush1.bf16.msra.mxu0 %v1142
        %1160 = vmatprep.subr.bf16.mxu0 0
        %1161 = vmatpush1.bf16.msra.mxu0 %v1143
        %1162 = vmatprep.subr.bf16.mxu0 0
        %1163 = vmatpush1.bf16.msra.mxu0 0
        %1164 = vmatprep.subr.bf16.mxu0 0
        %1165 = vmatpush1.bf16.msra.mxu0 0
        %1166 = vmatprep.subr.bf16.mxu0 0
        %1167 = vmatpush1.bf16.msra.mxu0 0
        %1168 = vmatprep.subr.bf16.mxu0 0
        %1169 = vmatpush1.bf16.msra.mxu0 0
        %1170 = vmatprep.subr.bf16.mxu0 0
        %1171 = vmatpush1.bf16.msra.mxu0 0
        %1172 = vmatprep.subr.bf16.mxu0 0
        %1173 = vmatpush1.bf16.msra.mxu0 0
        %1174 = vmatprep.subr.bf16.mxu0 0
        %1175 = vmatpush1.bf16.msra.mxu0 0
        %1176 = vmatprep.subr.bf16.mxu0 0
        %1177 = vmatpush1.bf16.msra.mxu0 0
        %1178 = vmatprep.subr.bf16.mxu0 0
        %1179 = vmatpush1.bf16.msra.mxu0 0
        %1180 = vmatprep.subr.bf16.mxu0 0
        %1181 = vmatpush1.bf16.msra.mxu0 0
        %1182 = vmatprep.subr.bf16.mxu0 0
        %1183 = vmatpush1.bf16.msra.mxu0 0
        %1184 = vmatprep.subr.bf16.mxu0 0
        %1185 = vmatpush1.bf16.msra.mxu0 0
        %1186 = vmatprep.subr.bf16.mxu0 0
        %1187 = vmatpush1.bf16.msra.mxu0 0
        %1188 = vmatprep.subr.bf16.mxu0 0
        %1189 = vmatpush1.bf16.msra.mxu0 0
        %1190 = vmatprep.mubr.bf16.mxu0 0
        %1191 = vmatmul.mubr.bf16.gmra.mrb[0].mxu0 %v1147
        %v1192 = vpop.f32.mrb[0].mxu0
        %v1193 = vadd.f32 0.0, %v1192
        %v1194 = vpop.f32.mrb[0].mxu0
        %v1195 = vpop.f32.mrb[0].mxu0
        %v1196 = vadd.f32 0.0, %v1195
        %v1197 = vpop.f32.mrb[0].mxu0
        %1198 = vmatprep.mubr.bf16.mxu0 0
        %1199 = vmatmul.mubr.bf16.gmra.mrb[0].mxu0 %v1150
        %v1200 = vpop.f32.mrb[0].mxu0
        %v1201 = vadd.f32 0.0, %v1200
        %v1202 = vpop.f32.mrb[0].mxu0
        %v1203 = vpop.f32.mrb[0].mxu0
        %v1204 = vadd.f32 0.0, %v1203
        %v1205 = vpop.f32.mrb[0].mxu0
        %1206 = vmatprep.mubr.bf16.mxu0 0
        %1207 = vmatmul.mubr.bf16.gmra.mrb[0].mxu0 %v1153
        %v1208 = vpop.f32.mrb[0].mxu0
        %v1209 = vadd.f32 0.0, %v1208
        %v1210 = vpop.f32.mrb[0].mxu0
        %v1211 = vpop.f32.mrb[0].mxu0
        %v1212 = vadd.f32 0.0, %v1211
        %v1213 = vpop.f32.mrb[0].mxu0
        %1214 = vmatprep.mubr.bf16.mxu0 0
        %1215 = vmatmul.mubr.bf16.gmra.mrb[0].mxu0 %v1156
        %v1216 = vpop.f32.mrb[0].mxu0
        %v1217 = vadd.f32 0.0, %v1216
        %v1218 = vpop.f32.mrb[0].mxu0
        %v1219 = vpop.f32.mrb[0].mxu0
        %v1220 = vpop.f32.mrb[0].mxu0
        %1221 = vdwg.mxu0
        %v1222 = vadd.f32 %v1112, %v1193
        %v1223 = vadd.f32 %v1113, %v1196
        %v1224 = vadd.f32 %v1114, %v1201
        %v1225 = vadd.f32 %v1115, %v1204
        %v1226 = vadd.f32 %v1116, %v1209
        %v1227 = vadd.f32 %v1117, %v1212
        %v1228 = vadd.f32 %v1118, %v1217
        %v1229 = vld [vmem:[#allocation2 + $0xa] sm:$0xff]
        %v1230 = vld [vmem:[#allocation2 + $0x12] sm:$0xff]
        %v1231 = vld [vmem:[#allocation2 + $0x1a] sm:$0xff]
        %v1232 = vld [vmem:[#allocation2 + $0x22] sm:$0xff]
        %v1233 = vld [vmem:[#allocation2 + $0x2a] sm:$0xff]
        %v1234 = vld [vmem:[#allocation2 + $0x32] sm:$0xff]
        %v1235 = vld [vmem:[#allocation2 + $0x3a] sm:$0x3f]
        %v1236 = vld [vmem:[%s3 + $0x50] sm:$0xf]
        %v1237 = vld [vmem:[%s3 + $0x54] sm:$0xf]
        %v1238 = vld [vmem:[%s3 + $0x58] sm:$0xf]
        %v1239 = vld [vmem:[%s3 + $0x5c] sm:$0xf]
        %v1240 = vpack.c.bf16 %v1230, %v1229
        %v1241 = vpack.c.bf16 %v1232, %v1231
        %v1242 = vpack.c.bf16 %v1234, %v1233
        %v1243 = vpack.c.bf16 %v1235, %v1235
        %v1248 = vunpack.c.l.b16 %v1236
        %v1249 = vunpack.c.l.b16 %v1237
        %v1250 = vunpack.c.l.b16 %v1238
        %v1251 = vunpack.c.l.b16 %v1239
        %v1252 = vpack.c.b16 %v1249, %v1248
        %v1253 = vpack.c.b16 %v1251, %v1250
        %v1257 = vsel %vm679, %v1240, 0
        %v1260 = vsel %vm679, %v1241, 0
        %v1263 = vsel %vm679, %v1242, 0
        %v1266 = vsel %vm679, %v1243, 0
        %1268 = vmatprep.subr.bf16.mxu0 0
        %1269 = vmatpush1.bf16.msra.mxu0 %v1252
        %1270 = vmatprep.subr.bf16.mxu0 0
        %1271 = vmatpush1.bf16.msra.mxu0 %v1253
        %1272 = vmatprep.subr.bf16.mxu0 0
        %1273 = vmatpush1.bf16.msra.mxu0 0
        %1274 = vmatprep.subr.bf16.mxu0 0
        %1275 = vmatpush1.bf16.msra.mxu0 0
        %1276 = vmatprep.subr.bf16.mxu0 0
        %1277 = vmatpush1.bf16.msra.mxu0 0
        %1278 = vmatprep.subr.bf16.mxu0 0
        %1279 = vmatpush1.bf16.msra.mxu0 0
        %1280 = vmatprep.subr.bf16.mxu0 0
        %1281 = vmatpush1.bf16.msra.mxu0 0
        %1282 = vmatprep.subr.bf16.mxu0 0
        %1283 = vmatpush1.bf16.msra.mxu0 0
        %1284 = vmatprep.subr.bf16.mxu0 0
        %1285 = vmatpush1.bf16.msra.mxu0 0
        %1286 = vmatprep.subr.bf16.mxu0 0
        %1287 = vmatpush1.bf16.msra.mxu0 0
        %1288 = vmatprep.subr.bf16.mxu0 0
        %1289 = vmatpush1.bf16.msra.mxu0 0
        %1290 = vmatprep.subr.bf16.mxu0 0
        %1291 = vmatpush1.bf16.msra.mxu0 0
        %1292 = vmatprep.subr.bf16.mxu0 0
        %1293 = vmatpush1.bf16.msra.mxu0 0
        %1294 = vmatprep.subr.bf16.mxu0 0
        %1295 = vmatpush1.bf16.msra.mxu0 0
        %1296 = vmatprep.subr.bf16.mxu0 0
        %1297 = vmatpush1.bf16.msra.mxu0 0
        %1298 = vmatprep.subr.bf16.mxu0 0
        %1299 = vmatpush1.bf16.msra.mxu0 0
        %1300 = vmatprep.mubr.bf16.mxu0 0
        %1301 = vmatmul.mubr.bf16.gmra.mrb[0].mxu0 %v1257
        %v1302 = vpop.f32.mrb[0].mxu0
        %v1303 = vadd.f32 0.0, %v1302
        %v1304 = vpop.f32.mrb[0].mxu0
        %v1305 = vpop.f32.mrb[0].mxu0
        %v1306 = vadd.f32 0.0, %v1305
        %v1307 = vpop.f32.mrb[0].mxu0
        %1308 = vmatprep.mubr.bf16.mxu0 0
        %1309 = vmatmul.mubr.bf16.gmra.mrb[0].mxu0 %v1260
        %v1310 = vpop.f32.mrb[0].mxu0
        %v1311 = vadd.f32 0.0, %v1310
        %v1312 = vpop.f32.mrb[0].mxu0
        %v1313 = vpop.f32.mrb[0].mxu0
        %v1314 = vadd.f32 0.0, %v1313
        %v1315 = vpop.f32.mrb[0].mxu0
        %1316 = vmatprep.mubr.bf16.mxu0 0
        %1317 = vmatmul.mubr.bf16.gmra.mrb[0].mxu0 %v1263
        %v1318 = vpop.f32.mrb[0].mxu0
        %v1319 = vadd.f32 0.0, %v1318
        %v1320 = vpop.f32.mrb[0].mxu0
        %v1321 = vpop.f32.mrb[0].mxu0
        %v1322 = vadd.f32 0.0, %v1321
        %v1323 = vpop.f32.mrb[0].mxu0
        %1324 = vmatprep.mubr.bf16.mxu0 0
        %1325 = vmatmul.mubr.bf16.gmra.mrb[0].mxu0 %v1266
        %v1326 = vpop.f32.mrb[0].mxu0
        %v1327 = vadd.f32 0.0, %v1326
        %v1328 = vpop.f32.mrb[0].mxu0
        %v1329 = vpop.f32.mrb[0].mxu0
        %v1330 = vpop.f32.mrb[0].mxu0
        %1331 = vdwg.mxu0
        %v1332 = vadd.f32 %v1222, %v1303
        %v1333 = vadd.f32 %v1223, %v1306
        %v1334 = vadd.f32 %v1224, %v1311
        %v1335 = vadd.f32 %v1225, %v1314
        %v1336 = vadd.f32 %v1226, %v1319
        %v1337 = vadd.f32 %v1227, %v1322
        %v1338 = vadd.f32 %v1228, %v1327
        %v1339 = vld [vmem:[#allocation2 + $0xb] sm:$0xff]
        %v1340 = vld [vmem:[#allocation2 + $0x13] sm:$0xff]
        %v1341 = vld [vmem:[#allocation2 + $0x1b] sm:$0xff]
        %v1342 = vld [vmem:[#allocation2 + $0x23] sm:$0xff]
        %v1343 = vld [vmem:[#allocation2 + $0x2b] sm:$0xff]
        %v1344 = vld [vmem:[#allocation2 + $0x33] sm:$0xff]
        %v1345 = vld [vmem:[#allocation2 + $0x3b] sm:$0x3f]
        %v1346 = vld [vmem:[%s3 + $0x60] sm:$0xf]
        %v1347 = vld [vmem:[%s3 + $0x64] sm:$0xf]
        %v1348 = vld [vmem:[%s3 + $0x68] sm:$0xf]
        %v1349 = vld [vmem:[%s3 + $0x6c] sm:$0xf]
        %v1350 = vpack.c.bf16 %v1340, %v1339
        %v1351 = vpack.c.bf16 %v1342, %v1341
        %v1352 = vpack.c.bf16 %v1344, %v1343
        %v1353 = vpack.c.bf16 %v1345, %v1345
        %v1358 = vunpack.c.l.b16 %v1346
        %v1359 = vunpack.c.l.b16 %v1347
        %v1360 = vunpack.c.l.b16 %v1348
        %v1361 = vunpack.c.l.b16 %v1349
        %v1362 = vpack.c.b16 %v1359, %v1358
        %v1363 = vpack.c.b16 %v1361, %v1360
        %v1367 = vsel %vm679, %v1350, 0
        %v1370 = vsel %vm679, %v1351, 0
        %v1373 = vsel %vm679, %v1352, 0
        %v1376 = vsel %vm679, %v1353, 0
        %1378 = vmatprep.subr.bf16.mxu0 0
        %1379 = vmatpush1.bf16.msra.mxu0 %v1362
        %1380 = vmatprep.subr.bf16.mxu0 0
        %1381 = vmatpush1.bf16.msra.mxu0 %v1363
        %1382 = vmatprep.subr.bf16.mxu0 0
        %1383 = vmatpush1.bf16.msra.mxu0 0
        %1384 = vmatprep.subr.bf16.mxu0 0
        %1385 = vmatpush1.bf16.msra.mxu0 0
        %1386 = vmatprep.subr.bf16.mxu0 0
        %1387 = vmatpush1.bf16.msra.mxu0 0
        %1388 = vmatprep.subr.bf16.mxu0 0
        %1389 = vmatpush1.bf16.msra.mxu0 0
        %1390 = vmatprep.subr.bf16.mxu0 0
        %1391 = vmatpush1.bf16.msra.mxu0 0
        %1392 = vmatprep.subr.bf16.mxu0 0
        %1393 = vmatpush1.bf16.msra.mxu0 0
        %1394 = vmatprep.subr.bf16.mxu0 0
        %1395 = vmatpush1.bf16.msra.mxu0 0
        %1396 = vmatprep.subr.bf16.mxu0 0
        %1397 = vmatpush1.bf16.msra.mxu0 0
        %1398 = vmatprep.subr.bf16.mxu0 0
        %1399 = vmatpush1.bf16.msra.mxu0 0
        %1400 = vmatprep.subr.bf16.mxu0 0
        %1401 = vmatpush1.bf16.msra.mxu0 0
        %1402 = vmatprep.subr.bf16.mxu0 0
        %1403 = vmatpush1.bf16.msra.mxu0 0
        %1404 = vmatprep.subr.bf16.mxu0 0
        %1405 = vmatpush1.bf16.msra.mxu0 0
        %1406 = vmatprep.subr.bf16.mxu0 0
        %1407 = vmatpush1.bf16.msra.mxu0 0
        %1408 = vmatprep.subr.bf16.mxu0 0
        %1409 = vmatpush1.bf16.msra.mxu0 0
        %1410 = vmatprep.mubr.bf16.mxu0 0
        %1411 = vmatmul.mubr.bf16.gmra.mrb[0].mxu0 %v1367
        %v1412 = vpop.f32.mrb[0].mxu0
        %v1413 = vadd.f32 0.0, %v1412
        %v1414 = vpop.f32.mrb[0].mxu0
        %v1415 = vpop.f32.mrb[0].mxu0
        %v1416 = vadd.f32 0.0, %v1415
        %v1417 = vpop.f32.mrb[0].mxu0
        %1418 = vmatprep.mubr.bf16.mxu0 0
        %1419 = vmatmul.mubr.bf16.gmra.mrb[0].mxu0 %v1370
        %v1420 = vpop.f32.mrb[0].mxu0
        %v1421 = vadd.f32 0.0, %v1420
        %v1422 = vpop.f32.mrb[0].mxu0
        %v1423 = vpop.f32.mrb[0].mxu0
        %v1424 = vadd.f32 0.0, %v1423
        %v1425 = vpop.f32.mrb[0].mxu0
        %1426 = vmatprep.mubr.bf16.mxu0 0
        %1427 = vmatmul.mubr.bf16.gmra.mrb[0].mxu0 %v1373
        %v1428 = vpop.f32.mrb[0].mxu0
        %v1429 = vadd.f32 0.0, %v1428
        %v1430 = vpop.f32.mrb[0].mxu0
        %v1431 = vpop.f32.mrb[0].mxu0
        %v1432 = vadd.f32 0.0, %v1431
        %v1433 = vpop.f32.mrb[0].mxu0
        %1434 = vmatprep.mubr.bf16.mxu0 0
        %1435 = vmatmul.mubr.bf16.gmra.mrb[0].mxu0 %v1376
        %v1436 = vpop.f32.mrb[0].mxu0
        %v1437 = vadd.f32 0.0, %v1436
        %v1438 = vpop.f32.mrb[0].mxu0
        %v1439 = vpop.f32.mrb[0].mxu0
        %v1440 = vpop.f32.mrb[0].mxu0
        %1441 = vdwg.mxu0
        %v1442 = vadd.f32 %v1332, %v1413
        %v1443 = vadd.f32 %v1333, %v1416
        %v1444 = vadd.f32 %v1334, %v1421
        %v1445 = vadd.f32 %v1335, %v1424
        %v1446 = vadd.f32 %v1336, %v1429
        %v1447 = vadd.f32 %v1337, %v1432
        %v1448 = vadd.f32 %v1338, %v1437
        %v1449 = vld [vmem:[#allocation2 + $0xc] sm:$0xff]
        %v1450 = vld [vmem:[#allocation2 + $0x14] sm:$0xff]
        %v1451 = vld [vmem:[#allocation2 + $0x1c] sm:$0xff]
        %v1452 = vld [vmem:[#allocation2 + $0x24] sm:$0xff]
        %v1453 = vld [vmem:[#allocation2 + $0x2c] sm:$0xff]
        %v1454 = vld [vmem:[#allocation2 + $0x34] sm:$0xff]
        %v1455 = vld [vmem:[#allocation2 + $0x3c] sm:$0x3f]
        %v1456 = vld [vmem:[%s3 + $0x70] sm:$0xf]
        %v1457 = vld [vmem:[%s3 + $0x74] sm:$0xf]
        %v1458 = vld [vmem:[%s3 + $0x78] sm:$0xf]
        %v1459 = vld [vmem:[%s3 + $0x7c] sm:$0xf]
        %v1460 = vpack.c.bf16 %v1450, %v1449
        %v1461 = vpack.c.bf16 %v1452, %v1451
        %v1462 = vpack.c.bf16 %v1454, %v1453
        %v1463 = vpack.c.bf16 %v1455, %v1455
        %v1468 = vunpack.c.l.b16 %v1456
        %v1469 = vunpack.c.l.b16 %v1457
        %v1470 = vunpack.c.l.b16 %v1458
        %v1471 = vunpack.c.l.b16 %v1459
        %v1472 = vpack.c.b16 %v1469, %v1468
        %v1473 = vpack.c.b16 %v1471, %v1470
        %v1477 = vsel %vm679, %v1460, 0
        %v1480 = vsel %vm679, %v1461, 0
        %v1483 = vsel %vm679, %v1462, 0
        %v1486 = vsel %vm679, %v1463, 0
        %1488 = vmatprep.subr.bf16.mxu0 0
        %1489 = vmatpush1.bf16.msra.mxu0 %v1472
        %1490 = vmatprep.subr.bf16.mxu0 0
        %1491 = vmatpush1.bf16.msra.mxu0 %v1473
        %1492 = vmatprep.subr.bf16.mxu0 0
        %1493 = vmatpush1.bf16.msra.mxu0 0
        %1494 = vmatprep.subr.bf16.mxu0 0
        %1495 = vmatpush1.bf16.msra.mxu0 0
        %1496 = vmatprep.subr.bf16.mxu0 0
        %1497 = vmatpush1.bf16.msra.mxu0 0
        %1498 = vmatprep.subr.bf16.mxu0 0
        %1499 = vmatpush1.bf16.msra.mxu0 0
        %1500 = vmatprep.subr.bf16.mxu0 0
        %1501 = vmatpush1.bf16.msra.mxu0 0
        %1502 = vmatprep.subr.bf16.mxu0 0
        %1503 = vmatpush1.bf16.msra.mxu0 0
        %1504 = vmatprep.subr.bf16.mxu0 0
        %1505 = vmatpush1.bf16.msra.mxu0 0
        %1506 = vmatprep.subr.bf16.mxu0 0
        %1507 = vmatpush1.bf16.msra.mxu0 0
        %1508 = vmatprep.subr.bf16.mxu0 0
        %1509 = vmatpush1.bf16.msra.mxu0 0
        %1510 = vmatprep.subr.bf16.mxu0 0
        %1511 = vmatpush1.bf16.msra.mxu0 0
        %1512 = vmatprep.subr.bf16.mxu0 0
        %1513 = vmatpush1.bf16.msra.mxu0 0
        %1514 = vmatprep.subr.bf16.mxu0 0
        %1515 = vmatpush1.bf16.msra.mxu0 0
        %1516 = vmatprep.subr.bf16.mxu0 0
        %1517 = vmatpush1.bf16.msra.mxu0 0
        %1518 = vmatprep.subr.bf16.mxu0 0
        %1519 = vmatpush1.bf16.msra.mxu0 0
        %1520 = vmatprep.mubr.bf16.mxu0 0
        %1521 = vmatmul.mubr.bf16.gmra.mrb[0].mxu0 %v1477
        %v1522 = vpop.f32.mrb[0].mxu0
        %v1523 = vadd.f32 0.0, %v1522
        %v1524 = vpop.f32.mrb[0].mxu0
        %v1525 = vpop.f32.mrb[0].mxu0
        %v1526 = vadd.f32 0.0, %v1525
        %v1527 = vpop.f32.mrb[0].mxu0
        %1528 = vmatprep.mubr.bf16.mxu0 0
        %1529 = vmatmul.mubr.bf16.gmra.mrb[0].mxu0 %v1480
        %v1530 = vpop.f32.mrb[0].mxu0
        %v1531 = vadd.f32 0.0, %v1530
        %v1532 = vpop.f32.mrb[0].mxu0
        %v1533 = vpop.f32.mrb[0].mxu0
        %v1534 = vadd.f32 0.0, %v1533
        %v1535 = vpop.f32.mrb[0].mxu0
        %1536 = vmatprep.mubr.bf16.mxu0 0
        %1537 = vmatmul.mubr.bf16.gmra.mrb[0].mxu0 %v1483
        %v1538 = vpop.f32.mrb[0].mxu0
        %v1539 = vadd.f32 0.0, %v1538
        %v1540 = vpop.f32.mrb[0].mxu0
        %v1541 = vpop.f32.mrb[0].mxu0
        %v1542 = vadd.f32 0.0, %v1541
        %v1543 = vpop.f32.mrb[0].mxu0
        %1544 = vmatprep.mubr.bf16.mxu0 0
        %1545 = vmatmul.mubr.bf16.gmra.mrb[0].mxu0 %v1486
        %v1546 = vpop.f32.mrb[0].mxu0
        %v1547 = vadd.f32 0.0, %v1546
        %v1548 = vpop.f32.mrb[0].mxu0
        %v1549 = vpop.f32.mrb[0].mxu0
        %v1550 = vpop.f32.mrb[0].mxu0
        %1551 = vdwg.mxu0
        %v1552 = vadd.f32 %v1442, %v1523
        %v1553 = vadd.f32 %v1443, %v1526
        %v1554 = vadd.f32 %v1444, %v1531
        %v1555 = vadd.f32 %v1445, %v1534
        %v1556 = vadd.f32 %v1446, %v1539
        %v1557 = vadd.f32 %v1447, %v1542
        %v1558 = vadd.f32 %v1448, %v1547
        %v1559 = vld [vmem:[#allocation2 + $0x12] sm:$0xff]
        %v1560 = vld [vmem:[#allocation2 + $0x1a] sm:$0xff]
        %v1561 = vld [vmem:[#allocation2 + $0x22] sm:$0xff]
        %v1562 = vld [vmem:[#allocation2 + $0x2a] sm:$0xff]
        %v1563 = vld [vmem:[#allocation2 + $0x32] sm:$0xff]
        %v1564 = vld [vmem:[#allocation2 + $0x3a] sm:$0xff]
        %v1565 = vld [vmem:[#allocation2 + $0x42] sm:$0x3f]
        %v1566 = vld [vmem:[%s3 + $0x80] sm:$0xf]
        %v1567 = vld [vmem:[%s3 + $0x84] sm:$0xf]
        %v1568 = vld [vmem:[%s3 + $0x88] sm:$0xf]
        %v1569 = vld [vmem:[%s3 + $0x8c] sm:$0xf]
        %v1570 = vpack.c.bf16 %v1560, %v1559
        %v1571 = vpack.c.bf16 %v1562, %v1561
        %v1572 = vpack.c.bf16 %v1564, %v1563
        %v1573 = vpack.c.bf16 %v1565, %v1565
        %v1578 = vunpack.c.l.b16 %v1566
        %v1579 = vunpack.c.l.b16 %v1567
        %v1580 = vunpack.c.l.b16 %v1568
        %v1581 = vunpack.c.l.b16 %v1569
        %v1582 = vpack.c.b16 %v1579, %v1578
        %v1583 = vpack.c.b16 %v1581, %v1580
        %v1587 = vsel %vm679, %v1570, 0
        %v1590 = vsel %vm679, %v1571, 0
        %v1593 = vsel %vm679, %v1572, 0
        %v1596 = vsel %vm679, %v1573, 0
        %1598 = vmatprep.subr.bf16.mxu0 0
        %1599 = vmatpush1.bf16.msra.mxu0 %v1582
        %1600 = vmatprep.subr.bf16.mxu0 0
        %1601 = vmatpush1.bf16.msra.mxu0 %v1583
        %1602 = vmatprep.subr.bf16.mxu0 0
        %1603 = vmatpush1.bf16.msra.mxu0 0
        %1604 = vmatprep.subr.bf16.mxu0 0
        %1605 = vmatpush1.bf16.msra.mxu0 0
        %1606 = vmatprep.subr.bf16.mxu0 0
        %1607 = vmatpush1.bf16.msra.mxu0 0
        %1608 = vmatprep.subr.bf16.mxu0 0
        %1609 = vmatpush1.bf16.msra.mxu0 0
        %1610 = vmatprep.subr.bf16.mxu0 0
        %1611 = vmatpush1.bf16.msra.mxu0 0
        %1612 = vmatprep.subr.bf16.mxu0 0
        %1613 = vmatpush1.bf16.msra.mxu0 0
        %1614 = vmatprep.subr.bf16.mxu0 0
        %1615 = vmatpush1.bf16.msra.mxu0 0
        %1616 = vmatprep.subr.bf16.mxu0 0
        %1617 = vmatpush1.bf16.msra.mxu0 0
        %1618 = vmatprep.subr.bf16.mxu0 0
        %1619 = vmatpush1.bf16.msra.mxu0 0
        %1620 = vmatprep.subr.bf16.mxu0 0
        %1621 = vmatpush1.bf16.msra.mxu0 0
        %1622 = vmatprep.subr.bf16.mxu0 0
        %1623 = vmatpush1.bf16.msra.mxu0 0
        %1624 = vmatprep.subr.bf16.mxu0 0
        %1625 = vmatpush1.bf16.msra.mxu0 0
        %1626 = vmatprep.subr.bf16.mxu0 0
        %1627 = vmatpush1.bf16.msra.mxu0 0
        %1628 = vmatprep.subr.bf16.mxu0 0
        %1629 = vmatpush1.bf16.msra.mxu0 0
        %1630 = vmatprep.mubr.bf16.mxu0 0
        %1631 = vmatmul.mubr.bf16.gmra.mrb[0].mxu0 %v1587
        %v1632 = vpop.f32.mrb[0].mxu0
        %v1633 = vadd.f32 0.0, %v1632
        %v1634 = vpop.f32.mrb[0].mxu0
        %v1635 = vpop.f32.mrb[0].mxu0
        %v1636 = vadd.f32 0.0, %v1635
        %v1637 = vpop.f32.mrb[0].mxu0
        %1638 = vmatprep.mubr.bf16.mxu0 0
        %1639 = vmatmul.mubr.bf16.gmra.mrb[0].mxu0 %v1590
        %v1640 = vpop.f32.mrb[0].mxu0
        %v1641 = vadd.f32 0.0, %v1640
        %v1642 = vpop.f32.mrb[0].mxu0
        %v1643 = vpop.f32.mrb[0].mxu0
        %v1644 = vadd.f32 0.0, %v1643
        %v1645 = vpop.f32.mrb[0].mxu0
        %1646 = vmatprep.mubr.bf16.mxu0 0
        %1647 = vmatmul.mubr.bf16.gmra.mrb[0].mxu0 %v1593
        %v1648 = vpop.f32.mrb[0].mxu0
        %v1649 = vadd.f32 0.0, %v1648
        %v1650 = vpop.f32.mrb[0].mxu0
        %v1651 = vpop.f32.mrb[0].mxu0
        %v1652 = vadd.f32 0.0, %v1651
        %v1653 = vpop.f32.mrb[0].mxu0
        %1654 = vmatprep.mubr.bf16.mxu0 0
        %1655 = vmatmul.mubr.bf16.gmra.mrb[0].mxu0 %v1596
        %v1656 = vpop.f32.mrb[0].mxu0
        %v1657 = vadd.f32 0.0, %v1656
        %v1658 = vpop.f32.mrb[0].mxu0
        %v1659 = vpop.f32.mrb[0].mxu0
        %v1660 = vpop.f32.mrb[0].mxu0
        %1661 = vdwg.mxu0
        %v1662 = vadd.f32 %v1552, %v1633
        %v1663 = vadd.f32 %v1553, %v1636
        %v1664 = vadd.f32 %v1554, %v1641
        %v1665 = vadd.f32 %v1555, %v1644
        %v1666 = vadd.f32 %v1556, %v1649
        %v1667 = vadd.f32 %v1557, %v1652
        %v1668 = vadd.f32 %v1558, %v1657
        %v1669 = vld [vmem:[#allocation2 + $0x13] sm:$0xff]
        %v1670 = vld [vmem:[#allocation2 + $0x1b] sm:$0xff]
        %v1671 = vld [vmem:[#allocation2 + $0x23] sm:$0xff]
        %v1672 = vld [vmem:[#allocation2 + $0x2b] sm:$0xff]
        %v1673 = vld [vmem:[#allocation2 + $0x33] sm:$0xff]
        %v1674 = vld [vmem:[#allocation2 + $0x3b] sm:$0xff]
        %v1675 = vld [vmem:[#allocation2 + $0x43] sm:$0x3f]
        %v1676 = vld [vmem:[%s3 + $0x90] sm:$0xf]
        %v1677 = vld [vmem:[%s3 + $0x94] sm:$0xf]
        %v1678 = vld [vmem:[%s3 + $0x98] sm:$0xf]
        %v1679 = vld [vmem:[%s3 + $0x9c] sm:$0xf]
        %v1680 = vpack.c.bf16 %v1670, %v1669
        %v1681 = vpack.c.bf16 %v1672, %v1671
        %v1682 = vpack.c.bf16 %v1674, %v1673
        %v1683 = vpack.c.bf16 %v1675, %v1675
        %v1688 = vunpack.c.l.b16 %v1676
        %v1689 = vunpack.c.l.b16 %v1677
        %v1690 = vunpack.c.l.b16 %v1678
        %v1691 = vunpack.c.l.b16 %v1679
        %v1692 = vpack.c.b16 %v1689, %v1688
        %v1693 = vpack.c.b16 %v1691, %v1690
        %v1697 = vsel %vm679, %v1680, 0
        %v1700 = vsel %vm679, %v1681, 0
        %v1703 = vsel %vm679, %v1682, 0
        %v1706 = vsel %vm679, %v1683, 0
        %1708 = vmatprep.subr.bf16.mxu0 0
        %1709 = vmatpush1.bf16.msra.mxu0 %v1692
        %1710 = vmatprep.subr.bf16.mxu0 0
        %1711 = vmatpush1.bf16.msra.mxu0 %v1693
        %1712 = vmatprep.subr.bf16.mxu0 0
        %1713 = vmatpush1.bf16.msra.mxu0 0
        %1714 = vmatprep.subr.bf16.mxu0 0
        %1715 = vmatpush1.bf16.msra.mxu0 0
        %1716 = vmatprep.subr.bf16.mxu0 0
        %1717 = vmatpush1.bf16.msra.mxu0 0
        %1718 = vmatprep.subr.bf16.mxu0 0
        %1719 = vmatpush1.bf16.msra.mxu0 0
        %1720 = vmatprep.subr.bf16.mxu0 0
        %1721 = vmatpush1.bf16.msra.mxu0 0
        %1722 = vmatprep.subr.bf16.mxu0 0
        %1723 = vmatpush1.bf16.msra.mxu0 0
        %1724 = vmatprep.subr.bf16.mxu0 0
        %1725 = vmatpush1.bf16.msra.mxu0 0
        %1726 = vmatprep.subr.bf16.mxu0 0
        %1727 = vmatpush1.bf16.msra.mxu0 0
        %1728 = vmatprep.subr.bf16.mxu0 0
        %1729 = vmatpush1.bf16.msra.mxu0 0
        %1730 = vmatprep.subr.bf16.mxu0 0
        %1731 = vmatpush1.bf16.msra.mxu0 0
        %1732 = vmatprep.subr.bf16.mxu0 0
        %1733 = vmatpush1.bf16.msra.mxu0 0
        %1734 = vmatprep.subr.bf16.mxu0 0
        %1735 = vmatpush1.bf16.msra.mxu0 0
        %1736 = vmatprep.subr.bf16.mxu0 0
        %1737 = vmatpush1.bf16.msra.mxu0 0
        %1738 = vmatprep.subr.bf16.mxu0 0
        %1739 = vmatpush1.bf16.msra.mxu0 0
        %1740 = vmatprep.mubr.bf16.mxu0 0
        %1741 = vmatmul.mubr.bf16.gmra.mrb[0].mxu0 %v1697
        %v1742 = vpop.f32.mrb[0].mxu0
        %v1743 = vadd.f32 0.0, %v1742
        %v1744 = vpop.f32.mrb[0].mxu0
        %v1745 = vpop.f32.mrb[0].mxu0
        %v1746 = vadd.f32 0.0, %v1745
        %v1747 = vpop.f32.mrb[0].mxu0
        %1748 = vmatprep.mubr.bf16.mxu0 0
        %1749 = vmatmul.mubr.bf16.gmra.mrb[0].mxu0 %v1700
        %v1750 = vpop.f32.mrb[0].mxu0
        %v1751 = vadd.f32 0.0, %v1750
        %v1752 = vpop.f32.mrb[0].mxu0
        %v1753 = vpop.f32.mrb[0].mxu0
        %v1754 = vadd.f32 0.0, %v1753
        %v1755 = vpop.f32.mrb[0].mxu0
        %1756 = vmatprep.mubr.bf16.mxu0 0
        %1757 = vmatmul.mubr.bf16.gmra.mrb[0].mxu0 %v1703
        %v1758 = vpop.f32.mrb[0].mxu0
        %v1759 = vadd.f32 0.0, %v1758
        %v1760 = vpop.f32.mrb[0].mxu0
        %v1761 = vpop.f32.mrb[0].mxu0
        %v1762 = vadd.f32 0.0, %v1761
        %v1763 = vpop.f32.mrb[0].mxu0
        %1764 = vmatprep.mubr.bf16.mxu0 0
        %1765 = vmatmul.mubr.bf16.gmra.mrb[0].mxu0 %v1706
        %v1766 = vpop.f32.mrb[0].mxu0
        %v1767 = vadd.f32 0.0, %v1766
        %v1768 = vpop.f32.mrb[0].mxu0
        %v1769 = vpop.f32.mrb[0].mxu0
        %v1770 = vpop.f32.mrb[0].mxu0
        %1771 = vdwg.mxu0
        %v1772 = vadd.f32 %v1662, %v1743
        %v1773 = vadd.f32 %v1663, %v1746
        %v1774 = vadd.f32 %v1664, %v1751
        %v1775 = vadd.f32 %v1665, %v1754
        %v1776 = vadd.f32 %v1666, %v1759
        %v1777 = vadd.f32 %v1667, %v1762
        %v1778 = vadd.f32 %v1668, %v1767
        %v1779 = vld [vmem:[#allocation2 + $0x14] sm:$0xff]
        %v1780 = vld [vmem:[#allocation2 + $0x1c] sm:$0xff]
        %v1781 = vld [vmem:[#allocation2 + $0x24] sm:$0xff]
        %v1782 = vld [vmem:[#allocation2 + $0x2c] sm:$0xff]
        %v1783 = vld [vmem:[#allocation2 + $0x34] sm:$0xff]
        %v1784 = vld [vmem:[#allocation2 + $0x3c] sm:$0xff]
        %v1785 = vld [vmem:[#allocation2 + $0x44] sm:$0x3f]
        %v1786 = vld [vmem:[%s3 + $0xa0] sm:$0xf]
        %v1787 = vld [vmem:[%s3 + $0xa4] sm:$0xf]
        %v1788 = vld [vmem:[%s3 + $0xa8] sm:$0xf]
        %v1789 = vld [vmem:[%s3 + $0xac] sm:$0xf]
        %v1790 = vpack.c.bf16 %v1780, %v1779
        %v1791 = vpack.c.bf16 %v1782, %v1781
        %v1792 = vpack.c.bf16 %v1784, %v1783
        %v1793 = vpack.c.bf16 %v1785, %v1785
        %v1798 = vunpack.c.l.b16 %v1786
        %v1799 = vunpack.c.l.b16 %v1787
        %v1800 = vunpack.c.l.b16 %v1788
        %v1801 = vunpack.c.l.b16 %v1789
        %v1802 = vpack.c.b16 %v1799, %v1798
        %v1803 = vpack.c.b16 %v1801, %v1800
        %v1807 = vsel %vm679, %v1790, 0
        %v1810 = vsel %vm679, %v1791, 0
        %v1813 = vsel %vm679, %v1792, 0
        %v1816 = vsel %vm679, %v1793, 0
        %1818 = vmatprep.subr.bf16.mxu0 0
        %1819 = vmatpush1.bf16.msra.mxu0 %v1802
        %1820 = vmatprep.subr.bf16.mxu0 0
        %1821 = vmatpush1.bf16.msra.mxu0 %v1803
        %1822 = vmatprep.subr.bf16.mxu0 0
        %1823 = vmatpush1.bf16.msra.mxu0 0
        %1824 = vmatprep.subr.bf16.mxu0 0
        %1825 = vmatpush1.bf16.msra.mxu0 0
        %1826 = vmatprep.subr.bf16.mxu0 0
        %1827 = vmatpush1.bf16.msra.mxu0 0
        %1828 = vmatprep.subr.bf16.mxu0 0
        %1829 = vmatpush1.bf16.msra.mxu0 0
        %1830 = vmatprep.subr.bf16.mxu0 0
        %1831 = vmatpush1.bf16.msra.mxu0 0
        %1832 = vmatprep.subr.bf16.mxu0 0
        %1833 = vmatpush1.bf16.msra.mxu0 0
        %1834 = vmatprep.subr.bf16.mxu0 0
        %1835 = vmatpush1.bf16.msra.mxu0 0
        %1836 = vmatprep.subr.bf16.mxu0 0
        %1837 = vmatpush1.bf16.msra.mxu0 0
        %1838 = vmatprep.subr.bf16.mxu0 0
        %1839 = vmatpush1.bf16.msra.mxu0 0
        %1840 = vmatprep.subr.bf16.mxu0 0
        %1841 = vmatpush1.bf16.msra.mxu0 0
        %1842 = vmatprep.subr.bf16.mxu0 0
        %1843 = vmatpush1.bf16.msra.mxu0 0
        %1844 = vmatprep.subr.bf16.mxu0 0
        %1845 = vmatpush1.bf16.msra.mxu0 0
        %1846 = vmatprep.subr.bf16.mxu0 0
        %1847 = vmatpush1.bf16.msra.mxu0 0
        %1848 = vmatprep.subr.bf16.mxu0 0
        %1849 = vmatpush1.bf16.msra.mxu0 0
        %1850 = vmatprep.mubr.bf16.mxu0 0
        %1851 = vmatmul.mubr.bf16.gmra.mrb[0].mxu0 %v1807
        %v1852 = vpop.f32.mrb[0].mxu0
        %v1853 = vadd.f32 0.0, %v1852
        %v1854 = vpop.f32.mrb[0].mxu0
        %v1855 = vpop.f32.mrb[0].mxu0
        %v1856 = vadd.f32 0.0, %v1855
        %v1857 = vpop.f32.mrb[0].mxu0
        %1858 = vmatprep.mubr.bf16.mxu0 0
        %1859 = vmatmul.mubr.bf16.gmra.mrb[0].mxu0 %v1810
        %v1860 = vpop.f32.mrb[0].mxu0
        %v1861 = vadd.f32 0.0, %v1860
        %v1862 = vpop.f32.mrb[0].mxu0
        %v1863 = vpop.f32.mrb[0].mxu0
        %v1864 = vadd.f32 0.0, %v1863
        %v1865 = vpop.f32.mrb[0].mxu0
        %1866 = vmatprep.mubr.bf16.mxu0 0
        %1867 = vmatmul.mubr.bf16.gmra.mrb[0].mxu0 %v1813
        %v1868 = vpop.f32.mrb[0].mxu0
        %v1869 = vadd.f32 0.0, %v1868
        %v1870 = vpop.f32.mrb[0].mxu0
        %v1871 = vpop.f32.mrb[0].mxu0
        %v1872 = vadd.f32 0.0, %v1871
        %v1873 = vpop.f32.mrb[0].mxu0
        %1874 = vmatprep.mubr.bf16.mxu0 0
        %1875 = vmatmul.mubr.bf16.gmra.mrb[0].mxu0 %v1816
        %v1876 = vpop.f32.mrb[0].mxu0
        %v1877 = vadd.f32 0.0, %v1876
        %v1878 = vpop.f32.mrb[0].mxu0
        %v1879 = vpop.f32.mrb[0].mxu0
        %v1880 = vpop.f32.mrb[0].mxu0
        %1881 = vdwg.mxu0
        %v1882 = vadd.f32 %v1772, %v1853
        %v1883 = vadd.f32 %v1773, %v1856
        %v1884 = vadd.f32 %v1774, %v1861
        %v1885 = vadd.f32 %v1775, %v1864
        %v1886 = vadd.f32 %v1776, %v1869
        %v1887 = vadd.f32 %v1777, %v1872
        %v1888 = vadd.f32 %v1778, %v1877
        %v1889 = vld [vmem:[#allocation2 + $0x15] sm:$0xff]
        %v1890 = vld [vmem:[#allocation2 + $0x1d] sm:$0xff]
        %v1891 = vld [vmem:[#allocation2 + $0x25] sm:$0xff]
        %v1892 = vld [vmem:[#allocation2 + $0x2d] sm:$0xff]
        %v1893 = vld [vmem:[#allocation2 + $0x35] sm:$0xff]
        %v1894 = vld [vmem:[#allocation2 + $0x3d] sm:$0xff]
        %v1895 = vld [vmem:[#allocation2 + $0x45] sm:$0x3f]
        %v1896 = vld [vmem:[%s3 + $0xb0] sm:$0xf]
        %v1897 = vld [vmem:[%s3 + $0xb4] sm:$0xf]
        %v1898 = vld [vmem:[%s3 + $0xb8] sm:$0xf]
        %v1899 = vld [vmem:[%s3 + $0xbc] sm:$0xf]
        %v1900 = vpack.c.bf16 %v1890, %v1889
        %v1901 = vpack.c.bf16 %v1892, %v1891
        %v1902 = vpack.c.bf16 %v1894, %v1893
        %v1903 = vpack.c.bf16 %v1895, %v1895
        %v1908 = vunpack.c.l.b16 %v1896
        %v1909 = vunpack.c.l.b16 %v1897
        %v1910 = vunpack.c.l.b16 %v1898
        %v1911 = vunpack.c.l.b16 %v1899
        %v1912 = vpack.c.b16 %v1909, %v1908
        %v1913 = vpack.c.b16 %v1911, %v1910
        %v1917 = vsel %vm679, %v1900, 0
        %v1920 = vsel %vm679, %v1901, 0
        %v1923 = vsel %vm679, %v1902, 0
        %v1926 = vsel %vm679, %v1903, 0
        %1928 = vmatprep.subr.bf16.mxu0 0
        %1929 = vmatpush1.bf16.msra.mxu0 %v1912
        %1930 = vmatprep.subr.bf16.mxu0 0
        %1931 = vmatpush1.bf16.msra.mxu0 %v1913
        %1932 = vmatprep.subr.bf16.mxu0 0
        %1933 = vmatpush1.bf16.msra.mxu0 0
        %1934 = vmatprep.subr.bf16.mxu0 0
        %1935 = vmatpush1.bf16.msra.mxu0 0
        %1936 = vmatprep.subr.bf16.mxu0 0
        %1937 = vmatpush1.bf16.msra.mxu0 0
        %1938 = vmatprep.subr.bf16.mxu0 0
        %1939 = vmatpush1.bf16.msra.mxu0 0
        %1940 = vmatprep.subr.bf16.mxu0 0
        %1941 = vmatpush1.bf16.msra.mxu0 0
        %1942 = vmatprep.subr.bf16.mxu0 0
        %1943 = vmatpush1.bf16.msra.mxu0 0
        %1944 = vmatprep.subr.bf16.mxu0 0
        %1945 = vmatpush1.bf16.msra.mxu0 0
        %1946 = vmatprep.subr.bf16.mxu0 0
        %1947 = vmatpush1.bf16.msra.mxu0 0
        %1948 = vmatprep.subr.bf16.mxu0 0
        %1949 = vmatpush1.bf16.msra.mxu0 0
        %1950 = vmatprep.subr.bf16.mxu0 0
        %1951 = vmatpush1.bf16.msra.mxu0 0
        %1952 = vmatprep.subr.bf16.mxu0 0
        %1953 = vmatpush1.bf16.msra.mxu0 0
        %1954 = vmatprep.subr.bf16.mxu0 0
        %1955 = vmatpush1.bf16.msra.mxu0 0
        %1956 = vmatprep.subr.bf16.mxu0 0
        %1957 = vmatpush1.bf16.msra.mxu0 0
        %1958 = vmatprep.subr.bf16.mxu0 0
        %1959 = vmatpush1.bf16.msra.mxu0 0
        %1960 = vmatprep.mubr.bf16.mxu0 0
        %1961 = vmatmul.mubr.bf16.gmra.mrb[0].mxu0 %v1917
        %v1962 = vpop.f32.mrb[0].mxu0
        %v1963 = vadd.f32 0.0, %v1962
        %v1964 = vpop.f32.mrb[0].mxu0
        %v1965 = vpop.f32.mrb[0].mxu0
        %v1966 = vadd.f32 0.0, %v1965
        %v1967 = vpop.f32.mrb[0].mxu0
        %1968 = vmatprep.mubr.bf16.mxu0 0
        %1969 = vmatmul.mubr.bf16.gmra.mrb[0].mxu0 %v1920
        %v1970 = vpop.f32.mrb[0].mxu0
        %v1971 = vadd.f32 0.0, %v1970
        %v1972 = vpop.f32.mrb[0].mxu0
        %v1973 = vpop.f32.mrb[0].mxu0
        %v1974 = vadd.f32 0.0, %v1973
        %v1975 = vpop.f32.mrb[0].mxu0
        %1976 = vmatprep.mubr.bf16.mxu0 0
        %1977 = vmatmul.mubr.bf16.gmra.mrb[0].mxu0 %v1923
        %v1978 = vpop.f32.mrb[0].mxu0
        %v1979 = vadd.f32 0.0, %v1978
        %v1980 = vpop.f32.mrb[0].mxu0
        %v1981 = vpop.f32.mrb[0].mxu0
        %v1982 = vadd.f32 0.0, %v1981
        %v1983 = vpop.f32.mrb[0].mxu0
        %1984 = vmatprep.mubr.bf16.mxu0 0
        %1985 = vmatmul.mubr.bf16.gmra.mrb[0].mxu0 %v1926
        %v1986 = vpop.f32.mrb[0].mxu0
        %v1987 = vadd.f32 0.0, %v1986
        %v1988 = vpop.f32.mrb[0].mxu0
        %v1989 = vpop.f32.mrb[0].mxu0
        %v1990 = vpop.f32.mrb[0].mxu0
        %1991 = vdwg.mxu0
        %v1992 = vadd.f32 %v1882, %v1963
        %v1993 = vadd.f32 %v1883, %v1966
        %v1994 = vadd.f32 %v1884, %v1971
        %v1995 = vadd.f32 %v1885, %v1974
        %v1996 = vadd.f32 %v1886, %v1979
        %v1997 = vadd.f32 %v1887, %v1982
        %v1998 = vadd.f32 %v1888, %v1987
        %v1999 = vld [vmem:[#allocation2 + $0x1b] sm:$0xff]
        %v2000 = vld [vmem:[#allocation2 + $0x23] sm:$0xff]
        %v2001 = vld [vmem:[#allocation2 + $0x2b] sm:$0xff]
        %v2002 = vld [vmem:[#allocation2 + $0x33] sm:$0xff]
        %v2003 = vld [vmem:[#allocation2 + $0x3b] sm:$0xff]
        %v2004 = vld [vmem:[#allocation2 + $0x43] sm:$0xff]
        %v2005 = vld [vmem:[#allocation2 + $0x4b] sm:$0x3f]
        %v2006 = vld [vmem:[%s3 + $0xc0] sm:$0xf]
        %v2007 = vld [vmem:[%s3 + $0xc4] sm:$0xf]
        %v2008 = vld [vmem:[%s3 + $0xc8] sm:$0xf]
        %v2009 = vld [vmem:[%s3 + $0xcc] sm:$0xf]
        %v2010 = vpack.c.bf16 %v2000, %v1999
        %v2011 = vpack.c.bf16 %v2002, %v2001
        %v2012 = vpack.c.bf16 %v2004, %v2003
        %v2013 = vpack.c.bf16 %v2005, %v2005
        %v2018 = vunpack.c.l.b16 %v2006
        %v2019 = vunpack.c.l.b16 %v2007
        %v2020 = vunpack.c.l.b16 %v2008
        %v2021 = vunpack.c.l.b16 %v2009
        %v2022 = vpack.c.b16 %v2019, %v2018
        %v2023 = vpack.c.b16 %v2021, %v2020
        %v2027 = vsel %vm679, %v2010, 0
        %v2030 = vsel %vm679, %v2011, 0
        %v2033 = vsel %vm679, %v2012, 0
        %v2036 = vsel %vm679, %v2013, 0
        %2038 = vmatprep.subr.bf16.mxu0 0
        %2039 = vmatpush1.bf16.msra.mxu0 %v2022
        %2040 = vmatprep.subr.bf16.mxu0 0
        %2041 = vmatpush1.bf16.msra.mxu0 %v2023
        %2042 = vmatprep.subr.bf16.mxu0 0
        %2043 = vmatpush1.bf16.msra.mxu0 0
        %2044 = vmatprep.subr.bf16.mxu0 0
        %2045 = vmatpush1.bf16.msra.mxu0 0
        %2046 = vmatprep.subr.bf16.mxu0 0
        %2047 = vmatpush1.bf16.msra.mxu0 0
        %2048 = vmatprep.subr.bf16.mxu0 0
        %2049 = vmatpush1.bf16.msra.mxu0 0
        %2050 = vmatprep.subr.bf16.mxu0 0
        %2051 = vmatpush1.bf16.msra.mxu0 0
        %2052 = vmatprep.subr.bf16.mxu0 0
        %2053 = vmatpush1.bf16.msra.mxu0 0
        %2054 = vmatprep.subr.bf16.mxu0 0
        %2055 = vmatpush1.bf16.msra.mxu0 0
        %2056 = vmatprep.subr.bf16.mxu0 0
        %2057 = vmatpush1.bf16.msra.mxu0 0
        %2058 = vmatprep.subr.bf16.mxu0 0
        %2059 = vmatpush1.bf16.msra.mxu0 0
        %2060 = vmatprep.subr.bf16.mxu0 0
        %2061 = vmatpush1.bf16.msra.mxu0 0
        %2062 = vmatprep.subr.bf16.mxu0 0
        %2063 = vmatpush1.bf16.msra.mxu0 0
        %2064 = vmatprep.subr.bf16.mxu0 0
        %2065 = vmatpush1.bf16.msra.mxu0 0
        %2066 = vmatprep.subr.bf16.mxu0 0
        %2067 = vmatpush1.bf16.msra.mxu0 0
        %2068 = vmatprep.subr.bf16.mxu0 0
        %2069 = vmatpush1.bf16.msra.mxu0 0
        %2070 = vmatprep.mubr.bf16.mxu0 0
        %2071 = vmatmul.mubr.bf16.gmra.mrb[0].mxu0 %v2027
        %v2072 = vpop.f32.mrb[0].mxu0
        %v2073 = vadd.f32 0.0, %v2072
        %v2074 = vpop.f32.mrb[0].mxu0
        %v2075 = vpop.f32.mrb[0].mxu0
        %v2076 = vadd.f32 0.0, %v2075
        %v2077 = vpop.f32.mrb[0].mxu0
        %2078 = vmatprep.mubr.bf16.mxu0 0
        %2079 = vmatmul.mubr.bf16.gmra.mrb[0].mxu0 %v2030
        %v2080 = vpop.f32.mrb[0].mxu0
        %v2081 = vadd.f32 0.0, %v2080
        %v2082 = vpop.f32.mrb[0].mxu0
        %v2083 = vpop.f32.mrb[0].mxu0
        %v2084 = vadd.f32 0.0, %v2083
        %v2085 = vpop.f32.mrb[0].mxu0
        %2086 = vmatprep.mubr.bf16.mxu0 0
        %2087 = vmatmul.mubr.bf16.gmra.mrb[0].mxu0 %v2033
        %v2088 = vpop.f32.mrb[0].mxu0
        %v2089 = vadd.f32 0.0, %v2088
        %v2090 = vpop.f32.mrb[0].mxu0
        %v2091 = vpop.f32.mrb[0].mxu0
        %v2092 = vadd.f32 0.0, %v2091
        %v2093 = vpop.f32.mrb[0].mxu0
        %2094 = vmatprep.mubr.bf16.mxu0 0
        %2095 = vmatmul.mubr.bf16.gmra.mrb[0].mxu0 %v2036
        %v2096 = vpop.f32.mrb[0].mxu0
        %v2097 = vadd.f32 0.0, %v2096
        %v2098 = vpop.f32.mrb[0].mxu0
        %v2099 = vpop.f32.mrb[0].mxu0
        %v2100 = vpop.f32.mrb[0].mxu0
        %2101 = vdwg.mxu0
        %v2102 = vadd.f32 %v1992, %v2073
        %v2103 = vadd.f32 %v1993, %v2076
        %v2104 = vadd.f32 %v1994, %v2081
        %v2105 = vadd.f32 %v1995, %v2084
        %v2106 = vadd.f32 %v1996, %v2089
        %v2107 = vadd.f32 %v1997, %v2092
        %v2108 = vadd.f32 %v1998, %v2097
        %v2109 = vld [vmem:[#allocation2 + $0x1c] sm:$0xff]
        %v2110 = vld [vmem:[#allocation2 + $0x24] sm:$0xff]
        %v2111 = vld [vmem:[#allocation2 + $0x2c] sm:$0xff]
        %v2112 = vld [vmem:[#allocation2 + $0x34] sm:$0xff]
        %v2113 = vld [vmem:[#allocation2 + $0x3c] sm:$0xff]
        %v2114 = vld [vmem:[#allocation2 + $0x44] sm:$0xff]
        %v2115 = vld [vmem:[#allocation2 + $0x4c] sm:$0x3f]
        %v2116 = vld [vmem:[%s3 + $0xd0] sm:$0xf]
        %v2117 = vld [vmem:[%s3 + $0xd4] sm:$0xf]
        %v2118 = vld [vmem:[%s3 + $0xd8] sm:$0xf]
        %v2119 = vld [vmem:[%s3 + $0xdc] sm:$0xf]
        %v2120 = vpack.c.bf16 %v2110, %v2109
        %v2121 = vpack.c.bf16 %v2112, %v2111
        %v2122 = vpack.c.bf16 %v2114, %v2113
        %v2123 = vpack.c.bf16 %v2115, %v2115
        %v2128 = vunpack.c.l.b16 %v2116
        %v2129 = vunpack.c.l.b16 %v2117
        %v2130 = vunpack.c.l.b16 %v2118
        %v2131 = vunpack.c.l.b16 %v2119
        %v2132 = vpack.c.b16 %v2129, %v2128
        %v2133 = vpack.c.b16 %v2131, %v2130
        %v2137 = vsel %vm679, %v2120, 0
        %v2140 = vsel %vm679, %v2121, 0
        %v2143 = vsel %vm679, %v2122, 0
        %v2146 = vsel %vm679, %v2123, 0
        %2148 = vmatprep.subr.bf16.mxu0 0
        %2149 = vmatpush1.bf16.msra.mxu0 %v2132
        %2150 = vmatprep.subr.bf16.mxu0 0
        %2151 = vmatpush1.bf16.msra.mxu0 %v2133
        %2152 = vmatprep.subr.bf16.mxu0 0
        %2153 = vmatpush1.bf16.msra.mxu0 0
        %2154 = vmatprep.subr.bf16.mxu0 0
        %2155 = vmatpush1.bf16.msra.mxu0 0
        %2156 = vmatprep.subr.bf16.mxu0 0
        %2157 = vmatpush1.bf16.msra.mxu0 0
        %2158 = vmatprep.subr.bf16.mxu0 0
        %2159 = vmatpush1.bf16.msra.mxu0 0
        %2160 = vmatprep.subr.bf16.mxu0 0
        %2161 = vmatpush1.bf16.msra.mxu0 0
        %2162 = vmatprep.subr.bf16.mxu0 0
        %2163 = vmatpush1.bf16.msra.mxu0 0
        %2164 = vmatprep.subr.bf16.mxu0 0
        %2165 = vmatpush1.bf16.msra.mxu0 0
        %2166 = vmatprep.subr.bf16.mxu0 0
        %2167 = vmatpush1.bf16.msra.mxu0 0
        %2168 = vmatprep.subr.bf16.mxu0 0
        %2169 = vmatpush1.bf16.msra.mxu0 0
        %2170 = vmatprep.subr.bf16.mxu0 0
        %2171 = vmatpush1.bf16.msra.mxu0 0
        %2172 = vmatprep.subr.bf16.mxu0 0
        %2173 = vmatpush1.bf16.msra.mxu0 0
        %2174 = vmatprep.subr.bf16.mxu0 0
        %2175 = vmatpush1.bf16.msra.mxu0 0
        %2176 = vmatprep.subr.bf16.mxu0 0
        %2177 = vmatpush1.bf16.msra.mxu0 0
        %2178 = vmatprep.subr.bf16.mxu0 0
        %2179 = vmatpush1.bf16.msra.mxu0 0
        %2180 = vmatprep.mubr.bf16.mxu0 0
        %2181 = vmatmul.mubr.bf16.gmra.mrb[0].mxu0 %v2137
        %v2182 = vpop.f32.mrb[0].mxu0
        %v2183 = vadd.f32 0.0, %v2182
        %v2184 = vpop.f32.mrb[0].mxu0
        %v2185 = vpop.f32.mrb[0].mxu0
        %v2186 = vadd.f32 0.0, %v2185
        %v2187 = vpop.f32.mrb[0].mxu0
        %2188 = vmatprep.mubr.bf16.mxu0 0
        %2189 = vmatmul.mubr.bf16.gmra.mrb[0].mxu0 %v2140
        %v2190 = vpop.f32.mrb[0].mxu0
        %v2191 = vadd.f32 0.0, %v2190
        %v2192 = vpop.f32.mrb[0].mxu0
        %v2193 = vpop.f32.mrb[0].mxu0
        %v2194 = vadd.f32 0.0, %v2193
        %v2195 = vpop.f32.mrb[0].mxu0
        %2196 = vmatprep.mubr.bf16.mxu0 0
        %2197 = vmatmul.mubr.bf16.gmra.mrb[0].mxu0 %v2143
        %v2198 = vpop.f32.mrb[0].mxu0
        %v2199 = vadd.f32 0.0, %v2198
        %v2200 = vpop.f32.mrb[0].mxu0
        %v2201 = vpop.f32.mrb[0].mxu0
        %v2202 = vadd.f32 0.0, %v2201
        %v2203 = vpop.f32.mrb[0].mxu0
        %2204 = vmatprep.mubr.bf16.mxu0 0
        %2205 = vmatmul.mubr.bf16.gmra.mrb[0].mxu0 %v2146
        %v2206 = vpop.f32.mrb[0].mxu0
        %v2207 = vadd.f32 0.0, %v2206
        %v2208 = vpop.f32.mrb[0].mxu0
        %v2209 = vpop.f32.mrb[0].mxu0
        %v2210 = vpop.f32.mrb[0].mxu0
        %2211 = vdwg.mxu0
        %v2212 = vadd.f32 %v2102, %v2183
        %v2213 = vadd.f32 %v2103, %v2186
        %v2214 = vadd.f32 %v2104, %v2191
        %v2215 = vadd.f32 %v2105, %v2194
        %v2216 = vadd.f32 %v2106, %v2199
        %v2217 = vadd.f32 %v2107, %v2202
        %v2218 = vadd.f32 %v2108, %v2207
        %v2219 = vld [vmem:[#allocation2 + $0x1d] sm:$0xff]
        %v2220 = vld [vmem:[#allocation2 + $0x25] sm:$0xff]
        %v2221 = vld [vmem:[#allocation2 + $0x2d] sm:$0xff]
        %v2222 = vld [vmem:[#allocation2 + $0x35] sm:$0xff]
        %v2223 = vld [vmem:[#allocation2 + $0x3d] sm:$0xff]
        %v2224 = vld [vmem:[#allocation2 + $0x45] sm:$0xff]
        %v2225 = vld [vmem:[#allocation2 + $0x4d] sm:$0x3f]
        %v2226 = vld [vmem:[%s3 + $0xe0] sm:$0xf]
        %v2227 = vld [vmem:[%s3 + $0xe4] sm:$0xf]
        %v2228 = vld [vmem:[%s3 + $0xe8] sm:$0xf]
        %v2229 = vld [vmem:[%s3 + $0xec] sm:$0xf]
        %v2230 = vpack.c.bf16 %v2220, %v2219
        %v2231 = vpack.c.bf16 %v2222, %v2221
        %v2232 = vpack.c.bf16 %v2224, %v2223
        %v2233 = vpack.c.bf16 %v2225, %v2225
        %v2238 = vunpack.c.l.b16 %v2226
        %v2239 = vunpack.c.l.b16 %v2227
        %v2240 = vunpack.c.l.b16 %v2228
        %v2241 = vunpack.c.l.b16 %v2229
        %v2242 = vpack.c.b16 %v2239, %v2238
        %v2243 = vpack.c.b16 %v2241, %v2240
        %v2247 = vsel %vm679, %v2230, 0
        %v2250 = vsel %vm679, %v2231, 0
        %v2253 = vsel %vm679, %v2232, 0
        %v2256 = vsel %vm679, %v2233, 0
        %2258 = vmatprep.subr.bf16.mxu0 0
        %2259 = vmatpush1.bf16.msra.mxu0 %v2242
        %2260 = vmatprep.subr.bf16.mxu0 0
        %2261 = vmatpush1.bf16.msra.mxu0 %v2243
        %2262 = vmatprep.subr.bf16.mxu0 0
        %2263 = vmatpush1.bf16.msra.mxu0 0
        %2264 = vmatprep.subr.bf16.mxu0 0
        %2265 = vmatpush1.bf16.msra.mxu0 0
        %2266 = vmatprep.subr.bf16.mxu0 0
        %2267 = vmatpush1.bf16.msra.mxu0 0
        %2268 = vmatprep.subr.bf16.mxu0 0
        %2269 = vmatpush1.bf16.msra.mxu0 0
        %2270 = vmatprep.subr.bf16.mxu0 0
        %2271 = vmatpush1.bf16.msra.mxu0 0
        %2272 = vmatprep.subr.bf16.mxu0 0
        %2273 = vmatpush1.bf16.msra.mxu0 0
        %2274 = vmatprep.subr.bf16.mxu0 0
        %2275 = vmatpush1.bf16.msra.mxu0 0
        %2276 = vmatprep.subr.bf16.mxu0 0
        %2277 = vmatpush1.bf16.msra.mxu0 0
        %2278 = vmatprep.subr.bf16.mxu0 0
        %2279 = vmatpush1.bf16.msra.mxu0 0
        %2280 = vmatprep.subr.bf16.mxu0 0
        %2281 = vmatpush1.bf16.msra.mxu0 0
        %2282 = vmatprep.subr.bf16.mxu0 0
        %2283 = vmatpush1.bf16.msra.mxu0 0
        %2284 = vmatprep.subr.bf16.mxu0 0
        %2285 = vmatpush1.bf16.msra.mxu0 0
        %2286 = vmatprep.subr.bf16.mxu0 0
        %2287 = vmatpush1.bf16.msra.mxu0 0
        %2288 = vmatprep.subr.bf16.mxu0 0
        %2289 = vmatpush1.bf16.msra.mxu0 0
        %2290 = vmatprep.mubr.bf16.mxu0 0
        %2291 = vmatmul.mubr.bf16.gmra.mrb[0].mxu0 %v2247
        %v2292 = vpop.f32.mrb[0].mxu0
        %v2293 = vadd.f32 0.0, %v2292
        %v2294 = vpop.f32.mrb[0].mxu0
        %v2295 = vpop.f32.mrb[0].mxu0
        %v2296 = vadd.f32 0.0, %v2295
        %v2297 = vpop.f32.mrb[0].mxu0
        %2298 = vmatprep.mubr.bf16.mxu0 0
        %2299 = vmatmul.mubr.bf16.gmra.mrb[0].mxu0 %v2250
        %v2300 = vpop.f32.mrb[0].mxu0
        %v2301 = vadd.f32 0.0, %v2300
        %v2302 = vpop.f32.mrb[0].mxu0
        %v2303 = vpop.f32.mrb[0].mxu0
        %v2304 = vadd.f32 0.0, %v2303
        %v2305 = vpop.f32.mrb[0].mxu0
        %2306 = vmatprep.mubr.bf16.mxu0 0
        %2307 = vmatmul.mubr.bf16.gmra.mrb[0].mxu0 %v2253
        %v2308 = vpop.f32.mrb[0].mxu0
        %v2309 = vadd.f32 0.0, %v2308
        %v2310 = vpop.f32.mrb[0].mxu0
        %v2311 = vpop.f32.mrb[0].mxu0
        %v2312 = vadd.f32 0.0, %v2311
        %v2313 = vpop.f32.mrb[0].mxu0
        %2314 = vmatprep.mubr.bf16.mxu0 0
        %2315 = vmatmul.mubr.bf16.gmra.mrb[0].mxu0 %v2256
        %v2316 = vpop.f32.mrb[0].mxu0
        %v2317 = vadd.f32 0.0, %v2316
        %v2318 = vpop.f32.mrb[0].mxu0
        %v2319 = vpop.f32.mrb[0].mxu0
        %v2320 = vpop.f32.mrb[0].mxu0
        %2321 = vdwg.mxu0
        %v2322 = vadd.f32 %v2212, %v2293
        %v2323 = vadd.f32 %v2213, %v2296
        %v2324 = vadd.f32 %v2214, %v2301
        %v2325 = vadd.f32 %v2215, %v2304
        %v2326 = vadd.f32 %v2216, %v2309
        %v2327 = vadd.f32 %v2217, %v2312
        %v2328 = vadd.f32 %v2218, %v2317
        %v2329 = vld [vmem:[#allocation2 + $0x1e] sm:$0xff]
        %v2330 = vld [vmem:[#allocation2 + $0x26] sm:$0xff]
        %v2331 = vld [vmem:[#allocation2 + $0x2e] sm:$0xff]
        %v2332 = vld [vmem:[#allocation2 + $0x36] sm:$0xff]
        %v2333 = vld [vmem:[#allocation2 + $0x3e] sm:$0xff]
        %v2334 = vld [vmem:[#allocation2 + $0x46] sm:$0xff]
        %v2335 = vld [vmem:[#allocation2 + $0x4e] sm:$0x3f]
        %v2336 = vld [vmem:[%s3 + $0xf0] sm:$0xf]
        %v2337 = vld [vmem:[%s3 + $0xf4] sm:$0xf]
        %v2338 = vld [vmem:[%s3 + $0xf8] sm:$0xf]
        %v2339 = vld [vmem:[%s3 + $0xfc] sm:$0xf]
        %v2340 = vpack.c.bf16 %v2330, %v2329
        %v2341 = vpack.c.bf16 %v2332, %v2331
        %v2342 = vpack.c.bf16 %v2334, %v2333
        %v2343 = vpack.c.bf16 %v2335, %v2335
        %v2348 = vunpack.c.l.b16 %v2336
        %v2349 = vunpack.c.l.b16 %v2337
        %v2350 = vunpack.c.l.b16 %v2338
        %v2351 = vunpack.c.l.b16 %v2339
        %v2352 = vpack.c.b16 %v2349, %v2348
        %v2353 = vpack.c.b16 %v2351, %v2350
        %v2357 = vsel %vm679, %v2340, 0
        %v2360 = vsel %vm679, %v2341, 0
        %v2363 = vsel %vm679, %v2342, 0
        %v2366 = vsel %vm679, %v2343, 0
        %2368 = vmatprep.subr.bf16.mxu0 0
        %2369 = vmatpush1.bf16.msra.mxu0 %v2352
        %2370 = vmatprep.subr.bf16.mxu0 0
        %2371 = vmatpush1.bf16.msra.mxu0 %v2353
        %2372 = vmatprep.subr.bf16.mxu0 0
        %2373 = vmatpush1.bf16.msra.mxu0 0
        %2374 = vmatprep.subr.bf16.mxu0 0
        %2375 = vmatpush1.bf16.msra.mxu0 0
        %2376 = vmatprep.subr.bf16.mxu0 0
        %2377 = vmatpush1.bf16.msra.mxu0 0
        %2378 = vmatprep.subr.bf16.mxu0 0
        %2379 = vmatpush1.bf16.msra.mxu0 0
        %2380 = vmatprep.subr.bf16.mxu0 0
        %2381 = vmatpush1.bf16.msra.mxu0 0
        %2382 = vmatprep.subr.bf16.mxu0 0
        %2383 = vmatpush1.bf16.msra.mxu0 0
        %2384 = vmatprep.subr.bf16.mxu0 0
        %2385 = vmatpush1.bf16.msra.mxu0 0
        %2386 = vmatprep.subr.bf16.mxu0 0
        %2387 = vmatpush1.bf16.msra.mxu0 0
        %2388 = vmatprep.subr.bf16.mxu0 0
        %2389 = vmatpush1.bf16.msra.mxu0 0
        %2390 = vmatprep.subr.bf16.mxu0 0
        %2391 = vmatpush1.bf16.msra.mxu0 0
        %2392 = vmatprep.subr.bf16.mxu0 0
        %2393 = vmatpush1.bf16.msra.mxu0 0
        %2394 = vmatprep.subr.bf16.mxu0 0
        %2395 = vmatpush1.bf16.msra.mxu0 0
        %2396 = vmatprep.subr.bf16.mxu0 0
        %2397 = vmatpush1.bf16.msra.mxu0 0
        %2398 = vmatprep.subr.bf16.mxu0 0
        %2399 = vmatpush1.bf16.msra.mxu0 0
        %2400 = vmatprep.mubr.bf16.mxu0 0
        %2401 = vmatmul.mubr.bf16.gmra.mrb[0].mxu0 %v2357
        %v2402 = vpop.f32.mrb[0].mxu0
        %v2403 = vadd.f32 0.0, %v2402
        %v2404 = vpop.f32.mrb[0].mxu0
        %v2405 = vpop.f32.mrb[0].mxu0
        %v2406 = vadd.f32 0.0, %v2405
        %v2407 = vpop.f32.mrb[0].mxu0
        %2408 = vmatprep.mubr.bf16.mxu0 0
        %2409 = vmatmul.mubr.bf16.gmra.mrb[0].mxu0 %v2360
        %v2410 = vpop.f32.mrb[0].mxu0
        %v2411 = vadd.f32 0.0, %v2410
        %v2412 = vpop.f32.mrb[0].mxu0
        %v2413 = vpop.f32.mrb[0].mxu0
        %v2414 = vadd.f32 0.0, %v2413
        %v2415 = vpop.f32.mrb[0].mxu0
        %2416 = vmatprep.mubr.bf16.mxu0 0
        %2417 = vmatmul.mubr.bf16.gmra.mrb[0].mxu0 %v2363
        %v2418 = vpop.f32.mrb[0].mxu0
        %v2419 = vadd.f32 0.0, %v2418
        %v2420 = vpop.f32.mrb[0].mxu0
        %v2421 = vpop.f32.mrb[0].mxu0
        %v2422 = vadd.f32 0.0, %v2421
        %v2423 = vpop.f32.mrb[0].mxu0
        %2424 = vmatprep.mubr.bf16.mxu0 0
        %2425 = vmatmul.mubr.bf16.gmra.mrb[0].mxu0 %v2366
        %v2426 = vpop.f32.mrb[0].mxu0
        %v2427 = vadd.f32 0.0, %v2426
        %v2428 = vpop.f32.mrb[0].mxu0
        %v2429 = vpop.f32.mrb[0].mxu0
        %v2430 = vpop.f32.mrb[0].mxu0
        %2431 = vdwg.mxu0
        %v2432 = vadd.f32 %v2322, %v2403
        %v2433 = vadd.f32 %v2323, %v2406
        %v2434 = vadd.f32 %v2324, %v2411
        %v2435 = vadd.f32 %v2325, %v2414
        %v2436 = vadd.f32 %v2326, %v2419
        %v2437 = vadd.f32 %v2327, %v2422
        %v2438 = vadd.f32 %v2328, %v2427
        %v2439 = vld [vmem:[%s4] sm:$0x1]
        %v2441 = vlaneseq
        %v2442 = vshrl.u32 %v2441, 7
        %v2443 = vsub.s32 0, %v2442
        %v2444 = vrot.slane %v2439, %v2443
        %v2446 = vadd.f32 %v2432, %v2444
        %v2447 = vadd.f32 %v2433, %v2444
        %v2448 = vadd.f32 %v2434, %v2444
        %v2449 = vadd.f32 %v2435, %v2444
        %v2450 = vadd.f32 %v2436, %v2444
        %v2451 = vadd.f32 %v2437, %v2444
        %v2452 = vadd.f32 %v2438, %v2444
        %v2453 = vmax.f32 %v2446, 0.0
        %v2454 = vmax.f32 %v2447, 0.0
        %v2455 = vmax.f32 %v2448, 0.0
        %v2456 = vmax.f32 %v2449, 0.0
        %v2457 = vmax.f32 %v2450, 0.0
        %v2458 = vmax.f32 %v2451, 0.0
        %v2459 = vmax.f32 %v2452, 0.0
        %vm2460 = vcmask 523264
        %2461 = vst.msk [vmem:[#allocation3] sm:$0xff] %vm2460, %v2453
        %2462 = vst.msk [vmem:[#allocation3 + $0x8] sm:$0xff] %vm2460, %v2454
        %2463 = vst.msk [vmem:[#allocation3 + $0x10] sm:$0xff] %vm2460, %v2455
        %2464 = vst.msk [vmem:[#allocation3 + $0x18] sm:$0xff] %vm2460, %v2456
        %2465 = vst.msk [vmem:[#allocation3 + $0x20] sm:$0xff] %vm2460, %v2457
        %2466 = vst.msk [vmem:[#allocation3 + $0x28] sm:$0xff] %vm2460, %v2458
        %vm2467 = vcmask 521216
        %2468 = vst.msk [vmem:[#allocation3 + $0x30] sm:$0x3f] %vm2467, %v2459
        %v2469 = vld [vmem:[#allocation3] sm:$0xff]
        %v2470 = vld [vmem:[#allocation3 + $0x8] sm:$0xff]
        %v2471 = vld [vmem:[#allocation3 + $0x10] sm:$0xff]
        %v2472 = vld [vmem:[#allocation3 + $0x18] sm:$0xff]
        %v2473 = vld [vmem:[#allocation3 + $0x20] sm:$0xf]
        %v2474 = vld [vmem:[%s5] sm:$0xf]
        %v2475 = vld [vmem:[%s5 + $0x4] sm:$0xf]
        %v2476 = vld [vmem:[%s5 + $0x8] sm:$0xf]
        %v2477 = vld [vmem:[%s5 + $0xc] sm:$0xf]
        %v2478 = vld [vmem:[%s5 + $0x10] sm:$0xf]
        %v2479 = vld [vmem:[%s5 + $0x14] sm:$0xf]
        %v2480 = vld [vmem:[%s5 + $0x18] sm:$0xf]
        %v2481 = vld [vmem:[%s5 + $0x1c] sm:$0xf]
        %v2482 = vpack.c.bf16 %v2470, %v2469
        %v2483 = vpack.c.bf16 %v2472, %v2471
        %v2484 = vpack.c.bf16 %v2473, %v2473
        %v2485 = vld [vmem:[#allocation3 + $0x1] sm:$0xff]
        %v2486 = vld [vmem:[#allocation3 + $0x9] sm:$0xff]
        %v2487 = vld [vmem:[#allocation3 + $0x11] sm:$0xff]
        %v2488 = vld [vmem:[#allocation3 + $0x19] sm:$0xff]
        %v2489 = vld [vmem:[#allocation3 + $0x21] sm:$0xf]
        %v2490 = vld [vmem:[%s5 + $0x20] sm:$0xf]
        %v2491 = vld [vmem:[%s5 + $0x24] sm:$0xf]
        %v2492 = vld [vmem:[%s5 + $0x28] sm:$0xf]
        %v2493 = vld [vmem:[%s5 + $0x2c] sm:$0xf]
        %v2494 = vld [vmem:[%s5 + $0x30] sm:$0xf]
        %v2495 = vld [vmem:[%s5 + $0x34] sm:$0xf]
        %v2496 = vld [vmem:[%s5 + $0x38] sm:$0xf]
        %v2497 = vld [vmem:[%s5 + $0x3c] sm:$0xf]
        %v2498 = vpack.c.bf16 %v2486, %v2485
        %v2499 = vpack.c.bf16 %v2488, %v2487
        %v2500 = vpack.c.bf16 %v2489, %v2489
        %v2509 = vunpack.c.l.b16 %v2490
        %v2510 = vunpack.c.l.b16 %v2491
        %v2511 = vunpack.c.l.b16 %v2492
        %v2512 = vunpack.c.l.b16 %v2493
        %v2513 = vunpack.c.l.b16 %v2494
        %v2514 = vunpack.c.l.b16 %v2495
        %v2515 = vunpack.c.l.b16 %v2496
        %v2516 = vunpack.c.l.b16 %v2497
        %v2517 = vpack.c.b16 %v2510, %v2509
        %v2518 = vpack.c.b16 %v2512, %v2511
        %v2519 = vpack.c.b16 %v2514, %v2513
        %v2520 = vpack.c.b16 %v2516, %v2515
        %v2526 = vsel %vm2460, %v2498, 0
        %v2529 = vsel %vm2460, %v2499, 0
        %v2532 = vsel %vm2460, %v2500, 0
        %2534 = vmatprep.subr.bf16.mxu0 0
        %2535 = vmatpush1.bf16.msra.mxu0 %v2517
        %2536 = vmatprep.subr.bf16.mxu0 0
        %2537 = vmatpush1.bf16.msra.mxu0 %v2518
        %2538 = vmatprep.subr.bf16.mxu0 0
        %2539 = vmatpush1.bf16.msra.mxu0 %v2519
        %2540 = vmatprep.subr.bf16.mxu0 0
        %2541 = vmatpush1.bf16.msra.mxu0 %v2520
        %2542 = vmatprep.subr.bf16.mxu0 0
        %2543 = vmatpush1.bf16.msra.mxu0 0
        %2544 = vmatprep.subr.bf16.mxu0 0
        %2545 = vmatpush1.bf16.msra.mxu0 0
        %2546 = vmatprep.subr.bf16.mxu0 0
        %2547 = vmatpush1.bf16.msra.mxu0 0
        %2548 = vmatprep.subr.bf16.mxu0 0
        %2549 = vmatpush1.bf16.msra.mxu0 0
        %2550 = vmatprep.subr.bf16.mxu0 0
        %2551 = vmatpush1.bf16.msra.mxu0 0
        %2552 = vmatprep.subr.bf16.mxu0 0
        %2553 = vmatpush1.bf16.msra.mxu0 0
        %2554 = vmatprep.subr.bf16.mxu0 0
        %2555 = vmatpush1.bf16.msra.mxu0 0
        %2556 = vmatprep.subr.bf16.mxu0 0
        %2557 = vmatpush1.bf16.msra.mxu0 0
        %2558 = vmatprep.subr.bf16.mxu0 0
        %2559 = vmatpush1.bf16.msra.mxu0 0
        %2560 = vmatprep.subr.bf16.mxu0 0
        %2561 = vmatpush1.bf16.msra.mxu0 0
        %2562 = vmatprep.subr.bf16.mxu0 0
        %2563 = vmatpush1.bf16.msra.mxu0 0
        %2564 = vmatprep.subr.bf16.mxu0 0
        %2565 = vmatpush1.bf16.msra.mxu0 0
        %2566 = vmatprep.mubr.bf16.mxu0 0
        %2567 = vmatmul.mubr.bf16.gmra.mrb[0].mxu0 %v2526
        %v2568 = vpop.f32.mrb[0].mxu0
        %v2569 = vadd.f32 0.0, %v2568
        %v2570 = vpop.f32.mrb[0].mxu0
        %v2571 = vpop.f32.mrb[0].mxu0
        %v2572 = vadd.f32 0.0, %v2571
        %v2573 = vpop.f32.mrb[0].mxu0
        %2574 = vmatprep.mubr.bf16.mxu0 0
        %2575 = vmatmul.mubr.bf16.gmra.mrb[0].mxu0 %v2529
        %v2576 = vpop.f32.mrb[0].mxu0
        %v2577 = vadd.f32 0.0, %v2576
        %v2578 = vpop.f32.mrb[0].mxu0
        %v2579 = vpop.f32.mrb[0].mxu0
        %v2580 = vadd.f32 0.0, %v2579
        %v2581 = vpop.f32.mrb[0].mxu0
        %2582 = vmatprep.mubr.bf16.mxu0 0
        %2583 = vmatmul.mubr.bf16.gmra.mrb[0].mxu0 %v2532
        %v2584 = vpop.f32.mrb[0].mxu0
        %v2585 = vadd.f32 0.0, %v2584
        %v2586 = vpop.f32.mrb[0].mxu0
        %v2587 = vpop.f32.mrb[0].mxu0
        %v2588 = vpop.f32.mrb[0].mxu0
        %2589 = vdwg.mxu0
        %v2598 = vunpack.c.l.b16 %v2474
        %v2599 = vunpack.c.l.b16 %v2475
        %v2600 = vunpack.c.l.b16 %v2476
        %v2601 = vunpack.c.l.b16 %v2477
        %v2602 = vunpack.c.l.b16 %v2478
        %v2603 = vunpack.c.l.b16 %v2479
        %v2604 = vunpack.c.l.b16 %v2480
        %v2605 = vunpack.c.l.b16 %v2481
        %v2606 = vpack.c.b16 %v2599, %v2598
        %v2607 = vpack.c.b16 %v2601, %v2600
        %v2608 = vpack.c.b16 %v2603, %v2602
        %v2609 = vpack.c.b16 %v2605, %v2604
        %v2615 = vsel %vm2460, %v2482, 0
        %v2618 = vsel %vm2460, %v2483, 0
        %v2621 = vsel %vm2460, %v2484, 0
        %2623 = vmatprep.subr.bf16.mxu0 0
        %2624 = vmatpush1.bf16.msra.mxu0 %v2606
        %2625 = vmatprep.subr.bf16.mxu0 0
        %2626 = vmatpush1.bf16.msra.mxu0 %v2607
        %2627 = vmatprep.subr.bf16.mxu0 0
        %2628 = vmatpush1.bf16.msra.mxu0 %v2608
        %2629 = vmatprep.subr.bf16.mxu0 0
        %2630 = vmatpush1.bf16.msra.mxu0 %v2609
        %2631 = vmatprep.subr.bf16.mxu0 0
        %2632 = vmatpush1.bf16.msra.mxu0 0
        %2633 = vmatprep.subr.bf16.mxu0 0
        %2634 = vmatpush1.bf16.msra.mxu0 0
        %2635 = vmatprep.subr.bf16.mxu0 0
        %2636 = vmatpush1.bf16.msra.mxu0 0
        %2637 = vmatprep.subr.bf16.mxu0 0
        %2638 = vmatpush1.bf16.msra.mxu0 0
        %2639 = vmatprep.subr.bf16.mxu0 0
        %2640 = vmatpush1.bf16.msra.mxu0 0
        %2641 = vmatprep.subr.bf16.mxu0 0
        %2642 = vmatpush1.bf16.msra.mxu0 0
        %2643 = vmatprep.subr.bf16.mxu0 0
        %2644 = vmatpush1.bf16.msra.mxu0 0
        %2645 = vmatprep.subr.bf16.mxu0 0
        %2646 = vmatpush1.bf16.msra.mxu0 0
        %2647 = vmatprep.subr.bf16.mxu0 0
        %2648 = vmatpush1.bf16.msra.mxu0 0
        %2649 = vmatprep.subr.bf16.mxu0 0
        %2650 = vmatpush1.bf16.msra.mxu0 0
        %2651 = vmatprep.subr.bf16.mxu0 0
        %2652 = vmatpush1.bf16.msra.mxu0 0
        %2653 = vmatprep.subr.bf16.mxu0 0
        %2654 = vmatpush1.bf16.msra.mxu0 0
        %2655 = vmatprep.mubr.bf16.mxu0 0
        %2656 = vmatmul.mubr.bf16.gmra.mrb[0].mxu0 %v2615
        %v2657 = vpop.f32.mrb[0].mxu0
        %v2658 = vadd.f32 %v2569, %v2657
        %v2659 = vpop.f32.mrb[0].mxu0
        %v2660 = vpop.f32.mrb[0].mxu0
        %v2661 = vadd.f32 %v2572, %v2660
        %v2662 = vpop.f32.mrb[0].mxu0
        %2663 = vmatprep.mubr.bf16.mxu0 0
        %2664 = vmatmul.mubr.bf16.gmra.mrb[0].mxu0 %v2618
        %v2665 = vpop.f32.mrb[0].mxu0
        %v2666 = vadd.f32 %v2577, %v2665
        %v2667 = vpop.f32.mrb[0].mxu0
        %v2668 = vpop.f32.mrb[0].mxu0
        %v2669 = vadd.f32 %v2580, %v2668
        %v2670 = vpop.f32.mrb[0].mxu0
        %2671 = vmatprep.mubr.bf16.mxu0 0
        %2672 = vmatmul.mubr.bf16.gmra.mrb[0].mxu0 %v2621
        %v2673 = vpop.f32.mrb[0].mxu0
        %v2674 = vadd.f32 %v2585, %v2673
        %v2675 = vpop.f32.mrb[0].mxu0
        %v2676 = vpop.f32.mrb[0].mxu0
        %v2677 = vpop.f32.mrb[0].mxu0
        %2678 = vdwg.mxu0
        %v2679 = vld [vmem:[#allocation3 + $0x2] sm:$0xff]
        %v2680 = vld [vmem:[#allocation3 + $0xa] sm:$0xff]
        %v2681 = vld [vmem:[#allocation3 + $0x12] sm:$0xff]
        %v2682 = vld [vmem:[#allocation3 + $0x1a] sm:$0xff]
        %v2683 = vld [vmem:[#allocation3 + $0x22] sm:$0xf]
        %v2684 = vld [vmem:[%s5 + $0x40] sm:$0xf]
        %v2685 = vld [vmem:[%s5 + $0x44] sm:$0xf]
        %v2686 = vld [vmem:[%s5 + $0x48] sm:$0xf]
        %v2687 = vld [vmem:[%s5 + $0x4c] sm:$0xf]
        %v2688 = vld [vmem:[%s5 + $0x50] sm:$0xf]
        %v2689 = vld [vmem:[%s5 + $0x54] sm:$0xf]
        %v2690 = vld [vmem:[%s5 + $0x58] sm:$0xf]
        %v2691 = vld [vmem:[%s5 + $0x5c] sm:$0xf]
        %v2692 = vpack.c.bf16 %v2680, %v2679
        %v2693 = vpack.c.bf16 %v2682, %v2681
        %v2694 = vpack.c.bf16 %v2683, %v2683
        %v2703 = vunpack.c.l.b16 %v2684
        %v2704 = vunpack.c.l.b16 %v2685
        %v2705 = vunpack.c.l.b16 %v2686
        %v2706 = vunpack.c.l.b16 %v2687
        %v2707 = vunpack.c.l.b16 %v2688
        %v2708 = vunpack.c.l.b16 %v2689
        %v2709 = vunpack.c.l.b16 %v2690
        %v2710 = vunpack.c.l.b16 %v2691
        %v2711 = vpack.c.b16 %v2704, %v2703
        %v2712 = vpack.c.b16 %v2706, %v2705
        %v2713 = vpack.c.b16 %v2708, %v2707
        %v2714 = vpack.c.b16 %v2710, %v2709
        %v2720 = vsel %vm2460, %v2692, 0
        %v2723 = vsel %vm2460, %v2693, 0
        %v2726 = vsel %vm2460, %v2694, 0
        %2728 = vmatprep.subr.bf16.mxu0 0
        %2729 = vmatpush1.bf16.msra.mxu0 %v2711
        %2730 = vmatprep.subr.bf16.mxu0 0
        %2731 = vmatpush1.bf16.msra.mxu0 %v2712
        %2732 = vmatprep.subr.bf16.mxu0 0
        %2733 = vmatpush1.bf16.msra.mxu0 %v2713
        %2734 = vmatprep.subr.bf16.mxu0 0
        %2735 = vmatpush1.bf16.msra.mxu0 %v2714
        %2736 = vmatprep.subr.bf16.mxu0 0
        %2737 = vmatpush1.bf16.msra.mxu0 0
        %2738 = vmatprep.subr.bf16.mxu0 0
        %2739 = vmatpush1.bf16.msra.mxu0 0
        %2740 = vmatprep.subr.bf16.mxu0 0
        %2741 = vmatpush1.bf16.msra.mxu0 0
        %2742 = vmatprep.subr.bf16.mxu0 0
        %2743 = vmatpush1.bf16.msra.mxu0 0
        %2744 = vmatprep.subr.bf16.mxu0 0
        %2745 = vmatpush1.bf16.msra.mxu0 0
        %2746 = vmatprep.subr.bf16.mxu0 0
        %2747 = vmatpush1.bf16.msra.mxu0 0
        %2748 = vmatprep.subr.bf16.mxu0 0
        %2749 = vmatpush1.bf16.msra.mxu0 0
        %2750 = vmatprep.subr.bf16.mxu0 0
        %2751 = vmatpush1.bf16.msra.mxu0 0
        %2752 = vmatprep.subr.bf16.mxu0 0
        %2753 = vmatpush1.bf16.msra.mxu0 0
        %2754 = vmatprep.subr.bf16.mxu0 0
        %2755 = vmatpush1.bf16.msra.mxu0 0
        %2756 = vmatprep.subr.bf16.mxu0 0
        %2757 = vmatpush1.bf16.msra.mxu0 0
        %2758 = vmatprep.subr.bf16.mxu0 0
        %2759 = vmatpush1.bf16.msra.mxu0 0
        %2760 = vmatprep.mubr.bf16.mxu0 0
        %2761 = vmatmul.mubr.bf16.gmra.mrb[0].mxu0 %v2720
        %v2762 = vpop.f32.mrb[0].mxu0
        %v2763 = vadd.f32 0.0, %v2762
        %v2764 = vpop.f32.mrb[0].mxu0
        %v2765 = vpop.f32.mrb[0].mxu0
        %v2766 = vadd.f32 0.0, %v2765
        %v2767 = vpop.f32.mrb[0].mxu0
        %2768 = vmatprep.mubr.bf16.mxu0 0
        %2769 = vmatmul.mubr.bf16.gmra.mrb[0].mxu0 %v2723
        %v2770 = vpop.f32.mrb[0].mxu0
        %v2771 = vadd.f32 0.0, %v2770
        %v2772 = vpop.f32.mrb[0].mxu0
        %v2773 = vpop.f32.mrb[0].mxu0
        %v2774 = vadd.f32 0.0, %v2773
        %v2775 = vpop.f32.mrb[0].mxu0
        %2776 = vmatprep.mubr.bf16.mxu0 0
        %2777 = vmatmul.mubr.bf16.gmra.mrb[0].mxu0 %v2726
        %v2778 = vpop.f32.mrb[0].mxu0
        %v2779 = vadd.f32 0.0, %v2778
        %v2780 = vpop.f32.mrb[0].mxu0
        %v2781 = vpop.f32.mrb[0].mxu0
        %v2782 = vpop.f32.mrb[0].mxu0
        %2783 = vdwg.mxu0
        %v2784 = vadd.f32 %v2658, %v2763
        %v2785 = vadd.f32 %v2661, %v2766
        %v2786 = vadd.f32 %v2666, %v2771
        %v2787 = vadd.f32 %v2669, %v2774
        %v2788 = vadd.f32 %v2674, %v2779
        %v2789 = vld [vmem:[#allocation3 + $0x9] sm:$0xff]
        %v2790 = vld [vmem:[#allocation3 + $0x11] sm:$0xff]
        %v2791 = vld [vmem:[#allocation3 + $0x19] sm:$0xff]
        %v2792 = vld [vmem:[#allocation3 + $0x21] sm:$0xff]
        %v2793 = vld [vmem:[#allocation3 + $0x29] sm:$0xf]
        %v2794 = vld [vmem:[%s5 + $0x60] sm:$0xf]
        %v2795 = vld [vmem:[%s5 + $0x64] sm:$0xf]
        %v2796 = vld [vmem:[%s5 + $0x68] sm:$0xf]
        %v2797 = vld [vmem:[%s5 + $0x6c] sm:$0xf]
        %v2798 = vld [vmem:[%s5 + $0x70] sm:$0xf]
        %v2799 = vld [vmem:[%s5 + $0x74] sm:$0xf]
        %v2800 = vld [vmem:[%s5 + $0x78] sm:$0xf]
        %v2801 = vld [vmem:[%s5 + $0x7c] sm:$0xf]
        %v2802 = vpack.c.bf16 %v2790, %v2789
        %v2803 = vpack.c.bf16 %v2792, %v2791
        %v2804 = vpack.c.bf16 %v2793, %v2793
        %v2813 = vunpack.c.l.b16 %v2794
        %v2814 = vunpack.c.l.b16 %v2795
        %v2815 = vunpack.c.l.b16 %v2796
        %v2816 = vunpack.c.l.b16 %v2797
        %v2817 = vunpack.c.l.b16 %v2798
        %v2818 = vunpack.c.l.b16 %v2799
        %v2819 = vunpack.c.l.b16 %v2800
        %v2820 = vunpack.c.l.b16 %v2801
        %v2821 = vpack.c.b16 %v2814, %v2813
        %v2822 = vpack.c.b16 %v2816, %v2815
        %v2823 = vpack.c.b16 %v2818, %v2817
        %v2824 = vpack.c.b16 %v2820, %v2819
        %v2830 = vsel %vm2460, %v2802, 0
        %v2833 = vsel %vm2460, %v2803, 0
        %v2836 = vsel %vm2460, %v2804, 0
        %2838 = vmatprep.subr.bf16.mxu0 0
        %2839 = vmatpush1.bf16.msra.mxu0 %v2821
        %2840 = vmatprep.subr.bf16.mxu0 0
        %2841 = vmatpush1.bf16.msra.mxu0 %v2822
        %2842 = vmatprep.subr.bf16.mxu0 0
        %2843 = vmatpush1.bf16.msra.mxu0 %v2823
        %2844 = vmatprep.subr.bf16.mxu0 0
        %2845 = vmatpush1.bf16.msra.mxu0 %v2824
        %2846 = vmatprep.subr.bf16.mxu0 0
        %2847 = vmatpush1.bf16.msra.mxu0 0
        %2848 = vmatprep.subr.bf16.mxu0 0
        %2849 = vmatpush1.bf16.msra.mxu0 0
        %2850 = vmatprep.subr.bf16.mxu0 0
        %2851 = vmatpush1.bf16.msra.mxu0 0
        %2852 = vmatprep.subr.bf16.mxu0 0
        %2853 = vmatpush1.bf16.msra.mxu0 0
        %2854 = vmatprep.subr.bf16.mxu0 0
        %2855 = vmatpush1.bf16.msra.mxu0 0
        %2856 = vmatprep.subr.bf16.mxu0 0
        %2857 = vmatpush1.bf16.msra.mxu0 0
        %2858 = vmatprep.subr.bf16.mxu0 0
        %2859 = vmatpush1.bf16.msra.mxu0 0
        %2860 = vmatprep.subr.bf16.mxu0 0
        %2861 = vmatpush1.bf16.msra.mxu0 0
        %2862 = vmatprep.subr.bf16.mxu0 0
        %2863 = vmatpush1.bf16.msra.mxu0 0
        %2864 = vmatprep.subr.bf16.mxu0 0
        %2865 = vmatpush1.bf16.msra.mxu0 0
        %2866 = vmatprep.subr.bf16.mxu0 0
        %2867 = vmatpush1.bf16.msra.mxu0 0
        %2868 = vmatprep.subr.bf16.mxu0 0
        %2869 = vmatpush1.bf16.msra.mxu0 0
        %2870 = vmatprep.mubr.bf16.mxu0 0
        %2871 = vmatmul.mubr.bf16.gmra.mrb[0].mxu0 %v2830
        %v2872 = vpop.f32.mrb[0].mxu0
        %v2873 = vadd.f32 0.0, %v2872
        %v2874 = vpop.f32.mrb[0].mxu0
        %v2875 = vpop.f32.mrb[0].mxu0
        %v2876 = vadd.f32 0.0, %v2875
        %v2877 = vpop.f32.mrb[0].mxu0
        %2878 = vmatprep.mubr.bf16.mxu0 0
        %2879 = vmatmul.mubr.bf16.gmra.mrb[0].mxu0 %v2833
        %v2880 = vpop.f32.mrb[0].mxu0
        %v2881 = vadd.f32 0.0, %v2880
        %v2882 = vpop.f32.mrb[0].mxu0
        %v2883 = vpop.f32.mrb[0].mxu0
        %v2884 = vadd.f32 0.0, %v2883
        %v2885 = vpop.f32.mrb[0].mxu0
        %2886 = vmatprep.mubr.bf16.mxu0 0
        %2887 = vmatmul.mubr.bf16.gmra.mrb[0].mxu0 %v2836
        %v2888 = vpop.f32.mrb[0].mxu0
        %v2889 = vadd.f32 0.0, %v2888
        %v2890 = vpop.f32.mrb[0].mxu0
        %v2891 = vpop.f32.mrb[0].mxu0
        %v2892 = vpop.f32.mrb[0].mxu0
        %2893 = vdwg.mxu0
        %v2894 = vadd.f32 %v2784, %v2873
        %v2895 = vadd.f32 %v2785, %v2876
        %v2896 = vadd.f32 %v2786, %v2881
        %v2897 = vadd.f32 %v2787, %v2884
        %v2898 = vadd.f32 %v2788, %v2889
        %v2899 = vld [vmem:[#allocation3 + $0xa] sm:$0xff]
        %v2900 = vld [vmem:[#allocation3 + $0x12] sm:$0xff]
        %v2901 = vld [vmem:[#allocation3 + $0x1a] sm:$0xff]
        %v2902 = vld [vmem:[#allocation3 + $0x22] sm:$0xff]
        %v2903 = vld [vmem:[#allocation3 + $0x2a] sm:$0xf]
        %v2904 = vld [vmem:[%s5 + $0x80] sm:$0xf]
        %v2905 = vld [vmem:[%s5 + $0x84] sm:$0xf]
        %v2906 = vld [vmem:[%s5 + $0x88] sm:$0xf]
        %v2907 = vld [vmem:[%s5 + $0x8c] sm:$0xf]
        %v2908 = vld [vmem:[%s5 + $0x90] sm:$0xf]
        %v2909 = vld [vmem:[%s5 + $0x94] sm:$0xf]
        %v2910 = vld [vmem:[%s5 + $0x98] sm:$0xf]
        %v2911 = vld [vmem:[%s5 + $0x9c] sm:$0xf]
        %v2912 = vpack.c.bf16 %v2900, %v2899
        %v2913 = vpack.c.bf16 %v2902, %v2901
        %v2914 = vpack.c.bf16 %v2903, %v2903
        %v2923 = vunpack.c.l.b16 %v2904
        %v2924 = vunpack.c.l.b16 %v2905
        %v2925 = vunpack.c.l.b16 %v2906
        %v2926 = vunpack.c.l.b16 %v2907
        %v2927 = vunpack.c.l.b16 %v2908
        %v2928 = vunpack.c.l.b16 %v2909
        %v2929 = vunpack.c.l.b16 %v2910
        %v2930 = vunpack.c.l.b16 %v2911
        %v2931 = vpack.c.b16 %v2924, %v2923
        %v2932 = vpack.c.b16 %v2926, %v2925
        %v2933 = vpack.c.b16 %v2928, %v2927
        %v2934 = vpack.c.b16 %v2930, %v2929
        %v2940 = vsel %vm2460, %v2912, 0
        %v2943 = vsel %vm2460, %v2913, 0
        %v2946 = vsel %vm2460, %v2914, 0
        %2948 = vmatprep.subr.bf16.mxu0 0
        %2949 = vmatpush1.bf16.msra.mxu0 %v2931
        %2950 = vmatprep.subr.bf16.mxu0 0
        %2951 = vmatpush1.bf16.msra.mxu0 %v2932
        %2952 = vmatprep.subr.bf16.mxu0 0
        %2953 = vmatpush1.bf16.msra.mxu0 %v2933
        %2954 = vmatprep.subr.bf16.mxu0 0
        %2955 = vmatpush1.bf16.msra.mxu0 %v2934
        %2956 = vmatprep.subr.bf16.mxu0 0
        %2957 = vmatpush1.bf16.msra.mxu0 0
        %2958 = vmatprep.subr.bf16.mxu0 0
        %2959 = vmatpush1.bf16.msra.mxu0 0
        %2960 = vmatprep.subr.bf16.mxu0 0
        %2961 = vmatpush1.bf16.msra.mxu0 0
        %2962 = vmatprep.subr.bf16.mxu0 0
        %2963 = vmatpush1.bf16.msra.mxu0 0
        %2964 = vmatprep.subr.bf16.mxu0 0
        %2965 = vmatpush1.bf16.msra.mxu0 0
        %2966 = vmatprep.subr.bf16.mxu0 0
        %2967 = vmatpush1.bf16.msra.mxu0 0
        %2968 = vmatprep.subr.bf16.mxu0 0
        %2969 = vmatpush1.bf16.msra.mxu0 0
        %2970 = vmatprep.subr.bf16.mxu0 0
        %2971 = vmatpush1.bf16.msra.mxu0 0
        %2972 = vmatprep.subr.bf16.mxu0 0
        %2973 = vmatpush1.bf16.msra.mxu0 0
        %2974 = vmatprep.subr.bf16.mxu0 0
        %2975 = vmatpush1.bf16.msra.mxu0 0
        %2976 = vmatprep.subr.bf16.mxu0 0
        %2977 = vmatpush1.bf16.msra.mxu0 0
        %2978 = vmatprep.subr.bf16.mxu0 0
        %2979 = vmatpush1.bf16.msra.mxu0 0
        %2980 = vmatprep.mubr.bf16.mxu0 0
        %2981 = vmatmul.mubr.bf16.gmra.mrb[0].mxu0 %v2940
        %v2982 = vpop.f32.mrb[0].mxu0
        %v2983 = vadd.f32 0.0, %v2982
        %v2984 = vpop.f32.mrb[0].mxu0
        %v2985 = vpop.f32.mrb[0].mxu0
        %v2986 = vadd.f32 0.0, %v2985
        %v2987 = vpop.f32.mrb[0].mxu0
        %2988 = vmatprep.mubr.bf16.mxu0 0
        %2989 = vmatmul.mubr.bf16.gmra.mrb[0].mxu0 %v2943
        %v2990 = vpop.f32.mrb[0].mxu0
        %v2991 = vadd.f32 0.0, %v2990
        %v2992 = vpop.f32.mrb[0].mxu0
        %v2993 = vpop.f32.mrb[0].mxu0
        %v2994 = vadd.f32 0.0, %v2993
        %v2995 = vpop.f32.mrb[0].mxu0
        %2996 = vmatprep.mubr.bf16.mxu0 0
        %2997 = vmatmul.mubr.bf16.gmra.mrb[0].mxu0 %v2946
        %v2998 = vpop.f32.mrb[0].mxu0
        %v2999 = vadd.f32 0.0, %v2998
        %v3000 = vpop.f32.mrb[0].mxu0
        %v3001 = vpop.f32.mrb[0].mxu0
        %v3002 = vpop.f32.mrb[0].mxu0
        %3003 = vdwg.mxu0
        %v3004 = vadd.f32 %v2894, %v2983
        %v3005 = vadd.f32 %v2895, %v2986
        %v3006 = vadd.f32 %v2896, %v2991
        %v3007 = vadd.f32 %v2897, %v2994
        %v3008 = vadd.f32 %v2898, %v2999
        %v3009 = vld [vmem:[#allocation3 + $0xb] sm:$0xff]
        %v3010 = vld [vmem:[#allocation3 + $0x13] sm:$0xff]
        %v3011 = vld [vmem:[#allocation3 + $0x1b] sm:$0xff]
        %v3012 = vld [vmem:[#allocation3 + $0x23] sm:$0xff]
        %v3013 = vld [vmem:[#allocation3 + $0x2b] sm:$0xf]
        %v3014 = vld [vmem:[%s5 + $0xa0] sm:$0xf]
        %v3015 = vld [vmem:[%s5 + $0xa4] sm:$0xf]
        %v3016 = vld [vmem:[%s5 + $0xa8] sm:$0xf]
        %v3017 = vld [vmem:[%s5 + $0xac] sm:$0xf]
        %v3018 = vld [vmem:[%s5 + $0xb0] sm:$0xf]
        %v3019 = vld [vmem:[%s5 + $0xb4] sm:$0xf]
        %v3020 = vld [vmem:[%s5 + $0xb8] sm:$0xf]
        %v3021 = vld [vmem:[%s5 + $0xbc] sm:$0xf]
        %v3022 = vpack.c.bf16 %v3010, %v3009
        %v3023 = vpack.c.bf16 %v3012, %v3011
        %v3024 = vpack.c.bf16 %v3013, %v3013
        %v3033 = vunpack.c.l.b16 %v3014
        %v3034 = vunpack.c.l.b16 %v3015
        %v3035 = vunpack.c.l.b16 %v3016
        %v3036 = vunpack.c.l.b16 %v3017
        %v3037 = vunpack.c.l.b16 %v3018
        %v3038 = vunpack.c.l.b16 %v3019
        %v3039 = vunpack.c.l.b16 %v3020
        %v3040 = vunpack.c.l.b16 %v3021
        %v3041 = vpack.c.b16 %v3034, %v3033
        %v3042 = vpack.c.b16 %v3036, %v3035
        %v3043 = vpack.c.b16 %v3038, %v3037
        %v3044 = vpack.c.b16 %v3040, %v3039
        %v3050 = vsel %vm2460, %v3022, 0
        %v3053 = vsel %vm2460, %v3023, 0
        %v3056 = vsel %vm2460, %v3024, 0
        %3058 = vmatprep.subr.bf16.mxu0 0
        %3059 = vmatpush1.bf16.msra.mxu0 %v3041
        %3060 = vmatprep.subr.bf16.mxu0 0
        %3061 = vmatpush1.bf16.msra.mxu0 %v3042
        %3062 = vmatprep.subr.bf16.mxu0 0
        %3063 = vmatpush1.bf16.msra.mxu0 %v3043
        %3064 = vmatprep.subr.bf16.mxu0 0
        %3065 = vmatpush1.bf16.msra.mxu0 %v3044
        %3066 = vmatprep.subr.bf16.mxu0 0
        %3067 = vmatpush1.bf16.msra.mxu0 0
        %3068 = vmatprep.subr.bf16.mxu0 0
        %3069 = vmatpush1.bf16.msra.mxu0 0
        %3070 = vmatprep.subr.bf16.mxu0 0
        %3071 = vmatpush1.bf16.msra.mxu0 0
        %3072 = vmatprep.subr.bf16.mxu0 0
        %3073 = vmatpush1.bf16.msra.mxu0 0
        %3074 = vmatprep.subr.bf16.mxu0 0
        %3075 = vmatpush1.bf16.msra.mxu0 0
        %3076 = vmatprep.subr.bf16.mxu0 0
        %3077 = vmatpush1.bf16.msra.mxu0 0
        %3078 = vmatprep.subr.bf16.mxu0 0
        %3079 = vmatpush1.bf16.msra.mxu0 0
        %3080 = vmatprep.subr.bf16.mxu0 0
        %3081 = vmatpush1.bf16.msra.mxu0 0
        %3082 = vmatprep.subr.bf16.mxu0 0
        %3083 = vmatpush1.bf16.msra.mxu0 0
        %3084 = vmatprep.subr.bf16.mxu0 0
        %3085 = vmatpush1.bf16.msra.mxu0 0
        %3086 = vmatprep.subr.bf16.mxu0 0
        %3087 = vmatpush1.bf16.msra.mxu0 0
        %3088 = vmatprep.subr.bf16.mxu0 0
        %3089 = vmatpush1.bf16.msra.mxu0 0
        %3090 = vmatprep.mubr.bf16.mxu0 0
        %3091 = vmatmul.mubr.bf16.gmra.mrb[0].mxu0 %v3050
        %v3092 = vpop.f32.mrb[0].mxu0
        %v3093 = vadd.f32 0.0, %v3092
        %v3094 = vpop.f32.mrb[0].mxu0
        %v3095 = vpop.f32.mrb[0].mxu0
        %v3096 = vadd.f32 0.0, %v3095
        %v3097 = vpop.f32.mrb[0].mxu0
        %3098 = vmatprep.mubr.bf16.mxu0 0
        %3099 = vmatmul.mubr.bf16.gmra.mrb[0].mxu0 %v3053
        %v3100 = vpop.f32.mrb[0].mxu0
        %v3101 = vadd.f32 0.0, %v3100
        %v3102 = vpop.f32.mrb[0].mxu0
        %v3103 = vpop.f32.mrb[0].mxu0
        %v3104 = vadd.f32 0.0, %v3103
        %v3105 = vpop.f32.mrb[0].mxu0
        %3106 = vmatprep.mubr.bf16.mxu0 0
        %3107 = vmatmul.mubr.bf16.gmra.mrb[0].mxu0 %v3056
        %v3108 = vpop.f32.mrb[0].mxu0
        %v3109 = vadd.f32 0.0, %v3108
        %v3110 = vpop.f32.mrb[0].mxu0
        %v3111 = vpop.f32.mrb[0].mxu0
        %v3112 = vpop.f32.mrb[0].mxu0
        %3113 = vdwg.mxu0
        %v3114 = vadd.f32 %v3004, %v3093
        %v3115 = vadd.f32 %v3005, %v3096
        %v3116 = vadd.f32 %v3006, %v3101
        %v3117 = vadd.f32 %v3007, %v3104
        %v3118 = vadd.f32 %v3008, %v3109
        %v3119 = vld [vmem:[#allocation3 + $0x12] sm:$0xff]
        %v3120 = vld [vmem:[#allocation3 + $0x1a] sm:$0xff]
        %v3121 = vld [vmem:[#allocation3 + $0x22] sm:$0xff]
        %v3122 = vld [vmem:[#allocation3 + $0x2a] sm:$0xff]
        %v3123 = vld [vmem:[#allocation3 + $0x32] sm:$0xf]
        %v3124 = vld [vmem:[%s5 + $0xc0] sm:$0xf]
        %v3125 = vld [vmem:[%s5 + $0xc4] sm:$0xf]
        %v3126 = vld [vmem:[%s5 + $0xc8] sm:$0xf]
        %v3127 = vld [vmem:[%s5 + $0xcc] sm:$0xf]
        %v3128 = vld [vmem:[%s5 + $0xd0] sm:$0xf]
        %v3129 = vld [vmem:[%s5 + $0xd4] sm:$0xf]
        %v3130 = vld [vmem:[%s5 + $0xd8] sm:$0xf]
        %v3131 = vld [vmem:[%s5 + $0xdc] sm:$0xf]
        %v3132 = vpack.c.bf16 %v3120, %v3119
        %v3133 = vpack.c.bf16 %v3122, %v3121
        %v3134 = vpack.c.bf16 %v3123, %v3123
        %v3143 = vunpack.c.l.b16 %v3124
        %v3144 = vunpack.c.l.b16 %v3125
        %v3145 = vunpack.c.l.b16 %v3126
        %v3146 = vunpack.c.l.b16 %v3127
        %v3147 = vunpack.c.l.b16 %v3128
        %v3148 = vunpack.c.l.b16 %v3129
        %v3149 = vunpack.c.l.b16 %v3130
        %v3150 = vunpack.c.l.b16 %v3131
        %v3151 = vpack.c.b16 %v3144, %v3143
        %v3152 = vpack.c.b16 %v3146, %v3145
        %v3153 = vpack.c.b16 %v3148, %v3147
        %v3154 = vpack.c.b16 %v3150, %v3149
        %v3160 = vsel %vm2460, %v3132, 0
        %v3163 = vsel %vm2460, %v3133, 0
        %v3166 = vsel %vm2460, %v3134, 0
        %3168 = vmatprep.subr.bf16.mxu0 0
        %3169 = vmatpush1.bf16.msra.mxu0 %v3151
        %3170 = vmatprep.subr.bf16.mxu0 0
        %3171 = vmatpush1.bf16.msra.mxu0 %v3152
        %3172 = vmatprep.subr.bf16.mxu0 0
        %3173 = vmatpush1.bf16.msra.mxu0 %v3153
        %3174 = vmatprep.subr.bf16.mxu0 0
        %3175 = vmatpush1.bf16.msra.mxu0 %v3154
        %3176 = vmatprep.subr.bf16.mxu0 0
        %3177 = vmatpush1.bf16.msra.mxu0 0
        %3178 = vmatprep.subr.bf16.mxu0 0
        %3179 = vmatpush1.bf16.msra.mxu0 0
        %3180 = vmatprep.subr.bf16.mxu0 0
        %3181 = vmatpush1.bf16.msra.mxu0 0
        %3182 = vmatprep.subr.bf16.mxu0 0
        %3183 = vmatpush1.bf16.msra.mxu0 0
        %3184 = vmatprep.subr.bf16.mxu0 0
        %3185 = vmatpush1.bf16.msra.mxu0 0
        %3186 = vmatprep.subr.bf16.mxu0 0
        %3187 = vmatpush1.bf16.msra.mxu0 0
        %3188 = vmatprep.subr.bf16.mxu0 0
        %3189 = vmatpush1.bf16.msra.mxu0 0
        %3190 = vmatprep.subr.bf16.mxu0 0
        %3191 = vmatpush1.bf16.msra.mxu0 0
        %3192 = vmatprep.subr.bf16.mxu0 0
        %3193 = vmatpush1.bf16.msra.mxu0 0
        %3194 = vmatprep.subr.bf16.mxu0 0
        %3195 = vmatpush1.bf16.msra.mxu0 0
        %3196 = vmatprep.subr.bf16.mxu0 0
        %3197 = vmatpush1.bf16.msra.mxu0 0
        %3198 = vmatprep.subr.bf16.mxu0 0
        %3199 = vmatpush1.bf16.msra.mxu0 0
        %3200 = vmatprep.mubr.bf16.mxu0 0
        %3201 = vmatmul.mubr.bf16.gmra.mrb[0].mxu0 %v3160
        %v3202 = vpop.f32.mrb[0].mxu0
        %v3203 = vadd.f32 0.0, %v3202
        %v3204 = vpop.f32.mrb[0].mxu0
        %v3205 = vpop.f32.mrb[0].mxu0
        %v3206 = vadd.f32 0.0, %v3205
        %v3207 = vpop.f32.mrb[0].mxu0
        %3208 = vmatprep.mubr.bf16.mxu0 0
        %3209 = vmatmul.mubr.bf16.gmra.mrb[0].mxu0 %v3163
        %v3210 = vpop.f32.mrb[0].mxu0
        %v3211 = vadd.f32 0.0, %v3210
        %v3212 = vpop.f32.mrb[0].mxu0
        %v3213 = vpop.f32.mrb[0].mxu0
        %v3214 = vadd.f32 0.0, %v3213
        %v3215 = vpop.f32.mrb[0].mxu0
        %3216 = vmatprep.mubr.bf16.mxu0 0
        %3217 = vmatmul.mubr.bf16.gmra.mrb[0].mxu0 %v3166
        %v3218 = vpop.f32.mrb[0].mxu0
        %v3219 = vadd.f32 0.0, %v3218
        %v3220 = vpop.f32.mrb[0].mxu0
        %v3221 = vpop.f32.mrb[0].mxu0
        %v3222 = vpop.f32.mrb[0].mxu0
        %3223 = vdwg.mxu0
        %v3224 = vadd.f32 %v3114, %v3203
        %v3225 = vadd.f32 %v3115, %v3206
        %v3226 = vadd.f32 %v3116, %v3211
        %v3227 = vadd.f32 %v3117, %v3214
        %v3228 = vadd.f32 %v3118, %v3219
        %v3229 = vld [vmem:[#allocation3 + $0x13] sm:$0xff]
        %v3230 = vld [vmem:[#allocation3 + $0x1b] sm:$0xff]
        %v3231 = vld [vmem:[#allocation3 + $0x23] sm:$0xff]
        %v3232 = vld [vmem:[#allocation3 + $0x2b] sm:$0xff]
        %v3233 = vld [vmem:[#allocation3 + $0x33] sm:$0xf]
        %v3234 = vld [vmem:[%s5 + $0xe0] sm:$0xf]
        %v3235 = vld [vmem:[%s5 + $0xe4] sm:$0xf]
        %v3236 = vld [vmem:[%s5 + $0xe8] sm:$0xf]
        %v3237 = vld [vmem:[%s5 + $0xec] sm:$0xf]
        %v3238 = vld [vmem:[%s5 + $0xf0] sm:$0xf]
        %v3239 = vld [vmem:[%s5 + $0xf4] sm:$0xf]
        %v3240 = vld [vmem:[%s5 + $0xf8] sm:$0xf]
        %v3241 = vld [vmem:[%s5 + $0xfc] sm:$0xf]
        %v3242 = vpack.c.bf16 %v3230, %v3229
        %v3243 = vpack.c.bf16 %v3232, %v3231
        %v3244 = vpack.c.bf16 %v3233, %v3233
        %v3253 = vunpack.c.l.b16 %v3234
        %v3254 = vunpack.c.l.b16 %v3235
        %v3255 = vunpack.c.l.b16 %v3236
        %v3256 = vunpack.c.l.b16 %v3237
        %v3257 = vunpack.c.l.b16 %v3238
        %v3258 = vunpack.c.l.b16 %v3239
        %v3259 = vunpack.c.l.b16 %v3240
        %v3260 = vunpack.c.l.b16 %v3241
        %v3261 = vpack.c.b16 %v3254, %v3253
        %v3262 = vpack.c.b16 %v3256, %v3255
        %v3263 = vpack.c.b16 %v3258, %v3257
        %v3264 = vpack.c.b16 %v3260, %v3259
        %v3270 = vsel %vm2460, %v3242, 0
        %v3273 = vsel %vm2460, %v3243, 0
        %v3276 = vsel %vm2460, %v3244, 0
        %3278 = vmatprep.subr.bf16.mxu0 0
        %3279 = vmatpush1.bf16.msra.mxu0 %v3261
        %3280 = vmatprep.subr.bf16.mxu0 0
        %3281 = vmatpush1.bf16.msra.mxu0 %v3262
        %3282 = vmatprep.subr.bf16.mxu0 0
        %3283 = vmatpush1.bf16.msra.mxu0 %v3263
        %3284 = vmatprep.subr.bf16.mxu0 0
        %3285 = vmatpush1.bf16.msra.mxu0 %v3264
        %3286 = vmatprep.subr.bf16.mxu0 0
        %3287 = vmatpush1.bf16.msra.mxu0 0
        %3288 = vmatprep.subr.bf16.mxu0 0
        %3289 = vmatpush1.bf16.msra.mxu0 0
        %3290 = vmatprep.subr.bf16.mxu0 0
        %3291 = vmatpush1.bf16.msra.mxu0 0
        %3292 = vmatprep.subr.bf16.mxu0 0
        %3293 = vmatpush1.bf16.msra.mxu0 0
        %3294 = vmatprep.subr.bf16.mxu0 0
        %3295 = vmatpush1.bf16.msra.mxu0 0
        %3296 = vmatprep.subr.bf16.mxu0 0
        %3297 = vmatpush1.bf16.msra.mxu0 0
        %3298 = vmatprep.subr.bf16.mxu0 0
        %3299 = vmatpush1.bf16.msra.mxu0 0
        %3300 = vmatprep.subr.bf16.mxu0 0
        %3301 = vmatpush1.bf16.msra.mxu0 0
        %3302 = vmatprep.subr.bf16.mxu0 0
        %3303 = vmatpush1.bf16.msra.mxu0 0
        %3304 = vmatprep.subr.bf16.mxu0 0
        %3305 = vmatpush1.bf16.msra.mxu0 0
        %3306 = vmatprep.subr.bf16.mxu0 0
        %3307 = vmatpush1.bf16.msra.mxu0 0
        %3308 = vmatprep.subr.bf16.mxu0 0
        %3309 = vmatpush1.bf16.msra.mxu0 0
        %3310 = vmatprep.mubr.bf16.mxu0 0
        %3311 = vmatmul.mubr.bf16.gmra.mrb[0].mxu0 %v3270
        %v3312 = vpop.f32.mrb[0].mxu0
        %v3313 = vadd.f32 0.0, %v3312
        %v3314 = vpop.f32.mrb[0].mxu0
        %v3315 = vpop.f32.mrb[0].mxu0
        %v3316 = vadd.f32 0.0, %v3315
        %v3317 = vpop.f32.mrb[0].mxu0
        %3318 = vmatprep.mubr.bf16.mxu0 0
        %3319 = vmatmul.mubr.bf16.gmra.mrb[0].mxu0 %v3273
        %v3320 = vpop.f32.mrb[0].mxu0
        %v3321 = vadd.f32 0.0, %v3320
        %v3322 = vpop.f32.mrb[0].mxu0
        %v3323 = vpop.f32.mrb[0].mxu0
        %v3324 = vadd.f32 0.0, %v3323
        %v3325 = vpop.f32.mrb[0].mxu0
        %3326 = vmatprep.mubr.bf16.mxu0 0
        %3327 = vmatmul.mubr.bf16.gmra.mrb[0].mxu0 %v3276
        %v3328 = vpop.f32.mrb[0].mxu0
        %v3329 = vadd.f32 0.0, %v3328
        %v3330 = vpop.f32.mrb[0].mxu0
        %v3331 = vpop.f32.mrb[0].mxu0
        %v3332 = vpop.f32.mrb[0].mxu0
        %3333 = vdwg.mxu0
        %v3334 = vadd.f32 %v3224, %v3313
        %v3335 = vadd.f32 %v3225, %v3316
        %v3336 = vadd.f32 %v3226, %v3321
        %v3337 = vadd.f32 %v3227, %v3324
        %v3338 = vadd.f32 %v3228, %v3329
        %v3339 = vld [vmem:[#allocation3 + $0x14] sm:$0xff]
        %v3340 = vld [vmem:[#allocation3 + $0x1c] sm:$0xff]
        %v3341 = vld [vmem:[#allocation3 + $0x24] sm:$0xff]
        %v3342 = vld [vmem:[#allocation3 + $0x2c] sm:$0xff]
        %v3343 = vld [vmem:[#allocation3 + $0x34] sm:$0xf]
        %v3344 = vld [vmem:[%s5 + $0x100] sm:$0xf]
        %v3345 = vld [vmem:[%s5 + $0x104] sm:$0xf]
        %v3346 = vld [vmem:[%s5 + $0x108] sm:$0xf]
        %v3347 = vld [vmem:[%s5 + $0x10c] sm:$0xf]
        %v3348 = vld [vmem:[%s5 + $0x110] sm:$0xf]
        %v3349 = vld [vmem:[%s5 + $0x114] sm:$0xf]
        %v3350 = vld [vmem:[%s5 + $0x118] sm:$0xf]
        %v3351 = vld [vmem:[%s5 + $0x11c] sm:$0xf]
        %v3352 = vpack.c.bf16 %v3340, %v3339
        %v3353 = vpack.c.bf16 %v3342, %v3341
        %v3354 = vpack.c.bf16 %v3343, %v3343
        %v3363 = vunpack.c.l.b16 %v3344
        %v3364 = vunpack.c.l.b16 %v3345
        %v3365 = vunpack.c.l.b16 %v3346
        %v3366 = vunpack.c.l.b16 %v3347
        %v3367 = vunpack.c.l.b16 %v3348
        %v3368 = vunpack.c.l.b16 %v3349
        %v3369 = vunpack.c.l.b16 %v3350
        %v3370 = vunpack.c.l.b16 %v3351
        %v3371 = vpack.c.b16 %v3364, %v3363
        %v3372 = vpack.c.b16 %v3366, %v3365
        %v3373 = vpack.c.b16 %v3368, %v3367
        %v3374 = vpack.c.b16 %v3370, %v3369
        %v3380 = vsel %vm2460, %v3352, 0
        %v3383 = vsel %vm2460, %v3353, 0
        %v3386 = vsel %vm2460, %v3354, 0
        %3388 = vmatprep.subr.bf16.mxu0 0
        %3389 = vmatpush1.bf16.msra.mxu0 %v3371
        %3390 = vmatprep.subr.bf16.mxu0 0
        %3391 = vmatpush1.bf16.msra.mxu0 %v3372
        %3392 = vmatprep.subr.bf16.mxu0 0
        %3393 = vmatpush1.bf16.msra.mxu0 %v3373
        %3394 = vmatprep.subr.bf16.mxu0 0
        %3395 = vmatpush1.bf16.msra.mxu0 %v3374
        %3396 = vmatprep.subr.bf16.mxu0 0
        %3397 = vmatpush1.bf16.msra.mxu0 0
        %3398 = vmatprep.subr.bf16.mxu0 0
        %3399 = vmatpush1.bf16.msra.mxu0 0
        %3400 = vmatprep.subr.bf16.mxu0 0
        %3401 = vmatpush1.bf16.msra.mxu0 0
        %3402 = vmatprep.subr.bf16.mxu0 0
        %3403 = vmatpush1.bf16.msra.mxu0 0
        %3404 = vmatprep.subr.bf16.mxu0 0
        %3405 = vmatpush1.bf16.msra.mxu0 0
        %3406 = vmatprep.subr.bf16.mxu0 0
        %3407 = vmatpush1.bf16.msra.mxu0 0
        %3408 = vmatprep.subr.bf16.mxu0 0
        %3409 = vmatpush1.bf16.msra.mxu0 0
        %3410 = vmatprep.subr.bf16.mxu0 0
        %3411 = vmatpush1.bf16.msra.mxu0 0
        %3412 = vmatprep.subr.bf16.mxu0 0
        %3413 = vmatpush1.bf16.msra.mxu0 0
        %3414 = vmatprep.subr.bf16.mxu0 0
        %3415 = vmatpush1.bf16.msra.mxu0 0
        %3416 = vmatprep.subr.bf16.mxu0 0
        %3417 = vmatpush1.bf16.msra.mxu0 0
        %3418 = vmatprep.subr.bf16.mxu0 0
        %3419 = vmatpush1.bf16.msra.mxu0 0
        %3420 = vmatprep.mubr.bf16.mxu0 0
        %3421 = vmatmul.mubr.bf16.gmra.mrb[0].mxu0 %v3380
        %v3422 = vpop.f32.mrb[0].mxu0
        %v3423 = vadd.f32 0.0, %v3422
        %v3424 = vpop.f32.mrb[0].mxu0
        %v3425 = vpop.f32.mrb[0].mxu0
        %v3426 = vadd.f32 0.0, %v3425
        %v3427 = vpop.f32.mrb[0].mxu0
        %3428 = vmatprep.mubr.bf16.mxu0 0
        %3429 = vmatmul.mubr.bf16.gmra.mrb[0].mxu0 %v3383
        %v3430 = vpop.f32.mrb[0].mxu0
        %v3431 = vadd.f32 0.0, %v3430
        %v3432 = vpop.f32.mrb[0].mxu0
        %v3433 = vpop.f32.mrb[0].mxu0
        %v3434 = vadd.f32 0.0, %v3433
        %v3435 = vpop.f32.mrb[0].mxu0
        %3436 = vmatprep.mubr.bf16.mxu0 0
        %3437 = vmatmul.mubr.bf16.gmra.mrb[0].mxu0 %v3386
        %v3438 = vpop.f32.mrb[0].mxu0
        %v3439 = vadd.f32 0.0, %v3438
        %v3440 = vpop.f32.mrb[0].mxu0
        %v3441 = vpop.f32.mrb[0].mxu0
        %v3442 = vpop.f32.mrb[0].mxu0
        %3443 = vdwg.mxu0
        %v3444 = vadd.f32 %v3334, %v3423
        %v3445 = vadd.f32 %v3335, %v3426
        %v3446 = vadd.f32 %v3336, %v3431
        %v3447 = vadd.f32 %v3337, %v3434
        %v3448 = vadd.f32 %v3338, %v3439
        %v3449 = vld [vmem:[%s6] sm:$0x1]
        %v3451 = vlaneseq
        %v3452 = vshrl.u32 %v3451, 7
        %v3453 = vsub.s32 0, %v3452
        %v3454 = vrot.slane %v3449, %v3453
        %v3456 = vadd.f32 %v3444, %v3454
        %v3457 = vadd.f32 %v3445, %v3454
        %v3458 = vadd.f32 %v3446, %v3454
        %v3459 = vadd.f32 %v3447, %v3454
        %v3460 = vadd.f32 %v3448, %v3454
        %v3461 = vmax.f32 %v3456, 0.0
        %v3462 = vmax.f32 %v3457, 0.0
        %v3463 = vmax.f32 %v3458, 0.0
        %v3464 = vmax.f32 %v3459, 0.0
        %v3465 = vmax.f32 %v3460, 0.0
        %3466 = vst.msk [vmem:[#allocation4] sm:$0xff] %vm2460, %v3461
        %3467 = vst.msk [vmem:[#allocation4 + $0x8] sm:$0xff] %vm2460, %v3462
        %3468 = vst.msk [vmem:[#allocation4 + $0x10] sm:$0xff] %vm2460, %v3463
        %3469 = vst.msk [vmem:[#allocation4 + $0x18] sm:$0xff] %vm2460, %v3464
        %vm3470 = vcmask 519168
        %3471 = vst.msk [vmem:[#allocation4 + $0x20] sm:$0xf] %vm3470, %v3465
        %v3472 = vld [vmem:[#allocation4] sm:$0x1]
        %v3473 = vld [vmem:[%s7] sm:$0xff]
        %v3474 = vld [vmem:[%s7 + $0x8] sm:$0xff]
        %v3475 = vld [vmem:[%s7 + $0x10] sm:$0xff]
        %v3476 = vld [vmem:[%s7 + $0x18] sm:$0xff]
        %v3477 = vld [vmem:[%s7 + $0x20] sm:$0xff]
        %v3478 = vld [vmem:[%s7 + $0x28] sm:$0xff]
        %v3479 = vld [vmem:[%s7 + $0x30] sm:$0xff]
        %v3480 = vld [vmem:[%s7 + $0x38] sm:$0xff]
        %v3481 = vld [vmem:[%s7 + $0x40] sm:$0xff]
        %v3482 = vld [vmem:[%s7 + $0x48] sm:$0xff]
        %v3483 = vld [vmem:[%s7 + $0x50] sm:$0xff]
        %v3484 = vld [vmem:[%s7 + $0x58] sm:$0xff]
        %v3485 = vld [vmem:[%s7 + $0x60] sm:$0xff]
        %v3486 = vld [vmem:[%s7 + $0x68] sm:$0xff]
        %v3487 = vld [vmem:[%s7 + $0x70] sm:$0xff]
        %v3488 = vld [vmem:[%s7 + $0x78] sm:$0xff]
        %v3489 = vpack.c.bf16 %v3472, %v3472
        %v3490 = vld [vmem:[#allocation4 + $0x1] sm:$0x1]
        %v3491 = vld [vmem:[%s7 + $0x80] sm:$0xff]
        %v3492 = vld [vmem:[%s7 + $0x88] sm:$0xff]
        %v3493 = vld [vmem:[%s7 + $0x90] sm:$0xff]
        %v3494 = vld [vmem:[%s7 + $0x98] sm:$0xff]
        %v3495 = vld [vmem:[%s7 + $0xa0] sm:$0xff]
        %v3496 = vld [vmem:[%s7 + $0xa8] sm:$0xff]
        %v3497 = vld [vmem:[%s7 + $0xb0] sm:$0xff]
        %v3498 = vld [vmem:[%s7 + $0xb8] sm:$0xff]
        %v3499 = vld [vmem:[%s7 + $0xc0] sm:$0xff]
        %v3500 = vld [vmem:[%s7 + $0xc8] sm:$0xff]
        %v3501 = vld [vmem:[%s7 + $0xd0] sm:$0xff]
        %v3502 = vld [vmem:[%s7 + $0xd8] sm:$0xff]
        %v3503 = vld [vmem:[%s7 + $0xe0] sm:$0xff]
        %v3504 = vld [vmem:[%s7 + $0xe8] sm:$0xff]
        %v3505 = vld [vmem:[%s7 + $0xf0] sm:$0xff]
        %v3506 = vld [vmem:[%s7 + $0xf8] sm:$0xff]
        %v3507 = vpack.c.bf16 %v3490, %v3490
        %v3524 = vunpack.c.l.b16 %v3491
        %v3525 = vunpack.c.h.b16 %v3491
        %v3526 = vunpack.c.l.b16 %v3492
        %v3527 = vunpack.c.h.b16 %v3492
        %v3528 = vunpack.c.l.b16 %v3493
        %v3529 = vunpack.c.h.b16 %v3493
        %v3530 = vunpack.c.l.b16 %v3494
        %v3531 = vunpack.c.h.b16 %v3494
        %v3532 = vunpack.c.l.b16 %v3495
        %v3533 = vunpack.c.h.b16 %v3495
        %v3534 = vunpack.c.l.b16 %v3496
        %v3535 = vunpack.c.h.b16 %v3496
        %v3536 = vunpack.c.l.b16 %v3497
        %v3537 = vunpack.c.h.b16 %v3497
        %v3538 = vunpack.c.l.b16 %v3498
        %v3539 = vunpack.c.h.b16 %v3498
        %v3540 = vunpack.c.l.b16 %v3499
        %v3541 = vunpack.c.h.b16 %v3499
        %v3542 = vunpack.c.l.b16 %v3500
        %v3543 = vunpack.c.h.b16 %v3500
        %v3544 = vunpack.c.l.b16 %v3501
        %v3545 = vunpack.c.h.b16 %v3501
        %v3546 = vunpack.c.l.b16 %v3502
        %v3547 = vunpack.c.h.b16 %v3502
        %v3548 = vunpack.c.l.b16 %v3503
        %v3549 = vunpack.c.h.b16 %v3503
        %v3550 = vunpack.c.l.b16 %v3504
        %v3551 = vunpack.c.h.b16 %v3504
        %v3552 = vunpack.c.l.b16 %v3505
        %v3553 = vunpack.c.h.b16 %v3505
        %v3554 = vunpack.c.l.b16 %v3506
        %v3555 = vunpack.c.h.b16 %v3506
        %v3556 = vpack.c.b16 %v3528, %v3524
        %v3557 = vpack.c.b16 %v3529, %v3525
        %v3558 = vpack.c.b16 %v3530, %v3526
        %v3559 = vpack.c.b16 %v3531, %v3527
        %v3560 = vpack.c.b16 %v3536, %v3532
        %v3561 = vpack.c.b16 %v3537, %v3533
        %v3562 = vpack.c.b16 %v3538, %v3534
        %v3563 = vpack.c.b16 %v3539, %v3535
        %v3564 = vpack.c.b16 %v3544, %v3540
        %v3565 = vpack.c.b16 %v3545, %v3541
        %v3566 = vpack.c.b16 %v3546, %v3542
        %v3567 = vpack.c.b16 %v3547, %v3543
        %v3568 = vpack.c.b16 %v3552, %v3548
        %v3569 = vpack.c.b16 %v3553, %v3549
        %v3570 = vpack.c.b16 %v3554, %v3550
        %v3571 = vpack.c.b16 %v3555, %v3551
        %v3589 = vsel %vm2460, %v3507, 0
        %3591 = vmatprep.subr.bf16.mxu0 %v3557
        %3592 = vmatpush1.bf16.msra.mxu0 %v3556
        %3593 = vmatprep.subr.bf16.mxu0 %v3561
        %3594 = vmatpush1.bf16.msra.mxu0 %v3560
        %3595 = vmatprep.subr.bf16.mxu0 %v3565
        %3596 = vmatpush1.bf16.msra.mxu0 %v3564
        %3597 = vmatprep.subr.bf16.mxu0 %v3569
        %3598 = vmatpush1.bf16.msra.mxu0 %v3568
        %3599 = vmatprep.subr.bf16.mxu0 0
        %3600 = vmatpush1.bf16.msra.mxu0 0
        %3601 = vmatprep.subr.bf16.mxu0 0
        %3602 = vmatpush1.bf16.msra.mxu0 0
        %3603 = vmatprep.subr.bf16.mxu0 0
        %3604 = vmatpush1.bf16.msra.mxu0 0
        %3605 = vmatprep.subr.bf16.mxu0 0
        %3606 = vmatpush1.bf16.msra.mxu0 0
        %3607 = vmatprep.subr.bf16.mxu0 0
        %3608 = vmatpush1.bf16.msra.mxu0 0
        %3609 = vmatprep.subr.bf16.mxu0 0
        %3610 = vmatpush1.bf16.msra.mxu0 0
        %3611 = vmatprep.subr.bf16.mxu0 0
        %3612 = vmatpush1.bf16.msra.mxu0 0
        %3613 = vmatprep.subr.bf16.mxu0 0
        %3614 = vmatpush1.bf16.msra.mxu0 0
        %3615 = vmatprep.subr.bf16.mxu0 0
        %3616 = vmatpush1.bf16.msra.mxu0 0
        %3617 = vmatprep.subr.bf16.mxu0 0
        %3618 = vmatpush1.bf16.msra.mxu0 0
        %3619 = vmatprep.subr.bf16.mxu0 0
        %3620 = vmatpush1.bf16.msra.mxu0 0
        %3621 = vmatprep.subr.bf16.mxu0 0
        %3622 = vmatpush1.bf16.msra.mxu0 0
        %3623 = vmatprep.mubr.bf16.mxu0 0
        %3624 = vmatmul.mubr.bf16.gmra.mrb[0].mxu0 %v3589
        %v3625 = vpop.f32.mrb[0].mxu0
        %v3626 = vadd.f32 0.0, %v3625
        %v3627 = vpop.f32.mrb[0].mxu0
        %v3628 = vadd.f32 0.0, %v3627
        %v3629 = vpop.f32.mrb[0].mxu0
        %v3630 = vpop.f32.mrb[0].mxu0
        %3631 = vdwg.mxu0
        %3632 = vmatprep.subr.bf16.mxu0 %v3559
        %3633 = vmatpush1.bf16.msra.mxu0 %v3558
        %3634 = vmatprep.subr.bf16.mxu0 %v3563
        %3635 = vmatpush1.bf16.msra.mxu0 %v3562
        %3636 = vmatprep.subr.bf16.mxu0 %v3567
        %3637 = vmatpush1.bf16.msra.mxu0 %v3566
        %3638 = vmatprep.subr.bf16.mxu0 %v3571
        %3639 = vmatpush1.bf16.msra.mxu0 %v3570
        %3640 = vmatprep.subr.bf16.mxu0 0
        %3641 = vmatpush1.bf16.msra.mxu0 0
        %3642 = vmatprep.subr.bf16.mxu0 0
        %3643 = vmatpush1.bf16.msra.mxu0 0
        %3644 = vmatprep.subr.bf16.mxu0 0
        %3645 = vmatpush1.bf16.msra.mxu0 0
        %3646 = vmatprep.subr.bf16.mxu0 0
        %3647 = vmatpush1.bf16.msra.mxu0 0
        %3648 = vmatprep.subr.bf16.mxu0 0
        %3649 = vmatpush1.bf16.msra.mxu0 0
        %3650 = vmatprep.subr.bf16.mxu0 0
        %3651 = vmatpush1.bf16.msra.mxu0 0
        %3652 = vmatprep.subr.bf16.mxu0 0
        %3653 = vmatpush1.bf16.msra.mxu0 0
        %3654 = vmatprep.subr.bf16.mxu0 0
        %3655 = vmatpush1.bf16.msra.mxu0 0
        %3656 = vmatprep.subr.bf16.mxu0 0
        %3657 = vmatpush1.bf16.msra.mxu0 0
        %3658 = vmatprep.subr.bf16.mxu0 0
        %3659 = vmatpush1.bf16.msra.mxu0 0
        %3660 = vmatprep.subr.bf16.mxu0 0
        %3661 = vmatpush1.bf16.msra.mxu0 0
        %3662 = vmatprep.subr.bf16.mxu0 0
        %3663 = vmatpush1.bf16.msra.mxu0 0
        %3664 = vmatprep.mubr.bf16.mxu0 0
        %3665 = vmatmul.mubr.bf16.gmra.mrb[0].mxu0 %v3589
        %v3666 = vpop.f32.mrb[0].mxu0
        %v3667 = vadd.f32 0.0, %v3666
        %v3668 = vpop.f32.mrb[0].mxu0
        %v3669 = vadd.f32 0.0, %v3668
        %v3670 = vpop.f32.mrb[0].mxu0
        %v3671 = vpop.f32.mrb[0].mxu0
        %3672 = vdwg.mxu0
        %v3689 = vunpack.c.l.b16 %v3473
        %v3690 = vunpack.c.h.b16 %v3473
        %v3691 = vunpack.c.l.b16 %v3474
        %v3692 = vunpack.c.h.b16 %v3474
        %v3693 = vunpack.c.l.b16 %v3475
        %v3694 = vunpack.c.h.b16 %v3475
        %v3695 = vunpack.c.l.b16 %v3476
        %v3696 = vunpack.c.h.b16 %v3476
        %v3697 = vunpack.c.l.b16 %v3477
        %v3698 = vunpack.c.h.b16 %v3477
        %v3699 = vunpack.c.l.b16 %v3478
        %v3700 = vunpack.c.h.b16 %v3478
        %v3701 = vunpack.c.l.b16 %v3479
        %v3702 = vunpack.c.h.b16 %v3479
        %v3703 = vunpack.c.l.b16 %v3480
        %v3704 = vunpack.c.h.b16 %v3480
        %v3705 = vunpack.c.l.b16 %v3481
        %v3706 = vunpack.c.h.b16 %v3481
        %v3707 = vunpack.c.l.b16 %v3482
        %v3708 = vunpack.c.h.b16 %v3482
        %v3709 = vunpack.c.l.b16 %v3483
        %v3710 = vunpack.c.h.b16 %v3483
        %v3711 = vunpack.c.l.b16 %v3484
        %v3712 = vunpack.c.h.b16 %v3484
        %v3713 = vunpack.c.l.b16 %v3485
        %v3714 = vunpack.c.h.b16 %v3485
        %v3715 = vunpack.c.l.b16 %v3486
        %v3716 = vunpack.c.h.b16 %v3486
        %v3717 = vunpack.c.l.b16 %v3487
        %v3718 = vunpack.c.h.b16 %v3487
        %v3719 = vunpack.c.l.b16 %v3488
        %v3720 = vunpack.c.h.b16 %v3488
        %v3721 = vpack.c.b16 %v3693, %v3689
        %v3722 = vpack.c.b16 %v3694, %v3690
        %v3723 = vpack.c.b16 %v3695, %v3691
        %v3724 = vpack.c.b16 %v3696, %v3692
        %v3725 = vpack.c.b16 %v3701, %v3697
        %v3726 = vpack.c.b16 %v3702, %v3698
        %v3727 = vpack.c.b16 %v3703, %v3699
        %v3728 = vpack.c.b16 %v3704, %v3700
        %v3729 = vpack.c.b16 %v3709, %v3705
        %v3730 = vpack.c.b16 %v3710, %v3706
        %v3731 = vpack.c.b16 %v3711, %v3707
        %v3732 = vpack.c.b16 %v3712, %v3708
        %v3733 = vpack.c.b16 %v3717, %v3713
        %v3734 = vpack.c.b16 %v3718, %v3714
        %v3735 = vpack.c.b16 %v3719, %v3715
        %v3736 = vpack.c.b16 %v3720, %v3716
        %v3754 = vsel %vm2460, %v3489, 0
        %3756 = vmatprep.subr.bf16.mxu0 %v3722
        %3757 = vmatpush1.bf16.msra.mxu0 %v3721
        %3758 = vmatprep.subr.bf16.mxu0 %v3726
        %3759 = vmatpush1.bf16.msra.mxu0 %v3725
        %3760 = vmatprep.subr.bf16.mxu0 %v3730
        %3761 = vmatpush1.bf16.msra.mxu0 %v3729
        %3762 = vmatprep.subr.bf16.mxu0 %v3734
        %3763 = vmatpush1.bf16.msra.mxu0 %v3733
        %3764 = vmatprep.subr.bf16.mxu0 0
        %3765 = vmatpush1.bf16.msra.mxu0 0
        %3766 = vmatprep.subr.bf16.mxu0 0
        %3767 = vmatpush1.bf16.msra.mxu0 0
        %3768 = vmatprep.subr.bf16.mxu0 0
        %3769 = vmatpush1.bf16.msra.mxu0 0
        %3770 = vmatprep.subr.bf16.mxu0 0
        %3771 = vmatpush1.bf16.msra.mxu0 0
        %3772 = vmatprep.subr.bf16.mxu0 0
        %3773 = vmatpush1.bf16.msra.mxu0 0
        %3774 = vmatprep.subr.bf16.mxu0 0
        %3775 = vmatpush1.bf16.msra.mxu0 0
        %3776 = vmatprep.subr.bf16.mxu0 0
        %3777 = vmatpush1.bf16.msra.mxu0 0
        %3778 = vmatprep.subr.bf16.mxu0 0
        %3779 = vmatpush1.bf16.msra.mxu0 0
        %3780 = vmatprep.subr.bf16.mxu0 0
        %3781 = vmatpush1.bf16.msra.mxu0 0
        %3782 = vmatprep.subr.bf16.mxu0 0
        %3783 = vmatpush1.bf16.msra.mxu0 0
        %3784 = vmatprep.subr.bf16.mxu0 0
        %3785 = vmatpush1.bf16.msra.mxu0 0
        %3786 = vmatprep.subr.bf16.mxu0 0
        %3787 = vmatpush1.bf16.msra.mxu0 0
        %3788 = vmatprep.mubr.bf16.mxu0 0
        %3789 = vmatmul.mubr.bf16.gmra.mrb[0].mxu0 %v3754
        %v3790 = vpop.f32.mrb[0].mxu0
        %v3791 = vadd.f32 %v3626, %v3790
        %v3792 = vpop.f32.mrb[0].mxu0
        %v3793 = vadd.f32 %v3628, %v3792
        %v3794 = vpop.f32.mrb[0].mxu0
        %v3795 = vpop.f32.mrb[0].mxu0
        %3796 = vdwg.mxu0
        %3797 = vmatprep.subr.bf16.mxu0 %v3724
        %3798 = vmatpush1.bf16.msra.mxu0 %v3723
        %3799 = vmatprep.subr.bf16.mxu0 %v3728
        %3800 = vmatpush1.bf16.msra.mxu0 %v3727
        %3801 = vmatprep.subr.bf16.mxu0 %v3732
        %3802 = vmatpush1.bf16.msra.mxu0 %v3731
        %3803 = vmatprep.subr.bf16.mxu0 %v3736
        %3804 = vmatpush1.bf16.msra.mxu0 %v3735
        %3805 = vmatprep.subr.bf16.mxu0 0
        %3806 = vmatpush1.bf16.msra.mxu0 0
        %3807 = vmatprep.subr.bf16.mxu0 0
        %3808 = vmatpush1.bf16.msra.mxu0 0
        %3809 = vmatprep.subr.bf16.mxu0 0
        %3810 = vmatpush1.bf16.msra.mxu0 0
        %3811 = vmatprep.subr.bf16.mxu0 0
        %3812 = vmatpush1.bf16.msra.mxu0 0
        %3813 = vmatprep.subr.bf16.mxu0 0
        %3814 = vmatpush1.bf16.msra.mxu0 0
        %3815 = vmatprep.subr.bf16.mxu0 0
        %3816 = vmatpush1.bf16.msra.mxu0 0
        %3817 = vmatprep.subr.bf16.mxu0 0
        %3818 = vmatpush1.bf16.msra.mxu0 0
        %3819 = vmatprep.subr.bf16.mxu0 0
        %3820 = vmatpush1.bf16.msra.mxu0 0
        %3821 = vmatprep.subr.bf16.mxu0 0
        %3822 = vmatpush1.bf16.msra.mxu0 0
        %3823 = vmatprep.subr.bf16.mxu0 0
        %3824 = vmatpush1.bf16.msra.mxu0 0
        %3825 = vmatprep.subr.bf16.mxu0 0
        %3826 = vmatpush1.bf16.msra.mxu0 0
        %3827 = vmatprep.subr.bf16.mxu0 0
        %3828 = vmatpush1.bf16.msra.mxu0 0
        %3829 = vmatprep.mubr.bf16.mxu0 0
        %3830 = vmatmul.mubr.bf16.gmra.mrb[0].mxu0 %v3754
        %v3831 = vpop.f32.mrb[0].mxu0
        %v3832 = vadd.f32 %v3667, %v3831
        %v3833 = vpop.f32.mrb[0].mxu0
        %v3834 = vadd.f32 %v3669, %v3833
        %v3835 = vpop.f32.mrb[0].mxu0
        %v3836 = vpop.f32.mrb[0].mxu0
        %3837 = vdwg.mxu0
        %v3838 = vld [vmem:[#allocation4 + $0x2] sm:$0x1]
        %v3839 = vld [vmem:[%s7 + $0x100] sm:$0xff]
        %v3840 = vld [vmem:[%s7 + $0x108] sm:$0xff]
        %v3841 = vld [vmem:[%s7 + $0x110] sm:$0xff]
        %v3842 = vld [vmem:[%s7 + $0x118] sm:$0xff]
        %v3843 = vld [vmem:[%s7 + $0x120] sm:$0xff]
        %v3844 = vld [vmem:[%s7 + $0x128] sm:$0xff]
        %v3845 = vld [vmem:[%s7 + $0x130] sm:$0xff]
        %v3846 = vld [vmem:[%s7 + $0x138] sm:$0xff]
        %v3847 = vld [vmem:[%s7 + $0x140] sm:$0xff]
        %v3848 = vld [vmem:[%s7 + $0x148] sm:$0xff]
        %v3849 = vld [vmem:[%s7 + $0x150] sm:$0xff]
        %v3850 = vld [vmem:[%s7 + $0x158] sm:$0xff]
        %v3851 = vld [vmem:[%s7 + $0x160] sm:$0xff]
        %v3852 = vld [vmem:[%s7 + $0x168] sm:$0xff]
        %v3853 = vld [vmem:[%s7 + $0x170] sm:$0xff]
        %v3854 = vld [vmem:[%s7 + $0x178] sm:$0xff]
        %v3855 = vpack.c.bf16 %v3838, %v3838
        %v3872 = vunpack.c.l.b16 %v3839
        %v3873 = vunpack.c.h.b16 %v3839
        %v3874 = vunpack.c.l.b16 %v3840
        %v3875 = vunpack.c.h.b16 %v3840
        %v3876 = vunpack.c.l.b16 %v3841
        %v3877 = vunpack.c.h.b16 %v3841
        %v3878 = vunpack.c.l.b16 %v3842
        %v3879 = vunpack.c.h.b16 %v3842
        %v3880 = vunpack.c.l.b16 %v3843
        %v3881 = vunpack.c.h.b16 %v3843
        %v3882 = vunpack.c.l.b16 %v3844
        %v3883 = vunpack.c.h.b16 %v3844
        %v3884 = vunpack.c.l.b16 %v3845
        %v3885 = vunpack.c.h.b16 %v3845
        %v3886 = vunpack.c.l.b16 %v3846
        %v3887 = vunpack.c.h.b16 %v3846
        %v3888 = vunpack.c.l.b16 %v3847
        %v3889 = vunpack.c.h.b16 %v3847
        %v3890 = vunpack.c.l.b16 %v3848
        %v3891 = vunpack.c.h.b16 %v3848
        %v3892 = vunpack.c.l.b16 %v3849
        %v3893 = vunpack.c.h.b16 %v3849
        %v3894 = vunpack.c.l.b16 %v3850
        %v3895 = vunpack.c.h.b16 %v3850
        %v3896 = vunpack.c.l.b16 %v3851
        %v3897 = vunpack.c.h.b16 %v3851
        %v3898 = vunpack.c.l.b16 %v3852
        %v3899 = vunpack.c.h.b16 %v3852
        %v3900 = vunpack.c.l.b16 %v3853
        %v3901 = vunpack.c.h.b16 %v3853
        %v3902 = vunpack.c.l.b16 %v3854
        %v3903 = vunpack.c.h.b16 %v3854
        %v3904 = vpack.c.b16 %v3876, %v3872
        %v3905 = vpack.c.b16 %v3877, %v3873
        %v3906 = vpack.c.b16 %v3878, %v3874
        %v3907 = vpack.c.b16 %v3879, %v3875
        %v3908 = vpack.c.b16 %v3884, %v3880
        %v3909 = vpack.c.b16 %v3885, %v3881
        %v3910 = vpack.c.b16 %v3886, %v3882
        %v3911 = vpack.c.b16 %v3887, %v3883
        %v3912 = vpack.c.b16 %v3892, %v3888
        %v3913 = vpack.c.b16 %v3893, %v3889
        %v3914 = vpack.c.b16 %v3894, %v3890
        %v3915 = vpack.c.b16 %v3895, %v3891
        %v3916 = vpack.c.b16 %v3900, %v3896
        %v3917 = vpack.c.b16 %v3901, %v3897
        %v3918 = vpack.c.b16 %v3902, %v3898
        %v3919 = vpack.c.b16 %v3903, %v3899
        %v3937 = vsel %vm2460, %v3855, 0
        %3939 = vmatprep.subr.bf16.mxu0 %v3905
        %3940 = vmatpush1.bf16.msra.mxu0 %v3904
        %3941 = vmatprep.subr.bf16.mxu0 %v3909
        %3942 = vmatpush1.bf16.msra.mxu0 %v3908
        %3943 = vmatprep.subr.bf16.mxu0 %v3913
        %3944 = vmatpush1.bf16.msra.mxu0 %v3912
        %3945 = vmatprep.subr.bf16.mxu0 %v3917
        %3946 = vmatpush1.bf16.msra.mxu0 %v3916
        %3947 = vmatprep.subr.bf16.mxu0 0
        %3948 = vmatpush1.bf16.msra.mxu0 0
        %3949 = vmatprep.subr.bf16.mxu0 0
        %3950 = vmatpush1.bf16.msra.mxu0 0
        %3951 = vmatprep.subr.bf16.mxu0 0
        %3952 = vmatpush1.bf16.msra.mxu0 0
        %3953 = vmatprep.subr.bf16.mxu0 0
        %3954 = vmatpush1.bf16.msra.mxu0 0
        %3955 = vmatprep.subr.bf16.mxu0 0
        %3956 = vmatpush1.bf16.msra.mxu0 0
        %3957 = vmatprep.subr.bf16.mxu0 0
        %3958 = vmatpush1.bf16.msra.mxu0 0
        %3959 = vmatprep.subr.bf16.mxu0 0
        %3960 = vmatpush1.bf16.msra.mxu0 0
        %3961 = vmatprep.subr.bf16.mxu0 0
        %3962 = vmatpush1.bf16.msra.mxu0 0
        %3963 = vmatprep.subr.bf16.mxu0 0
        %3964 = vmatpush1.bf16.msra.mxu0 0
        %3965 = vmatprep.subr.bf16.mxu0 0
        %3966 = vmatpush1.bf16.msra.mxu0 0
        %3967 = vmatprep.subr.bf16.mxu0 0
        %3968 = vmatpush1.bf16.msra.mxu0 0
        %3969 = vmatprep.subr.bf16.mxu0 0
        %3970 = vmatpush1.bf16.msra.mxu0 0
        %3971 = vmatprep.mubr.bf16.mxu0 0
        %3972 = vmatmul.mubr.bf16.gmra.mrb[0].mxu0 %v3937
        %v3973 = vpop.f32.mrb[0].mxu0
        %v3974 = vadd.f32 0.0, %v3973
        %v3975 = vpop.f32.mrb[0].mxu0
        %v3976 = vadd.f32 0.0, %v3975
        %v3977 = vpop.f32.mrb[0].mxu0
        %v3978 = vpop.f32.mrb[0].mxu0
        %3979 = vdwg.mxu0
        %3980 = vmatprep.subr.bf16.mxu0 %v3907
        %3981 = vmatpush1.bf16.msra.mxu0 %v3906
        %3982 = vmatprep.subr.bf16.mxu0 %v3911
        %3983 = vmatpush1.bf16.msra.mxu0 %v3910
        %3984 = vmatprep.subr.bf16.mxu0 %v3915
        %3985 = vmatpush1.bf16.msra.mxu0 %v3914
        %3986 = vmatprep.subr.bf16.mxu0 %v3919
        %3987 = vmatpush1.bf16.msra.mxu0 %v3918
        %3988 = vmatprep.subr.bf16.mxu0 0
        %3989 = vmatpush1.bf16.msra.mxu0 0
        %3990 = vmatprep.subr.bf16.mxu0 0
        %3991 = vmatpush1.bf16.msra.mxu0 0
        %3992 = vmatprep.subr.bf16.mxu0 0
        %3993 = vmatpush1.bf16.msra.mxu0 0
        %3994 = vmatprep.subr.bf16.mxu0 0
        %3995 = vmatpush1.bf16.msra.mxu0 0
        %3996 = vmatprep.subr.bf16.mxu0 0
        %3997 = vmatpush1.bf16.msra.mxu0 0
        %3998 = vmatprep.subr.bf16.mxu0 0
        %3999 = vmatpush1.bf16.msra.mxu0 0
        %4000 = vmatprep.subr.bf16.mxu0 0
        %4001 = vmatpush1.bf16.msra.mxu0 0
        %4002 = vmatprep.subr.bf16.mxu0 0
        %4003 = vmatpush1.bf16.msra.mxu0 0
        %4004 = vmatprep.subr.bf16.mxu0 0
        %4005 = vmatpush1.bf16.msra.mxu0 0
        %4006 = vmatprep.subr.bf16.mxu0 0
        %4007 = vmatpush1.bf16.msra.mxu0 0
        %4008 = vmatprep.subr.bf16.mxu0 0
        %4009 = vmatpush1.bf16.msra.mxu0 0
        %4010 = vmatprep.subr.bf16.mxu0 0
        %4011 = vmatpush1.bf16.msra.mxu0 0
        %4012 = vmatprep.mubr.bf16.mxu0 0
        %4013 = vmatmul.mubr.bf16.gmra.mrb[0].mxu0 %v3937
        %v4014 = vpop.f32.mrb[0].mxu0
        %v4015 = vadd.f32 0.0, %v4014
        %v4016 = vpop.f32.mrb[0].mxu0
        %v4017 = vadd.f32 0.0, %v4016
        %v4018 = vpop.f32.mrb[0].mxu0
        %v4019 = vpop.f32.mrb[0].mxu0
        %4020 = vdwg.mxu0
        %v4021 = vadd.f32 %v3791, %v3974
        %v4022 = vadd.f32 %v3793, %v3976
        %v4023 = vadd.f32 %v3832, %v4015
        %v4024 = vadd.f32 %v3834, %v4017
        %v4025 = vld [vmem:[#allocation4 + $0x3] sm:$0x1]
        %v4026 = vld [vmem:[%s7 + $0x180] sm:$0xff]
        %v4027 = vld [vmem:[%s7 + $0x188] sm:$0xff]
        %v4028 = vld [vmem:[%s7 + $0x190] sm:$0xff]
        %v4029 = vld [vmem:[%s7 + $0x198] sm:$0xff]
        %v4030 = vld [vmem:[%s7 + $0x1a0] sm:$0xff]
        %v4031 = vld [vmem:[%s7 + $0x1a8] sm:$0xff]
        %v4032 = vld [vmem:[%s7 + $0x1b0] sm:$0xff]
        %v4033 = vld [vmem:[%s7 + $0x1b8] sm:$0xff]
        %v4034 = vld [vmem:[%s7 + $0x1c0] sm:$0xff]
        %v4035 = vld [vmem:[%s7 + $0x1c8] sm:$0xff]
        %v4036 = vld [vmem:[%s7 + $0x1d0] sm:$0xff]
        %v4037 = vld [vmem:[%s7 + $0x1d8] sm:$0xff]
        %v4038 = vld [vmem:[%s7 + $0x1e0] sm:$0xff]
        %v4039 = vld [vmem:[%s7 + $0x1e8] sm:$0xff]
        %v4040 = vld [vmem:[%s7 + $0x1f0] sm:$0xff]
        %v4041 = vld [vmem:[%s7 + $0x1f8] sm:$0xff]
        %v4042 = vpack.c.bf16 %v4025, %v4025
        %v4059 = vunpack.c.l.b16 %v4026
        %v4060 = vunpack.c.h.b16 %v4026
        %v4061 = vunpack.c.l.b16 %v4027
        %v4062 = vunpack.c.h.b16 %v4027
        %v4063 = vunpack.c.l.b16 %v4028
        %v4064 = vunpack.c.h.b16 %v4028
        %v4065 = vunpack.c.l.b16 %v4029
        %v4066 = vunpack.c.h.b16 %v4029
        %v4067 = vunpack.c.l.b16 %v4030
        %v4068 = vunpack.c.h.b16 %v4030
        %v4069 = vunpack.c.l.b16 %v4031
        %v4070 = vunpack.c.h.b16 %v4031
        %v4071 = vunpack.c.l.b16 %v4032
        %v4072 = vunpack.c.h.b16 %v4032
        %v4073 = vunpack.c.l.b16 %v4033
        %v4074 = vunpack.c.h.b16 %v4033
        %v4075 = vunpack.c.l.b16 %v4034
        %v4076 = vunpack.c.h.b16 %v4034
        %v4077 = vunpack.c.l.b16 %v4035
        %v4078 = vunpack.c.h.b16 %v4035
        %v4079 = vunpack.c.l.b16 %v4036
        %v4080 = vunpack.c.h.b16 %v4036
        %v4081 = vunpack.c.l.b16 %v4037
        %v4082 = vunpack.c.h.b16 %v4037
        %v4083 = vunpack.c.l.b16 %v4038
        %v4084 = vunpack.c.h.b16 %v4038
        %v4085 = vunpack.c.l.b16 %v4039
        %v4086 = vunpack.c.h.b16 %v4039
        %v4087 = vunpack.c.l.b16 %v4040
        %v4088 = vunpack.c.h.b16 %v4040
        %v4089 = vunpack.c.l.b16 %v4041
        %v4090 = vunpack.c.h.b16 %v4041
        %v4091 = vpack.c.b16 %v4063, %v4059
        %v4092 = vpack.c.b16 %v4064, %v4060
        %v4093 = vpack.c.b16 %v4065, %v4061
        %v4094 = vpack.c.b16 %v4066, %v4062
        %v4095 = vpack.c.b16 %v4071, %v4067
        %v4096 = vpack.c.b16 %v4072, %v4068
        %v4097 = vpack.c.b16 %v4073, %v4069
        %v4098 = vpack.c.b16 %v4074, %v4070
        %v4099 = vpack.c.b16 %v4079, %v4075
        %v4100 = vpack.c.b16 %v4080, %v4076
        %v4101 = vpack.c.b16 %v4081, %v4077
        %v4102 = vpack.c.b16 %v4082, %v4078
        %v4103 = vpack.c.b16 %v4087, %v4083
        %v4104 = vpack.c.b16 %v4088, %v4084
        %v4105 = vpack.c.b16 %v4089, %v4085
        %v4106 = vpack.c.b16 %v4090, %v4086
        %v4124 = vsel %vm2460, %v4042, 0
        %4126 = vmatprep.subr.bf16.mxu0 %v4092
        %4127 = vmatpush1.bf16.msra.mxu0 %v4091
        %4128 = vmatprep.subr.bf16.mxu0 %v4096
        %4129 = vmatpush1.bf16.msra.mxu0 %v4095
        %4130 = vmatprep.subr.bf16.mxu0 %v4100
        %4131 = vmatpush1.bf16.msra.mxu0 %v4099
        %4132 = vmatprep.subr.bf16.mxu0 %v4104
        %4133 = vmatpush1.bf16.msra.mxu0 %v4103
        %4134 = vmatprep.subr.bf16.mxu0 0
        %4135 = vmatpush1.bf16.msra.mxu0 0
        %4136 = vmatprep.subr.bf16.mxu0 0
        %4137 = vmatpush1.bf16.msra.mxu0 0
        %4138 = vmatprep.subr.bf16.mxu0 0
        %4139 = vmatpush1.bf16.msra.mxu0 0
        %4140 = vmatprep.subr.bf16.mxu0 0
        %4141 = vmatpush1.bf16.msra.mxu0 0
        %4142 = vmatprep.subr.bf16.mxu0 0
        %4143 = vmatpush1.bf16.msra.mxu0 0
        %4144 = vmatprep.subr.bf16.mxu0 0
        %4145 = vmatpush1.bf16.msra.mxu0 0
        %4146 = vmatprep.subr.bf16.mxu0 0
        %4147 = vmatpush1.bf16.msra.mxu0 0
        %4148 = vmatprep.subr.bf16.mxu0 0
        %4149 = vmatpush1.bf16.msra.mxu0 0
        %4150 = vmatprep.subr.bf16.mxu0 0
        %4151 = vmatpush1.bf16.msra.mxu0 0
        %4152 = vmatprep.subr.bf16.mxu0 0
        %4153 = vmatpush1.bf16.msra.mxu0 0
        %4154 = vmatprep.subr.bf16.mxu0 0
        %4155 = vmatpush1.bf16.msra.mxu0 0
        %4156 = vmatprep.subr.bf16.mxu0 0
        %4157 = vmatpush1.bf16.msra.mxu0 0
        %4158 = vmatprep.mubr.bf16.mxu0 0
        %4159 = vmatmul.mubr.bf16.gmra.mrb[0].mxu0 %v4124
        %v4160 = vpop.f32.mrb[0].mxu0
        %v4161 = vadd.f32 0.0, %v4160
        %v4162 = vpop.f32.mrb[0].mxu0
        %v4163 = vadd.f32 0.0, %v4162
        %v4164 = vpop.f32.mrb[0].mxu0
        %v4165 = vpop.f32.mrb[0].mxu0
        %4166 = vdwg.mxu0
        %4167 = vmatprep.subr.bf16.mxu0 %v4094
        %4168 = vmatpush1.bf16.msra.mxu0 %v4093
        %4169 = vmatprep.subr.bf16.mxu0 %v4098
        %4170 = vmatpush1.bf16.msra.mxu0 %v4097
        %4171 = vmatprep.subr.bf16.mxu0 %v4102
        %4172 = vmatpush1.bf16.msra.mxu0 %v4101
        %4173 = vmatprep.subr.bf16.mxu0 %v4106
        %4174 = vmatpush1.bf16.msra.mxu0 %v4105
        %4175 = vmatprep.subr.bf16.mxu0 0
        %4176 = vmatpush1.bf16.msra.mxu0 0
        %4177 = vmatprep.subr.bf16.mxu0 0
        %4178 = vmatpush1.bf16.msra.mxu0 0
        %4179 = vmatprep.subr.bf16.mxu0 0
        %4180 = vmatpush1.bf16.msra.mxu0 0
        %4181 = vmatprep.subr.bf16.mxu0 0
        %4182 = vmatpush1.bf16.msra.mxu0 0
        %4183 = vmatprep.subr.bf16.mxu0 0
        %4184 = vmatpush1.bf16.msra.mxu0 0
        %4185 = vmatprep.subr.bf16.mxu0 0
        %4186 = vmatpush1.bf16.msra.mxu0 0
        %4187 = vmatprep.subr.bf16.mxu0 0
        %4188 = vmatpush1.bf16.msra.mxu0 0
        %4189 = vmatprep.subr.bf16.mxu0 0
        %4190 = vmatpush1.bf16.msra.mxu0 0
        %4191 = vmatprep.subr.bf16.mxu0 0
        %4192 = vmatpush1.bf16.msra.mxu0 0
        %4193 = vmatprep.subr.bf16.mxu0 0
        %4194 = vmatpush1.bf16.msra.mxu0 0
        %4195 = vmatprep.subr.bf16.mxu0 0
        %4196 = vmatpush1.bf16.msra.mxu0 0
        %4197 = vmatprep.subr.bf16.mxu0 0
        %4198 = vmatpush1.bf16.msra.mxu0 0
        %4199 = vmatprep.mubr.bf16.mxu0 0
        %4200 = vmatmul.mubr.bf16.gmra.mrb[0].mxu0 %v4124
        %v4201 = vpop.f32.mrb[0].mxu0
        %v4202 = vadd.f32 0.0, %v4201
        %v4203 = vpop.f32.mrb[0].mxu0
        %v4204 = vadd.f32 0.0, %v4203
        %v4205 = vpop.f32.mrb[0].mxu0
        %v4206 = vpop.f32.mrb[0].mxu0
        %4207 = vdwg.mxu0
        %v4208 = vadd.f32 %v4021, %v4161
        %v4209 = vadd.f32 %v4022, %v4163
        %v4210 = vadd.f32 %v4023, %v4202
        %v4211 = vadd.f32 %v4024, %v4204
        %v4212 = vld [vmem:[#allocation4 + $0x9] sm:$0x1]
        %v4213 = vld [vmem:[%s7 + $0x200] sm:$0xff]
        %v4214 = vld [vmem:[%s7 + $0x208] sm:$0xff]
        %v4215 = vld [vmem:[%s7 + $0x210] sm:$0xff]
        %v4216 = vld [vmem:[%s7 + $0x218] sm:$0xff]
        %v4217 = vld [vmem:[%s7 + $0x220] sm:$0xff]
        %v4218 = vld [vmem:[%s7 + $0x228] sm:$0xff]
        %v4219 = vld [vmem:[%s7 + $0x230] sm:$0xff]
        %v4220 = vld [vmem:[%s7 + $0x238] sm:$0xff]
        %v4221 = vld [vmem:[%s7 + $0x240] sm:$0xff]
        %v4222 = vld [vmem:[%s7 + $0x248] sm:$0xff]
        %v4223 = vld [vmem:[%s7 + $0x250] sm:$0xff]
        %v4224 = vld [vmem:[%s7 + $0x258] sm:$0xff]
        %v4225 = vld [vmem:[%s7 + $0x260] sm:$0xff]
        %v4226 = vld [vmem:[%s7 + $0x268] sm:$0xff]
        %v4227 = vld [vmem:[%s7 + $0x270] sm:$0xff]
        %v4228 = vld [vmem:[%s7 + $0x278] sm:$0xff]
        %v4229 = vpack.c.bf16 %v4212, %v4212
        %v4246 = vunpack.c.l.b16 %v4213
        %v4247 = vunpack.c.h.b16 %v4213
        %v4248 = vunpack.c.l.b16 %v4214
        %v4249 = vunpack.c.h.b16 %v4214
        %v4250 = vunpack.c.l.b16 %v4215
        %v4251 = vunpack.c.h.b16 %v4215
        %v4252 = vunpack.c.l.b16 %v4216
        %v4253 = vunpack.c.h.b16 %v4216
        %v4254 = vunpack.c.l.b16 %v4217
        %v4255 = vunpack.c.h.b16 %v4217
        %v4256 = vunpack.c.l.b16 %v4218
        %v4257 = vunpack.c.h.b16 %v4218
        %v4258 = vunpack.c.l.b16 %v4219
        %v4259 = vunpack.c.h.b16 %v4219
        %v4260 = vunpack.c.l.b16 %v4220
        %v4261 = vunpack.c.h.b16 %v4220
        %v4262 = vunpack.c.l.b16 %v4221
        %v4263 = vunpack.c.h.b16 %v4221
        %v4264 = vunpack.c.l.b16 %v4222
        %v4265 = vunpack.c.h.b16 %v4222
        %v4266 = vunpack.c.l.b16 %v4223
        %v4267 = vunpack.c.h.b16 %v4223
        %v4268 = vunpack.c.l.b16 %v4224
        %v4269 = vunpack.c.h.b16 %v4224
        %v4270 = vunpack.c.l.b16 %v4225
        %v4271 = vunpack.c.h.b16 %v4225
        %v4272 = vunpack.c.l.b16 %v4226
        %v4273 = vunpack.c.h.b16 %v4226
        %v4274 = vunpack.c.l.b16 %v4227
        %v4275 = vunpack.c.h.b16 %v4227
        %v4276 = vunpack.c.l.b16 %v4228
        %v4277 = vunpack.c.h.b16 %v4228
        %v4278 = vpack.c.b16 %v4250, %v4246
        %v4279 = vpack.c.b16 %v4251, %v4247
        %v4280 = vpack.c.b16 %v4252, %v4248
        %v4281 = vpack.c.b16 %v4253, %v4249
        %v4282 = vpack.c.b16 %v4258, %v4254
        %v4283 = vpack.c.b16 %v4259, %v4255
        %v4284 = vpack.c.b16 %v4260, %v4256
        %v4285 = vpack.c.b16 %v4261, %v4257
        %v4286 = vpack.c.b16 %v4266, %v4262
        %v4287 = vpack.c.b16 %v4267, %v4263
        %v4288 = vpack.c.b16 %v4268, %v4264
        %v4289 = vpack.c.b16 %v4269, %v4265
        %v4290 = vpack.c.b16 %v4274, %v4270
        %v4291 = vpack.c.b16 %v4275, %v4271
        %v4292 = vpack.c.b16 %v4276, %v4272
        %v4293 = vpack.c.b16 %v4277, %v4273
        %v4311 = vsel %vm2460, %v4229, 0
        %4313 = vmatprep.subr.bf16.mxu0 %v4279
        %4314 = vmatpush1.bf16.msra.mxu0 %v4278
        %4315 = vmatprep.subr.bf16.mxu0 %v4283
        %4316 = vmatpush1.bf16.msra.mxu0 %v4282
        %4317 = vmatprep.subr.bf16.mxu0 %v4287
        %4318 = vmatpush1.bf16.msra.mxu0 %v4286
        %4319 = vmatprep.subr.bf16.mxu0 %v4291
        %4320 = vmatpush1.bf16.msra.mxu0 %v4290
        %4321 = vmatprep.subr.bf16.mxu0 0
        %4322 = vmatpush1.bf16.msra.mxu0 0
        %4323 = vmatprep.subr.bf16.mxu0 0
        %4324 = vmatpush1.bf16.msra.mxu0 0
        %4325 = vmatprep.subr.bf16.mxu0 0
        %4326 = vmatpush1.bf16.msra.mxu0 0
        %4327 = vmatprep.subr.bf16.mxu0 0
        %4328 = vmatpush1.bf16.msra.mxu0 0
        %4329 = vmatprep.subr.bf16.mxu0 0
        %4330 = vmatpush1.bf16.msra.mxu0 0
        %4331 = vmatprep.subr.bf16.mxu0 0
        %4332 = vmatpush1.bf16.msra.mxu0 0
        %4333 = vmatprep.subr.bf16.mxu0 0
        %4334 = vmatpush1.bf16.msra.mxu0 0
        %4335 = vmatprep.subr.bf16.mxu0 0
        %4336 = vmatpush1.bf16.msra.mxu0 0
        %4337 = vmatprep.subr.bf16.mxu0 0
        %4338 = vmatpush1.bf16.msra.mxu0 0
        %4339 = vmatprep.subr.bf16.mxu0 0
        %4340 = vmatpush1.bf16.msra.mxu0 0
        %4341 = vmatprep.subr.bf16.mxu0 0
        %4342 = vmatpush1.bf16.msra.mxu0 0
        %4343 = vmatprep.subr.bf16.mxu0 0
        %4344 = vmatpush1.bf16.msra.mxu0 0
        %4345 = vmatprep.mubr.bf16.mxu0 0
        %4346 = vmatmul.mubr.bf16.gmra.mrb[0].mxu0 %v4311
        %v4347 = vpop.f32.mrb[0].mxu0
        %v4348 = vadd.f32 0.0, %v4347
        %v4349 = vpop.f32.mrb[0].mxu0
        %v4350 = vadd.f32 0.0, %v4349
        %v4351 = vpop.f32.mrb[0].mxu0
        %v4352 = vpop.f32.mrb[0].mxu0
        %4353 = vdwg.mxu0
        %4354 = vmatprep.subr.bf16.mxu0 %v4281
        %4355 = vmatpush1.bf16.msra.mxu0 %v4280
        %4356 = vmatprep.subr.bf16.mxu0 %v4285
        %4357 = vmatpush1.bf16.msra.mxu0 %v4284
        %4358 = vmatprep.subr.bf16.mxu0 %v4289
        %4359 = vmatpush1.bf16.msra.mxu0 %v4288
        %4360 = vmatprep.subr.bf16.mxu0 %v4293
        %4361 = vmatpush1.bf16.msra.mxu0 %v4292
        %4362 = vmatprep.subr.bf16.mxu0 0
        %4363 = vmatpush1.bf16.msra.mxu0 0
        %4364 = vmatprep.subr.bf16.mxu0 0
        %4365 = vmatpush1.bf16.msra.mxu0 0
        %4366 = vmatprep.subr.bf16.mxu0 0
        %4367 = vmatpush1.bf16.msra.mxu0 0
        %4368 = vmatprep.subr.bf16.mxu0 0
        %4369 = vmatpush1.bf16.msra.mxu0 0
        %4370 = vmatprep.subr.bf16.mxu0 0
        %4371 = vmatpush1.bf16.msra.mxu0 0
        %4372 = vmatprep.subr.bf16.mxu0 0
        %4373 = vmatpush1.bf16.msra.mxu0 0
        %4374 = vmatprep.subr.bf16.mxu0 0
        %4375 = vmatpush1.bf16.msra.mxu0 0
        %4376 = vmatprep.subr.bf16.mxu0 0
        %4377 = vmatpush1.bf16.msra.mxu0 0
        %4378 = vmatprep.subr.bf16.mxu0 0
        %4379 = vmatpush1.bf16.msra.mxu0 0
        %4380 = vmatprep.subr.bf16.mxu0 0
        %4381 = vmatpush1.bf16.msra.mxu0 0
        %4382 = vmatprep.subr.bf16.mxu0 0
        %4383 = vmatpush1.bf16.msra.mxu0 0
        %4384 = vmatprep.subr.bf16.mxu0 0
        %4385 = vmatpush1.bf16.msra.mxu0 0
        %4386 = vmatprep.mubr.bf16.mxu0 0
        %4387 = vmatmul.mubr.bf16.gmra.mrb[0].mxu0 %v4311
        %v4388 = vpop.f32.mrb[0].mxu0
        %v4389 = vadd.f32 0.0, %v4388
        %v4390 = vpop.f32.mrb[0].mxu0
        %v4391 = vadd.f32 0.0, %v4390
        %v4392 = vpop.f32.mrb[0].mxu0
        %v4393 = vpop.f32.mrb[0].mxu0
        %4394 = vdwg.mxu0
        %v4395 = vadd.f32 %v4208, %v4348
        %v4396 = vadd.f32 %v4209, %v4350
        %v4397 = vadd.f32 %v4210, %v4389
        %v4398 = vadd.f32 %v4211, %v4391
        %v4399 = vld [vmem:[#allocation4 + $0xa] sm:$0x1]
        %v4400 = vld [vmem:[%s7 + $0x280] sm:$0xff]
        %v4401 = vld [vmem:[%s7 + $0x288] sm:$0xff]
        %v4402 = vld [vmem:[%s7 + $0x290] sm:$0xff]
        %v4403 = vld [vmem:[%s7 + $0x298] sm:$0xff]
        %v4404 = vld [vmem:[%s7 + $0x2a0] sm:$0xff]
        %v4405 = vld [vmem:[%s7 + $0x2a8] sm:$0xff]
        %v4406 = vld [vmem:[%s7 + $0x2b0] sm:$0xff]
        %v4407 = vld [vmem:[%s7 + $0x2b8] sm:$0xff]
        %v4408 = vld [vmem:[%s7 + $0x2c0] sm:$0xff]
        %v4409 = vld [vmem:[%s7 + $0x2c8] sm:$0xff]
        %v4410 = vld [vmem:[%s7 + $0x2d0] sm:$0xff]
        %v4411 = vld [vmem:[%s7 + $0x2d8] sm:$0xff]
        %v4412 = vld [vmem:[%s7 + $0x2e0] sm:$0xff]
        %v4413 = vld [vmem:[%s7 + $0x2e8] sm:$0xff]
        %v4414 = vld [vmem:[%s7 + $0x2f0] sm:$0xff]
        %v4415 = vld [vmem:[%s7 + $0x2f8] sm:$0xff]
        %v4416 = vpack.c.bf16 %v4399, %v4399
        %v4433 = vunpack.c.l.b16 %v4400
        %v4434 = vunpack.c.h.b16 %v4400
        %v4435 = vunpack.c.l.b16 %v4401
        %v4436 = vunpack.c.h.b16 %v4401
        %v4437 = vunpack.c.l.b16 %v4402
        %v4438 = vunpack.c.h.b16 %v4402
        %v4439 = vunpack.c.l.b16 %v4403
        %v4440 = vunpack.c.h.b16 %v4403
        %v4441 = vunpack.c.l.b16 %v4404
        %v4442 = vunpack.c.h.b16 %v4404
        %v4443 = vunpack.c.l.b16 %v4405
        %v4444 = vunpack.c.h.b16 %v4405
        %v4445 = vunpack.c.l.b16 %v4406
        %v4446 = vunpack.c.h.b16 %v4406
        %v4447 = vunpack.c.l.b16 %v4407
        %v4448 = vunpack.c.h.b16 %v4407
        %v4449 = vunpack.c.l.b16 %v4408
        %v4450 = vunpack.c.h.b16 %v4408
        %v4451 = vunpack.c.l.b16 %v4409
        %v4452 = vunpack.c.h.b16 %v4409
        %v4453 = vunpack.c.l.b16 %v4410
        %v4454 = vunpack.c.h.b16 %v4410
        %v4455 = vunpack.c.l.b16 %v4411
        %v4456 = vunpack.c.h.b16 %v4411
        %v4457 = vunpack.c.l.b16 %v4412
        %v4458 = vunpack.c.h.b16 %v4412
        %v4459 = vunpack.c.l.b16 %v4413
        %v4460 = vunpack.c.h.b16 %v4413
        %v4461 = vunpack.c.l.b16 %v4414
        %v4462 = vunpack.c.h.b16 %v4414
        %v4463 = vunpack.c.l.b16 %v4415
        %v4464 = vunpack.c.h.b16 %v4415
        %v4465 = vpack.c.b16 %v4437, %v4433
        %v4466 = vpack.c.b16 %v4438, %v4434
        %v4467 = vpack.c.b16 %v4439, %v4435
        %v4468 = vpack.c.b16 %v4440, %v4436
        %v4469 = vpack.c.b16 %v4445, %v4441
        %v4470 = vpack.c.b16 %v4446, %v4442
        %v4471 = vpack.c.b16 %v4447, %v4443
        %v4472 = vpack.c.b16 %v4448, %v4444
        %v4473 = vpack.c.b16 %v4453, %v4449
        %v4474 = vpack.c.b16 %v4454, %v4450
        %v4475 = vpack.c.b16 %v4455, %v4451
        %v4476 = vpack.c.b16 %v4456, %v4452
        %v4477 = vpack.c.b16 %v4461, %v4457
        %v4478 = vpack.c.b16 %v4462, %v4458
        %v4479 = vpack.c.b16 %v4463, %v4459
        %v4480 = vpack.c.b16 %v4464, %v4460
        %v4498 = vsel %vm2460, %v4416, 0
        %4500 = vmatprep.subr.bf16.mxu0 %v4466
        %4501 = vmatpush1.bf16.msra.mxu0 %v4465
        %4502 = vmatprep.subr.bf16.mxu0 %v4470
        %4503 = vmatpush1.bf16.msra.mxu0 %v4469
        %4504 = vmatprep.subr.bf16.mxu0 %v4474
        %4505 = vmatpush1.bf16.msra.mxu0 %v4473
        %4506 = vmatprep.subr.bf16.mxu0 %v4478
        %4507 = vmatpush1.bf16.msra.mxu0 %v4477
        %4508 = vmatprep.subr.bf16.mxu0 0
        %4509 = vmatpush1.bf16.msra.mxu0 0
        %4510 = vmatprep.subr.bf16.mxu0 0
        %4511 = vmatpush1.bf16.msra.mxu0 0
        %4512 = vmatprep.subr.bf16.mxu0 0
        %4513 = vmatpush1.bf16.msra.mxu0 0
        %4514 = vmatprep.subr.bf16.mxu0 0
        %4515 = vmatpush1.bf16.msra.mxu0 0
        %4516 = vmatprep.subr.bf16.mxu0 0
        %4517 = vmatpush1.bf16.msra.mxu0 0
        %4518 = vmatprep.subr.bf16.mxu0 0
        %4519 = vmatpush1.bf16.msra.mxu0 0
        %4520 = vmatprep.subr.bf16.mxu0 0
        %4521 = vmatpush1.bf16.msra.mxu0 0
        %4522 = vmatprep.subr.bf16.mxu0 0
        %4523 = vmatpush1.bf16.msra.mxu0 0
        %4524 = vmatprep.subr.bf16.mxu0 0
        %4525 = vmatpush1.bf16.msra.mxu0 0
        %4526 = vmatprep.subr.bf16.mxu0 0
        %4527 = vmatpush1.bf16.msra.mxu0 0
        %4528 = vmatprep.subr.bf16.mxu0 0
        %4529 = vmatpush1.bf16.msra.mxu0 0
        %4530 = vmatprep.subr.bf16.mxu0 0
        %4531 = vmatpush1.bf16.msra.mxu0 0
        %4532 = vmatprep.mubr.bf16.mxu0 0
        %4533 = vmatmul.mubr.bf16.gmra.mrb[0].mxu0 %v4498
        %v4534 = vpop.f32.mrb[0].mxu0
        %v4535 = vadd.f32 0.0, %v4534
        %v4536 = vpop.f32.mrb[0].mxu0
        %v4537 = vadd.f32 0.0, %v4536
        %v4538 = vpop.f32.mrb[0].mxu0
        %v4539 = vpop.f32.mrb[0].mxu0
        %4540 = vdwg.mxu0
        %4541 = vmatprep.subr.bf16.mxu0 %v4468
        %4542 = vmatpush1.bf16.msra.mxu0 %v4467
        %4543 = vmatprep.subr.bf16.mxu0 %v4472
        %4544 = vmatpush1.bf16.msra.mxu0 %v4471
        %4545 = vmatprep.subr.bf16.mxu0 %v4476
        %4546 = vmatpush1.bf16.msra.mxu0 %v4475
        %4547 = vmatprep.subr.bf16.mxu0 %v4480
        %4548 = vmatpush1.bf16.msra.mxu0 %v4479
        %4549 = vmatprep.subr.bf16.mxu0 0
        %4550 = vmatpush1.bf16.msra.mxu0 0
        %4551 = vmatprep.subr.bf16.mxu0 0
        %4552 = vmatpush1.bf16.msra.mxu0 0
        %4553 = vmatprep.subr.bf16.mxu0 0
        %4554 = vmatpush1.bf16.msra.mxu0 0
        %4555 = vmatprep.subr.bf16.mxu0 0
        %4556 = vmatpush1.bf16.msra.mxu0 0
        %4557 = vmatprep.subr.bf16.mxu0 0
        %4558 = vmatpush1.bf16.msra.mxu0 0
        %4559 = vmatprep.subr.bf16.mxu0 0
        %4560 = vmatpush1.bf16.msra.mxu0 0
        %4561 = vmatprep.subr.bf16.mxu0 0
        %4562 = vmatpush1.bf16.msra.mxu0 0
        %4563 = vmatprep.subr.bf16.mxu0 0
        %4564 = vmatpush1.bf16.msra.mxu0 0
        %4565 = vmatprep.subr.bf16.mxu0 0
        %4566 = vmatpush1.bf16.msra.mxu0 0
        %4567 = vmatprep.subr.bf16.mxu0 0
        %4568 = vmatpush1.bf16.msra.mxu0 0
        %4569 = vmatprep.subr.bf16.mxu0 0
        %4570 = vmatpush1.bf16.msra.mxu0 0
        %4571 = vmatprep.subr.bf16.mxu0 0
        %4572 = vmatpush1.bf16.msra.mxu0 0
        %4573 = vmatprep.mubr.bf16.mxu0 0
        %4574 = vmatmul.mubr.bf16.gmra.mrb[0].mxu0 %v4498
        %v4575 = vpop.f32.mrb[0].mxu0
        %v4576 = vadd.f32 0.0, %v4575
        %v4577 = vpop.f32.mrb[0].mxu0
        %v4578 = vadd.f32 0.0, %v4577
        %v4579 = vpop.f32.mrb[0].mxu0
        %v4580 = vpop.f32.mrb[0].mxu0
        %4581 = vdwg.mxu0
        %v4582 = vadd.f32 %v4395, %v4535
        %v4583 = vadd.f32 %v4396, %v4537
        %v4584 = vadd.f32 %v4397, %v4576
        %v4585 = vadd.f32 %v4398, %v4578
        %v4586 = vld [vmem:[#allocation4 + $0xb] sm:$0x1]
        %v4587 = vld [vmem:[%s7 + $0x300] sm:$0xff]
        %v4588 = vld [vmem:[%s7 + $0x308] sm:$0xff]
        %v4589 = vld [vmem:[%s7 + $0x310] sm:$0xff]
        %v4590 = vld [vmem:[%s7 + $0x318] sm:$0xff]
        %v4591 = vld [vmem:[%s7 + $0x320] sm:$0xff]
        %v4592 = vld [vmem:[%s7 + $0x328] sm:$0xff]
        %v4593 = vld [vmem:[%s7 + $0x330] sm:$0xff]
        %v4594 = vld [vmem:[%s7 + $0x338] sm:$0xff]
        %v4595 = vld [vmem:[%s7 + $0x340] sm:$0xff]
        %v4596 = vld [vmem:[%s7 + $0x348] sm:$0xff]
        %v4597 = vld [vmem:[%s7 + $0x350] sm:$0xff]
        %v4598 = vld [vmem:[%s7 + $0x358] sm:$0xff]
        %v4599 = vld [vmem:[%s7 + $0x360] sm:$0xff]
        %v4600 = vld [vmem:[%s7 + $0x368] sm:$0xff]
        %v4601 = vld [vmem:[%s7 + $0x370] sm:$0xff]
        %v4602 = vld [vmem:[%s7 + $0x378] sm:$0xff]
        %v4603 = vpack.c.bf16 %v4586, %v4586
        %v4620 = vunpack.c.l.b16 %v4587
        %v4621 = vunpack.c.h.b16 %v4587
        %v4622 = vunpack.c.l.b16 %v4588
        %v4623 = vunpack.c.h.b16 %v4588
        %v4624 = vunpack.c.l.b16 %v4589
        %v4625 = vunpack.c.h.b16 %v4589
        %v4626 = vunpack.c.l.b16 %v4590
        %v4627 = vunpack.c.h.b16 %v4590
        %v4628 = vunpack.c.l.b16 %v4591
        %v4629 = vunpack.c.h.b16 %v4591
        %v4630 = vunpack.c.l.b16 %v4592
        %v4631 = vunpack.c.h.b16 %v4592
        %v4632 = vunpack.c.l.b16 %v4593
        %v4633 = vunpack.c.h.b16 %v4593
        %v4634 = vunpack.c.l.b16 %v4594
        %v4635 = vunpack.c.h.b16 %v4594
        %v4636 = vunpack.c.l.b16 %v4595
        %v4637 = vunpack.c.h.b16 %v4595
        %v4638 = vunpack.c.l.b16 %v4596
        %v4639 = vunpack.c.h.b16 %v4596
        %v4640 = vunpack.c.l.b16 %v4597
        %v4641 = vunpack.c.h.b16 %v4597
        %v4642 = vunpack.c.l.b16 %v4598
        %v4643 = vunpack.c.h.b16 %v4598
        %v4644 = vunpack.c.l.b16 %v4599
        %v4645 = vunpack.c.h.b16 %v4599
        %v4646 = vunpack.c.l.b16 %v4600
        %v4647 = vunpack.c.h.b16 %v4600
        %v4648 = vunpack.c.l.b16 %v4601
        %v4649 = vunpack.c.h.b16 %v4601
        %v4650 = vunpack.c.l.b16 %v4602
        %v4651 = vunpack.c.h.b16 %v4602
        %v4652 = vpack.c.b16 %v4624, %v4620
        %v4653 = vpack.c.b16 %v4625, %v4621
        %v4654 = vpack.c.b16 %v4626, %v4622
        %v4655 = vpack.c.b16 %v4627, %v4623
        %v4656 = vpack.c.b16 %v4632, %v4628
        %v4657 = vpack.c.b16 %v4633, %v4629
        %v4658 = vpack.c.b16 %v4634, %v4630
        %v4659 = vpack.c.b16 %v4635, %v4631
        %v4660 = vpack.c.b16 %v4640, %v4636
        %v4661 = vpack.c.b16 %v4641, %v4637
        %v4662 = vpack.c.b16 %v4642, %v4638
        %v4663 = vpack.c.b16 %v4643, %v4639
        %v4664 = vpack.c.b16 %v4648, %v4644
        %v4665 = vpack.c.b16 %v4649, %v4645
        %v4666 = vpack.c.b16 %v4650, %v4646
        %v4667 = vpack.c.b16 %v4651, %v4647
        %v4685 = vsel %vm2460, %v4603, 0
        %4687 = vmatprep.subr.bf16.mxu0 %v4653
        %4688 = vmatpush1.bf16.msra.mxu0 %v4652
        %4689 = vmatprep.subr.bf16.mxu0 %v4657
        %4690 = vmatpush1.bf16.msra.mxu0 %v4656
        %4691 = vmatprep.subr.bf16.mxu0 %v4661
        %4692 = vmatpush1.bf16.msra.mxu0 %v4660
        %4693 = vmatprep.subr.bf16.mxu0 %v4665
        %4694 = vmatpush1.bf16.msra.mxu0 %v4664
        %4695 = vmatprep.subr.bf16.mxu0 0
        %4696 = vmatpush1.bf16.msra.mxu0 0
        %4697 = vmatprep.subr.bf16.mxu0 0
        %4698 = vmatpush1.bf16.msra.mxu0 0
        %4699 = vmatprep.subr.bf16.mxu0 0
        %4700 = vmatpush1.bf16.msra.mxu0 0
        %4701 = vmatprep.subr.bf16.mxu0 0
        %4702 = vmatpush1.bf16.msra.mxu0 0
        %4703 = vmatprep.subr.bf16.mxu0 0
        %4704 = vmatpush1.bf16.msra.mxu0 0
        %4705 = vmatprep.subr.bf16.mxu0 0
        %4706 = vmatpush1.bf16.msra.mxu0 0
        %4707 = vmatprep.subr.bf16.mxu0 0
        %4708 = vmatpush1.bf16.msra.mxu0 0
        %4709 = vmatprep.subr.bf16.mxu0 0
        %4710 = vmatpush1.bf16.msra.mxu0 0
        %4711 = vmatprep.subr.bf16.mxu0 0
        %4712 = vmatpush1.bf16.msra.mxu0 0
        %4713 = vmatprep.subr.bf16.mxu0 0
        %4714 = vmatpush1.bf16.msra.mxu0 0
        %4715 = vmatprep.subr.bf16.mxu0 0
        %4716 = vmatpush1.bf16.msra.mxu0 0
        %4717 = vmatprep.subr.bf16.mxu0 0
        %4718 = vmatpush1.bf16.msra.mxu0 0
        %4719 = vmatprep.mubr.bf16.mxu0 0
        %4720 = vmatmul.mubr.bf16.gmra.mrb[0].mxu0 %v4685
        %v4721 = vpop.f32.mrb[0].mxu0
        %v4722 = vadd.f32 0.0, %v4721
        %v4723 = vpop.f32.mrb[0].mxu0
        %v4724 = vadd.f32 0.0, %v4723
        %v4725 = vpop.f32.mrb[0].mxu0
        %v4726 = vpop.f32.mrb[0].mxu0
        %4727 = vdwg.mxu0
        %4728 = vmatprep.subr.bf16.mxu0 %v4655
        %4729 = vmatpush1.bf16.msra.mxu0 %v4654
        %4730 = vmatprep.subr.bf16.mxu0 %v4659
        %4731 = vmatpush1.bf16.msra.mxu0 %v4658
        %4732 = vmatprep.subr.bf16.mxu0 %v4663
        %4733 = vmatpush1.bf16.msra.mxu0 %v4662
        %4734 = vmatprep.subr.bf16.mxu0 %v4667
        %4735 = vmatpush1.bf16.msra.mxu0 %v4666
        %4736 = vmatprep.subr.bf16.mxu0 0
        %4737 = vmatpush1.bf16.msra.mxu0 0
        %4738 = vmatprep.subr.bf16.mxu0 0
        %4739 = vmatpush1.bf16.msra.mxu0 0
        %4740 = vmatprep.subr.bf16.mxu0 0
        %4741 = vmatpush1.bf16.msra.mxu0 0
        %4742 = vmatprep.subr.bf16.mxu0 0
        %4743 = vmatpush1.bf16.msra.mxu0 0
        %4744 = vmatprep.subr.bf16.mxu0 0
        %4745 = vmatpush1.bf16.msra.mxu0 0
        %4746 = vmatprep.subr.bf16.mxu0 0
        %4747 = vmatpush1.bf16.msra.mxu0 0
        %4748 = vmatprep.subr.bf16.mxu0 0
        %4749 = vmatpush1.bf16.msra.mxu0 0
        %4750 = vmatprep.subr.bf16.mxu0 0
        %4751 = vmatpush1.bf16.msra.mxu0 0
        %4752 = vmatprep.subr.bf16.mxu0 0
        %4753 = vmatpush1.bf16.msra.mxu0 0
        %4754 = vmatprep.subr.bf16.mxu0 0
        %4755 = vmatpush1.bf16.msra.mxu0 0
        %4756 = vmatprep.subr.bf16.mxu0 0
        %4757 = vmatpush1.bf16.msra.mxu0 0
        %4758 = vmatprep.subr.bf16.mxu0 0
        %4759 = vmatpush1.bf16.msra.mxu0 0
        %4760 = vmatprep.mubr.bf16.mxu0 0
        %4761 = vmatmul.mubr.bf16.gmra.mrb[0].mxu0 %v4685
        %v4762 = vpop.f32.mrb[0].mxu0
        %v4763 = vadd.f32 0.0, %v4762
        %v4764 = vpop.f32.mrb[0].mxu0
        %v4765 = vadd.f32 0.0, %v4764
        %v4766 = vpop.f32.mrb[0].mxu0
        %v4767 = vpop.f32.mrb[0].mxu0
        %4768 = vdwg.mxu0
        %v4769 = vadd.f32 %v4582, %v4722
        %v4770 = vadd.f32 %v4583, %v4724
        %v4771 = vadd.f32 %v4584, %v4763
        %v4772 = vadd.f32 %v4585, %v4765
        %v4773 = vld [vmem:[#allocation4 + $0xc] sm:$0x1]
        %v4774 = vld [vmem:[%s7 + $0x380] sm:$0xff]
        %v4775 = vld [vmem:[%s7 + $0x388] sm:$0xff]
        %v4776 = vld [vmem:[%s7 + $0x390] sm:$0xff]
        %v4777 = vld [vmem:[%s7 + $0x398] sm:$0xff]
        %v4778 = vld [vmem:[%s7 + $0x3a0] sm:$0xff]
        %v4779 = vld [vmem:[%s7 + $0x3a8] sm:$0xff]
        %v4780 = vld [vmem:[%s7 + $0x3b0] sm:$0xff]
        %v4781 = vld [vmem:[%s7 + $0x3b8] sm:$0xff]
        %v4782 = vld [vmem:[%s7 + $0x3c0] sm:$0xff]
        %v4783 = vld [vmem:[%s7 + $0x3c8] sm:$0xff]
        %v4784 = vld [vmem:[%s7 + $0x3d0] sm:$0xff]
        %v4785 = vld [vmem:[%s7 + $0x3d8] sm:$0xff]
        %v4786 = vld [vmem:[%s7 + $0x3e0] sm:$0xff]
        %v4787 = vld [vmem:[%s7 + $0x3e8] sm:$0xff]
        %v4788 = vld [vmem:[%s7 + $0x3f0] sm:$0xff]
        %v4789 = vld [vmem:[%s7 + $0x3f8] sm:$0xff]
        %v4790 = vpack.c.bf16 %v4773, %v4773
        %v4807 = vunpack.c.l.b16 %v4774
        %v4808 = vunpack.c.h.b16 %v4774
        %v4809 = vunpack.c.l.b16 %v4775
        %v4810 = vunpack.c.h.b16 %v4775
        %v4811 = vunpack.c.l.b16 %v4776
        %v4812 = vunpack.c.h.b16 %v4776
        %v4813 = vunpack.c.l.b16 %v4777
        %v4814 = vunpack.c.h.b16 %v4777
        %v4815 = vunpack.c.l.b16 %v4778
        %v4816 = vunpack.c.h.b16 %v4778
        %v4817 = vunpack.c.l.b16 %v4779
        %v4818 = vunpack.c.h.b16 %v4779
        %v4819 = vunpack.c.l.b16 %v4780
        %v4820 = vunpack.c.h.b16 %v4780
        %v4821 = vunpack.c.l.b16 %v4781
        %v4822 = vunpack.c.h.b16 %v4781
        %v4823 = vunpack.c.l.b16 %v4782
        %v4824 = vunpack.c.h.b16 %v4782
        %v4825 = vunpack.c.l.b16 %v4783
        %v4826 = vunpack.c.h.b16 %v4783
        %v4827 = vunpack.c.l.b16 %v4784
        %v4828 = vunpack.c.h.b16 %v4784
        %v4829 = vunpack.c.l.b16 %v4785
        %v4830 = vunpack.c.h.b16 %v4785
        %v4831 = vunpack.c.l.b16 %v4786
        %v4832 = vunpack.c.h.b16 %v4786
        %v4833 = vunpack.c.l.b16 %v4787
        %v4834 = vunpack.c.h.b16 %v4787
        %v4835 = vunpack.c.l.b16 %v4788
        %v4836 = vunpack.c.h.b16 %v4788
        %v4837 = vunpack.c.l.b16 %v4789
        %v4838 = vunpack.c.h.b16 %v4789
        %v4839 = vpack.c.b16 %v4811, %v4807
        %v4840 = vpack.c.b16 %v4812, %v4808
        %v4841 = vpack.c.b16 %v4813, %v4809
        %v4842 = vpack.c.b16 %v4814, %v4810
        %v4843 = vpack.c.b16 %v4819, %v4815
        %v4844 = vpack.c.b16 %v4820, %v4816
        %v4845 = vpack.c.b16 %v4821, %v4817
        %v4846 = vpack.c.b16 %v4822, %v4818
        %v4847 = vpack.c.b16 %v4827, %v4823
        %v4848 = vpack.c.b16 %v4828, %v4824
        %v4849 = vpack.c.b16 %v4829, %v4825
        %v4850 = vpack.c.b16 %v4830, %v4826
        %v4851 = vpack.c.b16 %v4835, %v4831
        %v4852 = vpack.c.b16 %v4836, %v4832
        %v4853 = vpack.c.b16 %v4837, %v4833
        %v4854 = vpack.c.b16 %v4838, %v4834
        %v4872 = vsel %vm2460, %v4790, 0
        %4874 = vmatprep.subr.bf16.mxu0 %v4840
        %4875 = vmatpush1.bf16.msra.mxu0 %v4839
        %4876 = vmatprep.subr.bf16.mxu0 %v4844
        %4877 = vmatpush1.bf16.msra.mxu0 %v4843
        %4878 = vmatprep.subr.bf16.mxu0 %v4848
        %4879 = vmatpush1.bf16.msra.mxu0 %v4847
        %4880 = vmatprep.subr.bf16.mxu0 %v4852
        %4881 = vmatpush1.bf16.msra.mxu0 %v4851
        %4882 = vmatprep.subr.bf16.mxu0 0
        %4883 = vmatpush1.bf16.msra.mxu0 0
        %4884 = vmatprep.subr.bf16.mxu0 0
        %4885 = vmatpush1.bf16.msra.mxu0 0
        %4886 = vmatprep.subr.bf16.mxu0 0
        %4887 = vmatpush1.bf16.msra.mxu0 0
        %4888 = vmatprep.subr.bf16.mxu0 0
        %4889 = vmatpush1.bf16.msra.mxu0 0
        %4890 = vmatprep.subr.bf16.mxu0 0
        %4891 = vmatpush1.bf16.msra.mxu0 0
        %4892 = vmatprep.subr.bf16.mxu0 0
        %4893 = vmatpush1.bf16.msra.mxu0 0
        %4894 = vmatprep.subr.bf16.mxu0 0
        %4895 = vmatpush1.bf16.msra.mxu0 0
        %4896 = vmatprep.subr.bf16.mxu0 0
        %4897 = vmatpush1.bf16.msra.mxu0 0
        %4898 = vmatprep.subr.bf16.mxu0 0
        %4899 = vmatpush1.bf16.msra.mxu0 0
        %4900 = vmatprep.subr.bf16.mxu0 0
        %4901 = vmatpush1.bf16.msra.mxu0 0
        %4902 = vmatprep.subr.bf16.mxu0 0
        %4903 = vmatpush1.bf16.msra.mxu0 0
        %4904 = vmatprep.subr.bf16.mxu0 0
        %4905 = vmatpush1.bf16.msra.mxu0 0
        %4906 = vmatprep.mubr.bf16.mxu0 0
        %4907 = vmatmul.mubr.bf16.gmra.mrb[0].mxu0 %v4872
        %v4908 = vpop.f32.mrb[0].mxu0
        %v4909 = vadd.f32 0.0, %v4908
        %v4910 = vpop.f32.mrb[0].mxu0
        %v4911 = vadd.f32 0.0, %v4910
        %v4912 = vpop.f32.mrb[0].mxu0
        %v4913 = vpop.f32.mrb[0].mxu0
        %4914 = vdwg.mxu0
        %4915 = vmatprep.subr.bf16.mxu0 %v4842
        %4916 = vmatpush1.bf16.msra.mxu0 %v4841
        %4917 = vmatprep.subr.bf16.mxu0 %v4846
        %4918 = vmatpush1.bf16.msra.mxu0 %v4845
        %4919 = vmatprep.subr.bf16.mxu0 %v4850
        %4920 = vmatpush1.bf16.msra.mxu0 %v4849
        %4921 = vmatprep.subr.bf16.mxu0 %v4854
        %4922 = vmatpush1.bf16.msra.mxu0 %v4853
        %4923 = vmatprep.subr.bf16.mxu0 0
        %4924 = vmatpush1.bf16.msra.mxu0 0
        %4925 = vmatprep.subr.bf16.mxu0 0
        %4926 = vmatpush1.bf16.msra.mxu0 0
        %4927 = vmatprep.subr.bf16.mxu0 0
        %4928 = vmatpush1.bf16.msra.mxu0 0
        %4929 = vmatprep.subr.bf16.mxu0 0
        %4930 = vmatpush1.bf16.msra.mxu0 0
        %4931 = vmatprep.subr.bf16.mxu0 0
        %4932 = vmatpush1.bf16.msra.mxu0 0
        %4933 = vmatprep.subr.bf16.mxu0 0
        %4934 = vmatpush1.bf16.msra.mxu0 0
        %4935 = vmatprep.subr.bf16.mxu0 0
        %4936 = vmatpush1.bf16.msra.mxu0 0
        %4937 = vmatprep.subr.bf16.mxu0 0
        %4938 = vmatpush1.bf16.msra.mxu0 0
        %4939 = vmatprep.subr.bf16.mxu0 0
        %4940 = vmatpush1.bf16.msra.mxu0 0
        %4941 = vmatprep.subr.bf16.mxu0 0
        %4942 = vmatpush1.bf16.msra.mxu0 0
        %4943 = vmatprep.subr.bf16.mxu0 0
        %4944 = vmatpush1.bf16.msra.mxu0 0
        %4945 = vmatprep.subr.bf16.mxu0 0
        %4946 = vmatpush1.bf16.msra.mxu0 0
        %4947 = vmatprep.mubr.bf16.mxu0 0
        %4948 = vmatmul.mubr.bf16.gmra.mrb[0].mxu0 %v4872
        %v4949 = vpop.f32.mrb[0].mxu0
        %v4950 = vadd.f32 0.0, %v4949
        %v4951 = vpop.f32.mrb[0].mxu0
        %v4952 = vadd.f32 0.0, %v4951
        %v4953 = vpop.f32.mrb[0].mxu0
        %v4954 = vpop.f32.mrb[0].mxu0
        %4955 = vdwg.mxu0
        %v4956 = vadd.f32 %v4769, %v4909
        %v4957 = vadd.f32 %v4770, %v4911
        %v4958 = vadd.f32 %v4771, %v4950
        %v4959 = vadd.f32 %v4772, %v4952
        %v4960 = vld [vmem:[#allocation4 + $0x12] sm:$0x1]
        %v4961 = vld [vmem:[%s7 + $0x400] sm:$0xff]
        %v4962 = vld [vmem:[%s7 + $0x408] sm:$0xff]
        %v4963 = vld [vmem:[%s7 + $0x410] sm:$0xff]
        %v4964 = vld [vmem:[%s7 + $0x418] sm:$0xff]
        %v4965 = vld [vmem:[%s7 + $0x420] sm:$0xff]
        %v4966 = vld [vmem:[%s7 + $0x428] sm:$0xff]
        %v4967 = vld [vmem:[%s7 + $0x430] sm:$0xff]
        %v4968 = vld [vmem:[%s7 + $0x438] sm:$0xff]
        %v4969 = vld [vmem:[%s7 + $0x440] sm:$0xff]
        %v4970 = vld [vmem:[%s7 + $0x448] sm:$0xff]
        %v4971 = vld [vmem:[%s7 + $0x450] sm:$0xff]
        %v4972 = vld [vmem:[%s7 + $0x458] sm:$0xff]
        %v4973 = vld [vmem:[%s7 + $0x460] sm:$0xff]
        %v4974 = vld [vmem:[%s7 + $0x468] sm:$0xff]
        %v4975 = vld [vmem:[%s7 + $0x470] sm:$0xff]
        %v4976 = vld [vmem:[%s7 + $0x478] sm:$0xff]
        %v4977 = vpack.c.bf16 %v4960, %v4960
        %v4994 = vunpack.c.l.b16 %v4961
        %v4995 = vunpack.c.h.b16 %v4961
        %v4996 = vunpack.c.l.b16 %v4962
        %v4997 = vunpack.c.h.b16 %v4962
        %v4998 = vunpack.c.l.b16 %v4963
        %v4999 = vunpack.c.h.b16 %v4963
        %v5000 = vunpack.c.l.b16 %v4964
        %v5001 = vunpack.c.h.b16 %v4964
        %v5002 = vunpack.c.l.b16 %v4965
        %v5003 = vunpack.c.h.b16 %v4965
        %v5004 = vunpack.c.l.b16 %v4966
        %v5005 = vunpack.c.h.b16 %v4966
        %v5006 = vunpack.c.l.b16 %v4967
        %v5007 = vunpack.c.h.b16 %v4967
        %v5008 = vunpack.c.l.b16 %v4968
        %v5009 = vunpack.c.h.b16 %v4968
        %v5010 = vunpack.c.l.b16 %v4969
        %v5011 = vunpack.c.h.b16 %v4969
        %v5012 = vunpack.c.l.b16 %v4970
        %v5013 = vunpack.c.h.b16 %v4970
        %v5014 = vunpack.c.l.b16 %v4971
        %v5015 = vunpack.c.h.b16 %v4971
        %v5016 = vunpack.c.l.b16 %v4972
        %v5017 = vunpack.c.h.b16 %v4972
        %v5018 = vunpack.c.l.b16 %v4973
        %v5019 = vunpack.c.h.b16 %v4973
        %v5020 = vunpack.c.l.b16 %v4974
        %v5021 = vunpack.c.h.b16 %v4974
        %v5022 = vunpack.c.l.b16 %v4975
        %v5023 = vunpack.c.h.b16 %v4975
        %v5024 = vunpack.c.l.b16 %v4976
        %v5025 = vunpack.c.h.b16 %v4976
        %v5026 = vpack.c.b16 %v4998, %v4994
        %v5027 = vpack.c.b16 %v4999, %v4995
        %v5028 = vpack.c.b16 %v5000, %v4996
        %v5029 = vpack.c.b16 %v5001, %v4997
        %v5030 = vpack.c.b16 %v5006, %v5002
        %v5031 = vpack.c.b16 %v5007, %v5003
        %v5032 = vpack.c.b16 %v5008, %v5004
        %v5033 = vpack.c.b16 %v5009, %v5005
        %v5034 = vpack.c.b16 %v5014, %v5010
        %v5035 = vpack.c.b16 %v5015, %v5011
        %v5036 = vpack.c.b16 %v5016, %v5012
        %v5037 = vpack.c.b16 %v5017, %v5013
        %v5038 = vpack.c.b16 %v5022, %v5018
        %v5039 = vpack.c.b16 %v5023, %v5019
        %v5040 = vpack.c.b16 %v5024, %v5020
        %v5041 = vpack.c.b16 %v5025, %v5021
        %v5059 = vsel %vm2460, %v4977, 0
        %5061 = vmatprep.subr.bf16.mxu0 %v5027
        %5062 = vmatpush1.bf16.msra.mxu0 %v5026
        %5063 = vmatprep.subr.bf16.mxu0 %v5031
        %5064 = vmatpush1.bf16.msra.mxu0 %v5030
        %5065 = vmatprep.subr.bf16.mxu0 %v5035
        %5066 = vmatpush1.bf16.msra.mxu0 %v5034
        %5067 = vmatprep.subr.bf16.mxu0 %v5039
        %5068 = vmatpush1.bf16.msra.mxu0 %v5038
        %5069 = vmatprep.subr.bf16.mxu0 0
        %5070 = vmatpush1.bf16.msra.mxu0 0
        %5071 = vmatprep.subr.bf16.mxu0 0
        %5072 = vmatpush1.bf16.msra.mxu0 0
        %5073 = vmatprep.subr.bf16.mxu0 0
        %5074 = vmatpush1.bf16.msra.mxu0 0
        %5075 = vmatprep.subr.bf16.mxu0 0
        %5076 = vmatpush1.bf16.msra.mxu0 0
        %5077 = vmatprep.subr.bf16.mxu0 0
        %5078 = vmatpush1.bf16.msra.mxu0 0
        %5079 = vmatprep.subr.bf16.mxu0 0
        %5080 = vmatpush1.bf16.msra.mxu0 0
        %5081 = vmatprep.subr.bf16.mxu0 0
        %5082 = vmatpush1.bf16.msra.mxu0 0
        %5083 = vmatprep.subr.bf16.mxu0 0
        %5084 = vmatpush1.bf16.msra.mxu0 0
        %5085 = vmatprep.subr.bf16.mxu0 0
        %5086 = vmatpush1.bf16.msra.mxu0 0
        %5087 = vmatprep.subr.bf16.mxu0 0
        %5088 = vmatpush1.bf16.msra.mxu0 0
        %5089 = vmatprep.subr.bf16.mxu0 0
        %5090 = vmatpush1.bf16.msra.mxu0 0
        %5091 = vmatprep.subr.bf16.mxu0 0
        %5092 = vmatpush1.bf16.msra.mxu0 0
        %5093 = vmatprep.mubr.bf16.mxu0 0
        %5094 = vmatmul.mubr.bf16.gmra.mrb[0].mxu0 %v5059
        %v5095 = vpop.f32.mrb[0].mxu0
        %v5096 = vadd.f32 0.0, %v5095
        %v5097 = vpop.f32.mrb[0].mxu0
        %v5098 = vadd.f32 0.0, %v5097
        %v5099 = vpop.f32.mrb[0].mxu0
        %v5100 = vpop.f32.mrb[0].mxu0
        %5101 = vdwg.mxu0
        %5102 = vmatprep.subr.bf16.mxu0 %v5029
        %5103 = vmatpush1.bf16.msra.mxu0 %v5028
        %5104 = vmatprep.subr.bf16.mxu0 %v5033
        %5105 = vmatpush1.bf16.msra.mxu0 %v5032
        %5106 = vmatprep.subr.bf16.mxu0 %v5037
        %5107 = vmatpush1.bf16.msra.mxu0 %v5036
        %5108 = vmatprep.subr.bf16.mxu0 %v5041
        %5109 = vmatpush1.bf16.msra.mxu0 %v5040
        %5110 = vmatprep.subr.bf16.mxu0 0
        %5111 = vmatpush1.bf16.msra.mxu0 0
        %5112 = vmatprep.subr.bf16.mxu0 0
        %5113 = vmatpush1.bf16.msra.mxu0 0
        %5114 = vmatprep.subr.bf16.mxu0 0
        %5115 = vmatpush1.bf16.msra.mxu0 0
        %5116 = vmatprep.subr.bf16.mxu0 0
        %5117 = vmatpush1.bf16.msra.mxu0 0
        %5118 = vmatprep.subr.bf16.mxu0 0
        %5119 = vmatpush1.bf16.msra.mxu0 0
        %5120 = vmatprep.subr.bf16.mxu0 0
        %5121 = vmatpush1.bf16.msra.mxu0 0
        %5122 = vmatprep.subr.bf16.mxu0 0
        %5123 = vmatpush1.bf16.msra.mxu0 0
        %5124 = vmatprep.subr.bf16.mxu0 0
        %5125 = vmatpush1.bf16.msra.mxu0 0
        %5126 = vmatprep.subr.bf16.mxu0 0
        %5127 = vmatpush1.bf16.msra.mxu0 0
        %5128 = vmatprep.subr.bf16.mxu0 0
        %5129 = vmatpush1.bf16.msra.mxu0 0
        %5130 = vmatprep.subr.bf16.mxu0 0
        %5131 = vmatpush1.bf16.msra.mxu0 0
        %5132 = vmatprep.subr.bf16.mxu0 0
        %5133 = vmatpush1.bf16.msra.mxu0 0
        %5134 = vmatprep.mubr.bf16.mxu0 0
        %5135 = vmatmul.mubr.bf16.gmra.mrb[0].mxu0 %v5059
        %v5136 = vpop.f32.mrb[0].mxu0
        %v5137 = vadd.f32 0.0, %v5136
        %v5138 = vpop.f32.mrb[0].mxu0
        %v5139 = vadd.f32 0.0, %v5138
        %v5140 = vpop.f32.mrb[0].mxu0
        %v5141 = vpop.f32.mrb[0].mxu0
        %5142 = vdwg.mxu0
        %v5143 = vadd.f32 %v4956, %v5096
        %v5144 = vadd.f32 %v4957, %v5098
        %v5145 = vadd.f32 %v4958, %v5137
        %v5146 = vadd.f32 %v4959, %v5139
        %v5147 = vld [vmem:[#allocation4 + $0x13] sm:$0x1]
        %v5148 = vld [vmem:[%s7 + $0x480] sm:$0xff]
        %v5149 = vld [vmem:[%s7 + $0x488] sm:$0xff]
        %v5150 = vld [vmem:[%s7 + $0x490] sm:$0xff]
        %v5151 = vld [vmem:[%s7 + $0x498] sm:$0xff]
        %v5152 = vld [vmem:[%s7 + $0x4a0] sm:$0xff]
        %v5153 = vld [vmem:[%s7 + $0x4a8] sm:$0xff]
        %v5154 = vld [vmem:[%s7 + $0x4b0] sm:$0xff]
        %v5155 = vld [vmem:[%s7 + $0x4b8] sm:$0xff]
        %v5156 = vld [vmem:[%s7 + $0x4c0] sm:$0xff]
        %v5157 = vld [vmem:[%s7 + $0x4c8] sm:$0xff]
        %v5158 = vld [vmem:[%s7 + $0x4d0] sm:$0xff]
        %v5159 = vld [vmem:[%s7 + $0x4d8] sm:$0xff]
        %v5160 = vld [vmem:[%s7 + $0x4e0] sm:$0xff]
        %v5161 = vld [vmem:[%s7 + $0x4e8] sm:$0xff]
        %v5162 = vld [vmem:[%s7 + $0x4f0] sm:$0xff]
        %v5163 = vld [vmem:[%s7 + $0x4f8] sm:$0xff]
        %v5164 = vpack.c.bf16 %v5147, %v5147
        %v5181 = vunpack.c.l.b16 %v5148
        %v5182 = vunpack.c.h.b16 %v5148
        %v5183 = vunpack.c.l.b16 %v5149
        %v5184 = vunpack.c.h.b16 %v5149
        %v5185 = vunpack.c.l.b16 %v5150
        %v5186 = vunpack.c.h.b16 %v5150
        %v5187 = vunpack.c.l.b16 %v5151
        %v5188 = vunpack.c.h.b16 %v5151
        %v5189 = vunpack.c.l.b16 %v5152
        %v5190 = vunpack.c.h.b16 %v5152
        %v5191 = vunpack.c.l.b16 %v5153
        %v5192 = vunpack.c.h.b16 %v5153
        %v5193 = vunpack.c.l.b16 %v5154
        %v5194 = vunpack.c.h.b16 %v5154
        %v5195 = vunpack.c.l.b16 %v5155
        %v5196 = vunpack.c.h.b16 %v5155
        %v5197 = vunpack.c.l.b16 %v5156
        %v5198 = vunpack.c.h.b16 %v5156
        %v5199 = vunpack.c.l.b16 %v5157
        %v5200 = vunpack.c.h.b16 %v5157
        %v5201 = vunpack.c.l.b16 %v5158
        %v5202 = vunpack.c.h.b16 %v5158
        %v5203 = vunpack.c.l.b16 %v5159
        %v5204 = vunpack.c.h.b16 %v5159
        %v5205 = vunpack.c.l.b16 %v5160
        %v5206 = vunpack.c.h.b16 %v5160
        %v5207 = vunpack.c.l.b16 %v5161
        %v5208 = vunpack.c.h.b16 %v5161
        %v5209 = vunpack.c.l.b16 %v5162
        %v5210 = vunpack.c.h.b16 %v5162
        %v5211 = vunpack.c.l.b16 %v5163
        %v5212 = vunpack.c.h.b16 %v5163
        %v5213 = vpack.c.b16 %v5185, %v5181
        %v5214 = vpack.c.b16 %v5186, %v5182
        %v5215 = vpack.c.b16 %v5187, %v5183
        %v5216 = vpack.c.b16 %v5188, %v5184
        %v5217 = vpack.c.b16 %v5193, %v5189
        %v5218 = vpack.c.b16 %v5194, %v5190
        %v5219 = vpack.c.b16 %v5195, %v5191
        %v5220 = vpack.c.b16 %v5196, %v5192
        %v5221 = vpack.c.b16 %v5201, %v5197
        %v5222 = vpack.c.b16 %v5202, %v5198
        %v5223 = vpack.c.b16 %v5203, %v5199
        %v5224 = vpack.c.b16 %v5204, %v5200
        %v5225 = vpack.c.b16 %v5209, %v5205
        %v5226 = vpack.c.b16 %v5210, %v5206
        %v5227 = vpack.c.b16 %v5211, %v5207
        %v5228 = vpack.c.b16 %v5212, %v5208
        %v5246 = vsel %vm2460, %v5164, 0
        %5248 = vmatprep.subr.bf16.mxu0 %v5214
        %5249 = vmatpush1.bf16.msra.mxu0 %v5213
        %5250 = vmatprep.subr.bf16.mxu0 %v5218
        %5251 = vmatpush1.bf16.msra.mxu0 %v5217
        %5252 = vmatprep.subr.bf16.mxu0 %v5222
        %5253 = vmatpush1.bf16.msra.mxu0 %v5221
        %5254 = vmatprep.subr.bf16.mxu0 %v5226
        %5255 = vmatpush1.bf16.msra.mxu0 %v5225
        %5256 = vmatprep.subr.bf16.mxu0 0
        %5257 = vmatpush1.bf16.msra.mxu0 0
        %5258 = vmatprep.subr.bf16.mxu0 0
        %5259 = vmatpush1.bf16.msra.mxu0 0
        %5260 = vmatprep.subr.bf16.mxu0 0
        %5261 = vmatpush1.bf16.msra.mxu0 0
        %5262 = vmatprep.subr.bf16.mxu0 0
        %5263 = vmatpush1.bf16.msra.mxu0 0
        %5264 = vmatprep.subr.bf16.mxu0 0
        %5265 = vmatpush1.bf16.msra.mxu0 0
        %5266 = vmatprep.subr.bf16.mxu0 0
        %5267 = vmatpush1.bf16.msra.mxu0 0
        %5268 = vmatprep.subr.bf16.mxu0 0
        %5269 = vmatpush1.bf16.msra.mxu0 0
        %5270 = vmatprep.subr.bf16.mxu0 0
        %5271 = vmatpush1.bf16.msra.mxu0 0
        %5272 = vmatprep.subr.bf16.mxu0 0
        %5273 = vmatpush1.bf16.msra.mxu0 0
        %5274 = vmatprep.subr.bf16.mxu0 0
        %5275 = vmatpush1.bf16.msra.mxu0 0
        %5276 = vmatprep.subr.bf16.mxu0 0
        %5277 = vmatpush1.bf16.msra.mxu0 0
        %5278 = vmatprep.subr.bf16.mxu0 0
        %5279 = vmatpush1.bf16.msra.mxu0 0
        %5280 = vmatprep.mubr.bf16.mxu0 0
        %5281 = vmatmul.mubr.bf16.gmra.mrb[0].mxu0 %v5246
        %v5282 = vpop.f32.mrb[0].mxu0
        %v5283 = vadd.f32 0.0, %v5282
        %v5284 = vpop.f32.mrb[0].mxu0
        %v5285 = vadd.f32 0.0, %v5284
        %v5286 = vpop.f32.mrb[0].mxu0
        %v5287 = vpop.f32.mrb[0].mxu0
        %5288 = vdwg.mxu0
        %5289 = vmatprep.subr.bf16.mxu0 %v5216
        %5290 = vmatpush1.bf16.msra.mxu0 %v5215
        %5291 = vmatprep.subr.bf16.mxu0 %v5220
        %5292 = vmatpush1.bf16.msra.mxu0 %v5219
        %5293 = vmatprep.subr.bf16.mxu0 %v5224
        %5294 = vmatpush1.bf16.msra.mxu0 %v5223
        %5295 = vmatprep.subr.bf16.mxu0 %v5228
        %5296 = vmatpush1.bf16.msra.mxu0 %v5227
        %5297 = vmatprep.subr.bf16.mxu0 0
        %5298 = vmatpush1.bf16.msra.mxu0 0
        %5299 = vmatprep.subr.bf16.mxu0 0
        %5300 = vmatpush1.bf16.msra.mxu0 0
        %5301 = vmatprep.subr.bf16.mxu0 0
        %5302 = vmatpush1.bf16.msra.mxu0 0
        %5303 = vmatprep.subr.bf16.mxu0 0
        %5304 = vmatpush1.bf16.msra.mxu0 0
        %5305 = vmatprep.subr.bf16.mxu0 0
        %5306 = vmatpush1.bf16.msra.mxu0 0
        %5307 = vmatprep.subr.bf16.mxu0 0
        %5308 = vmatpush1.bf16.msra.mxu0 0
        %5309 = vmatprep.subr.bf16.mxu0 0
        %5310 = vmatpush1.bf16.msra.mxu0 0
        %5311 = vmatprep.subr.bf16.mxu0 0
        %5312 = vmatpush1.bf16.msra.mxu0 0
        %5313 = vmatprep.subr.bf16.mxu0 0
        %5314 = vmatpush1.bf16.msra.mxu0 0
        %5315 = vmatprep.subr.bf16.mxu0 0
        %5316 = vmatpush1.bf16.msra.mxu0 0
        %5317 = vmatprep.subr.bf16.mxu0 0
        %5318 = vmatpush1.bf16.msra.mxu0 0
        %5319 = vmatprep.subr.bf16.mxu0 0
        %5320 = vmatpush1.bf16.msra.mxu0 0
        %5321 = vmatprep.mubr.bf16.mxu0 0
        %5322 = vmatmul.mubr.bf16.gmra.mrb[0].mxu0 %v5246
        %v5323 = vpop.f32.mrb[0].mxu0
        %v5324 = vadd.f32 0.0, %v5323
        %v5325 = vpop.f32.mrb[0].mxu0
        %v5326 = vadd.f32 0.0, %v5325
        %v5327 = vpop.f32.mrb[0].mxu0
        %v5328 = vpop.f32.mrb[0].mxu0
        %5329 = vdwg.mxu0
        %v5330 = vadd.f32 %v5143, %v5283
        %v5331 = vadd.f32 %v5144, %v5285
        %v5332 = vadd.f32 %v5145, %v5324
        %v5333 = vadd.f32 %v5146, %v5326
        %v5334 = vld [vmem:[#allocation4 + $0x14] sm:$0x1]
        %v5335 = vld [vmem:[%s7 + $0x500] sm:$0xff]
        %v5336 = vld [vmem:[%s7 + $0x508] sm:$0xff]
        %v5337 = vld [vmem:[%s7 + $0x510] sm:$0xff]
        %v5338 = vld [vmem:[%s7 + $0x518] sm:$0xff]
        %v5339 = vld [vmem:[%s7 + $0x520] sm:$0xff]
        %v5340 = vld [vmem:[%s7 + $0x528] sm:$0xff]
        %v5341 = vld [vmem:[%s7 + $0x530] sm:$0xff]
        %v5342 = vld [vmem:[%s7 + $0x538] sm:$0xff]
        %v5343 = vld [vmem:[%s7 + $0x540] sm:$0xff]
        %v5344 = vld [vmem:[%s7 + $0x548] sm:$0xff]
        %v5345 = vld [vmem:[%s7 + $0x550] sm:$0xff]
        %v5346 = vld [vmem:[%s7 + $0x558] sm:$0xff]
        %v5347 = vld [vmem:[%s7 + $0x560] sm:$0xff]
        %v5348 = vld [vmem:[%s7 + $0x568] sm:$0xff]
        %v5349 = vld [vmem:[%s7 + $0x570] sm:$0xff]
        %v5350 = vld [vmem:[%s7 + $0x578] sm:$0xff]
        %v5351 = vpack.c.bf16 %v5334, %v5334
        %v5368 = vunpack.c.l.b16 %v5335
        %v5369 = vunpack.c.h.b16 %v5335
        %v5370 = vunpack.c.l.b16 %v5336
        %v5371 = vunpack.c.h.b16 %v5336
        %v5372 = vunpack.c.l.b16 %v5337
        %v5373 = vunpack.c.h.b16 %v5337
        %v5374 = vunpack.c.l.b16 %v5338
        %v5375 = vunpack.c.h.b16 %v5338
        %v5376 = vunpack.c.l.b16 %v5339
        %v5377 = vunpack.c.h.b16 %v5339
        %v5378 = vunpack.c.l.b16 %v5340
        %v5379 = vunpack.c.h.b16 %v5340
        %v5380 = vunpack.c.l.b16 %v5341
        %v5381 = vunpack.c.h.b16 %v5341
        %v5382 = vunpack.c.l.b16 %v5342
        %v5383 = vunpack.c.h.b16 %v5342
        %v5384 = vunpack.c.l.b16 %v5343
        %v5385 = vunpack.c.h.b16 %v5343
        %v5386 = vunpack.c.l.b16 %v5344
        %v5387 = vunpack.c.h.b16 %v5344
        %v5388 = vunpack.c.l.b16 %v5345
        %v5389 = vunpack.c.h.b16 %v5345
        %v5390 = vunpack.c.l.b16 %v5346
        %v5391 = vunpack.c.h.b16 %v5346
        %v5392 = vunpack.c.l.b16 %v5347
        %v5393 = vunpack.c.h.b16 %v5347
        %v5394 = vunpack.c.l.b16 %v5348
        %v5395 = vunpack.c.h.b16 %v5348
        %v5396 = vunpack.c.l.b16 %v5349
        %v5397 = vunpack.c.h.b16 %v5349
        %v5398 = vunpack.c.l.b16 %v5350
        %v5399 = vunpack.c.h.b16 %v5350
        %v5400 = vpack.c.b16 %v5372, %v5368
        %v5401 = vpack.c.b16 %v5373, %v5369
        %v5402 = vpack.c.b16 %v5374, %v5370
        %v5403 = vpack.c.b16 %v5375, %v5371
        %v5404 = vpack.c.b16 %v5380, %v5376
        %v5405 = vpack.c.b16 %v5381, %v5377
        %v5406 = vpack.c.b16 %v5382, %v5378
        %v5407 = vpack.c.b16 %v5383, %v5379
        %v5408 = vpack.c.b16 %v5388, %v5384
        %v5409 = vpack.c.b16 %v5389, %v5385
        %v5410 = vpack.c.b16 %v5390, %v5386
        %v5411 = vpack.c.b16 %v5391, %v5387
        %v5412 = vpack.c.b16 %v5396, %v5392
        %v5413 = vpack.c.b16 %v5397, %v5393
        %v5414 = vpack.c.b16 %v5398, %v5394
        %v5415 = vpack.c.b16 %v5399, %v5395
        %v5433 = vsel %vm2460, %v5351, 0
        %5435 = vmatprep.subr.bf16.mxu0 %v5401
        %5436 = vmatpush1.bf16.msra.mxu0 %v5400
        %5437 = vmatprep.subr.bf16.mxu0 %v5405
        %5438 = vmatpush1.bf16.msra.mxu0 %v5404
        %5439 = vmatprep.subr.bf16.mxu0 %v5409
        %5440 = vmatpush1.bf16.msra.mxu0 %v5408
        %5441 = vmatprep.subr.bf16.mxu0 %v5413
        %5442 = vmatpush1.bf16.msra.mxu0 %v5412
        %5443 = vmatprep.subr.bf16.mxu0 0
        %5444 = vmatpush1.bf16.msra.mxu0 0
        %5445 = vmatprep.subr.bf16.mxu0 0
        %5446 = vmatpush1.bf16.msra.mxu0 0
        %5447 = vmatprep.subr.bf16.mxu0 0
        %5448 = vmatpush1.bf16.msra.mxu0 0
        %5449 = vmatprep.subr.bf16.mxu0 0
        %5450 = vmatpush1.bf16.msra.mxu0 0
        %5451 = vmatprep.subr.bf16.mxu0 0
        %5452 = vmatpush1.bf16.msra.mxu0 0
        %5453 = vmatprep.subr.bf16.mxu0 0
        %5454 = vmatpush1.bf16.msra.mxu0 0
        %5455 = vmatprep.subr.bf16.mxu0 0
        %5456 = vmatpush1.bf16.msra.mxu0 0
        %5457 = vmatprep.subr.bf16.mxu0 0
        %5458 = vmatpush1.bf16.msra.mxu0 0
        %5459 = vmatprep.subr.bf16.mxu0 0
        %5460 = vmatpush1.bf16.msra.mxu0 0
        %5461 = vmatprep.subr.bf16.mxu0 0
        %5462 = vmatpush1.bf16.msra.mxu0 0
        %5463 = vmatprep.subr.bf16.mxu0 0
        %5464 = vmatpush1.bf16.msra.mxu0 0
        %5465 = vmatprep.subr.bf16.mxu0 0
        %5466 = vmatpush1.bf16.msra.mxu0 0
        %5467 = vmatprep.mubr.bf16.mxu0 0
        %5468 = vmatmul.mubr.bf16.gmra.mrb[0].mxu0 %v5433
        %v5469 = vpop.f32.mrb[0].mxu0
        %v5470 = vadd.f32 0.0, %v5469
        %v5471 = vpop.f32.mrb[0].mxu0
        %v5472 = vadd.f32 0.0, %v5471
        %v5473 = vpop.f32.mrb[0].mxu0
        %v5474 = vpop.f32.mrb[0].mxu0
        %5475 = vdwg.mxu0
        %5476 = vmatprep.subr.bf16.mxu0 %v5403
        %5477 = vmatpush1.bf16.msra.mxu0 %v5402
        %5478 = vmatprep.subr.bf16.mxu0 %v5407
        %5479 = vmatpush1.bf16.msra.mxu0 %v5406
        %5480 = vmatprep.subr.bf16.mxu0 %v5411
        %5481 = vmatpush1.bf16.msra.mxu0 %v5410
        %5482 = vmatprep.subr.bf16.mxu0 %v5415
        %5483 = vmatpush1.bf16.msra.mxu0 %v5414
        %5484 = vmatprep.subr.bf16.mxu0 0
        %5485 = vmatpush1.bf16.msra.mxu0 0
        %5486 = vmatprep.subr.bf16.mxu0 0
        %5487 = vmatpush1.bf16.msra.mxu0 0
        %5488 = vmatprep.subr.bf16.mxu0 0
        %5489 = vmatpush1.bf16.msra.mxu0 0
        %5490 = vmatprep.subr.bf16.mxu0 0
        %5491 = vmatpush1.bf16.msra.mxu0 0
        %5492 = vmatprep.subr.bf16.mxu0 0
        %5493 = vmatpush1.bf16.msra.mxu0 0
        %5494 = vmatprep.subr.bf16.mxu0 0
        %5495 = vmatpush1.bf16.msra.mxu0 0
        %5496 = vmatprep.subr.bf16.mxu0 0
        %5497 = vmatpush1.bf16.msra.mxu0 0
        %5498 = vmatprep.subr.bf16.mxu0 0
        %5499 = vmatpush1.bf16.msra.mxu0 0
        %5500 = vmatprep.subr.bf16.mxu0 0
        %5501 = vmatpush1.bf16.msra.mxu0 0
        %5502 = vmatprep.subr.bf16.mxu0 0
        %5503 = vmatpush1.bf16.msra.mxu0 0
        %5504 = vmatprep.subr.bf16.mxu0 0
        %5505 = vmatpush1.bf16.msra.mxu0 0
        %5506 = vmatprep.subr.bf16.mxu0 0
        %5507 = vmatpush1.bf16.msra.mxu0 0
        %5508 = vmatprep.mubr.bf16.mxu0 0
        %5509 = vmatmul.mubr.bf16.gmra.mrb[0].mxu0 %v5433
        %v5510 = vpop.f32.mrb[0].mxu0
        %v5511 = vadd.f32 0.0, %v5510
        %v5512 = vpop.f32.mrb[0].mxu0
        %v5513 = vadd.f32 0.0, %v5512
        %v5514 = vpop.f32.mrb[0].mxu0
        %v5515 = vpop.f32.mrb[0].mxu0
        %5516 = vdwg.mxu0
        %v5517 = vadd.f32 %v5330, %v5470
        %v5518 = vadd.f32 %v5331, %v5472
        %v5519 = vadd.f32 %v5332, %v5511
        %v5520 = vadd.f32 %v5333, %v5513
        %v5521 = vld [vmem:[#allocation4 + $0x15] sm:$0x1]
        %v5522 = vld [vmem:[%s7 + $0x580] sm:$0xff]
        %v5523 = vld [vmem:[%s7 + $0x588] sm:$0xff]
        %v5524 = vld [vmem:[%s7 + $0x590] sm:$0xff]
        %v5525 = vld [vmem:[%s7 + $0x598] sm:$0xff]
        %v5526 = vld [vmem:[%s7 + $0x5a0] sm:$0xff]
        %v5527 = vld [vmem:[%s7 + $0x5a8] sm:$0xff]
        %v5528 = vld [vmem:[%s7 + $0x5b0] sm:$0xff]
        %v5529 = vld [vmem:[%s7 + $0x5b8] sm:$0xff]
        %v5530 = vld [vmem:[%s7 + $0x5c0] sm:$0xff]
        %v5531 = vld [vmem:[%s7 + $0x5c8] sm:$0xff]
        %v5532 = vld [vmem:[%s7 + $0x5d0] sm:$0xff]
        %v5533 = vld [vmem:[%s7 + $0x5d8] sm:$0xff]
        %v5534 = vld [vmem:[%s7 + $0x5e0] sm:$0xff]
        %v5535 = vld [vmem:[%s7 + $0x5e8] sm:$0xff]
        %v5536 = vld [vmem:[%s7 + $0x5f0] sm:$0xff]
        %v5537 = vld [vmem:[%s7 + $0x5f8] sm:$0xff]
        %v5538 = vpack.c.bf16 %v5521, %v5521
        %v5555 = vunpack.c.l.b16 %v5522
        %v5556 = vunpack.c.h.b16 %v5522
        %v5557 = vunpack.c.l.b16 %v5523
        %v5558 = vunpack.c.h.b16 %v5523
        %v5559 = vunpack.c.l.b16 %v5524
        %v5560 = vunpack.c.h.b16 %v5524
        %v5561 = vunpack.c.l.b16 %v5525
        %v5562 = vunpack.c.h.b16 %v5525
        %v5563 = vunpack.c.l.b16 %v5526
        %v5564 = vunpack.c.h.b16 %v5526
        %v5565 = vunpack.c.l.b16 %v5527
        %v5566 = vunpack.c.h.b16 %v5527
        %v5567 = vunpack.c.l.b16 %v5528
        %v5568 = vunpack.c.h.b16 %v5528
        %v5569 = vunpack.c.l.b16 %v5529
        %v5570 = vunpack.c.h.b16 %v5529
        %v5571 = vunpack.c.l.b16 %v5530
        %v5572 = vunpack.c.h.b16 %v5530
        %v5573 = vunpack.c.l.b16 %v5531
        %v5574 = vunpack.c.h.b16 %v5531
        %v5575 = vunpack.c.l.b16 %v5532
        %v5576 = vunpack.c.h.b16 %v5532
        %v5577 = vunpack.c.l.b16 %v5533
        %v5578 = vunpack.c.h.b16 %v5533
        %v5579 = vunpack.c.l.b16 %v5534
        %v5580 = vunpack.c.h.b16 %v5534
        %v5581 = vunpack.c.l.b16 %v5535
        %v5582 = vunpack.c.h.b16 %v5535
        %v5583 = vunpack.c.l.b16 %v5536
        %v5584 = vunpack.c.h.b16 %v5536
        %v5585 = vunpack.c.l.b16 %v5537
        %v5586 = vunpack.c.h.b16 %v5537
        %v5587 = vpack.c.b16 %v5559, %v5555
        %v5588 = vpack.c.b16 %v5560, %v5556
        %v5589 = vpack.c.b16 %v5561, %v5557
        %v5590 = vpack.c.b16 %v5562, %v5558
        %v5591 = vpack.c.b16 %v5567, %v5563
        %v5592 = vpack.c.b16 %v5568, %v5564
        %v5593 = vpack.c.b16 %v5569, %v5565
        %v5594 = vpack.c.b16 %v5570, %v5566
        %v5595 = vpack.c.b16 %v5575, %v5571
        %v5596 = vpack.c.b16 %v5576, %v5572
        %v5597 = vpack.c.b16 %v5577, %v5573
        %v5598 = vpack.c.b16 %v5578, %v5574
        %v5599 = vpack.c.b16 %v5583, %v5579
        %v5600 = vpack.c.b16 %v5584, %v5580
        %v5601 = vpack.c.b16 %v5585, %v5581
        %v5602 = vpack.c.b16 %v5586, %v5582
        %v5620 = vsel %vm2460, %v5538, 0
        %5622 = vmatprep.subr.bf16.mxu0 %v5588
        %5623 = vmatpush1.bf16.msra.mxu0 %v5587
        %5624 = vmatprep.subr.bf16.mxu0 %v5592
        %5625 = vmatpush1.bf16.msra.mxu0 %v5591
        %5626 = vmatprep.subr.bf16.mxu0 %v5596
        %5627 = vmatpush1.bf16.msra.mxu0 %v5595
        %5628 = vmatprep.subr.bf16.mxu0 %v5600
        %5629 = vmatpush1.bf16.msra.mxu0 %v5599
        %5630 = vmatprep.subr.bf16.mxu0 0
        %5631 = vmatpush1.bf16.msra.mxu0 0
        %5632 = vmatprep.subr.bf16.mxu0 0
        %5633 = vmatpush1.bf16.msra.mxu0 0
        %5634 = vmatprep.subr.bf16.mxu0 0
        %5635 = vmatpush1.bf16.msra.mxu0 0
        %5636 = vmatprep.subr.bf16.mxu0 0
        %5637 = vmatpush1.bf16.msra.mxu0 0
        %5638 = vmatprep.subr.bf16.mxu0 0
        %5639 = vmatpush1.bf16.msra.mxu0 0
        %5640 = vmatprep.subr.bf16.mxu0 0
        %5641 = vmatpush1.bf16.msra.mxu0 0
        %5642 = vmatprep.subr.bf16.mxu0 0
        %5643 = vmatpush1.bf16.msra.mxu0 0
        %5644 = vmatprep.subr.bf16.mxu0 0
        %5645 = vmatpush1.bf16.msra.mxu0 0
        %5646 = vmatprep.subr.bf16.mxu0 0
        %5647 = vmatpush1.bf16.msra.mxu0 0
        %5648 = vmatprep.subr.bf16.mxu0 0
        %5649 = vmatpush1.bf16.msra.mxu0 0
        %5650 = vmatprep.subr.bf16.mxu0 0
        %5651 = vmatpush1.bf16.msra.mxu0 0
        %5652 = vmatprep.subr.bf16.mxu0 0
        %5653 = vmatpush1.bf16.msra.mxu0 0
        %5654 = vmatprep.mubr.bf16.mxu0 0
        %5655 = vmatmul.mubr.bf16.gmra.mrb[0].mxu0 %v5620
        %v5656 = vpop.f32.mrb[0].mxu0
        %v5657 = vadd.f32 0.0, %v5656
        %v5658 = vpop.f32.mrb[0].mxu0
        %v5659 = vadd.f32 0.0, %v5658
        %v5660 = vpop.f32.mrb[0].mxu0
        %v5661 = vpop.f32.mrb[0].mxu0
        %5662 = vdwg.mxu0
        %5663 = vmatprep.subr.bf16.mxu0 %v5590
        %5664 = vmatpush1.bf16.msra.mxu0 %v5589
        %5665 = vmatprep.subr.bf16.mxu0 %v5594
        %5666 = vmatpush1.bf16.msra.mxu0 %v5593
        %5667 = vmatprep.subr.bf16.mxu0 %v5598
        %5668 = vmatpush1.bf16.msra.mxu0 %v5597
        %5669 = vmatprep.subr.bf16.mxu0 %v5602
        %5670 = vmatpush1.bf16.msra.mxu0 %v5601
        %5671 = vmatprep.subr.bf16.mxu0 0
        %5672 = vmatpush1.bf16.msra.mxu0 0
        %5673 = vmatprep.subr.bf16.mxu0 0
        %5674 = vmatpush1.bf16.msra.mxu0 0
        %5675 = vmatprep.subr.bf16.mxu0 0
        %5676 = vmatpush1.bf16.msra.mxu0 0
        %5677 = vmatprep.subr.bf16.mxu0 0
        %5678 = vmatpush1.bf16.msra.mxu0 0
        %5679 = vmatprep.subr.bf16.mxu0 0
        %5680 = vmatpush1.bf16.msra.mxu0 0
        %5681 = vmatprep.subr.bf16.mxu0 0
        %5682 = vmatpush1.bf16.msra.mxu0 0
        %5683 = vmatprep.subr.bf16.mxu0 0
        %5684 = vmatpush1.bf16.msra.mxu0 0
        %5685 = vmatprep.subr.bf16.mxu0 0
        %5686 = vmatpush1.bf16.msra.mxu0 0
        %5687 = vmatprep.subr.bf16.mxu0 0
        %5688 = vmatpush1.bf16.msra.mxu0 0
        %5689 = vmatprep.subr.bf16.mxu0 0
        %5690 = vmatpush1.bf16.msra.mxu0 0
        %5691 = vmatprep.subr.bf16.mxu0 0
        %5692 = vmatpush1.bf16.msra.mxu0 0
        %5693 = vmatprep.subr.bf16.mxu0 0
        %5694 = vmatpush1.bf16.msra.mxu0 0
        %5695 = vmatprep.mubr.bf16.mxu0 0
        %5696 = vmatmul.mubr.bf16.gmra.mrb[0].mxu0 %v5620
        %v5697 = vpop.f32.mrb[0].mxu0
        %v5698 = vadd.f32 0.0, %v5697
        %v5699 = vpop.f32.mrb[0].mxu0
        %v5700 = vadd.f32 0.0, %v5699
        %v5701 = vpop.f32.mrb[0].mxu0
        %v5702 = vpop.f32.mrb[0].mxu0
        %5703 = vdwg.mxu0
        %v5704 = vadd.f32 %v5517, %v5657
        %v5705 = vadd.f32 %v5518, %v5659
        %v5706 = vadd.f32 %v5519, %v5698
        %v5707 = vadd.f32 %v5520, %v5700
        %v5708 = vld [vmem:[#allocation4 + $0x1b] sm:$0x1]
        %v5709 = vld [vmem:[%s7 + $0x600] sm:$0xff]
        %v5710 = vld [vmem:[%s7 + $0x608] sm:$0xff]
        %v5711 = vld [vmem:[%s7 + $0x610] sm:$0xff]
        %v5712 = vld [vmem:[%s7 + $0x618] sm:$0xff]
        %v5713 = vld [vmem:[%s7 + $0x620] sm:$0xff]
        %v5714 = vld [vmem:[%s7 + $0x628] sm:$0xff]
        %v5715 = vld [vmem:[%s7 + $0x630] sm:$0xff]
        %v5716 = vld [vmem:[%s7 + $0x638] sm:$0xff]
        %v5717 = vld [vmem:[%s7 + $0x640] sm:$0xff]
        %v5718 = vld [vmem:[%s7 + $0x648] sm:$0xff]
        %v5719 = vld [vmem:[%s7 + $0x650] sm:$0xff]
        %v5720 = vld [vmem:[%s7 + $0x658] sm:$0xff]
        %v5721 = vld [vmem:[%s7 + $0x660] sm:$0xff]
        %v5722 = vld [vmem:[%s7 + $0x668] sm:$0xff]
        %v5723 = vld [vmem:[%s7 + $0x670] sm:$0xff]
        %v5724 = vld [vmem:[%s7 + $0x678] sm:$0xff]
        %v5725 = vpack.c.bf16 %v5708, %v5708
        %v5742 = vunpack.c.l.b16 %v5709
        %v5743 = vunpack.c.h.b16 %v5709
        %v5744 = vunpack.c.l.b16 %v5710
        %v5745 = vunpack.c.h.b16 %v5710
        %v5746 = vunpack.c.l.b16 %v5711
        %v5747 = vunpack.c.h.b16 %v5711
        %v5748 = vunpack.c.l.b16 %v5712
        %v5749 = vunpack.c.h.b16 %v5712
        %v5750 = vunpack.c.l.b16 %v5713
        %v5751 = vunpack.c.h.b16 %v5713
        %v5752 = vunpack.c.l.b16 %v5714
        %v5753 = vunpack.c.h.b16 %v5714
        %v5754 = vunpack.c.l.b16 %v5715
        %v5755 = vunpack.c.h.b16 %v5715
        %v5756 = vunpack.c.l.b16 %v5716
        %v5757 = vunpack.c.h.b16 %v5716
        %v5758 = vunpack.c.l.b16 %v5717
        %v5759 = vunpack.c.h.b16 %v5717
        %v5760 = vunpack.c.l.b16 %v5718
        %v5761 = vunpack.c.h.b16 %v5718
        %v5762 = vunpack.c.l.b16 %v5719
        %v5763 = vunpack.c.h.b16 %v5719
        %v5764 = vunpack.c.l.b16 %v5720
        %v5765 = vunpack.c.h.b16 %v5720
        %v5766 = vunpack.c.l.b16 %v5721
        %v5767 = vunpack.c.h.b16 %v5721
        %v5768 = vunpack.c.l.b16 %v5722
        %v5769 = vunpack.c.h.b16 %v5722
        %v5770 = vunpack.c.l.b16 %v5723
        %v5771 = vunpack.c.h.b16 %v5723
        %v5772 = vunpack.c.l.b16 %v5724
        %v5773 = vunpack.c.h.b16 %v5724
        %v5774 = vpack.c.b16 %v5746, %v5742
        %v5775 = vpack.c.b16 %v5747, %v5743
        %v5776 = vpack.c.b16 %v5748, %v5744
        %v5777 = vpack.c.b16 %v5749, %v5745
        %v5778 = vpack.c.b16 %v5754, %v5750
        %v5779 = vpack.c.b16 %v5755, %v5751
        %v5780 = vpack.c.b16 %v5756, %v5752
        %v5781 = vpack.c.b16 %v5757, %v5753
        %v5782 = vpack.c.b16 %v5762, %v5758
        %v5783 = vpack.c.b16 %v5763, %v5759
        %v5784 = vpack.c.b16 %v5764, %v5760
        %v5785 = vpack.c.b16 %v5765, %v5761
        %v5786 = vpack.c.b16 %v5770, %v5766
        %v5787 = vpack.c.b16 %v5771, %v5767
        %v5788 = vpack.c.b16 %v5772, %v5768
        %v5789 = vpack.c.b16 %v5773, %v5769
        %v5807 = vsel %vm2460, %v5725, 0
        %5809 = vmatprep.subr.bf16.mxu0 %v5775
        %5810 = vmatpush1.bf16.msra.mxu0 %v5774
        %5811 = vmatprep.subr.bf16.mxu0 %v5779
        %5812 = vmatpush1.bf16.msra.mxu0 %v5778
        %5813 = vmatprep.subr.bf16.mxu0 %v5783
        %5814 = vmatpush1.bf16.msra.mxu0 %v5782
        %5815 = vmatprep.subr.bf16.mxu0 %v5787
        %5816 = vmatpush1.bf16.msra.mxu0 %v5786
        %5817 = vmatprep.subr.bf16.mxu0 0
        %5818 = vmatpush1.bf16.msra.mxu0 0
        %5819 = vmatprep.subr.bf16.mxu0 0
        %5820 = vmatpush1.bf16.msra.mxu0 0
        %5821 = vmatprep.subr.bf16.mxu0 0
        %5822 = vmatpush1.bf16.msra.mxu0 0
        %5823 = vmatprep.subr.bf16.mxu0 0
        %5824 = vmatpush1.bf16.msra.mxu0 0
        %5825 = vmatprep.subr.bf16.mxu0 0
        %5826 = vmatpush1.bf16.msra.mxu0 0
        %5827 = vmatprep.subr.bf16.mxu0 0
        %5828 = vmatpush1.bf16.msra.mxu0 0
        %5829 = vmatprep.subr.bf16.mxu0 0
        %5830 = vmatpush1.bf16.msra.mxu0 0
        %5831 = vmatprep.subr.bf16.mxu0 0
        %5832 = vmatpush1.bf16.msra.mxu0 0
        %5833 = vmatprep.subr.bf16.mxu0 0
        %5834 = vmatpush1.bf16.msra.mxu0 0
        %5835 = vmatprep.subr.bf16.mxu0 0
        %5836 = vmatpush1.bf16.msra.mxu0 0
        %5837 = vmatprep.subr.bf16.mxu0 0
        %5838 = vmatpush1.bf16.msra.mxu0 0
        %5839 = vmatprep.subr.bf16.mxu0 0
        %5840 = vmatpush1.bf16.msra.mxu0 0
        %5841 = vmatprep.mubr.bf16.mxu0 0
        %5842 = vmatmul.mubr.bf16.gmra.mrb[0].mxu0 %v5807
        %v5843 = vpop.f32.mrb[0].mxu0
        %v5844 = vadd.f32 0.0, %v5843
        %v5845 = vpop.f32.mrb[0].mxu0
        %v5846 = vadd.f32 0.0, %v5845
        %v5847 = vpop.f32.mrb[0].mxu0
        %v5848 = vpop.f32.mrb[0].mxu0
        %5849 = vdwg.mxu0
        %5850 = vmatprep.subr.bf16.mxu0 %v5777
        %5851 = vmatpush1.bf16.msra.mxu0 %v5776
        %5852 = vmatprep.subr.bf16.mxu0 %v5781
        %5853 = vmatpush1.bf16.msra.mxu0 %v5780
        %5854 = vmatprep.subr.bf16.mxu0 %v5785
        %5855 = vmatpush1.bf16.msra.mxu0 %v5784
        %5856 = vmatprep.subr.bf16.mxu0 %v5789
        %5857 = vmatpush1.bf16.msra.mxu0 %v5788
        %5858 = vmatprep.subr.bf16.mxu0 0
        %5859 = vmatpush1.bf16.msra.mxu0 0
        %5860 = vmatprep.subr.bf16.mxu0 0
        %5861 = vmatpush1.bf16.msra.mxu0 0
        %5862 = vmatprep.subr.bf16.mxu0 0
        %5863 = vmatpush1.bf16.msra.mxu0 0
        %5864 = vmatprep.subr.bf16.mxu0 0
        %5865 = vmatpush1.bf16.msra.mxu0 0
        %5866 = vmatprep.subr.bf16.mxu0 0
        %5867 = vmatpush1.bf16.msra.mxu0 0
        %5868 = vmatprep.subr.bf16.mxu0 0
        %5869 = vmatpush1.bf16.msra.mxu0 0
        %5870 = vmatprep.subr.bf16.mxu0 0
        %5871 = vmatpush1.bf16.msra.mxu0 0
        %5872 = vmatprep.subr.bf16.mxu0 0
        %5873 = vmatpush1.bf16.msra.mxu0 0
        %5874 = vmatprep.subr.bf16.mxu0 0
        %5875 = vmatpush1.bf16.msra.mxu0 0
        %5876 = vmatprep.subr.bf16.mxu0 0
        %5877 = vmatpush1.bf16.msra.mxu0 0
        %5878 = vmatprep.subr.bf16.mxu0 0
        %5879 = vmatpush1.bf16.msra.mxu0 0
        %5880 = vmatprep.subr.bf16.mxu0 0
        %5881 = vmatpush1.bf16.msra.mxu0 0
        %5882 = vmatprep.mubr.bf16.mxu0 0
        %5883 = vmatmul.mubr.bf16.gmra.mrb[0].mxu0 %v5807
        %v5884 = vpop.f32.mrb[0].mxu0
        %v5885 = vadd.f32 0.0, %v5884
        %v5886 = vpop.f32.mrb[0].mxu0
        %v5887 = vadd.f32 0.0, %v5886
        %v5888 = vpop.f32.mrb[0].mxu0
        %v5889 = vpop.f32.mrb[0].mxu0
        %5890 = vdwg.mxu0
        %v5891 = vadd.f32 %v5704, %v5844
        %v5892 = vadd.f32 %v5705, %v5846
        %v5893 = vadd.f32 %v5706, %v5885
        %v5894 = vadd.f32 %v5707, %v5887
        %v5895 = vld [vmem:[#allocation4 + $0x1c] sm:$0x1]
        %v5896 = vld [vmem:[%s7 + $0x680] sm:$0xff]
        %v5897 = vld [vmem:[%s7 + $0x688] sm:$0xff]
        %v5898 = vld [vmem:[%s7 + $0x690] sm:$0xff]
        %v5899 = vld [vmem:[%s7 + $0x698] sm:$0xff]
        %v5900 = vld [vmem:[%s7 + $0x6a0] sm:$0xff]
        %v5901 = vld [vmem:[%s7 + $0x6a8] sm:$0xff]
        %v5902 = vld [vmem:[%s7 + $0x6b0] sm:$0xff]
        %v5903 = vld [vmem:[%s7 + $0x6b8] sm:$0xff]
        %v5904 = vld [vmem:[%s7 + $0x6c0] sm:$0xff]
        %v5905 = vld [vmem:[%s7 + $0x6c8] sm:$0xff]
        %v5906 = vld [vmem:[%s7 + $0x6d0] sm:$0xff]
        %v5907 = vld [vmem:[%s7 + $0x6d8] sm:$0xff]
        %v5908 = vld [vmem:[%s7 + $0x6e0] sm:$0xff]
        %v5909 = vld [vmem:[%s7 + $0x6e8] sm:$0xff]
        %v5910 = vld [vmem:[%s7 + $0x6f0] sm:$0xff]
        %v5911 = vld [vmem:[%s7 + $0x6f8] sm:$0xff]
        %v5912 = vpack.c.bf16 %v5895, %v5895
        %v5929 = vunpack.c.l.b16 %v5896
        %v5930 = vunpack.c.h.b16 %v5896
        %v5931 = vunpack.c.l.b16 %v5897
        %v5932 = vunpack.c.h.b16 %v5897
        %v5933 = vunpack.c.l.b16 %v5898
        %v5934 = vunpack.c.h.b16 %v5898
        %v5935 = vunpack.c.l.b16 %v5899
        %v5936 = vunpack.c.h.b16 %v5899
        %v5937 = vunpack.c.l.b16 %v5900
        %v5938 = vunpack.c.h.b16 %v5900
        %v5939 = vunpack.c.l.b16 %v5901
        %v5940 = vunpack.c.h.b16 %v5901
        %v5941 = vunpack.c.l.b16 %v5902
        %v5942 = vunpack.c.h.b16 %v5902
        %v5943 = vunpack.c.l.b16 %v5903
        %v5944 = vunpack.c.h.b16 %v5903
        %v5945 = vunpack.c.l.b16 %v5904
        %v5946 = vunpack.c.h.b16 %v5904
        %v5947 = vunpack.c.l.b16 %v5905
        %v5948 = vunpack.c.h.b16 %v5905
        %v5949 = vunpack.c.l.b16 %v5906
        %v5950 = vunpack.c.h.b16 %v5906
        %v5951 = vunpack.c.l.b16 %v5907
        %v5952 = vunpack.c.h.b16 %v5907
        %v5953 = vunpack.c.l.b16 %v5908
        %v5954 = vunpack.c.h.b16 %v5908
        %v5955 = vunpack.c.l.b16 %v5909
        %v5956 = vunpack.c.h.b16 %v5909
        %v5957 = vunpack.c.l.b16 %v5910
        %v5958 = vunpack.c.h.b16 %v5910
        %v5959 = vunpack.c.l.b16 %v5911
        %v5960 = vunpack.c.h.b16 %v5911
        %v5961 = vpack.c.b16 %v5933, %v5929
        %v5962 = vpack.c.b16 %v5934, %v5930
        %v5963 = vpack.c.b16 %v5935, %v5931
        %v5964 = vpack.c.b16 %v5936, %v5932
        %v5965 = vpack.c.b16 %v5941, %v5937
        %v5966 = vpack.c.b16 %v5942, %v5938
        %v5967 = vpack.c.b16 %v5943, %v5939
        %v5968 = vpack.c.b16 %v5944, %v5940
        %v5969 = vpack.c.b16 %v5949, %v5945
        %v5970 = vpack.c.b16 %v5950, %v5946
        %v5971 = vpack.c.b16 %v5951, %v5947
        %v5972 = vpack.c.b16 %v5952, %v5948
        %v5973 = vpack.c.b16 %v5957, %v5953
        %v5974 = vpack.c.b16 %v5958, %v5954
        %v5975 = vpack.c.b16 %v5959, %v5955
        %v5976 = vpack.c.b16 %v5960, %v5956
        %v5994 = vsel %vm2460, %v5912, 0
        %5996 = vmatprep.subr.bf16.mxu0 %v5962
        %5997 = vmatpush1.bf16.msra.mxu0 %v5961
        %5998 = vmatprep.subr.bf16.mxu0 %v5966
        %5999 = vmatpush1.bf16.msra.mxu0 %v5965
        %6000 = vmatprep.subr.bf16.mxu0 %v5970
        %6001 = vmatpush1.bf16.msra.mxu0 %v5969
        %6002 = vmatprep.subr.bf16.mxu0 %v5974
        %6003 = vmatpush1.bf16.msra.mxu0 %v5973
        %6004 = vmatprep.subr.bf16.mxu0 0
        %6005 = vmatpush1.bf16.msra.mxu0 0
        %6006 = vmatprep.subr.bf16.mxu0 0
        %6007 = vmatpush1.bf16.msra.mxu0 0
        %6008 = vmatprep.subr.bf16.mxu0 0
        %6009 = vmatpush1.bf16.msra.mxu0 0
        %6010 = vmatprep.subr.bf16.mxu0 0
        %6011 = vmatpush1.bf16.msra.mxu0 0
        %6012 = vmatprep.subr.bf16.mxu0 0
        %6013 = vmatpush1.bf16.msra.mxu0 0
        %6014 = vmatprep.subr.bf16.mxu0 0
        %6015 = vmatpush1.bf16.msra.mxu0 0
        %6016 = vmatprep.subr.bf16.mxu0 0
        %6017 = vmatpush1.bf16.msra.mxu0 0
        %6018 = vmatprep.subr.bf16.mxu0 0
        %6019 = vmatpush1.bf16.msra.mxu0 0
        %6020 = vmatprep.subr.bf16.mxu0 0
        %6021 = vmatpush1.bf16.msra.mxu0 0
        %6022 = vmatprep.subr.bf16.mxu0 0
        %6023 = vmatpush1.bf16.msra.mxu0 0
        %6024 = vmatprep.subr.bf16.mxu0 0
        %6025 = vmatpush1.bf16.msra.mxu0 0
        %6026 = vmatprep.subr.bf16.mxu0 0
        %6027 = vmatpush1.bf16.msra.mxu0 0
        %6028 = vmatprep.mubr.bf16.mxu0 0
        %6029 = vmatmul.mubr.bf16.gmra.mrb[0].mxu0 %v5994
        %v6030 = vpop.f32.mrb[0].mxu0
        %v6031 = vadd.f32 0.0, %v6030
        %v6032 = vpop.f32.mrb[0].mxu0
        %v6033 = vadd.f32 0.0, %v6032
        %v6034 = vpop.f32.mrb[0].mxu0
        %v6035 = vpop.f32.mrb[0].mxu0
        %6036 = vdwg.mxu0
        %6037 = vmatprep.subr.bf16.mxu0 %v5964
        %6038 = vmatpush1.bf16.msra.mxu0 %v5963
        %6039 = vmatprep.subr.bf16.mxu0 %v5968
        %6040 = vmatpush1.bf16.msra.mxu0 %v5967
        %6041 = vmatprep.subr.bf16.mxu0 %v5972
        %6042 = vmatpush1.bf16.msra.mxu0 %v5971
        %6043 = vmatprep.subr.bf16.mxu0 %v5976
        %6044 = vmatpush1.bf16.msra.mxu0 %v5975
        %6045 = vmatprep.subr.bf16.mxu0 0
        %6046 = vmatpush1.bf16.msra.mxu0 0
        %6047 = vmatprep.subr.bf16.mxu0 0
        %6048 = vmatpush1.bf16.msra.mxu0 0
        %6049 = vmatprep.subr.bf16.mxu0 0
        %6050 = vmatpush1.bf16.msra.mxu0 0
        %6051 = vmatprep.subr.bf16.mxu0 0
        %6052 = vmatpush1.bf16.msra.mxu0 0
        %6053 = vmatprep.subr.bf16.mxu0 0
        %6054 = vmatpush1.bf16.msra.mxu0 0
        %6055 = vmatprep.subr.bf16.mxu0 0
        %6056 = vmatpush1.bf16.msra.mxu0 0
        %6057 = vmatprep.subr.bf16.mxu0 0
        %6058 = vmatpush1.bf16.msra.mxu0 0
        %6059 = vmatprep.subr.bf16.mxu0 0
        %6060 = vmatpush1.bf16.msra.mxu0 0
        %6061 = vmatprep.subr.bf16.mxu0 0
        %6062 = vmatpush1.bf16.msra.mxu0 0
        %6063 = vmatprep.subr.bf16.mxu0 0
        %6064 = vmatpush1.bf16.msra.mxu0 0
        %6065 = vmatprep.subr.bf16.mxu0 0
        %6066 = vmatpush1.bf16.msra.mxu0 0
        %6067 = vmatprep.subr.bf16.mxu0 0
        %6068 = vmatpush1.bf16.msra.mxu0 0
        %6069 = vmatprep.mubr.bf16.mxu0 0
        %6070 = vmatmul.mubr.bf16.gmra.mrb[0].mxu0 %v5994
        %v6071 = vpop.f32.mrb[0].mxu0
        %v6072 = vadd.f32 0.0, %v6071
        %v6073 = vpop.f32.mrb[0].mxu0
        %v6074 = vadd.f32 0.0, %v6073
        %v6075 = vpop.f32.mrb[0].mxu0
        %v6076 = vpop.f32.mrb[0].mxu0
        %6077 = vdwg.mxu0
        %v6078 = vadd.f32 %v5891, %v6031
        %v6079 = vadd.f32 %v5892, %v6033
        %v6080 = vadd.f32 %v5893, %v6072
        %v6081 = vadd.f32 %v5894, %v6074
        %v6082 = vld [vmem:[#allocation4 + $0x1d] sm:$0x1]
        %v6083 = vld [vmem:[%s7 + $0x700] sm:$0xff]
        %v6084 = vld [vmem:[%s7 + $0x708] sm:$0xff]
        %v6085 = vld [vmem:[%s7 + $0x710] sm:$0xff]
        %v6086 = vld [vmem:[%s7 + $0x718] sm:$0xff]
        %v6087 = vld [vmem:[%s7 + $0x720] sm:$0xff]
        %v6088 = vld [vmem:[%s7 + $0x728] sm:$0xff]
        %v6089 = vld [vmem:[%s7 + $0x730] sm:$0xff]
        %v6090 = vld [vmem:[%s7 + $0x738] sm:$0xff]
        %v6091 = vld [vmem:[%s7 + $0x740] sm:$0xff]
        %v6092 = vld [vmem:[%s7 + $0x748] sm:$0xff]
        %v6093 = vld [vmem:[%s7 + $0x750] sm:$0xff]
        %v6094 = vld [vmem:[%s7 + $0x758] sm:$0xff]
        %v6095 = vld [vmem:[%s7 + $0x760] sm:$0xff]
        %v6096 = vld [vmem:[%s7 + $0x768] sm:$0xff]
        %v6097 = vld [vmem:[%s7 + $0x770] sm:$0xff]
        %v6098 = vld [vmem:[%s7 + $0x778] sm:$0xff]
        %v6099 = vpack.c.bf16 %v6082, %v6082
        %v6116 = vunpack.c.l.b16 %v6083
        %v6117 = vunpack.c.h.b16 %v6083
        %v6118 = vunpack.c.l.b16 %v6084
        %v6119 = vunpack.c.h.b16 %v6084
        %v6120 = vunpack.c.l.b16 %v6085
        %v6121 = vunpack.c.h.b16 %v6085
        %v6122 = vunpack.c.l.b16 %v6086
        %v6123 = vunpack.c.h.b16 %v6086
        %v6124 = vunpack.c.l.b16 %v6087
        %v6125 = vunpack.c.h.b16 %v6087
        %v6126 = vunpack.c.l.b16 %v6088
        %v6127 = vunpack.c.h.b16 %v6088
        %v6128 = vunpack.c.l.b16 %v6089
        %v6129 = vunpack.c.h.b16 %v6089
        %v6130 = vunpack.c.l.b16 %v6090
        %v6131 = vunpack.c.h.b16 %v6090
        %v6132 = vunpack.c.l.b16 %v6091
        %v6133 = vunpack.c.h.b16 %v6091
        %v6134 = vunpack.c.l.b16 %v6092
        %v6135 = vunpack.c.h.b16 %v6092
        %v6136 = vunpack.c.l.b16 %v6093
        %v6137 = vunpack.c.h.b16 %v6093
        %v6138 = vunpack.c.l.b16 %v6094
        %v6139 = vunpack.c.h.b16 %v6094
        %v6140 = vunpack.c.l.b16 %v6095
        %v6141 = vunpack.c.h.b16 %v6095
        %v6142 = vunpack.c.l.b16 %v6096
        %v6143 = vunpack.c.h.b16 %v6096
        %v6144 = vunpack.c.l.b16 %v6097
        %v6145 = vunpack.c.h.b16 %v6097
        %v6146 = vunpack.c.l.b16 %v6098
        %v6147 = vunpack.c.h.b16 %v6098
        %v6148 = vpack.c.b16 %v6120, %v6116
        %v6149 = vpack.c.b16 %v6121, %v6117
        %v6150 = vpack.c.b16 %v6122, %v6118
        %v6151 = vpack.c.b16 %v6123, %v6119
        %v6152 = vpack.c.b16 %v6128, %v6124
        %v6153 = vpack.c.b16 %v6129, %v6125
        %v6154 = vpack.c.b16 %v6130, %v6126
        %v6155 = vpack.c.b16 %v6131, %v6127
        %v6156 = vpack.c.b16 %v6136, %v6132
        %v6157 = vpack.c.b16 %v6137, %v6133
        %v6158 = vpack.c.b16 %v6138, %v6134
        %v6159 = vpack.c.b16 %v6139, %v6135
        %v6160 = vpack.c.b16 %v6144, %v6140
        %v6161 = vpack.c.b16 %v6145, %v6141
        %v6162 = vpack.c.b16 %v6146, %v6142
        %v6163 = vpack.c.b16 %v6147, %v6143
        %v6181 = vsel %vm2460, %v6099, 0
        %6183 = vmatprep.subr.bf16.mxu0 %v6149
        %6184 = vmatpush1.bf16.msra.mxu0 %v6148
        %6185 = vmatprep.subr.bf16.mxu0 %v6153
        %6186 = vmatpush1.bf16.msra.mxu0 %v6152
        %6187 = vmatprep.subr.bf16.mxu0 %v6157
        %6188 = vmatpush1.bf16.msra.mxu0 %v6156
        %6189 = vmatprep.subr.bf16.mxu0 %v6161
        %6190 = vmatpush1.bf16.msra.mxu0 %v6160
        %6191 = vmatprep.subr.bf16.mxu0 0
        %6192 = vmatpush1.bf16.msra.mxu0 0
        %6193 = vmatprep.subr.bf16.mxu0 0
        %6194 = vmatpush1.bf16.msra.mxu0 0
        %6195 = vmatprep.subr.bf16.mxu0 0
        %6196 = vmatpush1.bf16.msra.mxu0 0
        %6197 = vmatprep.subr.bf16.mxu0 0
        %6198 = vmatpush1.bf16.msra.mxu0 0
        %6199 = vmatprep.subr.bf16.mxu0 0
        %6200 = vmatpush1.bf16.msra.mxu0 0
        %6201 = vmatprep.subr.bf16.mxu0 0
        %6202 = vmatpush1.bf16.msra.mxu0 0
        %6203 = vmatprep.subr.bf16.mxu0 0
        %6204 = vmatpush1.bf16.msra.mxu0 0
        %6205 = vmatprep.subr.bf16.mxu0 0
        %6206 = vmatpush1.bf16.msra.mxu0 0
        %6207 = vmatprep.subr.bf16.mxu0 0
        %6208 = vmatpush1.bf16.msra.mxu0 0
        %6209 = vmatprep.subr.bf16.mxu0 0
        %6210 = vmatpush1.bf16.msra.mxu0 0
        %6211 = vmatprep.subr.bf16.mxu0 0
        %6212 = vmatpush1.bf16.msra.mxu0 0
        %6213 = vmatprep.subr.bf16.mxu0 0
        %6214 = vmatpush1.bf16.msra.mxu0 0
        %6215 = vmatprep.mubr.bf16.mxu0 0
        %6216 = vmatmul.mubr.bf16.gmra.mrb[0].mxu0 %v6181
        %v6217 = vpop.f32.mrb[0].mxu0
        %v6218 = vadd.f32 0.0, %v6217
        %v6219 = vpop.f32.mrb[0].mxu0
        %v6220 = vadd.f32 0.0, %v6219
        %v6221 = vpop.f32.mrb[0].mxu0
        %v6222 = vpop.f32.mrb[0].mxu0
        %6223 = vdwg.mxu0
        %6224 = vmatprep.subr.bf16.mxu0 %v6151
        %6225 = vmatpush1.bf16.msra.mxu0 %v6150
        %6226 = vmatprep.subr.bf16.mxu0 %v6155
        %6227 = vmatpush1.bf16.msra.mxu0 %v6154
        %6228 = vmatprep.subr.bf16.mxu0 %v6159
        %6229 = vmatpush1.bf16.msra.mxu0 %v6158
        %6230 = vmatprep.subr.bf16.mxu0 %v6163
        %6231 = vmatpush1.bf16.msra.mxu0 %v6162
        %6232 = vmatprep.subr.bf16.mxu0 0
        %6233 = vmatpush1.bf16.msra.mxu0 0
        %6234 = vmatprep.subr.bf16.mxu0 0
        %6235 = vmatpush1.bf16.msra.mxu0 0
        %6236 = vmatprep.subr.bf16.mxu0 0
        %6237 = vmatpush1.bf16.msra.mxu0 0
        %6238 = vmatprep.subr.bf16.mxu0 0
        %6239 = vmatpush1.bf16.msra.mxu0 0
        %6240 = vmatprep.subr.bf16.mxu0 0
        %6241 = vmatpush1.bf16.msra.mxu0 0
        %6242 = vmatprep.subr.bf16.mxu0 0
        %6243 = vmatpush1.bf16.msra.mxu0 0
        %6244 = vmatprep.subr.bf16.mxu0 0
        %6245 = vmatpush1.bf16.msra.mxu0 0
        %6246 = vmatprep.subr.bf16.mxu0 0
        %6247 = vmatpush1.bf16.msra.mxu0 0
        %6248 = vmatprep.subr.bf16.mxu0 0
        %6249 = vmatpush1.bf16.msra.mxu0 0
        %6250 = vmatprep.subr.bf16.mxu0 0
        %6251 = vmatpush1.bf16.msra.mxu0 0
        %6252 = vmatprep.subr.bf16.mxu0 0
        %6253 = vmatpush1.bf16.msra.mxu0 0
        %6254 = vmatprep.subr.bf16.mxu0 0
        %6255 = vmatpush1.bf16.msra.mxu0 0
        %6256 = vmatprep.mubr.bf16.mxu0 0
        %6257 = vmatmul.mubr.bf16.gmra.mrb[0].mxu0 %v6181
        %v6258 = vpop.f32.mrb[0].mxu0
        %v6259 = vadd.f32 0.0, %v6258
        %v6260 = vpop.f32.mrb[0].mxu0
        %v6261 = vadd.f32 0.0, %v6260
        %v6262 = vpop.f32.mrb[0].mxu0
        %v6263 = vpop.f32.mrb[0].mxu0
        %6264 = vdwg.mxu0
        %v6265 = vadd.f32 %v6078, %v6218
        %v6266 = vadd.f32 %v6079, %v6220
        %v6267 = vadd.f32 %v6080, %v6259
        %v6268 = vadd.f32 %v6081, %v6261
        %v6269 = vld [vmem:[#allocation4 + $0x1e] sm:$0x1]
        %v6270 = vld [vmem:[%s7 + $0x780] sm:$0xff]
        %v6271 = vld [vmem:[%s7 + $0x788] sm:$0xff]
        %v6272 = vld [vmem:[%s7 + $0x790] sm:$0xff]
        %v6273 = vld [vmem:[%s7 + $0x798] sm:$0xff]
        %v6274 = vld [vmem:[%s7 + $0x7a0] sm:$0xff]
        %v6275 = vld [vmem:[%s7 + $0x7a8] sm:$0xff]
        %v6276 = vld [vmem:[%s7 + $0x7b0] sm:$0xff]
        %v6277 = vld [vmem:[%s7 + $0x7b8] sm:$0xff]
        %v6278 = vld [vmem:[%s7 + $0x7c0] sm:$0xff]
        %v6279 = vld [vmem:[%s7 + $0x7c8] sm:$0xff]
        %v6280 = vld [vmem:[%s7 + $0x7d0] sm:$0xff]
        %v6281 = vld [vmem:[%s7 + $0x7d8] sm:$0xff]
        %v6282 = vld [vmem:[%s7 + $0x7e0] sm:$0xff]
        %v6283 = vld [vmem:[%s7 + $0x7e8] sm:$0xff]
        %v6284 = vld [vmem:[%s7 + $0x7f0] sm:$0xff]
        %v6285 = vld [vmem:[%s7 + $0x7f8] sm:$0xff]
        %v6286 = vpack.c.bf16 %v6269, %v6269
        %v6303 = vunpack.c.l.b16 %v6270
        %v6304 = vunpack.c.h.b16 %v6270
        %v6305 = vunpack.c.l.b16 %v6271
        %v6306 = vunpack.c.h.b16 %v6271
        %v6307 = vunpack.c.l.b16 %v6272
        %v6308 = vunpack.c.h.b16 %v6272
        %v6309 = vunpack.c.l.b16 %v6273
        %v6310 = vunpack.c.h.b16 %v6273
        %v6311 = vunpack.c.l.b16 %v6274
        %v6312 = vunpack.c.h.b16 %v6274
        %v6313 = vunpack.c.l.b16 %v6275
        %v6314 = vunpack.c.h.b16 %v6275
        %v6315 = vunpack.c.l.b16 %v6276
        %v6316 = vunpack.c.h.b16 %v6276
        %v6317 = vunpack.c.l.b16 %v6277
        %v6318 = vunpack.c.h.b16 %v6277
        %v6319 = vunpack.c.l.b16 %v6278
        %v6320 = vunpack.c.h.b16 %v6278
        %v6321 = vunpack.c.l.b16 %v6279
        %v6322 = vunpack.c.h.b16 %v6279
        %v6323 = vunpack.c.l.b16 %v6280
        %v6324 = vunpack.c.h.b16 %v6280
        %v6325 = vunpack.c.l.b16 %v6281
        %v6326 = vunpack.c.h.b16 %v6281
        %v6327 = vunpack.c.l.b16 %v6282
        %v6328 = vunpack.c.h.b16 %v6282
        %v6329 = vunpack.c.l.b16 %v6283
        %v6330 = vunpack.c.h.b16 %v6283
        %v6331 = vunpack.c.l.b16 %v6284
        %v6332 = vunpack.c.h.b16 %v6284
        %v6333 = vunpack.c.l.b16 %v6285
        %v6334 = vunpack.c.h.b16 %v6285
        %v6335 = vpack.c.b16 %v6307, %v6303
        %v6336 = vpack.c.b16 %v6308, %v6304
        %v6337 = vpack.c.b16 %v6309, %v6305
        %v6338 = vpack.c.b16 %v6310, %v6306
        %v6339 = vpack.c.b16 %v6315, %v6311
        %v6340 = vpack.c.b16 %v6316, %v6312
        %v6341 = vpack.c.b16 %v6317, %v6313
        %v6342 = vpack.c.b16 %v6318, %v6314
        %v6343 = vpack.c.b16 %v6323, %v6319
        %v6344 = vpack.c.b16 %v6324, %v6320
        %v6345 = vpack.c.b16 %v6325, %v6321
        %v6346 = vpack.c.b16 %v6326, %v6322
        %v6347 = vpack.c.b16 %v6331, %v6327
        %v6348 = vpack.c.b16 %v6332, %v6328
        %v6349 = vpack.c.b16 %v6333, %v6329
        %v6350 = vpack.c.b16 %v6334, %v6330
        %v6368 = vsel %vm2460, %v6286, 0
        %6370 = vmatprep.subr.bf16.mxu0 %v6336
        %6371 = vmatpush1.bf16.msra.mxu0 %v6335
        %6372 = vmatprep.subr.bf16.mxu0 %v6340
        %6373 = vmatpush1.bf16.msra.mxu0 %v6339
        %6374 = vmatprep.subr.bf16.mxu0 %v6344
        %6375 = vmatpush1.bf16.msra.mxu0 %v6343
        %6376 = vmatprep.subr.bf16.mxu0 %v6348
        %6377 = vmatpush1.bf16.msra.mxu0 %v6347
        %6378 = vmatprep.subr.bf16.mxu0 0
        %6379 = vmatpush1.bf16.msra.mxu0 0
        %6380 = vmatprep.subr.bf16.mxu0 0
        %6381 = vmatpush1.bf16.msra.mxu0 0
        %6382 = vmatprep.subr.bf16.mxu0 0
        %6383 = vmatpush1.bf16.msra.mxu0 0
        %6384 = vmatprep.subr.bf16.mxu0 0
        %6385 = vmatpush1.bf16.msra.mxu0 0
        %6386 = vmatprep.subr.bf16.mxu0 0
        %6387 = vmatpush1.bf16.msra.mxu0 0
        %6388 = vmatprep.subr.bf16.mxu0 0
        %6389 = vmatpush1.bf16.msra.mxu0 0
        %6390 = vmatprep.subr.bf16.mxu0 0
        %6391 = vmatpush1.bf16.msra.mxu0 0
        %6392 = vmatprep.subr.bf16.mxu0 0
        %6393 = vmatpush1.bf16.msra.mxu0 0
        %6394 = vmatprep.subr.bf16.mxu0 0
        %6395 = vmatpush1.bf16.msra.mxu0 0
        %6396 = vmatprep.subr.bf16.mxu0 0
        %6397 = vmatpush1.bf16.msra.mxu0 0
        %6398 = vmatprep.subr.bf16.mxu0 0
        %6399 = vmatpush1.bf16.msra.mxu0 0
        %6400 = vmatprep.subr.bf16.mxu0 0
        %6401 = vmatpush1.bf16.msra.mxu0 0
        %6402 = vmatprep.mubr.bf16.mxu0 0
        %6403 = vmatmul.mubr.bf16.gmra.mrb[0].mxu0 %v6368
        %v6404 = vpop.f32.mrb[0].mxu0
        %v6405 = vadd.f32 0.0, %v6404
        %v6406 = vpop.f32.mrb[0].mxu0
        %v6407 = vadd.f32 0.0, %v6406
        %v6408 = vpop.f32.mrb[0].mxu0
        %v6409 = vpop.f32.mrb[0].mxu0
        %6410 = vdwg.mxu0
        %6411 = vmatprep.subr.bf16.mxu0 %v6338
        %6412 = vmatpush1.bf16.msra.mxu0 %v6337
        %6413 = vmatprep.subr.bf16.mxu0 %v6342
        %6414 = vmatpush1.bf16.msra.mxu0 %v6341
        %6415 = vmatprep.subr.bf16.mxu0 %v6346
        %6416 = vmatpush1.bf16.msra.mxu0 %v6345
        %6417 = vmatprep.subr.bf16.mxu0 %v6350
        %6418 = vmatpush1.bf16.msra.mxu0 %v6349
        %6419 = vmatprep.subr.bf16.mxu0 0
        %6420 = vmatpush1.bf16.msra.mxu0 0
        %6421 = vmatprep.subr.bf16.mxu0 0
        %6422 = vmatpush1.bf16.msra.mxu0 0
        %6423 = vmatprep.subr.bf16.mxu0 0
        %6424 = vmatpush1.bf16.msra.mxu0 0
        %6425 = vmatprep.subr.bf16.mxu0 0
        %6426 = vmatpush1.bf16.msra.mxu0 0
        %6427 = vmatprep.subr.bf16.mxu0 0
        %6428 = vmatpush1.bf16.msra.mxu0 0
        %6429 = vmatprep.subr.bf16.mxu0 0
        %6430 = vmatpush1.bf16.msra.mxu0 0
        %6431 = vmatprep.subr.bf16.mxu0 0
        %6432 = vmatpush1.bf16.msra.mxu0 0
        %6433 = vmatprep.subr.bf16.mxu0 0
        %6434 = vmatpush1.bf16.msra.mxu0 0
        %6435 = vmatprep.subr.bf16.mxu0 0
        %6436 = vmatpush1.bf16.msra.mxu0 0
        %6437 = vmatprep.subr.bf16.mxu0 0
        %6438 = vmatpush1.bf16.msra.mxu0 0
        %6439 = vmatprep.subr.bf16.mxu0 0
        %6440 = vmatpush1.bf16.msra.mxu0 0
        %6441 = vmatprep.subr.bf16.mxu0 0
        %6442 = vmatpush1.bf16.msra.mxu0 0
        %6443 = vmatprep.mubr.bf16.mxu0 0
        %6444 = vmatmul.mubr.bf16.gmra.mrb[0].mxu0 %v6368
        %v6445 = vpop.f32.mrb[0].mxu0
        %v6446 = vadd.f32 0.0, %v6445
        %v6447 = vpop.f32.mrb[0].mxu0
        %v6448 = vadd.f32 0.0, %v6447
        %v6449 = vpop.f32.mrb[0].mxu0
        %v6450 = vpop.f32.mrb[0].mxu0
        %6451 = vdwg.mxu0
        %v6452 = vadd.f32 %v6265, %v6405
        %v6453 = vadd.f32 %v6266, %v6407
        %v6454 = vadd.f32 %v6267, %v6446
        %v6455 = vadd.f32 %v6268, %v6448
        %v6456 = vld [vmem:[%s8] sm:$0xf]
        %v6458 = vlaneseq
        %v6459 = vshrl.u32 %v6458, 7
        %v6460 = vsub.s32 0, %v6459
        %v6461 = vrot.slane %v6456, %v6460
        %v6462 = vlaneseq
        %v6463 = vshrl.u32 %v6462, 7
        %v6464 = vsub.s32 1, %v6463
        %v6465 = vrot.slane %v6456, %v6464
        %v6466 = vlaneseq
        %v6467 = vshrl.u32 %v6466, 7
        %v6468 = vsub.s32 2, %v6467
        %v6469 = vrot.slane %v6456, %v6468
        %v6470 = vlaneseq
        %v6471 = vshrl.u32 %v6470, 7
        %v6472 = vsub.s32 3, %v6471
        %v6473 = vrot.slane %v6456, %v6472
        %v6478 = vadd.f32 %v6452, %v6461
        %v6479 = vadd.f32 %v6453, %v6465
        %v6480 = vadd.f32 %v6454, %v6469
        %v6481 = vadd.f32 %v6455, %v6473
        %v6482 = vmax.f32 %v6478, 0.0
        %v6483 = vmax.f32 %v6479, 0.0
        %v6484 = vmax.f32 %v6480, 0.0
        %v6485 = vmax.f32 %v6481, 0.0
        %v6486 = vld [vmem:[%s9] sm:$0xf]
        %v6487 = vld [vmem:[%s9 + $0x4] sm:$0xf]
        %v6488 = vld [vmem:[%s9 + $0x8] sm:$0xf]
        %v6489 = vld [vmem:[%s9 + $0xc] sm:$0xf]
        %v6490 = vld [vmem:[%s9 + $0x10] sm:$0xf]
        %v6491 = vld [vmem:[%s9 + $0x14] sm:$0xf]
        %v6492 = vld [vmem:[%s9 + $0x18] sm:$0xf]
        %v6493 = vld [vmem:[%s9 + $0x1c] sm:$0xf]
        %v6494 = vld [vmem:[%s9 + $0x20] sm:$0xf]
        %v6495 = vld [vmem:[%s9 + $0x24] sm:$0xf]
        %v6496 = vld [vmem:[%s9 + $0x28] sm:$0xf]
        %v6497 = vld [vmem:[%s9 + $0x2c] sm:$0xf]
        %v6498 = vld [vmem:[%s9 + $0x30] sm:$0xf]
        %v6499 = vld [vmem:[%s9 + $0x34] sm:$0xf]
        %v6500 = vld [vmem:[%s9 + $0x38] sm:$0xf]
        %v6501 = vld [vmem:[%s9 + $0x3c] sm:$0xf]
        %v6502 = vld [vmem:[%s9 + $0x40] sm:$0xf]
        %v6503 = vld [vmem:[%s9 + $0x44] sm:$0xf]
        %v6504 = vld [vmem:[%s9 + $0x48] sm:$0xf]
        %v6505 = vld [vmem:[%s9 + $0x4c] sm:$0xf]
        %v6506 = vld [vmem:[%s9 + $0x50] sm:$0xf]
        %v6507 = vld [vmem:[%s9 + $0x54] sm:$0xf]
        %v6508 = vld [vmem:[%s9 + $0x58] sm:$0xf]
        %v6509 = vld [vmem:[%s9 + $0x5c] sm:$0xf]
        %v6510 = vld [vmem:[%s9 + $0x60] sm:$0xf]
        %v6511 = vld [vmem:[%s9 + $0x64] sm:$0xf]
        %v6512 = vld [vmem:[%s9 + $0x68] sm:$0xf]
        %v6513 = vld [vmem:[%s9 + $0x6c] sm:$0xf]
        %v6514 = vld [vmem:[%s9 + $0x70] sm:$0xf]
        %v6515 = vld [vmem:[%s9 + $0x74] sm:$0xf]
        %v6516 = vld [vmem:[%s9 + $0x78] sm:$0xf]
        %v6517 = vld [vmem:[%s9 + $0x7c] sm:$0xf]
        %v6518 = vld [vmem:[%s9 + $0x80] sm:$0xf]
        %v6519 = vld [vmem:[%s9 + $0x84] sm:$0xf]
        %v6520 = vld [vmem:[%s9 + $0x88] sm:$0xf]
        %v6521 = vld [vmem:[%s9 + $0x8c] sm:$0xf]
        %v6522 = vld [vmem:[%s9 + $0x90] sm:$0xf]
        %v6523 = vld [vmem:[%s9 + $0x94] sm:$0xf]
        %v6524 = vld [vmem:[%s9 + $0x98] sm:$0xf]
        %v6525 = vld [vmem:[%s9 + $0x9c] sm:$0xf]
        %v6526 = vld [vmem:[%s9 + $0xa0] sm:$0xf]
        %v6527 = vld [vmem:[%s9 + $0xa4] sm:$0xf]
        %v6528 = vld [vmem:[%s9 + $0xa8] sm:$0xf]
        %v6529 = vld [vmem:[%s9 + $0xac] sm:$0xf]
        %v6530 = vld [vmem:[%s9 + $0xb0] sm:$0xf]
        %v6531 = vld [vmem:[%s9 + $0xb4] sm:$0xf]
        %v6532 = vld [vmem:[%s9 + $0xb8] sm:$0xf]
        %v6533 = vld [vmem:[%s9 + $0xbc] sm:$0xf]
        %v6534 = vld [vmem:[%s9 + $0xc0] sm:$0xf]
        %v6535 = vld [vmem:[%s9 + $0xc4] sm:$0xf]
        %v6536 = vld [vmem:[%s9 + $0xc8] sm:$0xf]
        %v6537 = vld [vmem:[%s9 + $0xcc] sm:$0xf]
        %v6538 = vld [vmem:[%s9 + $0xd0] sm:$0xf]
        %v6539 = vld [vmem:[%s9 + $0xd4] sm:$0xf]
        %v6540 = vld [vmem:[%s9 + $0xd8] sm:$0xf]
        %v6541 = vld [vmem:[%s9 + $0xdc] sm:$0xf]
        %v6542 = vld [vmem:[%s9 + $0xe0] sm:$0xf]
        %v6543 = vld [vmem:[%s9 + $0xe4] sm:$0xf]
        %v6544 = vld [vmem:[%s9 + $0xe8] sm:$0xf]
        %v6545 = vld [vmem:[%s9 + $0xec] sm:$0xf]
        %v6546 = vld [vmem:[%s9 + $0xf0] sm:$0xf]
        %v6547 = vld [vmem:[%s9 + $0xf4] sm:$0xf]
        %v6548 = vld [vmem:[%s9 + $0xf8] sm:$0xf]
        %v6549 = vld [vmem:[%s9 + $0xfc] sm:$0xf]
        %v6550 = vpack.c.bf16 %v6482, %v6482
        %v6551 = vpack.c.bf16 %v6483, %v6483
        %v6552 = vpack.c.bf16 %v6484, %v6484
        %v6553 = vpack.c.bf16 %v6485, %v6485
        %v6554 = vld [vmem:[%s10] sm:$0x1]
        %v6619 = vunpack.c.l.b16 %v6486
        %v6620 = vunpack.c.l.b16 %v6487
        %v6621 = vunpack.c.l.b16 %v6488
        %v6622 = vunpack.c.l.b16 %v6489
        %v6623 = vunpack.c.l.b16 %v6490
        %v6624 = vunpack.c.l.b16 %v6491
        %v6625 = vunpack.c.l.b16 %v6492
        %v6626 = vunpack.c.l.b16 %v6493
        %v6627 = vunpack.c.l.b16 %v6494
        %v6628 = vunpack.c.l.b16 %v6495
        %v6629 = vunpack.c.l.b16 %v6496
        %v6630 = vunpack.c.l.b16 %v6497
        %v6631 = vunpack.c.l.b16 %v6498
        %v6632 = vunpack.c.l.b16 %v6499
        %v6633 = vunpack.c.l.b16 %v6500
        %v6634 = vunpack.c.l.b16 %v6501
        %v6635 = vunpack.c.l.b16 %v6502
        %v6636 = vunpack.c.l.b16 %v6503
        %v6637 = vunpack.c.l.b16 %v6504
        %v6638 = vunpack.c.l.b16 %v6505
        %v6639 = vunpack.c.l.b16 %v6506
        %v6640 = vunpack.c.l.b16 %v6507
        %v6641 = vunpack.c.l.b16 %v6508
        %v6642 = vunpack.c.l.b16 %v6509
        %v6643 = vunpack.c.l.b16 %v6510
        %v6644 = vunpack.c.l.b16 %v6511
        %v6645 = vunpack.c.l.b16 %v6512
        %v6646 = vunpack.c.l.b16 %v6513
        %v6647 = vunpack.c.l.b16 %v6514
        %v6648 = vunpack.c.l.b16 %v6515
        %v6649 = vunpack.c.l.b16 %v6516
        %v6650 = vunpack.c.l.b16 %v6517
        %v6651 = vunpack.c.l.b16 %v6518
        %v6652 = vunpack.c.l.b16 %v6519
        %v6653 = vunpack.c.l.b16 %v6520
        %v6654 = vunpack.c.l.b16 %v6521
        %v6655 = vunpack.c.l.b16 %v6522
        %v6656 = vunpack.c.l.b16 %v6523
        %v6657 = vunpack.c.l.b16 %v6524
        %v6658 = vunpack.c.l.b16 %v6525
        %v6659 = vunpack.c.l.b16 %v6526
        %v6660 = vunpack.c.l.b16 %v6527
        %v6661 = vunpack.c.l.b16 %v6528
        %v6662 = vunpack.c.l.b16 %v6529
        %v6663 = vunpack.c.l.b16 %v6530
        %v6664 = vunpack.c.l.b16 %v6531
        %v6665 = vunpack.c.l.b16 %v6532
        %v6666 = vunpack.c.l.b16 %v6533
        %v6667 = vunpack.c.l.b16 %v6534
        %v6668 = vunpack.c.l.b16 %v6535
        %v6669 = vunpack.c.l.b16 %v6536
        %v6670 = vunpack.c.l.b16 %v6537
        %v6671 = vunpack.c.l.b16 %v6538
        %v6672 = vunpack.c.l.b16 %v6539
        %v6673 = vunpack.c.l.b16 %v6540
        %v6674 = vunpack.c.l.b16 %v6541
        %v6675 = vunpack.c.l.b16 %v6542
        %v6676 = vunpack.c.l.b16 %v6543
        %v6677 = vunpack.c.l.b16 %v6544
        %v6678 = vunpack.c.l.b16 %v6545
        %v6679 = vunpack.c.l.b16 %v6546
        %v6680 = vunpack.c.l.b16 %v6547
        %v6681 = vunpack.c.l.b16 %v6548
        %v6682 = vunpack.c.l.b16 %v6549
        %v6683 = vpack.c.b16 %v6620, %v6619
        %v6684 = vpack.c.b16 %v6622, %v6621
        %v6685 = vpack.c.b16 %v6624, %v6623
        %v6686 = vpack.c.b16 %v6626, %v6625
        %v6687 = vpack.c.b16 %v6628, %v6627
        %v6688 = vpack.c.b16 %v6630, %v6629
        %v6689 = vpack.c.b16 %v6632, %v6631
        %v6690 = vpack.c.b16 %v6634, %v6633
        %v6691 = vpack.c.b16 %v6636, %v6635
        %v6692 = vpack.c.b16 %v6638, %v6637
        %v6693 = vpack.c.b16 %v6640, %v6639
        %v6694 = vpack.c.b16 %v6642, %v6641
        %v6695 = vpack.c.b16 %v6644, %v6643
        %v6696 = vpack.c.b16 %v6646, %v6645
        %v6697 = vpack.c.b16 %v6648, %v6647
        %v6698 = vpack.c.b16 %v6650, %v6649
        %v6699 = vpack.c.b16 %v6652, %v6651
        %v6700 = vpack.c.b16 %v6654, %v6653
        %v6701 = vpack.c.b16 %v6656, %v6655
        %v6702 = vpack.c.b16 %v6658, %v6657
        %v6703 = vpack.c.b16 %v6660, %v6659
        %v6704 = vpack.c.b16 %v6662, %v6661
        %v6705 = vpack.c.b16 %v6664, %v6663
        %v6706 = vpack.c.b16 %v6666, %v6665
        %v6707 = vpack.c.b16 %v6668, %v6667
        %v6708 = vpack.c.b16 %v6670, %v6669
        %v6709 = vpack.c.b16 %v6672, %v6671
        %v6710 = vpack.c.b16 %v6674, %v6673
        %v6711 = vpack.c.b16 %v6676, %v6675
        %v6712 = vpack.c.b16 %v6678, %v6677
        %v6713 = vpack.c.b16 %v6680, %v6679
        %v6714 = vpack.c.b16 %v6682, %v6681
        %6747 = vmatprep.subr.bf16.mxu0 0
        %6748 = vmatpush1.bf16.msra.mxu0 %v6683
        %6749 = vmatprep.subr.bf16.mxu0 0
        %6750 = vmatpush1.bf16.msra.mxu0 %v6684
        %6751 = vmatprep.subr.bf16.mxu0 0
        %6752 = vmatpush1.bf16.msra.mxu0 %v6685
        %6753 = vmatprep.subr.bf16.mxu0 0
        %6754 = vmatpush1.bf16.msra.mxu0 %v6686
        %6755 = vmatprep.subr.bf16.mxu0 0
        %6756 = vmatpush1.bf16.msra.mxu0 %v6687
        %6757 = vmatprep.subr.bf16.mxu0 0
        %6758 = vmatpush1.bf16.msra.mxu0 %v6688
        %6759 = vmatprep.subr.bf16.mxu0 0
        %6760 = vmatpush1.bf16.msra.mxu0 %v6689
        %6761 = vmatprep.subr.bf16.mxu0 0
        %6762 = vmatpush1.bf16.msra.mxu0 %v6690
        %6763 = vmatprep.subr.bf16.mxu0 0
        %6764 = vmatpush1.bf16.msra.mxu0 %v6691
        %6765 = vmatprep.subr.bf16.mxu0 0
        %6766 = vmatpush1.bf16.msra.mxu0 %v6692
        %6767 = vmatprep.subr.bf16.mxu0 0
        %6768 = vmatpush1.bf16.msra.mxu0 %v6693
        %6769 = vmatprep.subr.bf16.mxu0 0
        %6770 = vmatpush1.bf16.msra.mxu0 %v6694
        %6771 = vmatprep.subr.bf16.mxu0 0
        %6772 = vmatpush1.bf16.msra.mxu0 %v6695
        %6773 = vmatprep.subr.bf16.mxu0 0
        %6774 = vmatpush1.bf16.msra.mxu0 %v6696
        %6775 = vmatprep.subr.bf16.mxu0 0
        %6776 = vmatpush1.bf16.msra.mxu0 %v6697
        %6777 = vmatprep.subr.bf16.mxu0 0
        %6778 = vmatpush1.bf16.msra.mxu0 %v6698
        %6779 = vmatprep.mubr.bf16.mxu0 %v6551
        %6780 = vmatmul.mubr.bf16.gmra.mrb[0].mxu0 %v6550
        %v6781 = vpop.f32.mrb[0].mxu0
        %v6782 = vadd.f32 %v6554, %v6781
        %v6783 = vpop.f32.mrb[0].mxu0
        %v6784 = vpop.f32.mrb[0].mxu0
        %v6785 = vpop.f32.mrb[0].mxu0
        %6786 = vdwg.mxu0
        %6787 = vmatprep.subr.bf16.mxu0 0
        %6788 = vmatpush1.bf16.msra.mxu0 %v6699
        %6789 = vmatprep.subr.bf16.mxu0 0
        %6790 = vmatpush1.bf16.msra.mxu0 %v6700
        %6791 = vmatprep.subr.bf16.mxu0 0
        %6792 = vmatpush1.bf16.msra.mxu0 %v6701
        %6793 = vmatprep.subr.bf16.mxu0 0
        %6794 = vmatpush1.bf16.msra.mxu0 %v6702
        %6795 = vmatprep.subr.bf16.mxu0 0
        %6796 = vmatpush1.bf16.msra.mxu0 %v6703
        %6797 = vmatprep.subr.bf16.mxu0 0
        %6798 = vmatpush1.bf16.msra.mxu0 %v6704
        %6799 = vmatprep.subr.bf16.mxu0 0
        %6800 = vmatpush1.bf16.msra.mxu0 %v6705
        %6801 = vmatprep.subr.bf16.mxu0 0
        %6802 = vmatpush1.bf16.msra.mxu0 %v6706
        %6803 = vmatprep.subr.bf16.mxu0 0
        %6804 = vmatpush1.bf16.msra.mxu0 %v6707
        %6805 = vmatprep.subr.bf16.mxu0 0
        %6806 = vmatpush1.bf16.msra.mxu0 %v6708
        %6807 = vmatprep.subr.bf16.mxu0 0
        %6808 = vmatpush1.bf16.msra.mxu0 %v6709
        %6809 = vmatprep.subr.bf16.mxu0 0
        %6810 = vmatpush1.bf16.msra.mxu0 %v6710
        %6811 = vmatprep.subr.bf16.mxu0 0
        %6812 = vmatpush1.bf16.msra.mxu0 %v6711
        %6813 = vmatprep.subr.bf16.mxu0 0
        %6814 = vmatpush1.bf16.msra.mxu0 %v6712
        %6815 = vmatprep.subr.bf16.mxu0 0
        %6816 = vmatpush1.bf16.msra.mxu0 %v6713
        %6817 = vmatprep.subr.bf16.mxu0 0
        %6818 = vmatpush1.bf16.msra.mxu0 %v6714
        %6819 = vmatprep.mubr.bf16.mxu0 %v6553
        %6820 = vmatmul.mubr.bf16.gmra.mrb[0].mxu0 %v6552
        %v6821 = vpop.f32.mrb[0].mxu0
        %v6822 = vadd.f32 %v6782, %v6821
        %v6823 = vpop.f32.mrb[0].mxu0
        %v6824 = vpop.f32.mrb[0].mxu0
        %v6825 = vpop.f32.mrb[0].mxu0
        %6826 = vdwg.mxu0
        %6827 = vst [vmem:[%s378] sm:$0x1] %v6822
        %s6828 = sand.u32 %s269, 1
        %s6829 = scalar_lea.sflag [#allocation6], %s6828
        %s6830 = sand.u32 %s269, 1
        %s6831 = scalar_lea.vmem [#allocation5], %s6830
        // Predicated region
        $region65: #{dqn_forward.1} parent=63 // pred_check
          %p6832 = pneg %p279
        $region66: #{dqn_forward.1} parent=63 // pred_check_branch
          %6834 = sbr.rel (%p6832) target = $region68
        $region67: #{dqn_forward.1} parent=63 // pred_region
          %s6836 = ssub.s32 16, 16
          %6837 = vsyncadd %s6829, %s6836
          %s6838 = smul.addr %s25, 16
          %s6839 = scalar_lea.hbm %s11, %s6838
          %s6841 = sshll.u32 %s6831, 4
          %s6842 = int_to_ptr.vmem [resolvable:$true] %s6841
          %6844 = dma.vmem_to_hbm [thread:$0]  %s6842, 16, %s6839, %s6829
        $region68: #{dqn_forward.1} parent=63 // pred_fallthru
          _
      $region64: #{dqn_forward.1} parent=5 // pred_fallthru
        _
      %p6845 = scmp.le.s32.totalorder 2, %s20
      // Predicated region
      $region69: #{dqn_forward.1} parent=5 // pred_check
        %p6846 = pneg %p6845
      $region70: #{dqn_forward.1} parent=5 // pred_check_branch
        %6848 = sbr.rel (%p6846) target = $region72
      $region71: #{dqn_forward.1} parent=5 // pred_region
        %s6849 = ssub.s32 %s20, 2
        // Predicated region
        $region73: #{dqn_forward.1} parent=71 // pred_check
          %p6850 = pneg %p285
        $region74: #{dqn_forward.1} parent=71 // pred_check_branch
          %6852 = sbr.rel (%p6850) target = $region76
        $region75: #{dqn_forward.1} parent=71 // pred_region
          %s6853 = sand.u32 %s270, 1
          %s6854 = scalar_lea.sflag [#allocation6], %s6853
          %s6855 = sand.u32 %s270, 1
          %s6856 = scalar_lea.vmem [#allocation5], %s6855
          %6857 = dma.done %s6854, 16
        $region76: #{dqn_forward.1} parent=71 // pred_fallthru
          _
      $region72: #{dqn_forward.1} parent=5 // pred_fallthru
        _
    $region6: #{dqn_forward.1} parent=1 // loop_footer
      %s24 = sadd.s32 1, %s20
    $region7: #{dqn_forward.1} parent=1 // loop_footer_branch
      %19 = sbr.rel target = $region3
    $region8: #{dqn_forward.1} parent=1 // loop_exit
      _
    %6858 = vsyncpa [#allocation6], 1
    %s6859 = scalar_lea.sflag [#allocation6], 1
    %6860 = vsyncpa %s6859, 1

</llo_original>
